<compile_context>
chip_gen: v7x
topology: tpu7x:2x2x1
jax: 0.10.0
libtpu: 0.0.40
codegen_flags: <defaults>
</compile_context>

<pallas_src>
import jax
import jax.numpy as jnp
from jax.experimental import pallas as pl
from jax.experimental.pallas import tpu as pltpu

_BN_EPS = 1e-5


# ----------------------------------------------------------------------------
# in-kernel helpers (iota/compare, 2-D matmuls, elementwise only -> Mosaic-safe)
# ----------------------------------------------------------------------------
def _select_matrix(rows, cols, fn):
    """0/1 f32 matrix M[r, c] = fn(r, c), built from 2-D broadcasted_iota."""
    r = jax.lax.broadcasted_iota(jnp.int32, (rows, cols), 0)
    c = jax.lax.broadcasted_iota(jnp.int32, (rows, cols), 1)
    return jnp.where(fn(r, c), 1.0, 0.0).astype(jnp.float32)


def _mm(a, b):
    return jnp.dot(a, b, preferred_element_type=jnp.float32)


def _conv_bn_relu_pool(xs, t_ref, gamma, beta, cout):
    """One fused stage (3x3 conv + train-BN + ReLU + 2x2 maxpool) on row-layout values.

    xs:    list (len N) of (H, Cin*W) f32 values, lane index = ci*W + w.
    t_ref: (3, Cin*W, Cout*W) packed conv weight (see _pack_conv3x3).
    gamma, beta: (1, Cout) f32 BatchNorm affine parameters.
    Returns: list of (H//2, Cout*(W//2)) pooled activations (same lane convention).
    """
    H = xs[0].shape[0]
    lout = t_ref.shape[2]
    W = lout // cout

    # --- Conv2d(3x3, stride 1, pad 1): per h-offset row-shift selection + matmul.
    #     rsel_dh[h, r] = 1 iff r == h + dh - 1  (rows outside [0,H) -> zero = h padding)
    rsels = [_select_matrix(H, H, lambda h, r, dh=dh: r == h + dh - 1) for dh in range(3)]
    accs = []
    for x in xs:
        acc = jnp.zeros((H, lout), jnp.float32)
        for dh in range(3):
            acc = acc + _mm(rsels[dh], _mm(x, t_ref[dh]))
        accs.append(acc)

    # --- Training-mode BatchNorm folded to one per-lane scale/shift.
    #     (conv bias omitted: it cancels exactly in the mean subtraction)
    count = float(len(xs) * H * W)
    rsum = jnp.zeros((1, lout), jnp.float32)
    rsq = jnp.zeros((1, lout), jnp.float32)
    for acc in accs:
        rsum = rsum + jnp.sum(acc, axis=0, keepdims=True)
        rsq = rsq + jnp.sum(acc * acc, axis=0, keepdims=True)
    gather = _select_matrix(lout, cout, lambda l, c: (l >= c * W) & (l < c * W + W))
    ch_sum = _mm(rsum, gather)                       # (1, Cout) per-channel sums
    ch_sq = _mm(rsq, gather)
    mean = ch_sum / count
    var = ch_sq / count - mean * mean                # one-pass variance, f32
    scale = gamma * jax.lax.rsqrt(var + _BN_EPS)     # (1, Cout)
    shift = beta - mean * scale
    spread = _select_matrix(cout, lout, lambda c, l: (l >= c * W) & (l < c * W + W))
    s_lane = _mm(scale, spread)                      # per-lane scale (1, Cout*W)
    t_lane = _mm(shift, spread)                      # per-lane shift

    # --- 2x2/2 MaxPool via even/odd row- and lane-selection matmuls + elementwise max.
    row_even = _select_matrix(H // 2, H, lambda i, r: r == 2 * i)
    row_odd = _select_matrix(H // 2, H, lambda i, r: r == 2 * i + 1)
    col_even = _select_matrix(lout, lout // 2, lambda l, o: l == 2 * o)
    col_odd = _select_matrix(lout, lout // 2, lambda l, o: l == 2 * o + 1)

    outs = []
    for acc in accs:
        y = jnp.maximum(acc * s_lane + t_lane, 0.0)                 # BN + ReLU
        ph = jnp.maximum(_mm(row_even, y), _mm(row_odd, y))         # pool over h
        pooled = jnp.maximum(_mm(ph, col_even), _mm(ph, col_odd))   # pool over w
        outs.append(pooled)
    return outs


def _cnn_kernel(x_ref, t1_ref, t2_ref, t3_ref, th_ref,
                g1_ref, b1_ref, g2_ref, b2_ref, g3_ref, b3_ref,
                bh_ref, o_ref):
    n_batch = x_ref.shape[0]
    xs = [x_ref[n] for n in range(n_batch)]           # per-image (H, Cin*W) rows
    xs = _conv_bn_relu_pool(xs, t1_ref, g1_ref[...], b1_ref[...], g1_ref.shape[1])
    xs = _conv_bn_relu_pool(xs, t2_ref, g2_ref[...], b2_ref[...], g2_ref.shape[1])
    xs = _conv_bn_relu_pool(xs, t3_ref, g3_ref[...], b3_ref[...], g3_ref.shape[1])
    # conv_reduce head: 1x1 conv + bias (block-diagonal over w, packed in th).
    for n in range(n_batch):
        o_ref[n] = _mm(xs[n], th_ref[...]) + bh_ref[...]


# ----------------------------------------------------------------------------
# one-time weight packing (plain JAX, outside the jitted forward)
# ----------------------------------------------------------------------------
def _pack_conv3x3(w, width):
    """PyTorch OIHW (Cout, Cin, 3, 3) weight -> (3, Cin*W, Cout*W) row-matmul matrices.

    T[dh, ci*W + w_in, co*W + w_out] = w[co, ci, dh, w_in - w_out + 1]
    (zero where the kw offset falls outside [0, 3): built-in w padding).
    """
    cout, cin, kh, kw = w.shape
    wi = jnp.arange(width)[:, None]
    wo = jnp.arange(width)[None, :]
    dj = wi - wo + (kw // 2)
    valid = (dj >= 0) & (dj < kw)
    djc = jnp.clip(dj, 0, kw - 1)
    w_r = jnp.transpose(w, (2, 1, 0, 3)).astype(jnp.float32)     # (kh, Cin, Cout, kw)
    mats = []
    for dh in range(kh):
        blk = w_r[dh][:, :, djc] * valid[None, None]             # (Cin, Cout, W, W)
        mats.append(jnp.transpose(blk, (0, 2, 1, 3)).reshape(cin * width, cout * width))
    return jnp.stack(mats)


def _pack_head(w, b, width):
    """1x1 conv (Cout, Cin, 1, 1) -> block-diag (Cin*W, Cout*W) matrix + (1, Cout*W) bias."""
    mat = jnp.kron(w[:, :, 0, 0].T.astype(jnp.float32), jnp.eye(width, dtype=jnp.float32))
    bias = jnp.repeat(b.astype(jnp.float32), width)[None, :]
    return mat, bias


def prepare_kernel_params(params, spatial):
    widths = [spatial, spatial // 2, spatial // 4]
    kp = {}
    for i, name in enumerate(("conv1", "conv2", "conv3")):
        p = params[name]
        kp[f"t{i + 1}"] = _pack_conv3x3(p["w"], widths[i])
        kp[f"g{i + 1}"] = p["gamma"].astype(jnp.float32)[None, :]
        kp[f"b{i + 1}"] = p["beta"].astype(jnp.float32)[None, :]
    th, bh = _pack_head(params["conv_reduce"]["w"], params["conv_reduce"]["b"], spatial // 8)
    kp["th"], kp["bh"] = th, bh
    return kp


# ----------------------------------------------------------------------------
# forward (one pallas_call; only entry/exit layout glue outside)
# ----------------------------------------------------------------------------
def cnn_forward(kparams, x_nchw):
    N, C, H, W = x_nchw.shape
    # NCHW -> row layout (N, H, C*W), lane index = c*W + w (done once at entry).
    x_rows = jnp.transpose(x_nchw, (0, 2, 1, 3)).reshape(N, H, C * W).astype(jnp.float32)
    w_out = W // 8
    h_out = H // 8
    c_out = kparams["bh"].shape[1] // w_out
    out_rows = pl.pallas_call(
        _cnn_kernel,
        out_shape=jax.ShapeDtypeStruct((N, h_out, c_out * w_out), jnp.float32),
        in_specs=[pl.BlockSpec(memory_space=pltpu.MemorySpace.VMEM)] * 12,
        out_specs=pl.BlockSpec(memory_space=pltpu.MemorySpace.VMEM),
    )(x_rows,
      kparams["t1"], kparams["t2"], kparams["t3"], kparams["th"],
      kparams["g1"], kparams["b1"], kparams["g2"], kparams["b2"],
      kparams["g3"], kparams["b3"], kparams["bh"])
    # row layout (N, h, co*Wout + w) -> NCHW (once at exit).
    return jnp.transpose(out_rows.reshape(N, h_out, c_out, w_out), (0, 2, 1, 3))


# ----------------------------------------------------------------------------
# parameters (PyTorch-style uniform init; BN gamma=1, beta=0) + pure-JAX reference
# ----------------------------------------------------------------------------
def make_params(key, in_channels):
    def conv_init(k, cout, cin, ksz):
        fan_in = cin * ksz * ksz
        bound = 1.0 / (fan_in ** 0.5)
        kw_, kb_ = jax.random.split(k)
        w = jax.random.uniform(kw_, (cout, cin, ksz, ksz), jnp.float32, -bound, bound)
        b = jax.random.uniform(kb_, (cout,), jnp.float32, -bound, bound)
        return w, b

    keys = jax.random.split(key, 4)
    params = {}
    for i, (cin, cout) in enumerate([(in_channels, 8), (8, 16), (16, 32)], start=1):
        w, b = conv_init(keys[i - 1], cout, cin, 3)
        params[f"conv{i}"] = {"w": w, "b": b,
                              "gamma": jnp.ones((cout,), jnp.float32),
                              "beta": jnp.zeros((cout,), jnp.float32)}
    w, b = conv_init(keys[3], 8, 32, 1)
    params["conv_reduce"] = {"w": w, "b": b}
    return params


def reference_forward(params, x):
    def conv(x, w, b, pad):
        y = jax.lax.conv_general_dilated(
            x, w, (1, 1), ((pad, pad), (pad, pad)),
            dimension_numbers=("NCHW", "OIHW", "NCHW"))
        return y + b[None, :, None, None]

    for name in ("conv1", "conv2", "conv3"):
        p = params[name]
        y = conv(x, p["w"], p["b"], 1)
        mean = jnp.mean(y, axis=(0, 2, 3), keepdims=True)
        var = jnp.mean((y - mean) ** 2, axis=(0, 2, 3), keepdims=True)
        y = (y - mean) * jax.lax.rsqrt(var + _BN_EPS)
        y = y * p["gamma"][None, :, None, None] + p["beta"][None, :, None, None]
        y = jnp.maximum(y, 0.0)
        x = jax.lax.reduce_window(y, -jnp.inf, jax.lax.max,
                                  (1, 1, 2, 2), (1, 1, 2, 2), "VALID")
    p = params["conv_reduce"]
    return conv(x, p["w"], p["b"], 0)


if __name__ == "__main__":
    key = jax.random.PRNGKey(0)
    kp_key, kx_key = jax.random.split(key)
    in_channels, batch, spatial = 4, 2, 16

    params = make_params(kp_key, in_channels)
    x = jax.random.normal(kx_key, (batch, in_channels, spatial, spatial), jnp.float32)

    kparams = prepare_kernel_params(params, spatial)   # weight packing: once, outside jit
    out = jax.jit(cnn_forward)(kparams, x)
    out = jax.block_until_ready(out)

    assert out.shape == (batch, 8, spatial // 8, spatial // 8), out.shape
    assert out.dtype == jnp.float32
    assert bool(jnp.all(jnp.isfinite(out)))

    ref = reference_forward(params, x)
    assert jnp.allclose(out, ref, atol=3e-2, rtol=5e-2), float(jnp.max(jnp.abs(out - ref)))
    print("KERNEL_OK")
</pallas_src>

<mosaic_0001>
module attributes {stable_mosaic.version = 11 : i64} {
  func.func @_cnn_kernel(%arg0: memref<2x16x64xf32, #tpu.memory_space<vmem>>, %arg1: memref<3x64x128xf32, #tpu.memory_space<vmem>>, %arg2: memref<3x64x128xf32, #tpu.memory_space<vmem>>, %arg3: memref<3x64x128xf32, #tpu.memory_space<vmem>>, %arg4: memref<64x16xf32, #tpu.memory_space<vmem>>, %arg5: memref<1x8xf32, #tpu.memory_space<vmem>>, %arg6: memref<1x8xf32, #tpu.memory_space<vmem>>, %arg7: memref<1x16xf32, #tpu.memory_space<vmem>>, %arg8: memref<1x16xf32, #tpu.memory_space<vmem>>, %arg9: memref<1x32xf32, #tpu.memory_space<vmem>>, %arg10: memref<1x32xf32, #tpu.memory_space<vmem>>, %arg11: memref<1x16xf32, #tpu.memory_space<vmem>>, %arg12: memref<2x2x16xf32, #tpu.memory_space<vmem>>) attributes {dimension_semantics = [], scalar_prefetch = 0 : i64, scratch_operands = 0 : i64, tpu.core_type = #tpu.core_type<tc>} {
    %c0 = arith.constant 0 : index
    %c0_0 = arith.constant 0 : index
    %c0_1 = arith.constant 0 : index
    %0 = vector.load %arg0[%c0, %c0_0, %c0_1] : memref<2x16x64xf32, #tpu.memory_space<vmem>>, vector<1x16x64xf32>
    %1 = vector.shape_cast %0 : vector<1x16x64xf32> to vector<16x64xf32>
    %c1 = arith.constant 1 : index
    %c0_2 = arith.constant 0 : index
    %c0_3 = arith.constant 0 : index
    %2 = vector.load %arg0[%c1, %c0_2, %c0_3] : memref<2x16x64xf32, #tpu.memory_space<vmem>>, vector<1x16x64xf32>
    %3 = vector.shape_cast %2 : vector<1x16x64xf32> to vector<16x64xf32>
    %c0_4 = arith.constant 0 : index
    %c0_5 = arith.constant 0 : index
    %4 = vector.load %arg5[%c0_4, %c0_5] : memref<1x8xf32, #tpu.memory_space<vmem>>, vector<1x8xf32>
    %c0_6 = arith.constant 0 : index
    %c0_7 = arith.constant 0 : index
    %5 = vector.load %arg6[%c0_6, %c0_7] : memref<1x8xf32, #tpu.memory_space<vmem>>, vector<1x8xf32>
    %6 = tpu.iota {dimensions = array<i32: 0>} : vector<16x16xi32>
    %7 = tpu.iota {dimensions = array<i32: 1>} : vector<16x16xi32>
    %c0_i32 = arith.constant 0 : i32
    %8 = vector.broadcast %c0_i32 : i32 to vector<16x16xi32>
    %9 = arith.addi %6, %8 : vector<16x16xi32>
    %c1_i32 = arith.constant 1 : i32
    %10 = vector.broadcast %c1_i32 : i32 to vector<16x16xi32>
    %11 = arith.subi %9, %10 : vector<16x16xi32>
    %12 = arith.cmpi eq, %7, %11 : vector<16x16xi32>
    %cst = arith.constant 1.000000e+00 : f32
    %cst_8 = arith.constant 0.000000e+00 : f32
    %13 = vector.broadcast %cst : f32 to vector<16x16xf32>
    %14 = vector.broadcast %cst_8 : f32 to vector<16x16xf32>
    %15 = arith.select %12, %13, %14 : vector<16x16xi1>, vector<16x16xf32>
    %16 = tpu.iota {dimensions = array<i32: 0>} : vector<16x16xi32>
    %17 = tpu.iota {dimensions = array<i32: 1>} : vector<16x16xi32>
    %c1_i32_9 = arith.constant 1 : i32
    %18 = vector.broadcast %c1_i32_9 : i32 to vector<16x16xi32>
    %19 = arith.addi %16, %18 : vector<16x16xi32>
    %c1_i32_10 = arith.constant 1 : i32
    %20 = vector.broadcast %c1_i32_10 : i32 to vector<16x16xi32>
    %21 = arith.subi %19, %20 : vector<16x16xi32>
    %22 = arith.cmpi eq, %17, %21 : vector<16x16xi32>
    %cst_11 = arith.constant 1.000000e+00 : f32
    %cst_12 = arith.constant 0.000000e+00 : f32
    %23 = vector.broadcast %cst_11 : f32 to vector<16x16xf32>
    %24 = vector.broadcast %cst_12 : f32 to vector<16x16xf32>
    %25 = arith.select %22, %23, %24 : vector<16x16xi1>, vector<16x16xf32>
    %26 = tpu.iota {dimensions = array<i32: 0>} : vector<16x16xi32>
    %27 = tpu.iota {dimensions = array<i32: 1>} : vector<16x16xi32>
    %c2_i32 = arith.constant 2 : i32
    %28 = vector.broadcast %c2_i32 : i32 to vector<16x16xi32>
    %29 = arith.addi %26, %28 : vector<16x16xi32>
    %c1_i32_13 = arith.constant 1 : i32
    %30 = vector.broadcast %c1_i32_13 : i32 to vector<16x16xi32>
    %31 = arith.subi %29, %30 : vector<16x16xi32>
    %32 = arith.cmpi eq, %27, %31 : vector<16x16xi32>
    %cst_14 = arith.constant 1.000000e+00 : f32
    %cst_15 = arith.constant 0.000000e+00 : f32
    %33 = vector.broadcast %cst_14 : f32 to vector<16x16xf32>
    %34 = vector.broadcast %cst_15 : f32 to vector<16x16xf32>
    %35 = arith.select %32, %33, %34 : vector<16x16xi1>, vector<16x16xf32>
    %cst_16 = arith.constant 0.000000e+00 : f32
    %36 = vector.broadcast %cst_16 : f32 to vector<16x128xf32>
    %c0_17 = arith.constant 0 : index
    %c0_18 = arith.constant 0 : index
    %c0_19 = arith.constant 0 : index
    %37 = vector.load %arg1[%c0_17, %c0_18, %c0_19] : memref<3x64x128xf32, #tpu.memory_space<vmem>>, vector<1x64x128xf32>
    %38 = vector.shape_cast %37 : vector<1x64x128xf32> to vector<64x128xf32>
    %cst_20 = arith.constant dense<0.000000e+00> : vector<16x128xf32>
    %39 = tpu.matmul %1, %38, %cst_20 {dimension_numbers = #tpu.dot_dimension_numbers<[1], [0], [0], [1], [0, 0, 1, 1], [], []>} : vector<16x64xf32>, vector<64x128xf32>, vector<16x128xf32> -> vector<16x128xf32>
    %cst_21 = arith.constant dense<0.000000e+00> : vector<16x128xf32>
    %40 = tpu.matmul %15, %39, %cst_21 {dimension_numbers = #tpu.dot_dimension_numbers<[1], [0], [0], [1], [0, 0, 1, 1], [], []>} : vector<16x16xf32>, vector<16x128xf32>, vector<16x128xf32> -> vector<16x128xf32>
    %41 = arith.addf %36, %40 : vector<16x128xf32>
    %c1_22 = arith.constant 1 : index
    %c0_23 = arith.constant 0 : index
    %c0_24 = arith.constant 0 : index
    %42 = vector.load %arg1[%c1_22, %c0_23, %c0_24] : memref<3x64x128xf32, #tpu.memory_space<vmem>>, vector<1x64x128xf32>
    %43 = vector.shape_cast %42 : vector<1x64x128xf32> to vector<64x128xf32>
    %cst_25 = arith.constant dense<0.000000e+00> : vector<16x128xf32>
    %44 = tpu.matmul %1, %43, %cst_25 {dimension_numbers = #tpu.dot_dimension_numbers<[1], [0], [0], [1], [0, 0, 1, 1], [], []>} : vector<16x64xf32>, vector<64x128xf32>, vector<16x128xf32> -> vector<16x128xf32>
    %cst_26 = arith.constant dense<0.000000e+00> : vector<16x128xf32>
    %45 = tpu.matmul %25, %44, %cst_26 {dimension_numbers = #tpu.dot_dimension_numbers<[1], [0], [0], [1], [0, 0, 1, 1], [], []>} : vector<16x16xf32>, vector<16x128xf32>, vector<16x128xf32> -> vector<16x128xf32>
    %46 = arith.addf %41, %45 : vector<16x128xf32>
    %c2 = arith.constant 2 : index
    %c0_27 = arith.constant 0 : index
    %c0_28 = arith.constant 0 : index
    %47 = vector.load %arg1[%c2, %c0_27, %c0_28] : memref<3x64x128xf32, #tpu.memory_space<vmem>>, vector<1x64x128xf32>
    %48 = vector.shape_cast %47 : vector<1x64x128xf32> to vector<64x128xf32>
    %cst_29 = arith.constant dense<0.000000e+00> : vector<16x128xf32>
    %49 = tpu.matmul %1, %48, %cst_29 {dimension_numbers = #tpu.dot_dimension_numbers<[1], [0], [0], [1], [0, 0, 1, 1], [], []>} : vector<16x64xf32>, vector<64x128xf32>, vector<16x128xf32> -> vector<16x128xf32>
    %cst_30 = arith.constant dense<0.000000e+00> : vector<16x128xf32>
    %50 = tpu.matmul %35, %49, %cst_30 {dimension_numbers = #tpu.dot_dimension_numbers<[1], [0], [0], [1], [0, 0, 1, 1], [], []>} : vector<16x16xf32>, vector<16x128xf32>, vector<16x128xf32> -> vector<16x128xf32>
    %51 = arith.addf %46, %50 : vector<16x128xf32>
    %cst_31 = arith.constant 0.000000e+00 : f32
    %52 = vector.broadcast %cst_31 : f32 to vector<16x128xf32>
    %c0_32 = arith.constant 0 : index
    %c0_33 = arith.constant 0 : index
    %c0_34 = arith.constant 0 : index
    %53 = vector.load %arg1[%c0_32, %c0_33, %c0_34] : memref<3x64x128xf32, #tpu.memory_space<vmem>>, vector<1x64x128xf32>
    %54 = vector.shape_cast %53 : vector<1x64x128xf32> to vector<64x128xf32>
    %cst_35 = arith.constant dense<0.000000e+00> : vector<16x128xf32>
    %55 = tpu.matmul %3, %54, %cst_35 {dimension_numbers = #tpu.dot_dimension_numbers<[1], [0], [0], [1], [0, 0, 1, 1], [], []>} : vector<16x64xf32>, vector<64x128xf32>, vector<16x128xf32> -> vector<16x128xf32>
    %cst_36 = arith.constant dense<0.000000e+00> : vector<16x128xf32>
    %56 = tpu.matmul %15, %55, %cst_36 {dimension_numbers = #tpu.dot_dimension_numbers<[1], [0], [0], [1], [0, 0, 1, 1], [], []>} : vector<16x16xf32>, vector<16x128xf32>, vector<16x128xf32> -> vector<16x128xf32>
    %57 = arith.addf %52, %56 : vector<16x128xf32>
    %c1_37 = arith.constant 1 : index
    %c0_38 = arith.constant 0 : index
    %c0_39 = arith.constant 0 : index
    %58 = vector.load %arg1[%c1_37, %c0_38, %c0_39] : memref<3x64x128xf32, #tpu.memory_space<vmem>>, vector<1x64x128xf32>
    %59 = vector.shape_cast %58 : vector<1x64x128xf32> to vector<64x128xf32>
    %cst_40 = arith.constant dense<0.000000e+00> : vector<16x128xf32>
    %60 = tpu.matmul %3, %59, %cst_40 {dimension_numbers = #tpu.dot_dimension_numbers<[1], [0], [0], [1], [0, 0, 1, 1], [], []>} : vector<16x64xf32>, vector<64x128xf32>, vector<16x128xf32> -> vector<16x128xf32>
    %cst_41 = arith.constant dense<0.000000e+00> : vector<16x128xf32>
    %61 = tpu.matmul %25, %60, %cst_41 {dimension_numbers = #tpu.dot_dimension_numbers<[1], [0], [0], [1], [0, 0, 1, 1], [], []>} : vector<16x16xf32>, vector<16x128xf32>, vector<16x128xf32> -> vector<16x128xf32>
    %62 = arith.addf %57, %61 : vector<16x128xf32>
    %c2_42 = arith.constant 2 : index
    %c0_43 = arith.constant 0 : index
    %c0_44 = arith.constant 0 : index
    %63 = vector.load %arg1[%c2_42, %c0_43, %c0_44] : memref<3x64x128xf32, #tpu.memory_space<vmem>>, vector<1x64x128xf32>
    %64 = vector.shape_cast %63 : vector<1x64x128xf32> to vector<64x128xf32>
    %cst_45 = arith.constant dense<0.000000e+00> : vector<16x128xf32>
    %65 = tpu.matmul %3, %64, %cst_45 {dimension_numbers = #tpu.dot_dimension_numbers<[1], [0], [0], [1], [0, 0, 1, 1], [], []>} : vector<16x64xf32>, vector<64x128xf32>, vector<16x128xf32> -> vector<16x128xf32>
    %cst_46 = arith.constant dense<0.000000e+00> : vector<16x128xf32>
    %66 = tpu.matmul %35, %65, %cst_46 {dimension_numbers = #tpu.dot_dimension_numbers<[1], [0], [0], [1], [0, 0, 1, 1], [], []>} : vector<16x16xf32>, vector<16x128xf32>, vector<16x128xf32> -> vector<16x128xf32>
    %67 = arith.addf %62, %66 : vector<16x128xf32>
    %cst_47 = arith.constant 0.000000e+00 : f32
    %68 = vector.broadcast %cst_47 : f32 to vector<1x128xf32>
    %cst_48 = arith.constant 0.000000e+00 : f32
    %69 = vector.broadcast %cst_48 : f32 to vector<1x128xf32>
    %cst_49 = arith.constant dense<0.000000e+00> : vector<128xf32>
    %70 = vector.multi_reduction <add>, %51, %cst_49 [0] : vector<16x128xf32> to vector<128xf32>
    %71 = vector.shape_cast %70 : vector<128xf32> to vector<1x128xf32>
    %72 = arith.addf %68, %71 : vector<1x128xf32>
    %73 = arith.mulf %51, %51 : vector<16x128xf32>
    %cst_50 = arith.constant dense<0.000000e+00> : vector<128xf32>
    %74 = vector.multi_reduction <add>, %73, %cst_50 [0] : vector<16x128xf32> to vector<128xf32>
    %75 = vector.shape_cast %74 : vector<128xf32> to vector<1x128xf32>
    %76 = arith.addf %69, %75 : vector<1x128xf32>
    %cst_51 = arith.constant dense<0.000000e+00> : vector<128xf32>
    %77 = vector.multi_reduction <add>, %67, %cst_51 [0] : vector<16x128xf32> to vector<128xf32>
    %78 = vector.shape_cast %77 : vector<128xf32> to vector<1x128xf32>
    %79 = arith.addf %72, %78 : vector<1x128xf32>
    %80 = arith.mulf %67, %67 : vector<16x128xf32>
    %cst_52 = arith.constant dense<0.000000e+00> : vector<128xf32>
    %81 = vector.multi_reduction <add>, %80, %cst_52 [0] : vector<16x128xf32> to vector<128xf32>
    %82 = vector.shape_cast %81 : vector<128xf32> to vector<1x128xf32>
    %83 = arith.addf %76, %82 : vector<1x128xf32>
    %84 = tpu.iota {dimensions = array<i32: 0>} : vector<128x8xi32>
    %85 = tpu.iota {dimensions = array<i32: 1>} : vector<128x8xi32>
    %c16_i32 = arith.constant 16 : i32
    %86 = vector.broadcast %c16_i32 : i32 to vector<128x8xi32>
    %87 = arith.muli %85, %86 : vector<128x8xi32>
    %88 = arith.cmpi sge, %84, %87 : vector<128x8xi32>
    %c16_i32_53 = arith.constant 16 : i32
    %89 = vector.broadcast %c16_i32_53 : i32 to vector<128x8xi32>
    %90 = arith.muli %85, %89 : vector<128x8xi32>
    %c16_i32_54 = arith.constant 16 : i32
    %91 = vector.broadcast %c16_i32_54 : i32 to vector<128x8xi32>
    %92 = arith.addi %90, %91 : vector<128x8xi32>
    %93 = arith.cmpi slt, %84, %92 : vector<128x8xi32>
    %94 = arith.andi %88, %93 : vector<128x8xi1>
    %cst_55 = arith.constant 1.000000e+00 : f32
    %cst_56 = arith.constant 0.000000e+00 : f32
    %95 = vector.broadcast %cst_55 : f32 to vector<128x8xf32>
    %96 = vector.broadcast %cst_56 : f32 to vector<128x8xf32>
    %97 = arith.select %94, %95, %96 : vector<128x8xi1>, vector<128x8xf32>
    %cst_57 = arith.constant dense<0.000000e+00> : vector<1x8xf32>
    %98 = tpu.matmul %79, %97, %cst_57 {dimension_numbers = #tpu.dot_dimension_numbers<[1], [0], [0], [1], [0, 0, 1, 1], [], []>} : vector<1x128xf32>, vector<128x8xf32>, vector<1x8xf32> -> vector<1x8xf32>
    %cst_58 = arith.constant dense<0.000000e+00> : vector<1x8xf32>
    %99 = tpu.matmul %83, %97, %cst_58 {dimension_numbers = #tpu.dot_dimension_numbers<[1], [0], [0], [1], [0, 0, 1, 1], [], []>} : vector<1x128xf32>, vector<128x8xf32>, vector<1x8xf32> -> vector<1x8xf32>
    %cst_59 = arith.constant 5.120000e+02 : f32
    %100 = vector.broadcast %cst_59 : f32 to vector<1x8xf32>
    %101 = arith.divf %98, %100 : vector<1x8xf32>
    %cst_60 = arith.constant 5.120000e+02 : f32
    %102 = vector.broadcast %cst_60 : f32 to vector<1x8xf32>
    %103 = arith.divf %99, %102 : vector<1x8xf32>
    %104 = arith.mulf %101, %101 : vector<1x8xf32>
    %105 = arith.subf %103, %104 : vector<1x8xf32>
    %cst_61 = arith.constant 9.99999974E-6 : f32
    %106 = vector.broadcast %cst_61 : f32 to vector<1x8xf32>
    %107 = arith.addf %105, %106 : vector<1x8xf32>
    %108 = math.rsqrt %107 : vector<1x8xf32>
    %109 = arith.mulf %4, %108 : vector<1x8xf32>
    %110 = arith.mulf %101, %109 : vector<1x8xf32>
    %111 = arith.subf %5, %110 : vector<1x8xf32>
    %112 = tpu.iota {dimensions = array<i32: 0>} : vector<8x128xi32>
    %113 = tpu.iota {dimensions = array<i32: 1>} : vector<8x128xi32>
    %c16_i32_62 = arith.constant 16 : i32
    %114 = vector.broadcast %c16_i32_62 : i32 to vector<8x128xi32>
    %115 = arith.muli %112, %114 : vector<8x128xi32>
    %116 = arith.cmpi sge, %113, %115 : vector<8x128xi32>
    %c16_i32_63 = arith.constant 16 : i32
    %117 = vector.broadcast %c16_i32_63 : i32 to vector<8x128xi32>
    %118 = arith.muli %112, %117 : vector<8x128xi32>
    %c16_i32_64 = arith.constant 16 : i32
    %119 = vector.broadcast %c16_i32_64 : i32 to vector<8x128xi32>
    %120 = arith.addi %118, %119 : vector<8x128xi32>
    %121 = arith.cmpi slt, %113, %120 : vector<8x128xi32>
    %122 = arith.andi %116, %121 : vector<8x128xi1>
    %cst_65 = arith.constant 1.000000e+00 : f32
    %cst_66 = arith.constant 0.000000e+00 : f32
    %123 = vector.broadcast %cst_65 : f32 to vector<8x128xf32>
    %124 = vector.broadcast %cst_66 : f32 to vector<8x128xf32>
    %125 = arith.select %122, %123, %124 : vector<8x128xi1>, vector<8x128xf32>
    %cst_67 = arith.constant dense<0.000000e+00> : vector<1x128xf32>
    %126 = tpu.matmul %109, %125, %cst_67 {dimension_numbers = #tpu.dot_dimension_numbers<[1], [0], [0], [1], [0, 0, 1, 1], [], []>} : vector<1x8xf32>, vector<8x128xf32>, vector<1x128xf32> -> vector<1x128xf32>
    %cst_68 = arith.constant dense<0.000000e+00> : vector<1x128xf32>
    %127 = tpu.matmul %111, %125, %cst_68 {dimension_numbers = #tpu.dot_dimension_numbers<[1], [0], [0], [1], [0, 0, 1, 1], [], []>} : vector<1x8xf32>, vector<8x128xf32>, vector<1x128xf32> -> vector<1x128xf32>
    %128 = tpu.iota {dimensions = array<i32: 0>} : vector<8x16xi32>
    %129 = tpu.iota {dimensions = array<i32: 1>} : vector<8x16xi32>
    %c2_i32_69 = arith.constant 2 : i32
    %130 = vector.broadcast %c2_i32_69 : i32 to vector<8x16xi32>
    %131 = arith.muli %130, %128 : vector<8x16xi32>
    %132 = arith.cmpi eq, %129, %131 : vector<8x16xi32>
    %cst_70 = arith.constant 1.000000e+00 : f32
    %cst_71 = arith.constant 0.000000e+00 : f32
    %133 = vector.broadcast %cst_70 : f32 to vector<8x16xf32>
    %134 = vector.broadcast %cst_71 : f32 to vector<8x16xf32>
    %135 = arith.select %132, %133, %134 : vector<8x16xi1>, vector<8x16xf32>
    %136 = tpu.iota {dimensions = array<i32: 0>} : vector<8x16xi32>
    %137 = tpu.iota {dimensions = array<i32: 1>} : vector<8x16xi32>
    %c2_i32_72 = arith.constant 2 : i32
    %138 = vector.broadcast %c2_i32_72 : i32 to vector<8x16xi32>
    %139 = arith.muli %138, %136 : vector<8x16xi32>
    %c1_i32_73 = arith.constant 1 : i32
    %140 = vector.broadcast %c1_i32_73 : i32 to vector<8x16xi32>
    %141 = arith.addi %139, %140 : vector<8x16xi32>
    %142 = arith.cmpi eq, %137, %141 : vector<8x16xi32>
    %cst_74 = arith.constant 1.000000e+00 : f32
    %cst_75 = arith.constant 0.000000e+00 : f32
    %143 = vector.broadcast %cst_74 : f32 to vector<8x16xf32>
    %144 = vector.broadcast %cst_75 : f32 to vector<8x16xf32>
    %145 = arith.select %142, %143, %144 : vector<8x16xi1>, vector<8x16xf32>
    %146 = tpu.iota {dimensions = array<i32: 0>} : vector<128x64xi32>
    %147 = tpu.iota {dimensions = array<i32: 1>} : vector<128x64xi32>
    %c2_i32_76 = arith.constant 2 : i32
    %148 = vector.broadcast %c2_i32_76 : i32 to vector<128x64xi32>
    %149 = arith.muli %148, %147 : vector<128x64xi32>
    %150 = arith.cmpi eq, %146, %149 : vector<128x64xi32>
    %cst_77 = arith.constant 1.000000e+00 : f32
    %cst_78 = arith.constant 0.000000e+00 : f32
    %151 = vector.broadcast %cst_77 : f32 to vector<128x64xf32>
    %152 = vector.broadcast %cst_78 : f32 to vector<128x64xf32>
    %153 = arith.select %150, %151, %152 : vector<128x64xi1>, vector<128x64xf32>
    %154 = tpu.iota {dimensions = array<i32: 0>} : vector<128x64xi32>
    %155 = tpu.iota {dimensions = array<i32: 1>} : vector<128x64xi32>
    %c2_i32_79 = arith.constant 2 : i32
    %156 = vector.broadcast %c2_i32_79 : i32 to vector<128x64xi32>
    %157 = arith.muli %156, %155 : vector<128x64xi32>
    %c1_i32_80 = arith.constant 1 : i32
    %158 = vector.broadcast %c1_i32_80 : i32 to vector<128x64xi32>
    %159 = arith.addi %157, %158 : vector<128x64xi32>
    %160 = arith.cmpi eq, %154, %159 : vector<128x64xi32>
    %cst_81 = arith.constant 1.000000e+00 : f32
    %cst_82 = arith.constant 0.000000e+00 : f32
    %161 = vector.broadcast %cst_81 : f32 to vector<128x64xf32>
    %162 = vector.broadcast %cst_82 : f32 to vector<128x64xf32>
    %163 = arith.select %160, %161, %162 : vector<128x64xi1>, vector<128x64xf32>
    %164 = vector.broadcast %126 : vector<1x128xf32> to vector<16x128xf32>
    %165 = arith.mulf %51, %164 : vector<16x128xf32>
    %166 = vector.broadcast %127 : vector<1x128xf32> to vector<16x128xf32>
    %167 = arith.addf %165, %166 : vector<16x128xf32>
    %cst_83 = arith.constant 0.000000e+00 : f32
    %168 = vector.broadcast %cst_83 : f32 to vector<16x128xf32>
    %169 = arith.maximumf %167, %168 : vector<16x128xf32>
    %cst_84 = arith.constant dense<0.000000e+00> : vector<8x128xf32>
    %170 = tpu.matmul %135, %169, %cst_84 {dimension_numbers = #tpu.dot_dimension_numbers<[1], [0], [0], [1], [0, 0, 1, 1], [], []>} : vector<8x16xf32>, vector<16x128xf32>, vector<8x128xf32> -> vector<8x128xf32>
    %cst_85 = arith.constant dense<0.000000e+00> : vector<8x128xf32>
    %171 = tpu.matmul %145, %169, %cst_85 {dimension_numbers = #tpu.dot_dimension_numbers<[1], [0], [0], [1], [0, 0, 1, 1], [], []>} : vector<8x16xf32>, vector<16x128xf32>, vector<8x128xf32> -> vector<8x128xf32>
    %172 = arith.maximumf %170, %171 : vector<8x128xf32>
    %cst_86 = arith.constant dense<0.000000e+00> : vector<8x64xf32>
    %173 = tpu.matmul %172, %153, %cst_86 {dimension_numbers = #tpu.dot_dimension_numbers<[1], [0], [0], [1], [0, 0, 1, 1], [], []>} : vector<8x128xf32>, vector<128x64xf32>, vector<8x64xf32> -> vector<8x64xf32>
    %cst_87 = arith.constant dense<0.000000e+00> : vector<8x64xf32>
    %174 = tpu.matmul %172, %163, %cst_87 {dimension_numbers = #tpu.dot_dimension_numbers<[1], [0], [0], [1], [0, 0, 1, 1], [], []>} : vector<8x128xf32>, vector<128x64xf32>, vector<8x64xf32> -> vector<8x64xf32>
    %175 = arith.maximumf %173, %174 : vector<8x64xf32>
    %176 = vector.broadcast %126 : vector<1x128xf32> to vector<16x128xf32>
    %177 = arith.mulf %67, %176 : vector<16x128xf32>
    %178 = vector.broadcast %127 : vector<1x128xf32> to vector<16x128xf32>
    %179 = arith.addf %177, %178 : vector<16x128xf32>
    %cst_88 = arith.constant 0.000000e+00 : f32
    %180 = vector.broadcast %cst_88 : f32 to vector<16x128xf32>
    %181 = arith.maximumf %179, %180 : vector<16x128xf32>
    %cst_89 = arith.constant dense<0.000000e+00> : vector<8x128xf32>
    %182 = tpu.matmul %135, %181, %cst_89 {dimension_numbers = #tpu.dot_dimension_numbers<[1], [0], [0], [1], [0, 0, 1, 1], [], []>} : vector<8x16xf32>, vector<16x128xf32>, vector<8x128xf32> -> vector<8x128xf32>
    %cst_90 = arith.constant dense<0.000000e+00> : vector<8x128xf32>
    %183 = tpu.matmul %145, %181, %cst_90 {dimension_numbers = #tpu.dot_dimension_numbers<[1], [0], [0], [1], [0, 0, 1, 1], [], []>} : vector<8x16xf32>, vector<16x128xf32>, vector<8x128xf32> -> vector<8x128xf32>
    %184 = arith.maximumf %182, %183 : vector<8x128xf32>
    %cst_91 = arith.constant dense<0.000000e+00> : vector<8x64xf32>
    %185 = tpu.matmul %184, %153, %cst_91 {dimension_numbers = #tpu.dot_dimension_numbers<[1], [0], [0], [1], [0, 0, 1, 1], [], []>} : vector<8x128xf32>, vector<128x64xf32>, vector<8x64xf32> -> vector<8x64xf32>
    %cst_92 = arith.constant dense<0.000000e+00> : vector<8x64xf32>
    %186 = tpu.matmul %184, %163, %cst_92 {dimension_numbers = #tpu.dot_dimension_numbers<[1], [0], [0], [1], [0, 0, 1, 1], [], []>} : vector<8x128xf32>, vector<128x64xf32>, vector<8x64xf32> -> vector<8x64xf32>
    %187 = arith.maximumf %185, %186 : vector<8x64xf32>
    %c0_93 = arith.constant 0 : index
    %c0_94 = arith.constant 0 : index
    %188 = vector.load %arg7[%c0_93, %c0_94] : memref<1x16xf32, #tpu.memory_space<vmem>>, vector<1x16xf32>
    %c0_95 = arith.constant 0 : index
    %c0_96 = arith.constant 0 : index
    %189 = vector.load %arg8[%c0_95, %c0_96] : memref<1x16xf32, #tpu.memory_space<vmem>>, vector<1x16xf32>
    %190 = tpu.iota {dimensions = array<i32: 0>} : vector<8x8xi32>
    %191 = tpu.iota {dimensions = array<i32: 1>} : vector<8x8xi32>
    %c0_i32_97 = arith.constant 0 : i32
    %192 = vector.broadcast %c0_i32_97 : i32 to vector<8x8xi32>
    %193 = arith.addi %190, %192 : vector<8x8xi32>
    %c1_i32_98 = arith.constant 1 : i32
    %194 = vector.broadcast %c1_i32_98 : i32 to vector<8x8xi32>
    %195 = arith.subi %193, %194 : vector<8x8xi32>
    %196 = arith.cmpi eq, %191, %195 : vector<8x8xi32>
    %cst_99 = arith.constant 1.000000e+00 : f32
    %cst_100 = arith.constant 0.000000e+00 : f32
    %197 = vector.broadcast %cst_99 : f32 to vector<8x8xf32>
    %198 = vector.broadcast %cst_100 : f32 to vector<8x8xf32>
    %199 = arith.select %196, %197, %198 : vector<8x8xi1>, vector<8x8xf32>
    %200 = tpu.iota {dimensions = array<i32: 0>} : vector<8x8xi32>
    %201 = tpu.iota {dimensions = array<i32: 1>} : vector<8x8xi32>
    %c1_i32_101 = arith.constant 1 : i32
    %202 = vector.broadcast %c1_i32_101 : i32 to vector<8x8xi32>
    %203 = arith.addi %200, %202 : vector<8x8xi32>
    %c1_i32_102 = arith.constant 1 : i32
    %204 = vector.broadcast %c1_i32_102 : i32 to vector<8x8xi32>
    %205 = arith.subi %203, %204 : vector<8x8xi32>
    %206 = arith.cmpi eq, %201, %205 : vector<8x8xi32>
    %cst_103 = arith.constant 1.000000e+00 : f32
    %cst_104 = arith.constant 0.000000e+00 : f32
    %207 = vector.broadcast %cst_103 : f32 to vector<8x8xf32>
    %208 = vector.broadcast %cst_104 : f32 to vector<8x8xf32>
    %209 = arith.select %206, %207, %208 : vector<8x8xi1>, vector<8x8xf32>
    %210 = tpu.iota {dimensions = array<i32: 0>} : vector<8x8xi32>
    %211 = tpu.iota {dimensions = array<i32: 1>} : vector<8x8xi32>
    %c2_i32_105 = arith.constant 2 : i32
    %212 = vector.broadcast %c2_i32_105 : i32 to vector<8x8xi32>
    %213 = arith.addi %210, %212 : vector<8x8xi32>
    %c1_i32_106 = arith.constant 1 : i32
    %214 = vector.broadcast %c1_i32_106 : i32 to vector<8x8xi32>
    %215 = arith.subi %213, %214 : vector<8x8xi32>
    %216 = arith.cmpi eq, %211, %215 : vector<8x8xi32>
    %cst_107 = arith.constant 1.000000e+00 : f32
    %cst_108 = arith.constant 0.000000e+00 : f32
    %217 = vector.broadcast %cst_107 : f32 to vector<8x8xf32>
    %218 = vector.broadcast %cst_108 : f32 to vector<8x8xf32>
    %219 = arith.select %216, %217, %218 : vector<8x8xi1>, vector<8x8xf32>
    %cst_109 = arith.constant 0.000000e+00 : f32
    %220 = vector.broadcast %cst_109 : f32 to vector<8x128xf32>
    %c0_110 = arith.constant 0 : index
    %c0_111 = arith.constant 0 : index
    %c0_112 = arith.constant 0 : index
    %221 = vector.load %arg2[%c0_110, %c0_111, %c0_112] : memref<3x64x128xf32, #tpu.memory_space<vmem>>, vector<1x64x128xf32>
    %222 = vector.shape_cast %221 : vector<1x64x128xf32> to vector<64x128xf32>
    %cst_113 = arith.constant dense<0.000000e+00> : vector<8x128xf32>
    %223 = tpu.matmul %175, %222, %cst_113 {dimension_numbers = #tpu.dot_dimension_numbers<[1], [0], [0], [1], [0, 0, 1, 1], [], []>} : vector<8x64xf32>, vector<64x128xf32>, vector<8x128xf32> -> vector<8x128xf32>
    %cst_114 = arith.constant dense<0.000000e+00> : vector<8x128xf32>
    %224 = tpu.matmul %199, %223, %cst_114 {dimension_numbers = #tpu.dot_dimension_numbers<[1], [0], [0], [1], [0, 0, 1, 1], [], []>} : vector<8x8xf32>, vector<8x128xf32>, vector<8x128xf32> -> vector<8x128xf32>
    %225 = arith.addf %220, %224 : vector<8x128xf32>
    %c1_115 = arith.constant 1 : index
    %c0_116 = arith.constant 0 : index
    %c0_117 = arith.constant 0 : index
    %226 = vector.load %arg2[%c1_115, %c0_116, %c0_117] : memref<3x64x128xf32, #tpu.memory_space<vmem>>, vector<1x64x128xf32>
    %227 = vector.shape_cast %226 : vector<1x64x128xf32> to vector<64x128xf32>
    %cst_118 = arith.constant dense<0.000000e+00> : vector<8x128xf32>
    %228 = tpu.matmul %175, %227, %cst_118 {dimension_numbers = #tpu.dot_dimension_numbers<[1], [0], [0], [1], [0, 0, 1, 1], [], []>} : vector<8x64xf32>, vector<64x128xf32>, vector<8x128xf32> -> vector<8x128xf32>
    %cst_119 = arith.constant dense<0.000000e+00> : vector<8x128xf32>
    %229 = tpu.matmul %209, %228, %cst_119 {dimension_numbers = #tpu.dot_dimension_numbers<[1], [0], [0], [1], [0, 0, 1, 1], [], []>} : vector<8x8xf32>, vector<8x128xf32>, vector<8x128xf32> -> vector<8x128xf32>
    %230 = arith.addf %225, %229 : vector<8x128xf32>
    %c2_120 = arith.constant 2 : index
    %c0_121 = arith.constant 0 : index
    %c0_122 = arith.constant 0 : index
    %231 = vector.load %arg2[%c2_120, %c0_121, %c0_122] : memref<3x64x128xf32, #tpu.memory_space<vmem>>, vector<1x64x128xf32>
    %232 = vector.shape_cast %231 : vector<1x64x128xf32> to vector<64x128xf32>
    %cst_123 = arith.constant dense<0.000000e+00> : vector<8x128xf32>
    %233 = tpu.matmul %175, %232, %cst_123 {dimension_numbers = #tpu.dot_dimension_numbers<[1], [0], [0], [1], [0, 0, 1, 1], [], []>} : vector<8x64xf32>, vector<64x128xf32>, vector<8x128xf32> -> vector<8x128xf32>
    %cst_124 = arith.constant dense<0.000000e+00> : vector<8x128xf32>
    %234 = tpu.matmul %219, %233, %cst_124 {dimension_numbers = #tpu.dot_dimension_numbers<[1], [0], [0], [1], [0, 0, 1, 1], [], []>} : vector<8x8xf32>, vector<8x128xf32>, vector<8x128xf32> -> vector<8x128xf32>
    %235 = arith.addf %230, %234 : vector<8x128xf32>
    %cst_125 = arith.constant 0.000000e+00 : f32
    %236 = vector.broadcast %cst_125 : f32 to vector<8x128xf32>
    %c0_126 = arith.constant 0 : index
    %c0_127 = arith.constant 0 : index
    %c0_128 = arith.constant 0 : index
    %237 = vector.load %arg2[%c0_126, %c0_127, %c0_128] : memref<3x64x128xf32, #tpu.memory_space<vmem>>, vector<1x64x128xf32>
    %238 = vector.shape_cast %237 : vector<1x64x128xf32> to vector<64x128xf32>
    %cst_129 = arith.constant dense<0.000000e+00> : vector<8x128xf32>
    %239 = tpu.matmul %187, %238, %cst_129 {dimension_numbers = #tpu.dot_dimension_numbers<[1], [0], [0], [1], [0, 0, 1, 1], [], []>} : vector<8x64xf32>, vector<64x128xf32>, vector<8x128xf32> -> vector<8x128xf32>
    %cst_130 = arith.constant dense<0.000000e+00> : vector<8x128xf32>
    %240 = tpu.matmul %199, %239, %cst_130 {dimension_numbers = #tpu.dot_dimension_numbers<[1], [0], [0], [1], [0, 0, 1, 1], [], []>} : vector<8x8xf32>, vector<8x128xf32>, vector<8x128xf32> -> vector<8x128xf32>
    %241 = arith.addf %236, %240 : vector<8x128xf32>
    %c1_131 = arith.constant 1 : index
    %c0_132 = arith.constant 0 : index
    %c0_133 = arith.constant 0 : index
    %242 = vector.load %arg2[%c1_131, %c0_132, %c0_133] : memref<3x64x128xf32, #tpu.memory_space<vmem>>, vector<1x64x128xf32>
    %243 = vector.shape_cast %242 : vector<1x64x128xf32> to vector<64x128xf32>
    %cst_134 = arith.constant dense<0.000000e+00> : vector<8x128xf32>
    %244 = tpu.matmul %187, %243, %cst_134 {dimension_numbers = #tpu.dot_dimension_numbers<[1], [0], [0], [1], [0, 0, 1, 1], [], []>} : vector<8x64xf32>, vector<64x128xf32>, vector<8x128xf32> -> vector<8x128xf32>
    %cst_135 = arith.constant dense<0.000000e+00> : vector<8x128xf32>
    %245 = tpu.matmul %209, %244, %cst_135 {dimension_numbers = #tpu.dot_dimension_numbers<[1], [0], [0], [1], [0, 0, 1, 1], [], []>} : vector<8x8xf32>, vector<8x128xf32>, vector<8x128xf32> -> vector<8x128xf32>
    %246 = arith.addf %241, %245 : vector<8x128xf32>
    %c2_136 = arith.constant 2 : index
    %c0_137 = arith.constant 0 : index
    %c0_138 = arith.constant 0 : index
    %247 = vector.load %arg2[%c2_136, %c0_137, %c0_138] : memref<3x64x128xf32, #tpu.memory_space<vmem>>, vector<1x64x128xf32>
    %248 = vector.shape_cast %247 : vector<1x64x128xf32> to vector<64x128xf32>
    %cst_139 = arith.constant dense<0.000000e+00> : vector<8x128xf32>
    %249 = tpu.matmul %187, %248, %cst_139 {dimension_numbers = #tpu.dot_dimension_numbers<[1], [0], [0], [1], [0, 0, 1, 1], [], []>} : vector<8x64xf32>, vector<64x128xf32>, vector<8x128xf32> -> vector<8x128xf32>
    %cst_140 = arith.constant dense<0.000000e+00> : vector<8x128xf32>
    %250 = tpu.matmul %219, %249, %cst_140 {dimension_numbers = #tpu.dot_dimension_numbers<[1], [0], [0], [1], [0, 0, 1, 1], [], []>} : vector<8x8xf32>, vector<8x128xf32>, vector<8x128xf32> -> vector<8x128xf32>
    %251 = arith.addf %246, %250 : vector<8x128xf32>
    %cst_141 = arith.constant 0.000000e+00 : f32
    %252 = vector.broadcast %cst_141 : f32 to vector<1x128xf32>
    %cst_142 = arith.constant 0.000000e+00 : f32
    %253 = vector.broadcast %cst_142 : f32 to vector<1x128xf32>
    %cst_143 = arith.constant dense<0.000000e+00> : vector<128xf32>
    %254 = vector.multi_reduction <add>, %235, %cst_143 [0] : vector<8x128xf32> to vector<128xf32>
    %255 = vector.shape_cast %254 : vector<128xf32> to vector<1x128xf32>
    %256 = arith.addf %252, %255 : vector<1x128xf32>
    %257 = arith.mulf %235, %235 : vector<8x128xf32>
    %cst_144 = arith.constant dense<0.000000e+00> : vector<128xf32>
    %258 = vector.multi_reduction <add>, %257, %cst_144 [0] : vector<8x128xf32> to vector<128xf32>
    %259 = vector.shape_cast %258 : vector<128xf32> to vector<1x128xf32>
    %260 = arith.addf %253, %259 : vector<1x128xf32>
    %cst_145 = arith.constant dense<0.000000e+00> : vector<128xf32>
    %261 = vector.multi_reduction <add>, %251, %cst_145 [0] : vector<8x128xf32> to vector<128xf32>
    %262 = vector.shape_cast %261 : vector<128xf32> to vector<1x128xf32>
    %263 = arith.addf %256, %262 : vector<1x128xf32>
    %264 = arith.mulf %251, %251 : vector<8x128xf32>
    %cst_146 = arith.constant dense<0.000000e+00> : vector<128xf32>
    %265 = vector.multi_reduction <add>, %264, %cst_146 [0] : vector<8x128xf32> to vector<128xf32>
    %266 = vector.shape_cast %265 : vector<128xf32> to vector<1x128xf32>
    %267 = arith.addf %260, %266 : vector<1x128xf32>
    %268 = tpu.iota {dimensions = array<i32: 0>} : vector<128x16xi32>
    %269 = tpu.iota {dimensions = array<i32: 1>} : vector<128x16xi32>
    %c8_i32 = arith.constant 8 : i32
    %270 = vector.broadcast %c8_i32 : i32 to vector<128x16xi32>
    %271 = arith.muli %269, %270 : vector<128x16xi32>
    %272 = arith.cmpi sge, %268, %271 : vector<128x16xi32>
    %c8_i32_147 = arith.constant 8 : i32
    %273 = vector.broadcast %c8_i32_147 : i32 to vector<128x16xi32>
    %274 = arith.muli %269, %273 : vector<128x16xi32>
    %c8_i32_148 = arith.constant 8 : i32
    %275 = vector.broadcast %c8_i32_148 : i32 to vector<128x16xi32>
    %276 = arith.addi %274, %275 : vector<128x16xi32>
    %277 = arith.cmpi slt, %268, %276 : vector<128x16xi32>
    %278 = arith.andi %272, %277 : vector<128x16xi1>
    %cst_149 = arith.constant 1.000000e+00 : f32
    %cst_150 = arith.constant 0.000000e+00 : f32
    %279 = vector.broadcast %cst_149 : f32 to vector<128x16xf32>
    %280 = vector.broadcast %cst_150 : f32 to vector<128x16xf32>
    %281 = arith.select %278, %279, %280 : vector<128x16xi1>, vector<128x16xf32>
    %cst_151 = arith.constant dense<0.000000e+00> : vector<1x16xf32>
    %282 = tpu.matmul %263, %281, %cst_151 {dimension_numbers = #tpu.dot_dimension_numbers<[1], [0], [0], [1], [0, 0, 1, 1], [], []>} : vector<1x128xf32>, vector<128x16xf32>, vector<1x16xf32> -> vector<1x16xf32>
    %cst_152 = arith.constant dense<0.000000e+00> : vector<1x16xf32>
    %283 = tpu.matmul %267, %281, %cst_152 {dimension_numbers = #tpu.dot_dimension_numbers<[1], [0], [0], [1], [0, 0, 1, 1], [], []>} : vector<1x128xf32>, vector<128x16xf32>, vector<1x16xf32> -> vector<1x16xf32>
    %cst_153 = arith.constant 1.280000e+02 : f32
    %284 = vector.broadcast %cst_153 : f32 to vector<1x16xf32>
    %285 = arith.divf %282, %284 : vector<1x16xf32>
    %cst_154 = arith.constant 1.280000e+02 : f32
    %286 = vector.broadcast %cst_154 : f32 to vector<1x16xf32>
    %287 = arith.divf %283, %286 : vector<1x16xf32>
    %288 = arith.mulf %285, %285 : vector<1x16xf32>
    %289 = arith.subf %287, %288 : vector<1x16xf32>
    %cst_155 = arith.constant 9.99999974E-6 : f32
    %290 = vector.broadcast %cst_155 : f32 to vector<1x16xf32>
    %291 = arith.addf %289, %290 : vector<1x16xf32>
    %292 = math.rsqrt %291 : vector<1x16xf32>
    %293 = arith.mulf %188, %292 : vector<1x16xf32>
    %294 = arith.mulf %285, %293 : vector<1x16xf32>
    %295 = arith.subf %189, %294 : vector<1x16xf32>
    %296 = tpu.iota {dimensions = array<i32: 0>} : vector<16x128xi32>
    %297 = tpu.iota {dimensions = array<i32: 1>} : vector<16x128xi32>
    %c8_i32_156 = arith.constant 8 : i32
    %298 = vector.broadcast %c8_i32_156 : i32 to vector<16x128xi32>
    %299 = arith.muli %296, %298 : vector<16x128xi32>
    %300 = arith.cmpi sge, %297, %299 : vector<16x128xi32>
    %c8_i32_157 = arith.constant 8 : i32
    %301 = vector.broadcast %c8_i32_157 : i32 to vector<16x128xi32>
    %302 = arith.muli %296, %301 : vector<16x128xi32>
    %c8_i32_158 = arith.constant 8 : i32
    %303 = vector.broadcast %c8_i32_158 : i32 to vector<16x128xi32>
    %304 = arith.addi %302, %303 : vector<16x128xi32>
    %305 = arith.cmpi slt, %297, %304 : vector<16x128xi32>
    %306 = arith.andi %300, %305 : vector<16x128xi1>
    %cst_159 = arith.constant 1.000000e+00 : f32
    %cst_160 = arith.constant 0.000000e+00 : f32
    %307 = vector.broadcast %cst_159 : f32 to vector<16x128xf32>
    %308 = vector.broadcast %cst_160 : f32 to vector<16x128xf32>
    %309 = arith.select %306, %307, %308 : vector<16x128xi1>, vector<16x128xf32>
    %cst_161 = arith.constant dense<0.000000e+00> : vector<1x128xf32>
    %310 = tpu.matmul %293, %309, %cst_161 {dimension_numbers = #tpu.dot_dimension_numbers<[1], [0], [0], [1], [0, 0, 1, 1], [], []>} : vector<1x16xf32>, vector<16x128xf32>, vector<1x128xf32> -> vector<1x128xf32>
    %cst_162 = arith.constant dense<0.000000e+00> : vector<1x128xf32>
    %311 = tpu.matmul %295, %309, %cst_162 {dimension_numbers = #tpu.dot_dimension_numbers<[1], [0], [0], [1], [0, 0, 1, 1], [], []>} : vector<1x16xf32>, vector<16x128xf32>, vector<1x128xf32> -> vector<1x128xf32>
    %312 = tpu.iota {dimensions = array<i32: 0>} : vector<4x8xi32>
    %313 = tpu.iota {dimensions = array<i32: 1>} : vector<4x8xi32>
    %c2_i32_163 = arith.constant 2 : i32
    %314 = vector.broadcast %c2_i32_163 : i32 to vector<4x8xi32>
    %315 = arith.muli %314, %312 : vector<4x8xi32>
    %316 = arith.cmpi eq, %313, %315 : vector<4x8xi32>
    %cst_164 = arith.constant 1.000000e+00 : f32
    %cst_165 = arith.constant 0.000000e+00 : f32
    %317 = vector.broadcast %cst_164 : f32 to vector<4x8xf32>
    %318 = vector.broadcast %cst_165 : f32 to vector<4x8xf32>
    %319 = arith.select %316, %317, %318 : vector<4x8xi1>, vector<4x8xf32>
    %320 = tpu.iota {dimensions = array<i32: 0>} : vector<4x8xi32>
    %321 = tpu.iota {dimensions = array<i32: 1>} : vector<4x8xi32>
    %c2_i32_166 = arith.constant 2 : i32
    %322 = vector.broadcast %c2_i32_166 : i32 to vector<4x8xi32>
    %323 = arith.muli %322, %320 : vector<4x8xi32>
    %c1_i32_167 = arith.constant 1 : i32
    %324 = vector.broadcast %c1_i32_167 : i32 to vector<4x8xi32>
    %325 = arith.addi %323, %324 : vector<4x8xi32>
    %326 = arith.cmpi eq, %321, %325 : vector<4x8xi32>
    %cst_168 = arith.constant 1.000000e+00 : f32
    %cst_169 = arith.constant 0.000000e+00 : f32
    %327 = vector.broadcast %cst_168 : f32 to vector<4x8xf32>
    %328 = vector.broadcast %cst_169 : f32 to vector<4x8xf32>
    %329 = arith.select %326, %327, %328 : vector<4x8xi1>, vector<4x8xf32>
    %330 = tpu.iota {dimensions = array<i32: 0>} : vector<128x64xi32>
    %331 = tpu.iota {dimensions = array<i32: 1>} : vector<128x64xi32>
    %c2_i32_170 = arith.constant 2 : i32
    %332 = vector.broadcast %c2_i32_170 : i32 to vector<128x64xi32>
    %333 = arith.muli %332, %331 : vector<128x64xi32>
    %334 = arith.cmpi eq, %330, %333 : vector<128x64xi32>
    %cst_171 = arith.constant 1.000000e+00 : f32
    %cst_172 = arith.constant 0.000000e+00 : f32
    %335 = vector.broadcast %cst_171 : f32 to vector<128x64xf32>
    %336 = vector.broadcast %cst_172 : f32 to vector<128x64xf32>
    %337 = arith.select %334, %335, %336 : vector<128x64xi1>, vector<128x64xf32>
    %338 = tpu.iota {dimensions = array<i32: 0>} : vector<128x64xi32>
    %339 = tpu.iota {dimensions = array<i32: 1>} : vector<128x64xi32>
    %c2_i32_173 = arith.constant 2 : i32
    %340 = vector.broadcast %c2_i32_173 : i32 to vector<128x64xi32>
    %341 = arith.muli %340, %339 : vector<128x64xi32>
    %c1_i32_174 = arith.constant 1 : i32
    %342 = vector.broadcast %c1_i32_174 : i32 to vector<128x64xi32>
    %343 = arith.addi %341, %342 : vector<128x64xi32>
    %344 = arith.cmpi eq, %338, %343 : vector<128x64xi32>
    %cst_175 = arith.constant 1.000000e+00 : f32
    %cst_176 = arith.constant 0.000000e+00 : f32
    %345 = vector.broadcast %cst_175 : f32 to vector<128x64xf32>
    %346 = vector.broadcast %cst_176 : f32 to vector<128x64xf32>
    %347 = arith.select %344, %345, %346 : vector<128x64xi1>, vector<128x64xf32>
    %348 = vector.broadcast %310 : vector<1x128xf32> to vector<8x128xf32>
    %349 = arith.mulf %235, %348 : vector<8x128xf32>
    %350 = vector.broadcast %311 : vector<1x128xf32> to vector<8x128xf32>
    %351 = arith.addf %349, %350 : vector<8x128xf32>
    %cst_177 = arith.constant 0.000000e+00 : f32
    %352 = vector.broadcast %cst_177 : f32 to vector<8x128xf32>
    %353 = arith.maximumf %351, %352 : vector<8x128xf32>
    %cst_178 = arith.constant dense<0.000000e+00> : vector<4x128xf32>
    %354 = tpu.matmul %319, %353, %cst_178 {dimension_numbers = #tpu.dot_dimension_numbers<[1], [0], [0], [1], [0, 0, 1, 1], [], []>} : vector<4x8xf32>, vector<8x128xf32>, vector<4x128xf32> -> vector<4x128xf32>
    %cst_179 = arith.constant dense<0.000000e+00> : vector<4x128xf32>
    %355 = tpu.matmul %329, %353, %cst_179 {dimension_numbers = #tpu.dot_dimension_numbers<[1], [0], [0], [1], [0, 0, 1, 1], [], []>} : vector<4x8xf32>, vector<8x128xf32>, vector<4x128xf32> -> vector<4x128xf32>
    %356 = arith.maximumf %354, %355 : vector<4x128xf32>
    %cst_180 = arith.constant dense<0.000000e+00> : vector<4x64xf32>
    %357 = tpu.matmul %356, %337, %cst_180 {dimension_numbers = #tpu.dot_dimension_numbers<[1], [0], [0], [1], [0, 0, 1, 1], [], []>} : vector<4x128xf32>, vector<128x64xf32>, vector<4x64xf32> -> vector<4x64xf32>
    %cst_181 = arith.constant dense<0.000000e+00> : vector<4x64xf32>
    %358 = tpu.matmul %356, %347, %cst_181 {dimension_numbers = #tpu.dot_dimension_numbers<[1], [0], [0], [1], [0, 0, 1, 1], [], []>} : vector<4x128xf32>, vector<128x64xf32>, vector<4x64xf32> -> vector<4x64xf32>
    %359 = arith.maximumf %357, %358 : vector<4x64xf32>
    %360 = vector.broadcast %310 : vector<1x128xf32> to vector<8x128xf32>
    %361 = arith.mulf %251, %360 : vector<8x128xf32>
    %362 = vector.broadcast %311 : vector<1x128xf32> to vector<8x128xf32>
    %363 = arith.addf %361, %362 : vector<8x128xf32>
    %cst_182 = arith.constant 0.000000e+00 : f32
    %364 = vector.broadcast %cst_182 : f32 to vector<8x128xf32>
    %365 = arith.maximumf %363, %364 : vector<8x128xf32>
    %cst_183 = arith.constant dense<0.000000e+00> : vector<4x128xf32>
    %366 = tpu.matmul %319, %365, %cst_183 {dimension_numbers = #tpu.dot_dimension_numbers<[1], [0], [0], [1], [0, 0, 1, 1], [], []>} : vector<4x8xf32>, vector<8x128xf32>, vector<4x128xf32> -> vector<4x128xf32>
    %cst_184 = arith.constant dense<0.000000e+00> : vector<4x128xf32>
    %367 = tpu.matmul %329, %365, %cst_184 {dimension_numbers = #tpu.dot_dimension_numbers<[1], [0], [0], [1], [0, 0, 1, 1], [], []>} : vector<4x8xf32>, vector<8x128xf32>, vector<4x128xf32> -> vector<4x128xf32>
    %368 = arith.maximumf %366, %367 : vector<4x128xf32>
    %cst_185 = arith.constant dense<0.000000e+00> : vector<4x64xf32>
    %369 = tpu.matmul %368, %337, %cst_185 {dimension_numbers = #tpu.dot_dimension_numbers<[1], [0], [0], [1], [0, 0, 1, 1], [], []>} : vector<4x128xf32>, vector<128x64xf32>, vector<4x64xf32> -> vector<4x64xf32>
    %cst_186 = arith.constant dense<0.000000e+00> : vector<4x64xf32>
    %370 = tpu.matmul %368, %347, %cst_186 {dimension_numbers = #tpu.dot_dimension_numbers<[1], [0], [0], [1], [0, 0, 1, 1], [], []>} : vector<4x128xf32>, vector<128x64xf32>, vector<4x64xf32> -> vector<4x64xf32>
    %371 = arith.maximumf %369, %370 : vector<4x64xf32>
    %c0_187 = arith.constant 0 : index
    %c0_188 = arith.constant 0 : index
    %372 = vector.load %arg9[%c0_187, %c0_188] : memref<1x32xf32, #tpu.memory_space<vmem>>, vector<1x32xf32>
    %c0_189 = arith.constant 0 : index
    %c0_190 = arith.constant 0 : index
    %373 = vector.load %arg10[%c0_189, %c0_190] : memref<1x32xf32, #tpu.memory_space<vmem>>, vector<1x32xf32>
    %374 = tpu.iota {dimensions = array<i32: 0>} : vector<4x4xi32>
    %375 = tpu.iota {dimensions = array<i32: 1>} : vector<4x4xi32>
    %c0_i32_191 = arith.constant 0 : i32
    %376 = vector.broadcast %c0_i32_191 : i32 to vector<4x4xi32>
    %377 = arith.addi %374, %376 : vector<4x4xi32>
    %c1_i32_192 = arith.constant 1 : i32
    %378 = vector.broadcast %c1_i32_192 : i32 to vector<4x4xi32>
    %379 = arith.subi %377, %378 : vector<4x4xi32>
    %380 = arith.cmpi eq, %375, %379 : vector<4x4xi32>
    %cst_193 = arith.constant 1.000000e+00 : f32
    %cst_194 = arith.constant 0.000000e+00 : f32
    %381 = vector.broadcast %cst_193 : f32 to vector<4x4xf32>
    %382 = vector.broadcast %cst_194 : f32 to vector<4x4xf32>
    %383 = arith.select %380, %381, %382 : vector<4x4xi1>, vector<4x4xf32>
    %384 = tpu.iota {dimensions = array<i32: 0>} : vector<4x4xi32>
    %385 = tpu.iota {dimensions = array<i32: 1>} : vector<4x4xi32>
    %c1_i32_195 = arith.constant 1 : i32
    %386 = vector.broadcast %c1_i32_195 : i32 to vector<4x4xi32>
    %387 = arith.addi %384, %386 : vector<4x4xi32>
    %c1_i32_196 = arith.constant 1 : i32
    %388 = vector.broadcast %c1_i32_196 : i32 to vector<4x4xi32>
    %389 = arith.subi %387, %388 : vector<4x4xi32>
    %390 = arith.cmpi eq, %385, %389 : vector<4x4xi32>
    %cst_197 = arith.constant 1.000000e+00 : f32
    %cst_198 = arith.constant 0.000000e+00 : f32
    %391 = vector.broadcast %cst_197 : f32 to vector<4x4xf32>
    %392 = vector.broadcast %cst_198 : f32 to vector<4x4xf32>
    %393 = arith.select %390, %391, %392 : vector<4x4xi1>, vector<4x4xf32>
    %394 = tpu.iota {dimensions = array<i32: 0>} : vector<4x4xi32>
    %395 = tpu.iota {dimensions = array<i32: 1>} : vector<4x4xi32>
    %c2_i32_199 = arith.constant 2 : i32
    %396 = vector.broadcast %c2_i32_199 : i32 to vector<4x4xi32>
    %397 = arith.addi %394, %396 : vector<4x4xi32>
    %c1_i32_200 = arith.constant 1 : i32
    %398 = vector.broadcast %c1_i32_200 : i32 to vector<4x4xi32>
    %399 = arith.subi %397, %398 : vector<4x4xi32>
    %400 = arith.cmpi eq, %395, %399 : vector<4x4xi32>
    %cst_201 = arith.constant 1.000000e+00 : f32
    %cst_202 = arith.constant 0.000000e+00 : f32
    %401 = vector.broadcast %cst_201 : f32 to vector<4x4xf32>
    %402 = vector.broadcast %cst_202 : f32 to vector<4x4xf32>
    %403 = arith.select %400, %401, %402 : vector<4x4xi1>, vector<4x4xf32>
    %cst_203 = arith.constant 0.000000e+00 : f32
    %404 = vector.broadcast %cst_203 : f32 to vector<4x128xf32>
    %c0_204 = arith.constant 0 : index
    %c0_205 = arith.constant 0 : index
    %c0_206 = arith.constant 0 : index
    %405 = vector.load %arg3[%c0_204, %c0_205, %c0_206] : memref<3x64x128xf32, #tpu.memory_space<vmem>>, vector<1x64x128xf32>
    %406 = vector.shape_cast %405 : vector<1x64x128xf32> to vector<64x128xf32>
    %cst_207 = arith.constant dense<0.000000e+00> : vector<4x128xf32>
    %407 = tpu.matmul %359, %406, %cst_207 {dimension_numbers = #tpu.dot_dimension_numbers<[1], [0], [0], [1], [0, 0, 1, 1], [], []>} : vector<4x64xf32>, vector<64x128xf32>, vector<4x128xf32> -> vector<4x128xf32>
    %cst_208 = arith.constant dense<0.000000e+00> : vector<4x128xf32>
    %408 = tpu.matmul %383, %407, %cst_208 {dimension_numbers = #tpu.dot_dimension_numbers<[1], [0], [0], [1], [0, 0, 1, 1], [], []>} : vector<4x4xf32>, vector<4x128xf32>, vector<4x128xf32> -> vector<4x128xf32>
    %409 = arith.addf %404, %408 : vector<4x128xf32>
    %c1_209 = arith.constant 1 : index
    %c0_210 = arith.constant 0 : index
    %c0_211 = arith.constant 0 : index
    %410 = vector.load %arg3[%c1_209, %c0_210, %c0_211] : memref<3x64x128xf32, #tpu.memory_space<vmem>>, vector<1x64x128xf32>
    %411 = vector.shape_cast %410 : vector<1x64x128xf32> to vector<64x128xf32>
    %cst_212 = arith.constant dense<0.000000e+00> : vector<4x128xf32>
    %412 = tpu.matmul %359, %411, %cst_212 {dimension_numbers = #tpu.dot_dimension_numbers<[1], [0], [0], [1], [0, 0, 1, 1], [], []>} : vector<4x64xf32>, vector<64x128xf32>, vector<4x128xf32> -> vector<4x128xf32>
    %cst_213 = arith.constant dense<0.000000e+00> : vector<4x128xf32>
    %413 = tpu.matmul %393, %412, %cst_213 {dimension_numbers = #tpu.dot_dimension_numbers<[1], [0], [0], [1], [0, 0, 1, 1], [], []>} : vector<4x4xf32>, vector<4x128xf32>, vector<4x128xf32> -> vector<4x128xf32>
    %414 = arith.addf %409, %413 : vector<4x128xf32>
    %c2_214 = arith.constant 2 : index
    %c0_215 = arith.constant 0 : index
    %c0_216 = arith.constant 0 : index
    %415 = vector.load %arg3[%c2_214, %c0_215, %c0_216] : memref<3x64x128xf32, #tpu.memory_space<vmem>>, vector<1x64x128xf32>
    %416 = vector.shape_cast %415 : vector<1x64x128xf32> to vector<64x128xf32>
    %cst_217 = arith.constant dense<0.000000e+00> : vector<4x128xf32>
    %417 = tpu.matmul %359, %416, %cst_217 {dimension_numbers = #tpu.dot_dimension_numbers<[1], [0], [0], [1], [0, 0, 1, 1], [], []>} : vector<4x64xf32>, vector<64x128xf32>, vector<4x128xf32> -> vector<4x128xf32>
    %cst_218 = arith.constant dense<0.000000e+00> : vector<4x128xf32>
    %418 = tpu.matmul %403, %417, %cst_218 {dimension_numbers = #tpu.dot_dimension_numbers<[1], [0], [0], [1], [0, 0, 1, 1], [], []>} : vector<4x4xf32>, vector<4x128xf32>, vector<4x128xf32> -> vector<4x128xf32>
    %419 = arith.addf %414, %418 : vector<4x128xf32>
    %cst_219 = arith.constant 0.000000e+00 : f32
    %420 = vector.broadcast %cst_219 : f32 to vector<4x128xf32>
    %c0_220 = arith.constant 0 : index
    %c0_221 = arith.constant 0 : index
    %c0_222 = arith.constant 0 : index
    %421 = vector.load %arg3[%c0_220, %c0_221, %c0_222] : memref<3x64x128xf32, #tpu.memory_space<vmem>>, vector<1x64x128xf32>
    %422 = vector.shape_cast %421 : vector<1x64x128xf32> to vector<64x128xf32>
    %cst_223 = arith.constant dense<0.000000e+00> : vector<4x128xf32>
    %423 = tpu.matmul %371, %422, %cst_223 {dimension_numbers = #tpu.dot_dimension_numbers<[1], [0], [0], [1], [0, 0, 1, 1], [], []>} : vector<4x64xf32>, vector<64x128xf32>, vector<4x128xf32> -> vector<4x128xf32>
    %cst_224 = arith.constant dense<0.000000e+00> : vector<4x128xf32>
    %424 = tpu.matmul %383, %423, %cst_224 {dimension_numbers = #tpu.dot_dimension_numbers<[1], [0], [0], [1], [0, 0, 1, 1], [], []>} : vector<4x4xf32>, vector<4x128xf32>, vector<4x128xf32> -> vector<4x128xf32>
    %425 = arith.addf %420, %424 : vector<4x128xf32>
    %c1_225 = arith.constant 1 : index
    %c0_226 = arith.constant 0 : index
    %c0_227 = arith.constant 0 : index
    %426 = vector.load %arg3[%c1_225, %c0_226, %c0_227] : memref<3x64x128xf32, #tpu.memory_space<vmem>>, vector<1x64x128xf32>
    %427 = vector.shape_cast %426 : vector<1x64x128xf32> to vector<64x128xf32>
    %cst_228 = arith.constant dense<0.000000e+00> : vector<4x128xf32>
    %428 = tpu.matmul %371, %427, %cst_228 {dimension_numbers = #tpu.dot_dimension_numbers<[1], [0], [0], [1], [0, 0, 1, 1], [], []>} : vector<4x64xf32>, vector<64x128xf32>, vector<4x128xf32> -> vector<4x128xf32>
    %cst_229 = arith.constant dense<0.000000e+00> : vector<4x128xf32>
    %429 = tpu.matmul %393, %428, %cst_229 {dimension_numbers = #tpu.dot_dimension_numbers<[1], [0], [0], [1], [0, 0, 1, 1], [], []>} : vector<4x4xf32>, vector<4x128xf32>, vector<4x128xf32> -> vector<4x128xf32>
    %430 = arith.addf %425, %429 : vector<4x128xf32>
    %c2_230 = arith.constant 2 : index
    %c0_231 = arith.constant 0 : index
    %c0_232 = arith.constant 0 : index
    %431 = vector.load %arg3[%c2_230, %c0_231, %c0_232] : memref<3x64x128xf32, #tpu.memory_space<vmem>>, vector<1x64x128xf32>
    %432 = vector.shape_cast %431 : vector<1x64x128xf32> to vector<64x128xf32>
    %cst_233 = arith.constant dense<0.000000e+00> : vector<4x128xf32>
    %433 = tpu.matmul %371, %432, %cst_233 {dimension_numbers = #tpu.dot_dimension_numbers<[1], [0], [0], [1], [0, 0, 1, 1], [], []>} : vector<4x64xf32>, vector<64x128xf32>, vector<4x128xf32> -> vector<4x128xf32>
    %cst_234 = arith.constant dense<0.000000e+00> : vector<4x128xf32>
    %434 = tpu.matmul %403, %433, %cst_234 {dimension_numbers = #tpu.dot_dimension_numbers<[1], [0], [0], [1], [0, 0, 1, 1], [], []>} : vector<4x4xf32>, vector<4x128xf32>, vector<4x128xf32> -> vector<4x128xf32>
    %435 = arith.addf %430, %434 : vector<4x128xf32>
    %cst_235 = arith.constant 0.000000e+00 : f32
    %436 = vector.broadcast %cst_235 : f32 to vector<1x128xf32>
    %cst_236 = arith.constant 0.000000e+00 : f32
    %437 = vector.broadcast %cst_236 : f32 to vector<1x128xf32>
    %cst_237 = arith.constant dense<0.000000e+00> : vector<128xf32>
    %438 = vector.multi_reduction <add>, %419, %cst_237 [0] : vector<4x128xf32> to vector<128xf32>
    %439 = vector.shape_cast %438 : vector<128xf32> to vector<1x128xf32>
    %440 = arith.addf %436, %439 : vector<1x128xf32>
    %441 = arith.mulf %419, %419 : vector<4x128xf32>
    %cst_238 = arith.constant dense<0.000000e+00> : vector<128xf32>
    %442 = vector.multi_reduction <add>, %441, %cst_238 [0] : vector<4x128xf32> to vector<128xf32>
    %443 = vector.shape_cast %442 : vector<128xf32> to vector<1x128xf32>
    %444 = arith.addf %437, %443 : vector<1x128xf32>
    %cst_239 = arith.constant dense<0.000000e+00> : vector<128xf32>
    %445 = vector.multi_reduction <add>, %435, %cst_239 [0] : vector<4x128xf32> to vector<128xf32>
    %446 = vector.shape_cast %445 : vector<128xf32> to vector<1x128xf32>
    %447 = arith.addf %440, %446 : vector<1x128xf32>
    %448 = arith.mulf %435, %435 : vector<4x128xf32>
    %cst_240 = arith.constant dense<0.000000e+00> : vector<128xf32>
    %449 = vector.multi_reduction <add>, %448, %cst_240 [0] : vector<4x128xf32> to vector<128xf32>
    %450 = vector.shape_cast %449 : vector<128xf32> to vector<1x128xf32>
    %451 = arith.addf %444, %450 : vector<1x128xf32>
    %452 = tpu.iota {dimensions = array<i32: 0>} : vector<128x32xi32>
    %453 = tpu.iota {dimensions = array<i32: 1>} : vector<128x32xi32>
    %c4_i32 = arith.constant 4 : i32
    %454 = vector.broadcast %c4_i32 : i32 to vector<128x32xi32>
    %455 = arith.muli %453, %454 : vector<128x32xi32>
    %456 = arith.cmpi sge, %452, %455 : vector<128x32xi32>
    %c4_i32_241 = arith.constant 4 : i32
    %457 = vector.broadcast %c4_i32_241 : i32 to vector<128x32xi32>
    %458 = arith.muli %453, %457 : vector<128x32xi32>
    %c4_i32_242 = arith.constant 4 : i32
    %459 = vector.broadcast %c4_i32_242 : i32 to vector<128x32xi32>
    %460 = arith.addi %458, %459 : vector<128x32xi32>
    %461 = arith.cmpi slt, %452, %460 : vector<128x32xi32>
    %462 = arith.andi %456, %461 : vector<128x32xi1>
    %cst_243 = arith.constant 1.000000e+00 : f32
    %cst_244 = arith.constant 0.000000e+00 : f32
    %463 = vector.broadcast %cst_243 : f32 to vector<128x32xf32>
    %464 = vector.broadcast %cst_244 : f32 to vector<128x32xf32>
    %465 = arith.select %462, %463, %464 : vector<128x32xi1>, vector<128x32xf32>
    %cst_245 = arith.constant dense<0.000000e+00> : vector<1x32xf32>
    %466 = tpu.matmul %447, %465, %cst_245 {dimension_numbers = #tpu.dot_dimension_numbers<[1], [0], [0], [1], [0, 0, 1, 1], [], []>} : vector<1x128xf32>, vector<128x32xf32>, vector<1x32xf32> -> vector<1x32xf32>
    %cst_246 = arith.constant dense<0.000000e+00> : vector<1x32xf32>
    %467 = tpu.matmul %451, %465, %cst_246 {dimension_numbers = #tpu.dot_dimension_numbers<[1], [0], [0], [1], [0, 0, 1, 1], [], []>} : vector<1x128xf32>, vector<128x32xf32>, vector<1x32xf32> -> vector<1x32xf32>
    %cst_247 = arith.constant 3.200000e+01 : f32
    %468 = vector.broadcast %cst_247 : f32 to vector<1x32xf32>
    %469 = arith.divf %466, %468 : vector<1x32xf32>
    %cst_248 = arith.constant 3.200000e+01 : f32
    %470 = vector.broadcast %cst_248 : f32 to vector<1x32xf32>
    %471 = arith.divf %467, %470 : vector<1x32xf32>
    %472 = arith.mulf %469, %469 : vector<1x32xf32>
    %473 = arith.subf %471, %472 : vector<1x32xf32>
    %cst_249 = arith.constant 9.99999974E-6 : f32
    %474 = vector.broadcast %cst_249 : f32 to vector<1x32xf32>
    %475 = arith.addf %473, %474 : vector<1x32xf32>
    %476 = math.rsqrt %475 : vector<1x32xf32>
    %477 = arith.mulf %372, %476 : vector<1x32xf32>
    %478 = arith.mulf %469, %477 : vector<1x32xf32>
    %479 = arith.subf %373, %478 : vector<1x32xf32>
    %480 = tpu.iota {dimensions = array<i32: 0>} : vector<32x128xi32>
    %481 = tpu.iota {dimensions = array<i32: 1>} : vector<32x128xi32>
    %c4_i32_250 = arith.constant 4 : i32
    %482 = vector.broadcast %c4_i32_250 : i32 to vector<32x128xi32>
    %483 = arith.muli %480, %482 : vector<32x128xi32>
    %484 = arith.cmpi sge, %481, %483 : vector<32x128xi32>
    %c4_i32_251 = arith.constant 4 : i32
    %485 = vector.broadcast %c4_i32_251 : i32 to vector<32x128xi32>
    %486 = arith.muli %480, %485 : vector<32x128xi32>
    %c4_i32_252 = arith.constant 4 : i32
    %487 = vector.broadcast %c4_i32_252 : i32 to vector<32x128xi32>
    %488 = arith.addi %486, %487 : vector<32x128xi32>
    %489 = arith.cmpi slt, %481, %488 : vector<32x128xi32>
    %490 = arith.andi %484, %489 : vector<32x128xi1>
    %cst_253 = arith.constant 1.000000e+00 : f32
    %cst_254 = arith.constant 0.000000e+00 : f32
    %491 = vector.broadcast %cst_253 : f32 to vector<32x128xf32>
    %492 = vector.broadcast %cst_254 : f32 to vector<32x128xf32>
    %493 = arith.select %490, %491, %492 : vector<32x128xi1>, vector<32x128xf32>
    %cst_255 = arith.constant dense<0.000000e+00> : vector<1x128xf32>
    %494 = tpu.matmul %477, %493, %cst_255 {dimension_numbers = #tpu.dot_dimension_numbers<[1], [0], [0], [1], [0, 0, 1, 1], [], []>} : vector<1x32xf32>, vector<32x128xf32>, vector<1x128xf32> -> vector<1x128xf32>
    %cst_256 = arith.constant dense<0.000000e+00> : vector<1x128xf32>
    %495 = tpu.matmul %479, %493, %cst_256 {dimension_numbers = #tpu.dot_dimension_numbers<[1], [0], [0], [1], [0, 0, 1, 1], [], []>} : vector<1x32xf32>, vector<32x128xf32>, vector<1x128xf32> -> vector<1x128xf32>
    %496 = tpu.iota {dimensions = array<i32: 0>} : vector<2x4xi32>
    %497 = tpu.iota {dimensions = array<i32: 1>} : vector<2x4xi32>
    %c2_i32_257 = arith.constant 2 : i32
    %498 = vector.broadcast %c2_i32_257 : i32 to vector<2x4xi32>
    %499 = arith.muli %498, %496 : vector<2x4xi32>
    %500 = arith.cmpi eq, %497, %499 : vector<2x4xi32>
    %cst_258 = arith.constant 1.000000e+00 : f32
    %cst_259 = arith.constant 0.000000e+00 : f32
    %501 = vector.broadcast %cst_258 : f32 to vector<2x4xf32>
    %502 = vector.broadcast %cst_259 : f32 to vector<2x4xf32>
    %503 = arith.select %500, %501, %502 : vector<2x4xi1>, vector<2x4xf32>
    %504 = tpu.iota {dimensions = array<i32: 0>} : vector<2x4xi32>
    %505 = tpu.iota {dimensions = array<i32: 1>} : vector<2x4xi32>
    %c2_i32_260 = arith.constant 2 : i32
    %506 = vector.broadcast %c2_i32_260 : i32 to vector<2x4xi32>
    %507 = arith.muli %506, %504 : vector<2x4xi32>
    %c1_i32_261 = arith.constant 1 : i32
    %508 = vector.broadcast %c1_i32_261 : i32 to vector<2x4xi32>
    %509 = arith.addi %507, %508 : vector<2x4xi32>
    %510 = arith.cmpi eq, %505, %509 : vector<2x4xi32>
    %cst_262 = arith.constant 1.000000e+00 : f32
    %cst_263 = arith.constant 0.000000e+00 : f32
    %511 = vector.broadcast %cst_262 : f32 to vector<2x4xf32>
    %512 = vector.broadcast %cst_263 : f32 to vector<2x4xf32>
    %513 = arith.select %510, %511, %512 : vector<2x4xi1>, vector<2x4xf32>
    %514 = tpu.iota {dimensions = array<i32: 0>} : vector<128x64xi32>
    %515 = tpu.iota {dimensions = array<i32: 1>} : vector<128x64xi32>
    %c2_i32_264 = arith.constant 2 : i32
    %516 = vector.broadcast %c2_i32_264 : i32 to vector<128x64xi32>
    %517 = arith.muli %516, %515 : vector<128x64xi32>
    %518 = arith.cmpi eq, %514, %517 : vector<128x64xi32>
    %cst_265 = arith.constant 1.000000e+00 : f32
    %cst_266 = arith.constant 0.000000e+00 : f32
    %519 = vector.broadcast %cst_265 : f32 to vector<128x64xf32>
    %520 = vector.broadcast %cst_266 : f32 to vector<128x64xf32>
    %521 = arith.select %518, %519, %520 : vector<128x64xi1>, vector<128x64xf32>
    %522 = tpu.iota {dimensions = array<i32: 0>} : vector<128x64xi32>
    %523 = tpu.iota {dimensions = array<i32: 1>} : vector<128x64xi32>
    %c2_i32_267 = arith.constant 2 : i32
    %524 = vector.broadcast %c2_i32_267 : i32 to vector<128x64xi32>
    %525 = arith.muli %524, %523 : vector<128x64xi32>
    %c1_i32_268 = arith.constant 1 : i32
    %526 = vector.broadcast %c1_i32_268 : i32 to vector<128x64xi32>
    %527 = arith.addi %525, %526 : vector<128x64xi32>
    %528 = arith.cmpi eq, %522, %527 : vector<128x64xi32>
    %cst_269 = arith.constant 1.000000e+00 : f32
    %cst_270 = arith.constant 0.000000e+00 : f32
    %529 = vector.broadcast %cst_269 : f32 to vector<128x64xf32>
    %530 = vector.broadcast %cst_270 : f32 to vector<128x64xf32>
    %531 = arith.select %528, %529, %530 : vector<128x64xi1>, vector<128x64xf32>
    %532 = vector.broadcast %494 : vector<1x128xf32> to vector<4x128xf32>
    %533 = arith.mulf %419, %532 : vector<4x128xf32>
    %534 = vector.broadcast %495 : vector<1x128xf32> to vector<4x128xf32>
    %535 = arith.addf %533, %534 : vector<4x128xf32>
    %cst_271 = arith.constant 0.000000e+00 : f32
    %536 = vector.broadcast %cst_271 : f32 to vector<4x128xf32>
    %537 = arith.maximumf %535, %536 : vector<4x128xf32>
    %cst_272 = arith.constant dense<0.000000e+00> : vector<2x128xf32>
    %538 = tpu.matmul %503, %537, %cst_272 {dimension_numbers = #tpu.dot_dimension_numbers<[1], [0], [0], [1], [0, 0, 1, 1], [], []>} : vector<2x4xf32>, vector<4x128xf32>, vector<2x128xf32> -> vector<2x128xf32>
    %cst_273 = arith.constant dense<0.000000e+00> : vector<2x128xf32>
    %539 = tpu.matmul %513, %537, %cst_273 {dimension_numbers = #tpu.dot_dimension_numbers<[1], [0], [0], [1], [0, 0, 1, 1], [], []>} : vector<2x4xf32>, vector<4x128xf32>, vector<2x128xf32> -> vector<2x128xf32>
    %540 = arith.maximumf %538, %539 : vector<2x128xf32>
    %cst_274 = arith.constant dense<0.000000e+00> : vector<2x64xf32>
    %541 = tpu.matmul %540, %521, %cst_274 {dimension_numbers = #tpu.dot_dimension_numbers<[1], [0], [0], [1], [0, 0, 1, 1], [], []>} : vector<2x128xf32>, vector<128x64xf32>, vector<2x64xf32> -> vector<2x64xf32>
    %cst_275 = arith.constant dense<0.000000e+00> : vector<2x64xf32>
    %542 = tpu.matmul %540, %531, %cst_275 {dimension_numbers = #tpu.dot_dimension_numbers<[1], [0], [0], [1], [0, 0, 1, 1], [], []>} : vector<2x128xf32>, vector<128x64xf32>, vector<2x64xf32> -> vector<2x64xf32>
    %543 = arith.maximumf %541, %542 : vector<2x64xf32>
    %544 = vector.broadcast %494 : vector<1x128xf32> to vector<4x128xf32>
    %545 = arith.mulf %435, %544 : vector<4x128xf32>
    %546 = vector.broadcast %495 : vector<1x128xf32> to vector<4x128xf32>
    %547 = arith.addf %545, %546 : vector<4x128xf32>
    %cst_276 = arith.constant 0.000000e+00 : f32
    %548 = vector.broadcast %cst_276 : f32 to vector<4x128xf32>
    %549 = arith.maximumf %547, %548 : vector<4x128xf32>
    %cst_277 = arith.constant dense<0.000000e+00> : vector<2x128xf32>
    %550 = tpu.matmul %503, %549, %cst_277 {dimension_numbers = #tpu.dot_dimension_numbers<[1], [0], [0], [1], [0, 0, 1, 1], [], []>} : vector<2x4xf32>, vector<4x128xf32>, vector<2x128xf32> -> vector<2x128xf32>
    %cst_278 = arith.constant dense<0.000000e+00> : vector<2x128xf32>
    %551 = tpu.matmul %513, %549, %cst_278 {dimension_numbers = #tpu.dot_dimension_numbers<[1], [0], [0], [1], [0, 0, 1, 1], [], []>} : vector<2x4xf32>, vector<4x128xf32>, vector<2x128xf32> -> vector<2x128xf32>
    %552 = arith.maximumf %550, %551 : vector<2x128xf32>
    %cst_279 = arith.constant dense<0.000000e+00> : vector<2x64xf32>
    %553 = tpu.matmul %552, %521, %cst_279 {dimension_numbers = #tpu.dot_dimension_numbers<[1], [0], [0], [1], [0, 0, 1, 1], [], []>} : vector<2x128xf32>, vector<128x64xf32>, vector<2x64xf32> -> vector<2x64xf32>
    %cst_280 = arith.constant dense<0.000000e+00> : vector<2x64xf32>
    %554 = tpu.matmul %552, %531, %cst_280 {dimension_numbers = #tpu.dot_dimension_numbers<[1], [0], [0], [1], [0, 0, 1, 1], [], []>} : vector<2x128xf32>, vector<128x64xf32>, vector<2x64xf32> -> vector<2x64xf32>
    %555 = arith.maximumf %553, %554 : vector<2x64xf32>
    %c0_281 = arith.constant 0 : index
    %c0_282 = arith.constant 0 : index
    %556 = vector.load %arg4[%c0_281, %c0_282] : memref<64x16xf32, #tpu.memory_space<vmem>>, vector<64x16xf32>
    %cst_283 = arith.constant dense<0.000000e+00> : vector<2x16xf32>
    %557 = tpu.matmul %543, %556, %cst_283 {dimension_numbers = #tpu.dot_dimension_numbers<[1], [0], [0], [1], [0, 0, 1, 1], [], []>} : vector<2x64xf32>, vector<64x16xf32>, vector<2x16xf32> -> vector<2x16xf32>
    %c0_284 = arith.constant 0 : index
    %c0_285 = arith.constant 0 : index
    %558 = vector.load %arg11[%c0_284, %c0_285] : memref<1x16xf32, #tpu.memory_space<vmem>>, vector<1x16xf32>
    %559 = vector.broadcast %558 : vector<1x16xf32> to vector<2x16xf32>
    %560 = arith.addf %557, %559 : vector<2x16xf32>
    %c0_286 = arith.constant 0 : index
    %c0_287 = arith.constant 0 : index
    %c0_288 = arith.constant 0 : index
    %561 = vector.load %arg12[%c0_286, %c0_287, %c0_288] : memref<2x2x16xf32, #tpu.memory_space<vmem>>, vector<1x2x16xf32>
    %562 = vector.shape_cast %561 : vector<1x2x16xf32> to vector<2x16xf32>
    %563 = vector.shape_cast %560 : vector<2x16xf32> to vector<1x2x16xf32>
    tpu.vector_store %arg12[%c0_286, %c0_287, %c0_288], %563 {strides = array<i32>} : memref<2x2x16xf32, #tpu.memory_space<vmem>>, vector<1x2x16xf32>,
    %c0_289 = arith.constant 0 : index
    %c0_290 = arith.constant 0 : index
    %564 = vector.load %arg4[%c0_289, %c0_290] : memref<64x16xf32, #tpu.memory_space<vmem>>, vector<64x16xf32>
    %cst_291 = arith.constant dense<0.000000e+00> : vector<2x16xf32>
    %565 = tpu.matmul %555, %564, %cst_291 {dimension_numbers = #tpu.dot_dimension_numbers<[1], [0], [0], [1], [0, 0, 1, 1], [], []>} : vector<2x64xf32>, vector<64x16xf32>, vector<2x16xf32> -> vector<2x16xf32>
    %c0_292 = arith.constant 0 : index
    %c0_293 = arith.constant 0 : index
    %566 = vector.load %arg11[%c0_292, %c0_293] : memref<1x16xf32, #tpu.memory_space<vmem>>, vector<1x16xf32>
    %567 = vector.broadcast %566 : vector<1x16xf32> to vector<2x16xf32>
    %568 = arith.addf %565, %567 : vector<2x16xf32>
    %c1_294 = arith.constant 1 : index
    %c0_295 = arith.constant 0 : index
    %c0_296 = arith.constant 0 : index
    %569 = vector.load %arg12[%c1_294, %c0_295, %c0_296] : memref<2x2x16xf32, #tpu.memory_space<vmem>>, vector<1x2x16xf32>
    %570 = vector.shape_cast %569 : vector<1x2x16xf32> to vector<2x16xf32>
    %571 = vector.shape_cast %568 : vector<2x16xf32> to vector<1x2x16xf32>
    tpu.vector_store %arg12[%c1_294, %c0_295, %c0_296], %571 {strides = array<i32>} : memref<2x2x16xf32, #tpu.memory_space<vmem>>, vector<1x2x16xf32>,
    return
  }
}

</mosaic_0001>

<llo_original>
// kernel: cnn_forward.1
$region0: #{cnn_forward.1}
  #allocation0 [shape = 'u32[]', space=smem, size = 0x4, offset = 0x4, fixed_abs, tag = 'smem constant byte address 0x4 - core index']
  #allocation1 [shape = 'u32[144,128]{1,0:T(1,128)}', space=vmem, size = 0x12000, scoped, tag = 'internal scratch']
  %s0 = inlined_call_operand.vmem [shape: f32[2,16,64], index: 0, kind: input, shape index: {}]
  %s1 = inlined_call_operand.vmem [shape: f32[3,64,128], index: 1, kind: input, shape index: {}]
  %s2 = inlined_call_operand.vmem [shape: f32[3,64,128], index: 2, kind: input, shape index: {}]
  %s3 = inlined_call_operand.hbm [shape: f32[3,64,128], index: 3, kind: input, shape index: {}]
  %s4 = inlined_call_operand.vmem [shape: f32[64,16], index: 4, kind: input, shape index: {}]
  %s5 = inlined_call_operand.vmem [shape: f32[1,8], index: 5, kind: input, shape index: {}]
  %s6 = inlined_call_operand.vmem [shape: f32[1,8], index: 6, kind: input, shape index: {}]
  %s7 = inlined_call_operand.vmem [shape: f32[1,16], index: 7, kind: input, shape index: {}]
  %s8 = inlined_call_operand.vmem [shape: f32[1,16], index: 8, kind: input, shape index: {}]
  %s9 = inlined_call_operand.vmem [shape: f32[1,32], index: 9, kind: input, shape index: {}]
  %s10 = inlined_call_operand.vmem [shape: f32[1,32], index: 10, kind: input, shape index: {}]
  %s11 = inlined_call_operand.vmem [shape: f32[1,16], index: 11, kind: input, shape index: {}]
  %s12 = inlined_call_operand.vmem [shape: f32[2,2,16], index: 12, kind: output, shape index: {}]
  %s13 = sld [smem:[#allocation0]]
  $region62: #{cnn_forward.1} parent=0
    _
  %s15 = ssub.s32 1, %s13
  %s16 = scalar_select 0, %s15, %s13
  $region1: #{cnn_forward.1} parent=0
    #allocation2 [shape = 'u8[98304]{0}', space=vmem, size = 0x18000, scoped, tag = 'input window, operand 3, single buffered']
    #allocation3 [shape = 's32[1]{0}', space=sflag, size = 0x4, scoped, tag = 'scoped memory for cnn_forward.1']
    %17 = vsyncpa [#allocation3], 0
    // Predicated region
    $region2: #{cnn_forward.1} parent=1 // pred_check
      _
    $region3: #{cnn_forward.1} parent=1 // pred_check_branch
      %19 = sbr.rel (0) target = $region5
    $region4: #{cnn_forward.1} parent=1 // pred_region
      _
    $region5: #{cnn_forward.1} parent=1 // pred_fallthru
      _
    // Predicated region
    $region6: #{cnn_forward.1} parent=1 // pred_check
      _
    $region7: #{cnn_forward.1} parent=1 // pred_check_branch
      %21 = sbr.rel (0) target = $region9
    $region8: #{cnn_forward.1} parent=1 // pred_region
      _
    $region9: #{cnn_forward.1} parent=1 // pred_fallthru
      _
    // Predicated region
    $region10: #{cnn_forward.1} parent=1 // pred_check
      _
    $region11: #{cnn_forward.1} parent=1 // pred_check_branch
      %23 = sbr.rel (0) target = $region13
    $region12: #{cnn_forward.1} parent=1 // pred_region
      _
    $region13: #{cnn_forward.1} parent=1 // pred_fallthru
      _
    // Predicated region
    $region14: #{cnn_forward.1} parent=1 // pred_check
      _
    $region15: #{cnn_forward.1} parent=1 // pred_check_branch
      %25 = sbr.rel (0) target = $region17
    $region16: #{cnn_forward.1} parent=1 // pred_region
      %s27 = ssub.s32 3072, 3072
      %28 = vsyncadd [#allocation3], %s27
      %s29 = sshll.u32 [#allocation2], 4
      %s30 = int_to_ptr.vmem [resolvable:$true] %s29
      %35 = dma.hbm_to_vmem [thread:$0]  %s3, 3072, %s30, [#allocation3], 128, 128, 8
    $region17: #{cnn_forward.1} parent=1 // pred_fallthru
      _
    // Predicated region
    $region18: #{cnn_forward.1} parent=1 // pred_check
      _
    $region19: #{cnn_forward.1} parent=1 // pred_check_branch
      %37 = sbr.rel (0) target = $region21
    $region20: #{cnn_forward.1} parent=1 // pred_region
      _
    $region21: #{cnn_forward.1} parent=1 // pred_fallthru
      _
    // Predicated region
    $region22: #{cnn_forward.1} parent=1 // pred_check
      _
    $region23: #{cnn_forward.1} parent=1 // pred_check_branch
      %39 = sbr.rel (0) target = $region25
    $region24: #{cnn_forward.1} parent=1 // pred_region
      _
    $region25: #{cnn_forward.1} parent=1 // pred_fallthru
      _
    // Predicated region
    $region26: #{cnn_forward.1} parent=1 // pred_check
      _
    $region27: #{cnn_forward.1} parent=1 // pred_check_branch
      %41 = sbr.rel (0) target = $region29
    $region28: #{cnn_forward.1} parent=1 // pred_region
      _
    $region29: #{cnn_forward.1} parent=1 // pred_fallthru
      _
    // Predicated region
    $region30: #{cnn_forward.1} parent=1 // pred_check
      _
    $region31: #{cnn_forward.1} parent=1 // pred_check_branch
      %43 = sbr.rel (0) target = $region33
    $region32: #{cnn_forward.1} parent=1 // pred_region
      _
    $region33: #{cnn_forward.1} parent=1 // pred_fallthru
      _
    // Predicated region
    $region34: #{cnn_forward.1} parent=1 // pred_check
      _
    $region35: #{cnn_forward.1} parent=1 // pred_check_branch
      %45 = sbr.rel (0) target = $region37
    $region36: #{cnn_forward.1} parent=1 // pred_region
      _
    $region37: #{cnn_forward.1} parent=1 // pred_fallthru
      _
    // Predicated region
    $region38: #{cnn_forward.1} parent=1 // pred_check
      _
    $region39: #{cnn_forward.1} parent=1 // pred_check_branch
      %47 = sbr.rel (0) target = $region41
    $region40: #{cnn_forward.1} parent=1 // pred_region
      _
    $region41: #{cnn_forward.1} parent=1 // pred_fallthru
      _
    // Predicated region
    $region42: #{cnn_forward.1} parent=1 // pred_check
      _
    $region43: #{cnn_forward.1} parent=1 // pred_check_branch
      %49 = sbr.rel (0) target = $region45
    $region44: #{cnn_forward.1} parent=1 // pred_region
      _
    $region45: #{cnn_forward.1} parent=1 // pred_fallthru
      _
    // Predicated region
    $region46: #{cnn_forward.1} parent=1 // pred_check
      _
    $region47: #{cnn_forward.1} parent=1 // pred_check_branch
      %51 = sbr.rel (0) target = $region49
    $region48: #{cnn_forward.1} parent=1 // pred_region
      _
    $region49: #{cnn_forward.1} parent=1 // pred_fallthru
      _
    // Predicated region
    $region50: #{cnn_forward.1} parent=1 // pred_check
      _
    $region51: #{cnn_forward.1} parent=1 // pred_check_branch
      %53 = sbr.rel (0) target = $region53
    $region52: #{cnn_forward.1} parent=1 // pred_region
      %54 = dma.done [#allocation3], 3072
    $region53: #{cnn_forward.1} parent=1 // pred_fallthru
      _
    %v55 = vld [vmem:[%s0] sm:$0xff]
    %v56 = vld [vmem:[%s0 + $0x8] sm:$0xff]
    %s57 = scalar_lea.vmem %s0, 16
    %v58 = vld [vmem:[%s57] sm:$0xff]
    %v59 = vld [vmem:[%s57 + $0x8] sm:$0xff]
    %v60 = vld [vmem:[%s5] sm:$0x1]
    %v61 = vld [vmem:[%s6] sm:$0x1]
    %v62 = vlaneseq
    %v63 = vshrl.u32 %v62, 7
    %v64 = vadd.s32 %v63, 8
    %v65 = vlaneseq
    %v66 = vand.u32 %v65, 127
    %v67 = vsub.s32 %v63, 1
    %v68 = vsub.s32 %v64, 1
    %vm69 = vcmp.eq.s32.totalorder %v66, %v67
    %vm70 = vcmp.eq.s32.totalorder %v66, %v68
    %v71 = vsel %vm69, 1.0, 0.0
    %v72 = vsel %vm70, 1.0, 0.0
    %vm73 = vcmp.eq.s32.totalorder %v66, %v63
    %vm74 = vcmp.eq.s32.totalorder %v66, %v64
    %v75 = vsel %vm73, 1.0, 0.0
    %v76 = vsel %vm74, 1.0, 0.0
    %v77 = vadd.s32 %v63, 2
    %v78 = vadd.s32 %v64, 2
    %v79 = vsub.s32 %v77, 1
    %v80 = vsub.s32 %v78, 1
    %vm81 = vcmp.eq.s32.totalorder %v66, %v79
    %vm82 = vcmp.eq.s32.totalorder %v66, %v80
    %v83 = vsel %vm81, 1.0, 0.0
    %v84 = vsel %vm82, 1.0, 0.0
    %v85 = vld [vmem:[%s1] sm:$0xff]
    %v86 = vld [vmem:[%s1 + $0x8] sm:$0xff]
    %v87 = vld [vmem:[%s1 + $0x10] sm:$0xff]
    %v88 = vld [vmem:[%s1 + $0x18] sm:$0xff]
    %v89 = vld [vmem:[%s1 + $0x20] sm:$0xff]
    %v90 = vld [vmem:[%s1 + $0x28] sm:$0xff]
    %v91 = vld [vmem:[%s1 + $0x30] sm:$0xff]
    %v92 = vld [vmem:[%s1 + $0x38] sm:$0xff]
    %vm93 = vcmask 523264
    %v95 = vsel %vm93, %v55, 0
    %v98 = vsel %vm93, %v56, 0
    %100 = vmatprep.subr.mxu0 0.0
    %101 = vmatpush1.msra.mxu0 %v85
    %102 = vmatprep.subr.mxu0 0.0
    %103 = vmatpush1.msra.mxu0 %v86
    %104 = vmatprep.subr.mxu0 0.0
    %105 = vmatpush1.msra.mxu0 %v87
    %106 = vmatprep.subr.mxu0 0.0
    %107 = vmatpush1.msra.mxu0 %v88
    %108 = vmatprep.subr.mxu0 0.0
    %109 = vmatpush1.msra.mxu0 %v89
    %110 = vmatprep.subr.mxu0 0.0
    %111 = vmatpush1.msra.mxu0 %v90
    %112 = vmatprep.subr.mxu0 0.0
    %113 = vmatpush1.msra.mxu0 %v91
    %114 = vmatprep.subr.mxu0 0.0
    %115 = vmatpush1.msra.mxu0 %v92
    %116 = vmatprep.subr.mxu0 0.0
    %117 = vmatpush1.msra.mxu0 0.0
    %118 = vmatprep.subr.mxu0 0.0
    %119 = vmatpush1.msra.mxu0 0.0
    %120 = vmatprep.subr.mxu0 0.0
    %121 = vmatpush1.msra.mxu0 0.0
    %122 = vmatprep.subr.mxu0 0.0
    %123 = vmatpush1.msra.mxu0 0.0
    %124 = vmatprep.subr.mxu0 0.0
    %125 = vmatpush1.msra.mxu0 0.0
    %126 = vmatprep.subr.mxu0 0.0
    %127 = vmatpush1.msra.mxu0 0.0
    %128 = vmatprep.subr.mxu0 0.0
    %129 = vmatpush1.msra.mxu0 0.0
    %130 = vmatprep.subr.mxu0 0.0
    %131 = vmatpush1.msra.mxu0 0.0
    %132 = vmatprep.subr.mxu0 0.0
    %133 = vmatpush1.msra.mxu0 0.0
    %134 = vmatprep.subr.mxu0 0.0
    %135 = vmatpush1.msra.mxu0 0.0
    %136 = vmatprep.subr.mxu0 0.0
    %137 = vmatpush1.msra.mxu0 0.0
    %138 = vmatprep.subr.mxu0 0.0
    %139 = vmatpush1.msra.mxu0 0.0
    %140 = vmatprep.subr.mxu0 0.0
    %141 = vmatpush1.msra.mxu0 0.0
    %142 = vmatprep.subr.mxu0 0.0
    %143 = vmatpush1.msra.mxu0 0.0
    %144 = vmatprep.subr.mxu0 0.0
    %145 = vmatpush1.msra.mxu0 0.0
    %146 = vmatprep.subr.mxu0 0.0
    %147 = vmatpush1.msra.mxu0 0.0
    %148 = vmatprep.subr.mxu0 0.0
    %149 = vmatpush1.msra.mxu0 0.0
    %150 = vmatprep.subr.mxu0 0.0
    %151 = vmatpush1.msra.mxu0 0.0
    %152 = vmatprep.subr.mxu0 0.0
    %153 = vmatpush1.msra.mxu0 0.0
    %154 = vmatprep.subr.mxu0 0.0
    %155 = vmatpush1.msra.mxu0 0.0
    %156 = vmatprep.subr.mxu0 0.0
    %157 = vmatpush1.msra.mxu0 0.0
    %158 = vmatprep.subr.mxu0 0.0
    %159 = vmatpush1.msra.mxu0 0.0
    %160 = vmatprep.subr.mxu0 0.0
    %161 = vmatpush1.msra.mxu0 0.0
    %162 = vmatprep.subr.mxu0 0.0
    %163 = vmatpush1.msra.mxu0 0.0
    %164 = vmatprep.mubr.f32.mxu0 0.0
    %165 = vmatmul.mubr.f32.gmra.mrb[0].mxu0 %v95
    %v166 = vpop.f32.mrb[0].mxu0
    %v167 = vadd.f32 0.0, %v166
    %v168 = vpop.f32.mrb[0].mxu0
    %169 = vmatprep.mubr.f32.mxu0 0.0
    %170 = vmatmul.mubr.f32.gmra.mrb[0].mxu0 %v98
    %v171 = vpop.f32.mrb[0].mxu0
    %v172 = vadd.f32 0.0, %v171
    %v173 = vpop.f32.mrb[0].mxu0
    %174 = vdwg.mxu0
    %s175 = scalar_lea.vmem %s1, 64
    %v176 = vld [vmem:[%s175] sm:$0xff]
    %v177 = vld [vmem:[%s175 + $0x8] sm:$0xff]
    %v178 = vld [vmem:[%s175 + $0x10] sm:$0xff]
    %v179 = vld [vmem:[%s175 + $0x18] sm:$0xff]
    %v180 = vld [vmem:[%s175 + $0x20] sm:$0xff]
    %v181 = vld [vmem:[%s175 + $0x28] sm:$0xff]
    %v182 = vld [vmem:[%s175 + $0x30] sm:$0xff]
    %v183 = vld [vmem:[%s175 + $0x38] sm:$0xff]
    %184 = vmatprep.subr.mxu0 0.0
    %185 = vmatpush1.msra.mxu0 %v176
    %186 = vmatprep.subr.mxu0 0.0
    %187 = vmatpush1.msra.mxu0 %v177
    %188 = vmatprep.subr.mxu0 0.0
    %189 = vmatpush1.msra.mxu0 %v178
    %190 = vmatprep.subr.mxu0 0.0
    %191 = vmatpush1.msra.mxu0 %v179
    %192 = vmatprep.subr.mxu0 0.0
    %193 = vmatpush1.msra.mxu0 %v180
    %194 = vmatprep.subr.mxu0 0.0
    %195 = vmatpush1.msra.mxu0 %v181
    %196 = vmatprep.subr.mxu0 0.0
    %197 = vmatpush1.msra.mxu0 %v182
    %198 = vmatprep.subr.mxu0 0.0
    %199 = vmatpush1.msra.mxu0 %v183
    %200 = vmatprep.subr.mxu0 0.0
    %201 = vmatpush1.msra.mxu0 0.0
    %202 = vmatprep.subr.mxu0 0.0
    %203 = vmatpush1.msra.mxu0 0.0
    %204 = vmatprep.subr.mxu0 0.0
    %205 = vmatpush1.msra.mxu0 0.0
    %206 = vmatprep.subr.mxu0 0.0
    %207 = vmatpush1.msra.mxu0 0.0
    %208 = vmatprep.subr.mxu0 0.0
    %209 = vmatpush1.msra.mxu0 0.0
    %210 = vmatprep.subr.mxu0 0.0
    %211 = vmatpush1.msra.mxu0 0.0
    %212 = vmatprep.subr.mxu0 0.0
    %213 = vmatpush1.msra.mxu0 0.0
    %214 = vmatprep.subr.mxu0 0.0
    %215 = vmatpush1.msra.mxu0 0.0
    %216 = vmatprep.subr.mxu0 0.0
    %217 = vmatpush1.msra.mxu0 0.0
    %218 = vmatprep.subr.mxu0 0.0
    %219 = vmatpush1.msra.mxu0 0.0
    %220 = vmatprep.subr.mxu0 0.0
    %221 = vmatpush1.msra.mxu0 0.0
    %222 = vmatprep.subr.mxu0 0.0
    %223 = vmatpush1.msra.mxu0 0.0
    %224 = vmatprep.subr.mxu0 0.0
    %225 = vmatpush1.msra.mxu0 0.0
    %226 = vmatprep.subr.mxu0 0.0
    %227 = vmatpush1.msra.mxu0 0.0
    %228 = vmatprep.subr.mxu0 0.0
    %229 = vmatpush1.msra.mxu0 0.0
    %230 = vmatprep.subr.mxu0 0.0
    %231 = vmatpush1.msra.mxu0 0.0
    %232 = vmatprep.subr.mxu0 0.0
    %233 = vmatpush1.msra.mxu0 0.0
    %234 = vmatprep.subr.mxu0 0.0
    %235 = vmatpush1.msra.mxu0 0.0
    %236 = vmatprep.subr.mxu0 0.0
    %237 = vmatpush1.msra.mxu0 0.0
    %238 = vmatprep.subr.mxu0 0.0
    %239 = vmatpush1.msra.mxu0 0.0
    %240 = vmatprep.subr.mxu0 0.0
    %241 = vmatpush1.msra.mxu0 0.0
    %242 = vmatprep.subr.mxu0 0.0
    %243 = vmatpush1.msra.mxu0 0.0
    %244 = vmatprep.subr.mxu0 0.0
    %245 = vmatpush1.msra.mxu0 0.0
    %246 = vmatprep.subr.mxu0 0.0
    %247 = vmatpush1.msra.mxu0 0.0
    %248 = vmatprep.mubr.f32.mxu0 0.0
    %249 = vmatmul.mubr.f32.gmra.mrb[0].mxu0 %v95
    %v250 = vpop.f32.mrb[0].mxu0
    %v251 = vadd.f32 0.0, %v250
    %v252 = vpop.f32.mrb[0].mxu0
    %253 = vmatprep.mubr.f32.mxu0 0.0
    %254 = vmatmul.mubr.f32.gmra.mrb[0].mxu0 %v98
    %v255 = vpop.f32.mrb[0].mxu0
    %v256 = vadd.f32 0.0, %v255
    %v257 = vpop.f32.mrb[0].mxu0
    %258 = vdwg.mxu0
    %vm259 = vcmask 130048
    %v261 = vsel %vm259, %v75, 0
    %v264 = vsel %vm259, %v76, 0
    %266 = vmatprep.subr.mxu0 0.0
    %267 = vmatpush1.msra.mxu0 %v251
    %268 = vmatprep.subr.mxu0 0.0
    %269 = vmatpush1.msra.mxu0 %v256
    %270 = vmatprep.subr.mxu0 0.0
    %271 = vmatpush1.msra.mxu0 0.0
    %272 = vmatprep.subr.mxu0 0.0
    %273 = vmatpush1.msra.mxu0 0.0
    %274 = vmatprep.subr.mxu0 0.0
    %275 = vmatpush1.msra.mxu0 0.0
    %276 = vmatprep.subr.mxu0 0.0
    %277 = vmatpush1.msra.mxu0 0.0
    %278 = vmatprep.subr.mxu0 0.0
    %279 = vmatpush1.msra.mxu0 0.0
    %280 = vmatprep.subr.mxu0 0.0
    %281 = vmatpush1.msra.mxu0 0.0
    %282 = vmatprep.subr.mxu0 0.0
    %283 = vmatpush1.msra.mxu0 0.0
    %284 = vmatprep.subr.mxu0 0.0
    %285 = vmatpush1.msra.mxu0 0.0
    %286 = vmatprep.subr.mxu0 0.0
    %287 = vmatpush1.msra.mxu0 0.0
    %288 = vmatprep.subr.mxu0 0.0
    %289 = vmatpush1.msra.mxu0 0.0
    %290 = vmatprep.subr.mxu0 0.0
    %291 = vmatpush1.msra.mxu0 0.0
    %292 = vmatprep.subr.mxu0 0.0
    %293 = vmatpush1.msra.mxu0 0.0
    %294 = vmatprep.subr.mxu0 0.0
    %295 = vmatpush1.msra.mxu0 0.0
    %296 = vmatprep.subr.mxu0 0.0
    %297 = vmatpush1.msra.mxu0 0.0
    %298 = vmatprep.subr.mxu0 0.0
    %299 = vmatpush1.msra.mxu0 0.0
    %300 = vmatprep.subr.mxu0 0.0
    %301 = vmatpush1.msra.mxu0 0.0
    %302 = vmatprep.subr.mxu0 0.0
    %303 = vmatpush1.msra.mxu0 0.0
    %304 = vmatprep.subr.mxu0 0.0
    %305 = vmatpush1.msra.mxu0 0.0
    %306 = vmatprep.subr.mxu0 0.0
    %307 = vmatpush1.msra.mxu0 0.0
    %308 = vmatprep.subr.mxu0 0.0
    %309 = vmatpush1.msra.mxu0 0.0
    %310 = vmatprep.subr.mxu0 0.0
    %311 = vmatpush1.msra.mxu0 0.0
    %312 = vmatprep.subr.mxu0 0.0
    %313 = vmatpush1.msra.mxu0 0.0
    %314 = vmatprep.subr.mxu0 0.0
    %315 = vmatpush1.msra.mxu0 0.0
    %316 = vmatprep.subr.mxu0 0.0
    %317 = vmatpush1.msra.mxu0 0.0
    %318 = vmatprep.subr.mxu0 0.0
    %319 = vmatpush1.msra.mxu0 0.0
    %320 = vmatprep.subr.mxu0 0.0
    %321 = vmatpush1.msra.mxu0 0.0
    %322 = vmatprep.subr.mxu0 0.0
    %323 = vmatpush1.msra.mxu0 0.0
    %324 = vmatprep.subr.mxu0 0.0
    %325 = vmatpush1.msra.mxu0 0.0
    %326 = vmatprep.subr.mxu0 0.0
    %327 = vmatpush1.msra.mxu0 0.0
    %328 = vmatprep.subr.mxu0 0.0
    %329 = vmatpush1.msra.mxu0 0.0
    %330 = vmatprep.mubr.f32.mxu0 0.0
    %331 = vmatmul.mubr.f32.gmra.mrb[0].mxu0 %v261
    %v332 = vpop.f32.mrb[0].mxu0
    %v333 = vadd.f32 0.0, %v332
    %v334 = vpop.f32.mrb[0].mxu0
    %335 = vmatprep.mubr.f32.mxu0 0.0
    %336 = vmatmul.mubr.f32.gmra.mrb[0].mxu0 %v264
    %v337 = vpop.f32.mrb[0].mxu0
    %v338 = vadd.f32 0.0, %v337
    %v339 = vpop.f32.mrb[0].mxu0
    %340 = vdwg.mxu0
    %v342 = vsel %vm259, %v71, 0
    %v345 = vsel %vm259, %v72, 0
    %347 = vmatprep.subr.mxu0 0.0
    %348 = vmatpush1.msra.mxu0 %v167
    %349 = vmatprep.subr.mxu0 0.0
    %350 = vmatpush1.msra.mxu0 %v172
    %351 = vmatprep.subr.mxu0 0.0
    %352 = vmatpush1.msra.mxu0 0.0
    %353 = vmatprep.subr.mxu0 0.0
    %354 = vmatpush1.msra.mxu0 0.0
    %355 = vmatprep.subr.mxu0 0.0
    %356 = vmatpush1.msra.mxu0 0.0
    %357 = vmatprep.subr.mxu0 0.0
    %358 = vmatpush1.msra.mxu0 0.0
    %359 = vmatprep.subr.mxu0 0.0
    %360 = vmatpush1.msra.mxu0 0.0
    %361 = vmatprep.subr.mxu0 0.0
    %362 = vmatpush1.msra.mxu0 0.0
    %363 = vmatprep.subr.mxu0 0.0
    %364 = vmatpush1.msra.mxu0 0.0
    %365 = vmatprep.subr.mxu0 0.0
    %366 = vmatpush1.msra.mxu0 0.0
    %367 = vmatprep.subr.mxu0 0.0
    %368 = vmatpush1.msra.mxu0 0.0
    %369 = vmatprep.subr.mxu0 0.0
    %370 = vmatpush1.msra.mxu0 0.0
    %371 = vmatprep.subr.mxu0 0.0
    %372 = vmatpush1.msra.mxu0 0.0
    %373 = vmatprep.subr.mxu0 0.0
    %374 = vmatpush1.msra.mxu0 0.0
    %375 = vmatprep.subr.mxu0 0.0
    %376 = vmatpush1.msra.mxu0 0.0
    %377 = vmatprep.subr.mxu0 0.0
    %378 = vmatpush1.msra.mxu0 0.0
    %379 = vmatprep.subr.mxu0 0.0
    %380 = vmatpush1.msra.mxu0 0.0
    %381 = vmatprep.subr.mxu0 0.0
    %382 = vmatpush1.msra.mxu0 0.0
    %383 = vmatprep.subr.mxu0 0.0
    %384 = vmatpush1.msra.mxu0 0.0
    %385 = vmatprep.subr.mxu0 0.0
    %386 = vmatpush1.msra.mxu0 0.0
    %387 = vmatprep.subr.mxu0 0.0
    %388 = vmatpush1.msra.mxu0 0.0
    %389 = vmatprep.subr.mxu0 0.0
    %390 = vmatpush1.msra.mxu0 0.0
    %391 = vmatprep.subr.mxu0 0.0
    %392 = vmatpush1.msra.mxu0 0.0
    %393 = vmatprep.subr.mxu0 0.0
    %394 = vmatpush1.msra.mxu0 0.0
    %395 = vmatprep.subr.mxu0 0.0
    %396 = vmatpush1.msra.mxu0 0.0
    %397 = vmatprep.subr.mxu0 0.0
    %398 = vmatpush1.msra.mxu0 0.0
    %399 = vmatprep.subr.mxu0 0.0
    %400 = vmatpush1.msra.mxu0 0.0
    %401 = vmatprep.subr.mxu0 0.0
    %402 = vmatpush1.msra.mxu0 0.0
    %403 = vmatprep.subr.mxu0 0.0
    %404 = vmatpush1.msra.mxu0 0.0
    %405 = vmatprep.subr.mxu0 0.0
    %406 = vmatpush1.msra.mxu0 0.0
    %407 = vmatprep.subr.mxu0 0.0
    %408 = vmatpush1.msra.mxu0 0.0
    %409 = vmatprep.subr.mxu0 0.0
    %410 = vmatpush1.msra.mxu0 0.0
    %411 = vmatprep.mubr.f32.mxu0 0.0
    %412 = vmatmul.mubr.f32.gmra.mrb[0].mxu0 %v342
    %v413 = vpop.f32.mrb[0].mxu0
    %v414 = vadd.f32 %v333, %v413
    %v415 = vpop.f32.mrb[0].mxu0
    %416 = vmatprep.mubr.f32.mxu0 0.0
    %417 = vmatmul.mubr.f32.gmra.mrb[0].mxu0 %v345
    %v418 = vpop.f32.mrb[0].mxu0
    %v419 = vadd.f32 %v338, %v418
    %v420 = vpop.f32.mrb[0].mxu0
    %421 = vdwg.mxu0
    %s422 = scalar_lea.vmem %s1, 128
    %v423 = vld [vmem:[%s422] sm:$0xff]
    %v424 = vld [vmem:[%s422 + $0x8] sm:$0xff]
    %v425 = vld [vmem:[%s422 + $0x10] sm:$0xff]
    %v426 = vld [vmem:[%s422 + $0x18] sm:$0xff]
    %v427 = vld [vmem:[%s422 + $0x20] sm:$0xff]
    %v428 = vld [vmem:[%s422 + $0x28] sm:$0xff]
    %v429 = vld [vmem:[%s422 + $0x30] sm:$0xff]
    %v430 = vld [vmem:[%s422 + $0x38] sm:$0xff]
    %431 = vmatprep.subr.mxu0 0.0
    %432 = vmatpush1.msra.mxu0 %v423
    %433 = vmatprep.subr.mxu0 0.0
    %434 = vmatpush1.msra.mxu0 %v424
    %435 = vmatprep.subr.mxu0 0.0
    %436 = vmatpush1.msra.mxu0 %v425
    %437 = vmatprep.subr.mxu0 0.0
    %438 = vmatpush1.msra.mxu0 %v426
    %439 = vmatprep.subr.mxu0 0.0
    %440 = vmatpush1.msra.mxu0 %v427
    %441 = vmatprep.subr.mxu0 0.0
    %442 = vmatpush1.msra.mxu0 %v428
    %443 = vmatprep.subr.mxu0 0.0
    %444 = vmatpush1.msra.mxu0 %v429
    %445 = vmatprep.subr.mxu0 0.0
    %446 = vmatpush1.msra.mxu0 %v430
    %447 = vmatprep.subr.mxu0 0.0
    %448 = vmatpush1.msra.mxu0 0.0
    %449 = vmatprep.subr.mxu0 0.0
    %450 = vmatpush1.msra.mxu0 0.0
    %451 = vmatprep.subr.mxu0 0.0
    %452 = vmatpush1.msra.mxu0 0.0
    %453 = vmatprep.subr.mxu0 0.0
    %454 = vmatpush1.msra.mxu0 0.0
    %455 = vmatprep.subr.mxu0 0.0
    %456 = vmatpush1.msra.mxu0 0.0
    %457 = vmatprep.subr.mxu0 0.0
    %458 = vmatpush1.msra.mxu0 0.0
    %459 = vmatprep.subr.mxu0 0.0
    %460 = vmatpush1.msra.mxu0 0.0
    %461 = vmatprep.subr.mxu0 0.0
    %462 = vmatpush1.msra.mxu0 0.0
    %463 = vmatprep.subr.mxu0 0.0
    %464 = vmatpush1.msra.mxu0 0.0
    %465 = vmatprep.subr.mxu0 0.0
    %466 = vmatpush1.msra.mxu0 0.0
    %467 = vmatprep.subr.mxu0 0.0
    %468 = vmatpush1.msra.mxu0 0.0
    %469 = vmatprep.subr.mxu0 0.0
    %470 = vmatpush1.msra.mxu0 0.0
    %471 = vmatprep.subr.mxu0 0.0
    %472 = vmatpush1.msra.mxu0 0.0
    %473 = vmatprep.subr.mxu0 0.0
    %474 = vmatpush1.msra.mxu0 0.0
    %475 = vmatprep.subr.mxu0 0.0
    %476 = vmatpush1.msra.mxu0 0.0
    %477 = vmatprep.subr.mxu0 0.0
    %478 = vmatpush1.msra.mxu0 0.0
    %479 = vmatprep.subr.mxu0 0.0
    %480 = vmatpush1.msra.mxu0 0.0
    %481 = vmatprep.subr.mxu0 0.0
    %482 = vmatpush1.msra.mxu0 0.0
    %483 = vmatprep.subr.mxu0 0.0
    %484 = vmatpush1.msra.mxu0 0.0
    %485 = vmatprep.subr.mxu0 0.0
    %486 = vmatpush1.msra.mxu0 0.0
    %487 = vmatprep.subr.mxu0 0.0
    %488 = vmatpush1.msra.mxu0 0.0
    %489 = vmatprep.subr.mxu0 0.0
    %490 = vmatpush1.msra.mxu0 0.0
    %491 = vmatprep.subr.mxu0 0.0
    %492 = vmatpush1.msra.mxu0 0.0
    %493 = vmatprep.subr.mxu0 0.0
    %494 = vmatpush1.msra.mxu0 0.0
    %495 = vmatprep.mubr.f32.mxu0 0.0
    %496 = vmatmul.mubr.f32.gmra.mrb[0].mxu0 %v95
    %v497 = vpop.f32.mrb[0].mxu0
    %v498 = vadd.f32 0.0, %v497
    %v499 = vpop.f32.mrb[0].mxu0
    %500 = vmatprep.mubr.f32.mxu0 0.0
    %501 = vmatmul.mubr.f32.gmra.mrb[0].mxu0 %v98
    %v502 = vpop.f32.mrb[0].mxu0
    %v503 = vadd.f32 0.0, %v502
    %v504 = vpop.f32.mrb[0].mxu0
    %505 = vdwg.mxu0
    %v507 = vsel %vm259, %v83, 0
    %v510 = vsel %vm259, %v84, 0
    %512 = vmatprep.subr.mxu0 0.0
    %513 = vmatpush1.msra.mxu0 %v498
    %514 = vmatprep.subr.mxu0 0.0
    %515 = vmatpush1.msra.mxu0 %v503
    %516 = vmatprep.subr.mxu0 0.0
    %517 = vmatpush1.msra.mxu0 0.0
    %518 = vmatprep.subr.mxu0 0.0
    %519 = vmatpush1.msra.mxu0 0.0
    %520 = vmatprep.subr.mxu0 0.0
    %521 = vmatpush1.msra.mxu0 0.0
    %522 = vmatprep.subr.mxu0 0.0
    %523 = vmatpush1.msra.mxu0 0.0
    %524 = vmatprep.subr.mxu0 0.0
    %525 = vmatpush1.msra.mxu0 0.0
    %526 = vmatprep.subr.mxu0 0.0
    %527 = vmatpush1.msra.mxu0 0.0
    %528 = vmatprep.subr.mxu0 0.0
    %529 = vmatpush1.msra.mxu0 0.0
    %530 = vmatprep.subr.mxu0 0.0
    %531 = vmatpush1.msra.mxu0 0.0
    %532 = vmatprep.subr.mxu0 0.0
    %533 = vmatpush1.msra.mxu0 0.0
    %534 = vmatprep.subr.mxu0 0.0
    %535 = vmatpush1.msra.mxu0 0.0
    %536 = vmatprep.subr.mxu0 0.0
    %537 = vmatpush1.msra.mxu0 0.0
    %538 = vmatprep.subr.mxu0 0.0
    %539 = vmatpush1.msra.mxu0 0.0
    %540 = vmatprep.subr.mxu0 0.0
    %541 = vmatpush1.msra.mxu0 0.0
    %542 = vmatprep.subr.mxu0 0.0
    %543 = vmatpush1.msra.mxu0 0.0
    %544 = vmatprep.subr.mxu0 0.0
    %545 = vmatpush1.msra.mxu0 0.0
    %546 = vmatprep.subr.mxu0 0.0
    %547 = vmatpush1.msra.mxu0 0.0
    %548 = vmatprep.subr.mxu0 0.0
    %549 = vmatpush1.msra.mxu0 0.0
    %550 = vmatprep.subr.mxu0 0.0
    %551 = vmatpush1.msra.mxu0 0.0
    %552 = vmatprep.subr.mxu0 0.0
    %553 = vmatpush1.msra.mxu0 0.0
    %554 = vmatprep.subr.mxu0 0.0
    %555 = vmatpush1.msra.mxu0 0.0
    %556 = vmatprep.subr.mxu0 0.0
    %557 = vmatpush1.msra.mxu0 0.0
    %558 = vmatprep.subr.mxu0 0.0
    %559 = vmatpush1.msra.mxu0 0.0
    %560 = vmatprep.subr.mxu0 0.0
    %561 = vmatpush1.msra.mxu0 0.0
    %562 = vmatprep.subr.mxu0 0.0
    %563 = vmatpush1.msra.mxu0 0.0
    %564 = vmatprep.subr.mxu0 0.0
    %565 = vmatpush1.msra.mxu0 0.0
    %566 = vmatprep.subr.mxu0 0.0
    %567 = vmatpush1.msra.mxu0 0.0
    %568 = vmatprep.subr.mxu0 0.0
    %569 = vmatpush1.msra.mxu0 0.0
    %570 = vmatprep.subr.mxu0 0.0
    %571 = vmatpush1.msra.mxu0 0.0
    %572 = vmatprep.subr.mxu0 0.0
    %573 = vmatpush1.msra.mxu0 0.0
    %574 = vmatprep.subr.mxu0 0.0
    %575 = vmatpush1.msra.mxu0 0.0
    %576 = vmatprep.mubr.f32.mxu0 0.0
    %577 = vmatmul.mubr.f32.gmra.mrb[0].mxu0 %v507
    %v578 = vpop.f32.mrb[0].mxu0
    %v579 = vadd.f32 0.0, %v578
    %v580 = vpop.f32.mrb[0].mxu0
    %581 = vmatprep.mubr.f32.mxu0 0.0
    %582 = vmatmul.mubr.f32.gmra.mrb[0].mxu0 %v510
    %v583 = vpop.f32.mrb[0].mxu0
    %v584 = vadd.f32 0.0, %v583
    %v585 = vpop.f32.mrb[0].mxu0
    %586 = vdwg.mxu0
    %v587 = vadd.f32 %v414, %v579
    %v588 = vadd.f32 %v419, %v584
    %v590 = vsel %vm93, %v58, 0
    %v593 = vsel %vm93, %v59, 0
    %595 = vmatprep.subr.mxu0 0.0
    %596 = vmatpush1.msra.mxu0 %v85
    %597 = vmatprep.subr.mxu0 0.0
    %598 = vmatpush1.msra.mxu0 %v86
    %599 = vmatprep.subr.mxu0 0.0
    %600 = vmatpush1.msra.mxu0 %v87
    %601 = vmatprep.subr.mxu0 0.0
    %602 = vmatpush1.msra.mxu0 %v88
    %603 = vmatprep.subr.mxu0 0.0
    %604 = vmatpush1.msra.mxu0 %v89
    %605 = vmatprep.subr.mxu0 0.0
    %606 = vmatpush1.msra.mxu0 %v90
    %607 = vmatprep.subr.mxu0 0.0
    %608 = vmatpush1.msra.mxu0 %v91
    %609 = vmatprep.subr.mxu0 0.0
    %610 = vmatpush1.msra.mxu0 %v92
    %611 = vmatprep.subr.mxu0 0.0
    %612 = vmatpush1.msra.mxu0 0.0
    %613 = vmatprep.subr.mxu0 0.0
    %614 = vmatpush1.msra.mxu0 0.0
    %615 = vmatprep.subr.mxu0 0.0
    %616 = vmatpush1.msra.mxu0 0.0
    %617 = vmatprep.subr.mxu0 0.0
    %618 = vmatpush1.msra.mxu0 0.0
    %619 = vmatprep.subr.mxu0 0.0
    %620 = vmatpush1.msra.mxu0 0.0
    %621 = vmatprep.subr.mxu0 0.0
    %622 = vmatpush1.msra.mxu0 0.0
    %623 = vmatprep.subr.mxu0 0.0
    %624 = vmatpush1.msra.mxu0 0.0
    %625 = vmatprep.subr.mxu0 0.0
    %626 = vmatpush1.msra.mxu0 0.0
    %627 = vmatprep.subr.mxu0 0.0
    %628 = vmatpush1.msra.mxu0 0.0
    %629 = vmatprep.subr.mxu0 0.0
    %630 = vmatpush1.msra.mxu0 0.0
    %631 = vmatprep.subr.mxu0 0.0
    %632 = vmatpush1.msra.mxu0 0.0
    %633 = vmatprep.subr.mxu0 0.0
    %634 = vmatpush1.msra.mxu0 0.0
    %635 = vmatprep.subr.mxu0 0.0
    %636 = vmatpush1.msra.mxu0 0.0
    %637 = vmatprep.subr.mxu0 0.0
    %638 = vmatpush1.msra.mxu0 0.0
    %639 = vmatprep.subr.mxu0 0.0
    %640 = vmatpush1.msra.mxu0 0.0
    %641 = vmatprep.subr.mxu0 0.0
    %642 = vmatpush1.msra.mxu0 0.0
    %643 = vmatprep.subr.mxu0 0.0
    %644 = vmatpush1.msra.mxu0 0.0
    %645 = vmatprep.subr.mxu0 0.0
    %646 = vmatpush1.msra.mxu0 0.0
    %647 = vmatprep.subr.mxu0 0.0
    %648 = vmatpush1.msra.mxu0 0.0
    %649 = vmatprep.subr.mxu0 0.0
    %650 = vmatpush1.msra.mxu0 0.0
    %651 = vmatprep.subr.mxu0 0.0
    %652 = vmatpush1.msra.mxu0 0.0
    %653 = vmatprep.subr.mxu0 0.0
    %654 = vmatpush1.msra.mxu0 0.0
    %655 = vmatprep.subr.mxu0 0.0
    %656 = vmatpush1.msra.mxu0 0.0
    %657 = vmatprep.subr.mxu0 0.0
    %658 = vmatpush1.msra.mxu0 0.0
    %659 = vmatprep.mubr.f32.mxu0 0.0
    %660 = vmatmul.mubr.f32.gmra.mrb[0].mxu0 %v590
    %v661 = vpop.f32.mrb[0].mxu0
    %v662 = vadd.f32 0.0, %v661
    %v663 = vpop.f32.mrb[0].mxu0
    %664 = vmatprep.mubr.f32.mxu0 0.0
    %665 = vmatmul.mubr.f32.gmra.mrb[0].mxu0 %v593
    %v666 = vpop.f32.mrb[0].mxu0
    %v667 = vadd.f32 0.0, %v666
    %v668 = vpop.f32.mrb[0].mxu0
    %669 = vdwg.mxu0
    %670 = vmatprep.subr.mxu0 0.0
    %671 = vmatpush1.msra.mxu0 %v176
    %672 = vmatprep.subr.mxu0 0.0
    %673 = vmatpush1.msra.mxu0 %v177
    %674 = vmatprep.subr.mxu0 0.0
    %675 = vmatpush1.msra.mxu0 %v178
    %676 = vmatprep.subr.mxu0 0.0
    %677 = vmatpush1.msra.mxu0 %v179
    %678 = vmatprep.subr.mxu0 0.0
    %679 = vmatpush1.msra.mxu0 %v180
    %680 = vmatprep.subr.mxu0 0.0
    %681 = vmatpush1.msra.mxu0 %v181
    %682 = vmatprep.subr.mxu0 0.0
    %683 = vmatpush1.msra.mxu0 %v182
    %684 = vmatprep.subr.mxu0 0.0
    %685 = vmatpush1.msra.mxu0 %v183
    %686 = vmatprep.subr.mxu0 0.0
    %687 = vmatpush1.msra.mxu0 0.0
    %688 = vmatprep.subr.mxu0 0.0
    %689 = vmatpush1.msra.mxu0 0.0
    %690 = vmatprep.subr.mxu0 0.0
    %691 = vmatpush1.msra.mxu0 0.0
    %692 = vmatprep.subr.mxu0 0.0
    %693 = vmatpush1.msra.mxu0 0.0
    %694 = vmatprep.subr.mxu0 0.0
    %695 = vmatpush1.msra.mxu0 0.0
    %696 = vmatprep.subr.mxu0 0.0
    %697 = vmatpush1.msra.mxu0 0.0
    %698 = vmatprep.subr.mxu0 0.0
    %699 = vmatpush1.msra.mxu0 0.0
    %700 = vmatprep.subr.mxu0 0.0
    %701 = vmatpush1.msra.mxu0 0.0
    %702 = vmatprep.subr.mxu0 0.0
    %703 = vmatpush1.msra.mxu0 0.0
    %704 = vmatprep.subr.mxu0 0.0
    %705 = vmatpush1.msra.mxu0 0.0
    %706 = vmatprep.subr.mxu0 0.0
    %707 = vmatpush1.msra.mxu0 0.0
    %708 = vmatprep.subr.mxu0 0.0
    %709 = vmatpush1.msra.mxu0 0.0
    %710 = vmatprep.subr.mxu0 0.0
    %711 = vmatpush1.msra.mxu0 0.0
    %712 = vmatprep.subr.mxu0 0.0
    %713 = vmatpush1.msra.mxu0 0.0
    %714 = vmatprep.subr.mxu0 0.0
    %715 = vmatpush1.msra.mxu0 0.0
    %716 = vmatprep.subr.mxu0 0.0
    %717 = vmatpush1.msra.mxu0 0.0
    %718 = vmatprep.subr.mxu0 0.0
    %719 = vmatpush1.msra.mxu0 0.0
    %720 = vmatprep.subr.mxu0 0.0
    %721 = vmatpush1.msra.mxu0 0.0
    %722 = vmatprep.subr.mxu0 0.0
    %723 = vmatpush1.msra.mxu0 0.0
    %724 = vmatprep.subr.mxu0 0.0
    %725 = vmatpush1.msra.mxu0 0.0
    %726 = vmatprep.subr.mxu0 0.0
    %727 = vmatpush1.msra.mxu0 0.0
    %728 = vmatprep.subr.mxu0 0.0
    %729 = vmatpush1.msra.mxu0 0.0
    %730 = vmatprep.subr.mxu0 0.0
    %731 = vmatpush1.msra.mxu0 0.0
    %732 = vmatprep.subr.mxu0 0.0
    %733 = vmatpush1.msra.mxu0 0.0
    %734 = vmatprep.mubr.f32.mxu0 0.0
    %735 = vmatmul.mubr.f32.gmra.mrb[0].mxu0 %v590
    %v736 = vpop.f32.mrb[0].mxu0
    %v737 = vadd.f32 0.0, %v736
    %v738 = vpop.f32.mrb[0].mxu0
    %739 = vmatprep.mubr.f32.mxu0 0.0
    %740 = vmatmul.mubr.f32.gmra.mrb[0].mxu0 %v593
    %v741 = vpop.f32.mrb[0].mxu0
    %v742 = vadd.f32 0.0, %v741
    %v743 = vpop.f32.mrb[0].mxu0
    %744 = vdwg.mxu0
    %745 = vmatprep.subr.mxu0 0.0
    %746 = vmatpush1.msra.mxu0 %v737
    %747 = vmatprep.subr.mxu0 0.0
    %748 = vmatpush1.msra.mxu0 %v742
    %749 = vmatprep.subr.mxu0 0.0
    %750 = vmatpush1.msra.mxu0 0.0
    %751 = vmatprep.subr.mxu0 0.0
    %752 = vmatpush1.msra.mxu0 0.0
    %753 = vmatprep.subr.mxu0 0.0
    %754 = vmatpush1.msra.mxu0 0.0
    %755 = vmatprep.subr.mxu0 0.0
    %756 = vmatpush1.msra.mxu0 0.0
    %757 = vmatprep.subr.mxu0 0.0
    %758 = vmatpush1.msra.mxu0 0.0
    %759 = vmatprep.subr.mxu0 0.0
    %760 = vmatpush1.msra.mxu0 0.0
    %761 = vmatprep.subr.mxu0 0.0
    %762 = vmatpush1.msra.mxu0 0.0
    %763 = vmatprep.subr.mxu0 0.0
    %764 = vmatpush1.msra.mxu0 0.0
    %765 = vmatprep.subr.mxu0 0.0
    %766 = vmatpush1.msra.mxu0 0.0
    %767 = vmatprep.subr.mxu0 0.0
    %768 = vmatpush1.msra.mxu0 0.0
    %769 = vmatprep.subr.mxu0 0.0
    %770 = vmatpush1.msra.mxu0 0.0
    %771 = vmatprep.subr.mxu0 0.0
    %772 = vmatpush1.msra.mxu0 0.0
    %773 = vmatprep.subr.mxu0 0.0
    %774 = vmatpush1.msra.mxu0 0.0
    %775 = vmatprep.subr.mxu0 0.0
    %776 = vmatpush1.msra.mxu0 0.0
    %777 = vmatprep.subr.mxu0 0.0
    %778 = vmatpush1.msra.mxu0 0.0
    %779 = vmatprep.subr.mxu0 0.0
    %780 = vmatpush1.msra.mxu0 0.0
    %781 = vmatprep.subr.mxu0 0.0
    %782 = vmatpush1.msra.mxu0 0.0
    %783 = vmatprep.subr.mxu0 0.0
    %784 = vmatpush1.msra.mxu0 0.0
    %785 = vmatprep.subr.mxu0 0.0
    %786 = vmatpush1.msra.mxu0 0.0
    %787 = vmatprep.subr.mxu0 0.0
    %788 = vmatpush1.msra.mxu0 0.0
    %789 = vmatprep.subr.mxu0 0.0
    %790 = vmatpush1.msra.mxu0 0.0
    %791 = vmatprep.subr.mxu0 0.0
    %792 = vmatpush1.msra.mxu0 0.0
    %793 = vmatprep.subr.mxu0 0.0
    %794 = vmatpush1.msra.mxu0 0.0
    %795 = vmatprep.subr.mxu0 0.0
    %796 = vmatpush1.msra.mxu0 0.0
    %797 = vmatprep.subr.mxu0 0.0
    %798 = vmatpush1.msra.mxu0 0.0
    %799 = vmatprep.subr.mxu0 0.0
    %800 = vmatpush1.msra.mxu0 0.0
    %801 = vmatprep.subr.mxu0 0.0
    %802 = vmatpush1.msra.mxu0 0.0
    %803 = vmatprep.subr.mxu0 0.0
    %804 = vmatpush1.msra.mxu0 0.0
    %805 = vmatprep.subr.mxu0 0.0
    %806 = vmatpush1.msra.mxu0 0.0
    %807 = vmatprep.subr.mxu0 0.0
    %808 = vmatpush1.msra.mxu0 0.0
    %809 = vmatprep.mubr.f32.mxu0 0.0
    %810 = vmatmul.mubr.f32.gmra.mrb[0].mxu0 %v261
    %v811 = vpop.f32.mrb[0].mxu0
    %v812 = vadd.f32 0.0, %v811
    %v813 = vpop.f32.mrb[0].mxu0
    %814 = vmatprep.mubr.f32.mxu0 0.0
    %815 = vmatmul.mubr.f32.gmra.mrb[0].mxu0 %v264
    %v816 = vpop.f32.mrb[0].mxu0
    %v817 = vadd.f32 0.0, %v816
    %v818 = vpop.f32.mrb[0].mxu0
    %819 = vdwg.mxu0
    %820 = vmatprep.subr.mxu0 0.0
    %821 = vmatpush1.msra.mxu0 %v662
    %822 = vmatprep.subr.mxu0 0.0
    %823 = vmatpush1.msra.mxu0 %v667
    %824 = vmatprep.subr.mxu0 0.0
    %825 = vmatpush1.msra.mxu0 0.0
    %826 = vmatprep.subr.mxu0 0.0
    %827 = vmatpush1.msra.mxu0 0.0
    %828 = vmatprep.subr.mxu0 0.0
    %829 = vmatpush1.msra.mxu0 0.0
    %830 = vmatprep.subr.mxu0 0.0
    %831 = vmatpush1.msra.mxu0 0.0
    %832 = vmatprep.subr.mxu0 0.0
    %833 = vmatpush1.msra.mxu0 0.0
    %834 = vmatprep.subr.mxu0 0.0
    %835 = vmatpush1.msra.mxu0 0.0
    %836 = vmatprep.subr.mxu0 0.0
    %837 = vmatpush1.msra.mxu0 0.0
    %838 = vmatprep.subr.mxu0 0.0
    %839 = vmatpush1.msra.mxu0 0.0
    %840 = vmatprep.subr.mxu0 0.0
    %841 = vmatpush1.msra.mxu0 0.0
    %842 = vmatprep.subr.mxu0 0.0
    %843 = vmatpush1.msra.mxu0 0.0
    %844 = vmatprep.subr.mxu0 0.0
    %845 = vmatpush1.msra.mxu0 0.0
    %846 = vmatprep.subr.mxu0 0.0
    %847 = vmatpush1.msra.mxu0 0.0
    %848 = vmatprep.subr.mxu0 0.0
    %849 = vmatpush1.msra.mxu0 0.0
    %850 = vmatprep.subr.mxu0 0.0
    %851 = vmatpush1.msra.mxu0 0.0
    %852 = vmatprep.subr.mxu0 0.0
    %853 = vmatpush1.msra.mxu0 0.0
    %854 = vmatprep.subr.mxu0 0.0
    %855 = vmatpush1.msra.mxu0 0.0
    %856 = vmatprep.subr.mxu0 0.0
    %857 = vmatpush1.msra.mxu0 0.0
    %858 = vmatprep.subr.mxu0 0.0
    %859 = vmatpush1.msra.mxu0 0.0
    %860 = vmatprep.subr.mxu0 0.0
    %861 = vmatpush1.msra.mxu0 0.0
    %862 = vmatprep.subr.mxu0 0.0
    %863 = vmatpush1.msra.mxu0 0.0
    %864 = vmatprep.subr.mxu0 0.0
    %865 = vmatpush1.msra.mxu0 0.0
    %866 = vmatprep.subr.mxu0 0.0
    %867 = vmatpush1.msra.mxu0 0.0
    %868 = vmatprep.subr.mxu0 0.0
    %869 = vmatpush1.msra.mxu0 0.0
    %870 = vmatprep.subr.mxu0 0.0
    %871 = vmatpush1.msra.mxu0 0.0
    %872 = vmatprep.subr.mxu0 0.0
    %873 = vmatpush1.msra.mxu0 0.0
    %874 = vmatprep.subr.mxu0 0.0
    %875 = vmatpush1.msra.mxu0 0.0
    %876 = vmatprep.subr.mxu0 0.0
    %877 = vmatpush1.msra.mxu0 0.0
    %878 = vmatprep.subr.mxu0 0.0
    %879 = vmatpush1.msra.mxu0 0.0
    %880 = vmatprep.subr.mxu0 0.0
    %881 = vmatpush1.msra.mxu0 0.0
    %882 = vmatprep.subr.mxu0 0.0
    %883 = vmatpush1.msra.mxu0 0.0
    %884 = vmatprep.mubr.f32.mxu0 0.0
    %885 = vmatmul.mubr.f32.gmra.mrb[0].mxu0 %v342
    %v886 = vpop.f32.mrb[0].mxu0
    %v887 = vadd.f32 %v812, %v886
    %v888 = vpop.f32.mrb[0].mxu0
    %889 = vmatprep.mubr.f32.mxu0 0.0
    %890 = vmatmul.mubr.f32.gmra.mrb[0].mxu0 %v345
    %v891 = vpop.f32.mrb[0].mxu0
    %v892 = vadd.f32 %v817, %v891
    %v893 = vpop.f32.mrb[0].mxu0
    %894 = vdwg.mxu0
    %895 = vmatprep.subr.mxu0 0.0
    %896 = vmatpush1.msra.mxu0 %v423
    %897 = vmatprep.subr.mxu0 0.0
    %898 = vmatpush1.msra.mxu0 %v424
    %899 = vmatprep.subr.mxu0 0.0
    %900 = vmatpush1.msra.mxu0 %v425
    %901 = vmatprep.subr.mxu0 0.0
    %902 = vmatpush1.msra.mxu0 %v426
    %903 = vmatprep.subr.mxu0 0.0
    %904 = vmatpush1.msra.mxu0 %v427
    %905 = vmatprep.subr.mxu0 0.0
    %906 = vmatpush1.msra.mxu0 %v428
    %907 = vmatprep.subr.mxu0 0.0
    %908 = vmatpush1.msra.mxu0 %v429
    %909 = vmatprep.subr.mxu0 0.0
    %910 = vmatpush1.msra.mxu0 %v430
    %911 = vmatprep.subr.mxu0 0.0
    %912 = vmatpush1.msra.mxu0 0.0
    %913 = vmatprep.subr.mxu0 0.0
    %914 = vmatpush1.msra.mxu0 0.0
    %915 = vmatprep.subr.mxu0 0.0
    %916 = vmatpush1.msra.mxu0 0.0
    %917 = vmatprep.subr.mxu0 0.0
    %918 = vmatpush1.msra.mxu0 0.0
    %919 = vmatprep.subr.mxu0 0.0
    %920 = vmatpush1.msra.mxu0 0.0
    %921 = vmatprep.subr.mxu0 0.0
    %922 = vmatpush1.msra.mxu0 0.0
    %923 = vmatprep.subr.mxu0 0.0
    %924 = vmatpush1.msra.mxu0 0.0
    %925 = vmatprep.subr.mxu0 0.0
    %926 = vmatpush1.msra.mxu0 0.0
    %927 = vmatprep.subr.mxu0 0.0
    %928 = vmatpush1.msra.mxu0 0.0
    %929 = vmatprep.subr.mxu0 0.0
    %930 = vmatpush1.msra.mxu0 0.0
    %931 = vmatprep.subr.mxu0 0.0
    %932 = vmatpush1.msra.mxu0 0.0
    %933 = vmatprep.subr.mxu0 0.0
    %934 = vmatpush1.msra.mxu0 0.0
    %935 = vmatprep.subr.mxu0 0.0
    %936 = vmatpush1.msra.mxu0 0.0
    %937 = vmatprep.subr.mxu0 0.0
    %938 = vmatpush1.msra.mxu0 0.0
    %939 = vmatprep.subr.mxu0 0.0
    %940 = vmatpush1.msra.mxu0 0.0
    %941 = vmatprep.subr.mxu0 0.0
    %942 = vmatpush1.msra.mxu0 0.0
    %943 = vmatprep.subr.mxu0 0.0
    %944 = vmatpush1.msra.mxu0 0.0
    %945 = vmatprep.subr.mxu0 0.0
    %946 = vmatpush1.msra.mxu0 0.0
    %947 = vmatprep.subr.mxu0 0.0
    %948 = vmatpush1.msra.mxu0 0.0
    %949 = vmatprep.subr.mxu0 0.0
    %950 = vmatpush1.msra.mxu0 0.0
    %951 = vmatprep.subr.mxu0 0.0
    %952 = vmatpush1.msra.mxu0 0.0
    %953 = vmatprep.subr.mxu0 0.0
    %954 = vmatpush1.msra.mxu0 0.0
    %955 = vmatprep.subr.mxu0 0.0
    %956 = vmatpush1.msra.mxu0 0.0
    %957 = vmatprep.subr.mxu0 0.0
    %958 = vmatpush1.msra.mxu0 0.0
    %959 = vmatprep.mubr.f32.mxu0 0.0
    %960 = vmatmul.mubr.f32.gmra.mrb[0].mxu0 %v590
    %v961 = vpop.f32.mrb[0].mxu0
    %v962 = vadd.f32 0.0, %v961
    %v963 = vpop.f32.mrb[0].mxu0
    %964 = vmatprep.mubr.f32.mxu0 0.0
    %965 = vmatmul.mubr.f32.gmra.mrb[0].mxu0 %v593
    %v966 = vpop.f32.mrb[0].mxu0
    %v967 = vadd.f32 0.0, %v966
    %v968 = vpop.f32.mrb[0].mxu0
    %969 = vdwg.mxu0
    %970 = vmatprep.subr.mxu0 0.0
    %971 = vmatpush1.msra.mxu0 %v962
    %972 = vmatprep.subr.mxu0 0.0
    %973 = vmatpush1.msra.mxu0 %v967
    %974 = vmatprep.subr.mxu0 0.0
    %975 = vmatpush1.msra.mxu0 0.0
    %976 = vmatprep.subr.mxu0 0.0
    %977 = vmatpush1.msra.mxu0 0.0
    %978 = vmatprep.subr.mxu0 0.0
    %979 = vmatpush1.msra.mxu0 0.0
    %980 = vmatprep.subr.mxu0 0.0
    %981 = vmatpush1.msra.mxu0 0.0
    %982 = vmatprep.subr.mxu0 0.0
    %983 = vmatpush1.msra.mxu0 0.0
    %984 = vmatprep.subr.mxu0 0.0
    %985 = vmatpush1.msra.mxu0 0.0
    %986 = vmatprep.subr.mxu0 0.0
    %987 = vmatpush1.msra.mxu0 0.0
    %988 = vmatprep.subr.mxu0 0.0
    %989 = vmatpush1.msra.mxu0 0.0
    %990 = vmatprep.subr.mxu0 0.0
    %991 = vmatpush1.msra.mxu0 0.0
    %992 = vmatprep.subr.mxu0 0.0
    %993 = vmatpush1.msra.mxu0 0.0
    %994 = vmatprep.subr.mxu0 0.0
    %995 = vmatpush1.msra.mxu0 0.0
    %996 = vmatprep.subr.mxu0 0.0
    %997 = vmatpush1.msra.mxu0 0.0
    %998 = vmatprep.subr.mxu0 0.0
    %999 = vmatpush1.msra.mxu0 0.0
    %1000 = vmatprep.subr.mxu0 0.0
    %1001 = vmatpush1.msra.mxu0 0.0
    %1002 = vmatprep.subr.mxu0 0.0
    %1003 = vmatpush1.msra.mxu0 0.0
    %1004 = vmatprep.subr.mxu0 0.0
    %1005 = vmatpush1.msra.mxu0 0.0
    %1006 = vmatprep.subr.mxu0 0.0
    %1007 = vmatpush1.msra.mxu0 0.0
    %1008 = vmatprep.subr.mxu0 0.0
    %1009 = vmatpush1.msra.mxu0 0.0
    %1010 = vmatprep.subr.mxu0 0.0
    %1011 = vmatpush1.msra.mxu0 0.0
    %1012 = vmatprep.subr.mxu0 0.0
    %1013 = vmatpush1.msra.mxu0 0.0
    %1014 = vmatprep.subr.mxu0 0.0
    %1015 = vmatpush1.msra.mxu0 0.0
    %1016 = vmatprep.subr.mxu0 0.0
    %1017 = vmatpush1.msra.mxu0 0.0
    %1018 = vmatprep.subr.mxu0 0.0
    %1019 = vmatpush1.msra.mxu0 0.0
    %1020 = vmatprep.subr.mxu0 0.0
    %1021 = vmatpush1.msra.mxu0 0.0
    %1022 = vmatprep.subr.mxu0 0.0
    %1023 = vmatpush1.msra.mxu0 0.0
    %1024 = vmatprep.subr.mxu0 0.0
    %1025 = vmatpush1.msra.mxu0 0.0
    %1026 = vmatprep.subr.mxu0 0.0
    %1027 = vmatpush1.msra.mxu0 0.0
    %1028 = vmatprep.subr.mxu0 0.0
    %1029 = vmatpush1.msra.mxu0 0.0
    %1030 = vmatprep.subr.mxu0 0.0
    %1031 = vmatpush1.msra.mxu0 0.0
    %1032 = vmatprep.subr.mxu0 0.0
    %1033 = vmatpush1.msra.mxu0 0.0
    %1034 = vmatprep.mubr.f32.mxu0 0.0
    %1035 = vmatmul.mubr.f32.gmra.mrb[0].mxu0 %v507
    %v1036 = vpop.f32.mrb[0].mxu0
    %v1037 = vadd.f32 0.0, %v1036
    %v1038 = vpop.f32.mrb[0].mxu0
    %1039 = vmatprep.mubr.f32.mxu0 0.0
    %1040 = vmatmul.mubr.f32.gmra.mrb[0].mxu0 %v510
    %v1041 = vpop.f32.mrb[0].mxu0
    %v1042 = vadd.f32 0.0, %v1041
    %v1043 = vpop.f32.mrb[0].mxu0
    %1044 = vdwg.mxu0
    %v1045 = vadd.f32 %v887, %v1037
    %v1046 = vadd.f32 %v892, %v1042
    %v1047 = vadd.f32 %v587, %v588
    %v1048 = vrot.slane %v1047, 4
    %v1049 = vadd.f32 %v1047, %v1048
    %v1050 = vrot.slane %v1049, 2
    %v1051 = vadd.f32 %v1049, %v1050
    %v1052 = vrot.slane %v1051, 1
    %v1053 = vadd.f32 %v1051, %v1052
    %v1054 = vadd.f32 %v1053, 0.0
    %v1055 = vmul.f32 %v587, %v587
    %v1056 = vmul.f32 %v588, %v588
    %v1057 = vadd.f32 %v1055, %v1056
    %v1058 = vrot.slane %v1057, 4
    %v1059 = vadd.f32 %v1057, %v1058
    %v1060 = vrot.slane %v1059, 2
    %v1061 = vadd.f32 %v1059, %v1060
    %v1062 = vrot.slane %v1061, 1
    %v1063 = vadd.f32 %v1061, %v1062
    %v1064 = vadd.f32 %v1063, 0.0
    %v1065 = vadd.f32 %v1045, %v1046
    %v1066 = vrot.slane %v1065, 4
    %v1067 = vadd.f32 %v1065, %v1066
    %v1068 = vrot.slane %v1067, 2
    %v1069 = vadd.f32 %v1067, %v1068
    %v1070 = vrot.slane %v1069, 1
    %v1071 = vadd.f32 %v1069, %v1070
    %v1072 = vadd.f32 %v1054, %v1071
    %v1073 = vmul.f32 %v1045, %v1045
    %v1074 = vmul.f32 %v1046, %v1046
    %v1075 = vadd.f32 %v1073, %v1074
    %v1076 = vrot.slane %v1075, 4
    %v1077 = vadd.f32 %v1075, %v1076
    %v1078 = vrot.slane %v1077, 2
    %v1079 = vadd.f32 %v1077, %v1078
    %v1080 = vrot.slane %v1079, 1
    %v1081 = vadd.f32 %v1079, %v1080
    %v1082 = vadd.f32 %v1064, %v1081
    %v1083 = vadd.s32 %v63, 16
    %v1084 = vadd.s32 %v63, 24
    %v1085 = vadd.s32 %v63, 32
    %v1086 = vadd.s32 %v63, 40
    %v1087 = vadd.s32 %v63, 48
    %v1088 = vadd.s32 %v63, 56
    %v1089 = vadd.s32 %v63, 64
    %v1090 = vadd.s32 %v63, 72
    %v1091 = vadd.s32 %v63, 80
    %v1092 = vadd.s32 %v63, 88
    %v1093 = vadd.s32 %v63, 96
    %v1094 = vadd.s32 %v63, 104
    %v1095 = vadd.s32 %v63, 112
    %v1096 = vadd.s32 %v63, 120
    %v1097 = vmul.u32 %v66, 16
    %vm1098 = vcmp.ge.s32.totalorder %v63, %v1097
    %vm1099 = vcmp.ge.s32.totalorder %v64, %v1097
    %vm1100 = vcmp.ge.s32.totalorder %v1083, %v1097
    %vm1101 = vcmp.ge.s32.totalorder %v1084, %v1097
    %vm1102 = vcmp.ge.s32.totalorder %v1085, %v1097
    %vm1103 = vcmp.ge.s32.totalorder %v1086, %v1097
    %vm1104 = vcmp.ge.s32.totalorder %v1087, %v1097
    %vm1105 = vcmp.ge.s32.totalorder %v1088, %v1097
    %vm1106 = vcmp.ge.s32.totalorder %v1089, %v1097
    %vm1107 = vcmp.ge.s32.totalorder %v1090, %v1097
    %vm1108 = vcmp.ge.s32.totalorder %v1091, %v1097
    %vm1109 = vcmp.ge.s32.totalorder %v1092, %v1097
    %vm1110 = vcmp.ge.s32.totalorder %v1093, %v1097
    %vm1111 = vcmp.ge.s32.totalorder %v1094, %v1097
    %vm1112 = vcmp.ge.s32.totalorder %v1095, %v1097
    %vm1113 = vcmp.ge.s32.totalorder %v1096, %v1097
    %v1114 = vadd.s32 %v1097, 16
    %vm1115 = vcmp.lt.s32.totalorder %v63, %v1114
    %vm1116 = vcmp.lt.s32.totalorder %v64, %v1114
    %vm1117 = vcmp.lt.s32.totalorder %v1083, %v1114
    %vm1118 = vcmp.lt.s32.totalorder %v1084, %v1114
    %vm1119 = vcmp.lt.s32.totalorder %v1085, %v1114
    %vm1120 = vcmp.lt.s32.totalorder %v1086, %v1114
    %vm1121 = vcmp.lt.s32.totalorder %v1087, %v1114
    %vm1122 = vcmp.lt.s32.totalorder %v1088, %v1114
    %vm1123 = vcmp.lt.s32.totalorder %v1089, %v1114
    %vm1124 = vcmp.lt.s32.totalorder %v1090, %v1114
    %vm1125 = vcmp.lt.s32.totalorder %v1091, %v1114
    %vm1126 = vcmp.lt.s32.totalorder %v1092, %v1114
    %vm1127 = vcmp.lt.s32.totalorder %v1093, %v1114
    %vm1128 = vcmp.lt.s32.totalorder %v1094, %v1114
    %vm1129 = vcmp.lt.s32.totalorder %v1095, %v1114
    %vm1130 = vcmp.lt.s32.totalorder %v1096, %v1114
    %vm1131 = vmand %vm1098, %vm1115
    %vm1132 = vmand %vm1099, %vm1116
    %vm1133 = vmand %vm1100, %vm1117
    %vm1134 = vmand %vm1101, %vm1118
    %vm1135 = vmand %vm1102, %vm1119
    %vm1136 = vmand %vm1103, %vm1120
    %vm1137 = vmand %vm1104, %vm1121
    %vm1138 = vmand %vm1105, %vm1122
    %vm1139 = vmand %vm1106, %vm1123
    %vm1140 = vmand %vm1107, %vm1124
    %vm1141 = vmand %vm1108, %vm1125
    %vm1142 = vmand %vm1109, %vm1126
    %vm1143 = vmand %vm1110, %vm1127
    %vm1144 = vmand %vm1111, %vm1128
    %vm1145 = vmand %vm1112, %vm1129
    %vm1146 = vmand %vm1113, %vm1130
    %v1147 = vsel %vm1131, 1.0, 0.0
    %v1148 = vsel %vm1132, 1.0, 0.0
    %v1149 = vsel %vm1133, 1.0, 0.0
    %v1150 = vsel %vm1134, 1.0, 0.0
    %v1151 = vsel %vm1135, 1.0, 0.0
    %v1152 = vsel %vm1136, 1.0, 0.0
    %v1153 = vsel %vm1137, 1.0, 0.0
    %v1154 = vsel %vm1138, 1.0, 0.0
    %v1155 = vsel %vm1139, 1.0, 0.0
    %v1156 = vsel %vm1140, 1.0, 0.0
    %v1157 = vsel %vm1141, 1.0, 0.0
    %v1158 = vsel %vm1142, 1.0, 0.0
    %v1159 = vsel %vm1143, 1.0, 0.0
    %v1160 = vsel %vm1144, 1.0, 0.0
    %v1161 = vsel %vm1145, 1.0, 0.0
    %v1162 = vsel %vm1146, 1.0, 0.0
    %1163 = vmatprep.subr.mxu0 0.0
    %1164 = vmatpush1.msra.mxu0 %v1147
    %1165 = vmatprep.subr.mxu0 0.0
    %1166 = vmatpush1.msra.mxu0 %v1148
    %1167 = vmatprep.subr.mxu0 0.0
    %1168 = vmatpush1.msra.mxu0 %v1149
    %1169 = vmatprep.subr.mxu0 0.0
    %1170 = vmatpush1.msra.mxu0 %v1150
    %1171 = vmatprep.subr.mxu0 0.0
    %1172 = vmatpush1.msra.mxu0 %v1151
    %1173 = vmatprep.subr.mxu0 0.0
    %1174 = vmatpush1.msra.mxu0 %v1152
    %1175 = vmatprep.subr.mxu0 0.0
    %1176 = vmatpush1.msra.mxu0 %v1153
    %1177 = vmatprep.subr.mxu0 0.0
    %1178 = vmatpush1.msra.mxu0 %v1154
    %1179 = vmatprep.subr.mxu0 0.0
    %1180 = vmatpush1.msra.mxu0 %v1155
    %1181 = vmatprep.subr.mxu0 0.0
    %1182 = vmatpush1.msra.mxu0 %v1156
    %1183 = vmatprep.subr.mxu0 0.0
    %1184 = vmatpush1.msra.mxu0 %v1157
    %1185 = vmatprep.subr.mxu0 0.0
    %1186 = vmatpush1.msra.mxu0 %v1158
    %1187 = vmatprep.subr.mxu0 0.0
    %1188 = vmatpush1.msra.mxu0 %v1159
    %1189 = vmatprep.subr.mxu0 0.0
    %1190 = vmatpush1.msra.mxu0 %v1160
    %1191 = vmatprep.subr.mxu0 0.0
    %1192 = vmatpush1.msra.mxu0 %v1161
    %1193 = vmatprep.subr.mxu0 0.0
    %1194 = vmatpush1.msra.mxu0 %v1162
    %1195 = vmatprep.subr.mxu0 0.0
    %1196 = vmatpush1.msra.mxu0 0.0
    %1197 = vmatprep.subr.mxu0 0.0
    %1198 = vmatpush1.msra.mxu0 0.0
    %1199 = vmatprep.subr.mxu0 0.0
    %1200 = vmatpush1.msra.mxu0 0.0
    %1201 = vmatprep.subr.mxu0 0.0
    %1202 = vmatpush1.msra.mxu0 0.0
    %1203 = vmatprep.subr.mxu0 0.0
    %1204 = vmatpush1.msra.mxu0 0.0
    %1205 = vmatprep.subr.mxu0 0.0
    %1206 = vmatpush1.msra.mxu0 0.0
    %1207 = vmatprep.subr.mxu0 0.0
    %1208 = vmatpush1.msra.mxu0 0.0
    %1209 = vmatprep.subr.mxu0 0.0
    %1210 = vmatpush1.msra.mxu0 0.0
    %1211 = vmatprep.subr.mxu0 0.0
    %1212 = vmatpush1.msra.mxu0 0.0
    %1213 = vmatprep.subr.mxu0 0.0
    %1214 = vmatpush1.msra.mxu0 0.0
    %1215 = vmatprep.subr.mxu0 0.0
    %1216 = vmatpush1.msra.mxu0 0.0
    %1217 = vmatprep.subr.mxu0 0.0
    %1218 = vmatpush1.msra.mxu0 0.0
    %1219 = vmatprep.subr.mxu0 0.0
    %1220 = vmatpush1.msra.mxu0 0.0
    %1221 = vmatprep.subr.mxu0 0.0
    %1222 = vmatpush1.msra.mxu0 0.0
    %1223 = vmatprep.subr.mxu0 0.0
    %1224 = vmatpush1.msra.mxu0 0.0
    %1225 = vmatprep.subr.mxu0 0.0
    %1226 = vmatpush1.msra.mxu0 0.0
    %1227 = vmatprep.mubr.f32.mxu0 0.0
    %1228 = vmatmul.mubr.f32.gmra.mrb[0].mxu0 %v1072
    %v1229 = vpop.f32.mrb[0].mxu0
    %v1230 = vadd.f32 0.0, %v1229
    %v1231 = vpop.f32.mrb[0].mxu0
    %1232 = vdwg.mxu0
    %1233 = vmatprep.subr.mxu0 0.0
    %1234 = vmatpush1.msra.mxu0 %v1147
    %1235 = vmatprep.subr.mxu0 0.0
    %1236 = vmatpush1.msra.mxu0 %v1148
    %1237 = vmatprep.subr.mxu0 0.0
    %1238 = vmatpush1.msra.mxu0 %v1149
    %1239 = vmatprep.subr.mxu0 0.0
    %1240 = vmatpush1.msra.mxu0 %v1150
    %1241 = vmatprep.subr.mxu0 0.0
    %1242 = vmatpush1.msra.mxu0 %v1151
    %1243 = vmatprep.subr.mxu0 0.0
    %1244 = vmatpush1.msra.mxu0 %v1152
    %1245 = vmatprep.subr.mxu0 0.0
    %1246 = vmatpush1.msra.mxu0 %v1153
    %1247 = vmatprep.subr.mxu0 0.0
    %1248 = vmatpush1.msra.mxu0 %v1154
    %1249 = vmatprep.subr.mxu0 0.0
    %1250 = vmatpush1.msra.mxu0 %v1155
    %1251 = vmatprep.subr.mxu0 0.0
    %1252 = vmatpush1.msra.mxu0 %v1156
    %1253 = vmatprep.subr.mxu0 0.0
    %1254 = vmatpush1.msra.mxu0 %v1157
    %1255 = vmatprep.subr.mxu0 0.0
    %1256 = vmatpush1.msra.mxu0 %v1158
    %1257 = vmatprep.subr.mxu0 0.0
    %1258 = vmatpush1.msra.mxu0 %v1159
    %1259 = vmatprep.subr.mxu0 0.0
    %1260 = vmatpush1.msra.mxu0 %v1160
    %1261 = vmatprep.subr.mxu0 0.0
    %1262 = vmatpush1.msra.mxu0 %v1161
    %1263 = vmatprep.subr.mxu0 0.0
    %1264 = vmatpush1.msra.mxu0 %v1162
    %1265 = vmatprep.subr.mxu0 0.0
    %1266 = vmatpush1.msra.mxu0 0.0
    %1267 = vmatprep.subr.mxu0 0.0
    %1268 = vmatpush1.msra.mxu0 0.0
    %1269 = vmatprep.subr.mxu0 0.0
    %1270 = vmatpush1.msra.mxu0 0.0
    %1271 = vmatprep.subr.mxu0 0.0
    %1272 = vmatpush1.msra.mxu0 0.0
    %1273 = vmatprep.subr.mxu0 0.0
    %1274 = vmatpush1.msra.mxu0 0.0
    %1275 = vmatprep.subr.mxu0 0.0
    %1276 = vmatpush1.msra.mxu0 0.0
    %1277 = vmatprep.subr.mxu0 0.0
    %1278 = vmatpush1.msra.mxu0 0.0
    %1279 = vmatprep.subr.mxu0 0.0
    %1280 = vmatpush1.msra.mxu0 0.0
    %1281 = vmatprep.subr.mxu0 0.0
    %1282 = vmatpush1.msra.mxu0 0.0
    %1283 = vmatprep.subr.mxu0 0.0
    %1284 = vmatpush1.msra.mxu0 0.0
    %1285 = vmatprep.subr.mxu0 0.0
    %1286 = vmatpush1.msra.mxu0 0.0
    %1287 = vmatprep.subr.mxu0 0.0
    %1288 = vmatpush1.msra.mxu0 0.0
    %1289 = vmatprep.subr.mxu0 0.0
    %1290 = vmatpush1.msra.mxu0 0.0
    %1291 = vmatprep.subr.mxu0 0.0
    %1292 = vmatpush1.msra.mxu0 0.0
    %1293 = vmatprep.subr.mxu0 0.0
    %1294 = vmatpush1.msra.mxu0 0.0
    %1295 = vmatprep.subr.mxu0 0.0
    %1296 = vmatpush1.msra.mxu0 0.0
    %1297 = vmatprep.mubr.f32.mxu0 0.0
    %1298 = vmatmul.mubr.f32.gmra.mrb[0].mxu0 %v1082
    %v1299 = vpop.f32.mrb[0].mxu0
    %v1300 = vadd.f32 0.0, %v1299
    %v1301 = vpop.f32.mrb[0].mxu0
    %1302 = vdwg.mxu0
    %v1303 = vrcp.pop 512.0
    %v1304 = vmul.f32 %v1230, %v1303
    %v1305 = vmul.f32 %v1300, %v1303
    %v1306 = vmul.f32 %v1304, %v1304
    %v1307 = vsub.f32 %v1305, %v1306
    %v1308 = vadd.f32 %v1307, 1e-05
    %v1309 = vrsqrt.pop %v1308
    %v1310 = vmul.f32 %v60, %v1309
    %v1311 = vmul.f32 %v1304, %v1310
    %v1312 = vsub.f32 %v61, %v1311
    %v1313 = vmul.u32 %v63, 16
    %vm1314 = vcmp.ge.s32.totalorder %v66, %v1313
    %v1315 = vadd.s32 %v1313, 16
    %vm1316 = vcmp.lt.s32.totalorder %v66, %v1315
    %vm1317 = vmand %vm1314, %vm1316
    %v1318 = vsel %vm1317, 1.0, 0.0
    %vm1319 = vcmask 64512
    %v1321 = vsel %vm1319, %v1310, 0
    %1323 = vmatprep.subr.mxu0 0.0
    %1324 = vmatpush1.msra.mxu0 %v1318
    %1325 = vmatprep.subr.mxu0 0.0
    %1326 = vmatpush1.msra.mxu0 0.0
    %1327 = vmatprep.subr.mxu0 0.0
    %1328 = vmatpush1.msra.mxu0 0.0
    %1329 = vmatprep.subr.mxu0 0.0
    %1330 = vmatpush1.msra.mxu0 0.0
    %1331 = vmatprep.subr.mxu0 0.0
    %1332 = vmatpush1.msra.mxu0 0.0
    %1333 = vmatprep.subr.mxu0 0.0
    %1334 = vmatpush1.msra.mxu0 0.0
    %1335 = vmatprep.subr.mxu0 0.0
    %1336 = vmatpush1.msra.mxu0 0.0
    %1337 = vmatprep.subr.mxu0 0.0
    %1338 = vmatpush1.msra.mxu0 0.0
    %1339 = vmatprep.subr.mxu0 0.0
    %1340 = vmatpush1.msra.mxu0 0.0
    %1341 = vmatprep.subr.mxu0 0.0
    %1342 = vmatpush1.msra.mxu0 0.0
    %1343 = vmatprep.subr.mxu0 0.0
    %1344 = vmatpush1.msra.mxu0 0.0
    %1345 = vmatprep.subr.mxu0 0.0
    %1346 = vmatpush1.msra.mxu0 0.0
    %1347 = vmatprep.subr.mxu0 0.0
    %1348 = vmatpush1.msra.mxu0 0.0
    %1349 = vmatprep.subr.mxu0 0.0
    %1350 = vmatpush1.msra.mxu0 0.0
    %1351 = vmatprep.subr.mxu0 0.0
    %1352 = vmatpush1.msra.mxu0 0.0
    %1353 = vmatprep.subr.mxu0 0.0
    %1354 = vmatpush1.msra.mxu0 0.0
    %1355 = vmatprep.subr.mxu0 0.0
    %1356 = vmatpush1.msra.mxu0 0.0
    %1357 = vmatprep.subr.mxu0 0.0
    %1358 = vmatpush1.msra.mxu0 0.0
    %1359 = vmatprep.subr.mxu0 0.0
    %1360 = vmatpush1.msra.mxu0 0.0
    %1361 = vmatprep.subr.mxu0 0.0
    %1362 = vmatpush1.msra.mxu0 0.0
    %1363 = vmatprep.subr.mxu0 0.0
    %1364 = vmatpush1.msra.mxu0 0.0
    %1365 = vmatprep.subr.mxu0 0.0
    %1366 = vmatpush1.msra.mxu0 0.0
    %1367 = vmatprep.subr.mxu0 0.0
    %1368 = vmatpush1.msra.mxu0 0.0
    %1369 = vmatprep.subr.mxu0 0.0
    %1370 = vmatpush1.msra.mxu0 0.0
    %1371 = vmatprep.subr.mxu0 0.0
    %1372 = vmatpush1.msra.mxu0 0.0
    %1373 = vmatprep.subr.mxu0 0.0
    %1374 = vmatpush1.msra.mxu0 0.0
    %1375 = vmatprep.subr.mxu0 0.0
    %1376 = vmatpush1.msra.mxu0 0.0
    %1377 = vmatprep.subr.mxu0 0.0
    %1378 = vmatpush1.msra.mxu0 0.0
    %1379 = vmatprep.subr.mxu0 0.0
    %1380 = vmatpush1.msra.mxu0 0.0
    %1381 = vmatprep.subr.mxu0 0.0
    %1382 = vmatpush1.msra.mxu0 0.0
    %1383 = vmatprep.subr.mxu0 0.0
    %1384 = vmatpush1.msra.mxu0 0.0
    %1385 = vmatprep.subr.mxu0 0.0
    %1386 = vmatpush1.msra.mxu0 0.0
    %1387 = vmatprep.mubr.f32.mxu0 0.0
    %1388 = vmatmul.mubr.f32.gmra.mrb[0].mxu0 %v1321
    %v1389 = vpop.f32.mrb[0].mxu0
    %v1390 = vadd.f32 0.0, %v1389
    %v1391 = vpop.f32.mrb[0].mxu0
    %1392 = vdwg.mxu0
    %v1394 = vsel %vm1319, %v1312, 0
    %1396 = vmatprep.subr.mxu0 0.0
    %1397 = vmatpush1.msra.mxu0 %v1318
    %1398 = vmatprep.subr.mxu0 0.0
    %1399 = vmatpush1.msra.mxu0 0.0
    %1400 = vmatprep.subr.mxu0 0.0
    %1401 = vmatpush1.msra.mxu0 0.0
    %1402 = vmatprep.subr.mxu0 0.0
    %1403 = vmatpush1.msra.mxu0 0.0
    %1404 = vmatprep.subr.mxu0 0.0
    %1405 = vmatpush1.msra.mxu0 0.0
    %1406 = vmatprep.subr.mxu0 0.0
    %1407 = vmatpush1.msra.mxu0 0.0
    %1408 = vmatprep.subr.mxu0 0.0
    %1409 = vmatpush1.msra.mxu0 0.0
    %1410 = vmatprep.subr.mxu0 0.0
    %1411 = vmatpush1.msra.mxu0 0.0
    %1412 = vmatprep.subr.mxu0 0.0
    %1413 = vmatpush1.msra.mxu0 0.0
    %1414 = vmatprep.subr.mxu0 0.0
    %1415 = vmatpush1.msra.mxu0 0.0
    %1416 = vmatprep.subr.mxu0 0.0
    %1417 = vmatpush1.msra.mxu0 0.0
    %1418 = vmatprep.subr.mxu0 0.0
    %1419 = vmatpush1.msra.mxu0 0.0
    %1420 = vmatprep.subr.mxu0 0.0
    %1421 = vmatpush1.msra.mxu0 0.0
    %1422 = vmatprep.subr.mxu0 0.0
    %1423 = vmatpush1.msra.mxu0 0.0
    %1424 = vmatprep.subr.mxu0 0.0
    %1425 = vmatpush1.msra.mxu0 0.0
    %1426 = vmatprep.subr.mxu0 0.0
    %1427 = vmatpush1.msra.mxu0 0.0
    %1428 = vmatprep.subr.mxu0 0.0
    %1429 = vmatpush1.msra.mxu0 0.0
    %1430 = vmatprep.subr.mxu0 0.0
    %1431 = vmatpush1.msra.mxu0 0.0
    %1432 = vmatprep.subr.mxu0 0.0
    %1433 = vmatpush1.msra.mxu0 0.0
    %1434 = vmatprep.subr.mxu0 0.0
    %1435 = vmatpush1.msra.mxu0 0.0
    %1436 = vmatprep.subr.mxu0 0.0
    %1437 = vmatpush1.msra.mxu0 0.0
    %1438 = vmatprep.subr.mxu0 0.0
    %1439 = vmatpush1.msra.mxu0 0.0
    %1440 = vmatprep.subr.mxu0 0.0
    %1441 = vmatpush1.msra.mxu0 0.0
    %1442 = vmatprep.subr.mxu0 0.0
    %1443 = vmatpush1.msra.mxu0 0.0
    %1444 = vmatprep.subr.mxu0 0.0
    %1445 = vmatpush1.msra.mxu0 0.0
    %1446 = vmatprep.subr.mxu0 0.0
    %1447 = vmatpush1.msra.mxu0 0.0
    %1448 = vmatprep.subr.mxu0 0.0
    %1449 = vmatpush1.msra.mxu0 0.0
    %1450 = vmatprep.subr.mxu0 0.0
    %1451 = vmatpush1.msra.mxu0 0.0
    %1452 = vmatprep.subr.mxu0 0.0
    %1453 = vmatpush1.msra.mxu0 0.0
    %1454 = vmatprep.subr.mxu0 0.0
    %1455 = vmatpush1.msra.mxu0 0.0
    %1456 = vmatprep.subr.mxu0 0.0
    %1457 = vmatpush1.msra.mxu0 0.0
    %1458 = vmatprep.subr.mxu0 0.0
    %1459 = vmatpush1.msra.mxu0 0.0
    %1460 = vmatprep.mubr.f32.mxu0 0.0
    %1461 = vmatmul.mubr.f32.gmra.mrb[0].mxu0 %v1394
    %v1462 = vpop.f32.mrb[0].mxu0
    %v1463 = vadd.f32 0.0, %v1462
    %v1464 = vpop.f32.mrb[0].mxu0
    %1465 = vdwg.mxu0
    %v1466 = vmul.u32 %v63, 2
    %vm1467 = vcmp.eq.s32.totalorder %v66, %v1466
    %v1468 = vsel %vm1467, 1.0, 0.0
    %v1469 = vadd.s32 %v1466, 1
    %vm1470 = vcmp.eq.s32.totalorder %v66, %v1469
    %v1471 = vsel %vm1470, 1.0, 0.0
    %v1472 = vmul.u32 %v66, 2
    %vm1473 = vcmp.eq.s32.totalorder %v63, %v1472
    %vm1474 = vcmp.eq.s32.totalorder %v64, %v1472
    %vm1475 = vcmp.eq.s32.totalorder %v1083, %v1472
    %vm1476 = vcmp.eq.s32.totalorder %v1084, %v1472
    %vm1477 = vcmp.eq.s32.totalorder %v1085, %v1472
    %vm1478 = vcmp.eq.s32.totalorder %v1086, %v1472
    %vm1479 = vcmp.eq.s32.totalorder %v1087, %v1472
    %vm1480 = vcmp.eq.s32.totalorder %v1088, %v1472
    %vm1481 = vcmp.eq.s32.totalorder %v1089, %v1472
    %vm1482 = vcmp.eq.s32.totalorder %v1090, %v1472
    %vm1483 = vcmp.eq.s32.totalorder %v1091, %v1472
    %vm1484 = vcmp.eq.s32.totalorder %v1092, %v1472
    %vm1485 = vcmp.eq.s32.totalorder %v1093, %v1472
    %vm1486 = vcmp.eq.s32.totalorder %v1094, %v1472
    %vm1487 = vcmp.eq.s32.totalorder %v1095, %v1472
    %vm1488 = vcmp.eq.s32.totalorder %v1096, %v1472
    %v1489 = vsel %vm1473, 1.0, 0.0
    %v1490 = vsel %vm1474, 1.0, 0.0
    %v1491 = vsel %vm1475, 1.0, 0.0
    %v1492 = vsel %vm1476, 1.0, 0.0
    %v1493 = vsel %vm1477, 1.0, 0.0
    %v1494 = vsel %vm1478, 1.0, 0.0
    %v1495 = vsel %vm1479, 1.0, 0.0
    %v1496 = vsel %vm1480, 1.0, 0.0
    %v1497 = vsel %vm1481, 1.0, 0.0
    %v1498 = vsel %vm1482, 1.0, 0.0
    %v1499 = vsel %vm1483, 1.0, 0.0
    %v1500 = vsel %vm1484, 1.0, 0.0
    %v1501 = vsel %vm1485, 1.0, 0.0
    %v1502 = vsel %vm1486, 1.0, 0.0
    %v1503 = vsel %vm1487, 1.0, 0.0
    %v1504 = vsel %vm1488, 1.0, 0.0
    %v1505 = vadd.s32 %v1472, 1
    %vm1506 = vcmp.eq.s32.totalorder %v63, %v1505
    %vm1507 = vcmp.eq.s32.totalorder %v64, %v1505
    %vm1508 = vcmp.eq.s32.totalorder %v1083, %v1505
    %vm1509 = vcmp.eq.s32.totalorder %v1084, %v1505
    %vm1510 = vcmp.eq.s32.totalorder %v1085, %v1505
    %vm1511 = vcmp.eq.s32.totalorder %v1086, %v1505
    %vm1512 = vcmp.eq.s32.totalorder %v1087, %v1505
    %vm1513 = vcmp.eq.s32.totalorder %v1088, %v1505
    %vm1514 = vcmp.eq.s32.totalorder %v1089, %v1505
    %vm1515 = vcmp.eq.s32.totalorder %v1090, %v1505
    %vm1516 = vcmp.eq.s32.totalorder %v1091, %v1505
    %vm1517 = vcmp.eq.s32.totalorder %v1092, %v1505
    %vm1518 = vcmp.eq.s32.totalorder %v1093, %v1505
    %vm1519 = vcmp.eq.s32.totalorder %v1094, %v1505
    %vm1520 = vcmp.eq.s32.totalorder %v1095, %v1505
    %vm1521 = vcmp.eq.s32.totalorder %v1096, %v1505
    %v1522 = vsel %vm1506, 1.0, 0.0
    %v1523 = vsel %vm1507, 1.0, 0.0
    %v1524 = vsel %vm1508, 1.0, 0.0
    %v1525 = vsel %vm1509, 1.0, 0.0
    %v1526 = vsel %vm1510, 1.0, 0.0
    %v1527 = vsel %vm1511, 1.0, 0.0
    %v1528 = vsel %vm1512, 1.0, 0.0
    %v1529 = vsel %vm1513, 1.0, 0.0
    %v1530 = vsel %vm1514, 1.0, 0.0
    %v1531 = vsel %vm1515, 1.0, 0.0
    %v1532 = vsel %vm1516, 1.0, 0.0
    %v1533 = vsel %vm1517, 1.0, 0.0
    %v1534 = vsel %vm1518, 1.0, 0.0
    %v1535 = vsel %vm1519, 1.0, 0.0
    %v1536 = vsel %vm1520, 1.0, 0.0
    %v1537 = vsel %vm1521, 1.0, 0.0
    %v1538 = vlaneseq
    %v1539 = vshrl.u32 %v1538, 7
    %v1540 = vsub.s32 0, %v1539
    %v1541 = vrot.slane %v1390, %v1540
    %v1542 = vmul.f32 %v587, %v1541
    %v1543 = vmul.f32 %v588, %v1541
    %v1544 = vlaneseq
    %v1545 = vshrl.u32 %v1544, 7
    %v1546 = vsub.s32 0, %v1545
    %v1547 = vrot.slane %v1463, %v1546
    %v1548 = vadd.f32 %v1542, %v1547
    %v1549 = vadd.f32 %v1543, %v1547
    %v1550 = vmax.f32 %v1548, 0.0
    %v1551 = vmax.f32 %v1549, 0.0
    %v1553 = vsel %vm259, %v1468, 0
    %1555 = vmatprep.subr.mxu0 0.0
    %1556 = vmatpush1.msra.mxu0 %v1550
    %1557 = vmatprep.subr.mxu0 0.0
    %1558 = vmatpush1.msra.mxu0 %v1551
    %1559 = vmatprep.subr.mxu0 0.0
    %1560 = vmatpush1.msra.mxu0 0.0
    %1561 = vmatprep.subr.mxu0 0.0
    %1562 = vmatpush1.msra.mxu0 0.0
    %1563 = vmatprep.subr.mxu0 0.0
    %1564 = vmatpush1.msra.mxu0 0.0
    %1565 = vmatprep.subr.mxu0 0.0
    %1566 = vmatpush1.msra.mxu0 0.0
    %1567 = vmatprep.subr.mxu0 0.0
    %1568 = vmatpush1.msra.mxu0 0.0
    %1569 = vmatprep.subr.mxu0 0.0
    %1570 = vmatpush1.msra.mxu0 0.0
    %1571 = vmatprep.subr.mxu0 0.0
    %1572 = vmatpush1.msra.mxu0 0.0
    %1573 = vmatprep.subr.mxu0 0.0
    %1574 = vmatpush1.msra.mxu0 0.0
    %1575 = vmatprep.subr.mxu0 0.0
    %1576 = vmatpush1.msra.mxu0 0.0
    %1577 = vmatprep.subr.mxu0 0.0
    %1578 = vmatpush1.msra.mxu0 0.0
    %1579 = vmatprep.subr.mxu0 0.0
    %1580 = vmatpush1.msra.mxu0 0.0
    %1581 = vmatprep.subr.mxu0 0.0
    %1582 = vmatpush1.msra.mxu0 0.0
    %1583 = vmatprep.subr.mxu0 0.0
    %1584 = vmatpush1.msra.mxu0 0.0
    %1585 = vmatprep.subr.mxu0 0.0
    %1586 = vmatpush1.msra.mxu0 0.0
    %1587 = vmatprep.subr.mxu0 0.0
    %1588 = vmatpush1.msra.mxu0 0.0
    %1589 = vmatprep.subr.mxu0 0.0
    %1590 = vmatpush1.msra.mxu0 0.0
    %1591 = vmatprep.subr.mxu0 0.0
    %1592 = vmatpush1.msra.mxu0 0.0
    %1593 = vmatprep.subr.mxu0 0.0
    %1594 = vmatpush1.msra.mxu0 0.0
    %1595 = vmatprep.subr.mxu0 0.0
    %1596 = vmatpush1.msra.mxu0 0.0
    %1597 = vmatprep.subr.mxu0 0.0
    %1598 = vmatpush1.msra.mxu0 0.0
    %1599 = vmatprep.subr.mxu0 0.0
    %1600 = vmatpush1.msra.mxu0 0.0
    %1601 = vmatprep.subr.mxu0 0.0
    %1602 = vmatpush1.msra.mxu0 0.0
    %1603 = vmatprep.subr.mxu0 0.0
    %1604 = vmatpush1.msra.mxu0 0.0
    %1605 = vmatprep.subr.mxu0 0.0
    %1606 = vmatpush1.msra.mxu0 0.0
    %1607 = vmatprep.subr.mxu0 0.0
    %1608 = vmatpush1.msra.mxu0 0.0
    %1609 = vmatprep.subr.mxu0 0.0
    %1610 = vmatpush1.msra.mxu0 0.0
    %1611 = vmatprep.subr.mxu0 0.0
    %1612 = vmatpush1.msra.mxu0 0.0
    %1613 = vmatprep.subr.mxu0 0.0
    %1614 = vmatpush1.msra.mxu0 0.0
    %1615 = vmatprep.subr.mxu0 0.0
    %1616 = vmatpush1.msra.mxu0 0.0
    %1617 = vmatprep.subr.mxu0 0.0
    %1618 = vmatpush1.msra.mxu0 0.0
    %1619 = vmatprep.mubr.f32.mxu0 0.0
    %1620 = vmatmul.mubr.f32.gmra.mrb[0].mxu0 %v1553
    %v1621 = vpop.f32.mrb[0].mxu0
    %v1622 = vadd.f32 0.0, %v1621
    %v1623 = vpop.f32.mrb[0].mxu0
    %1624 = vdwg.mxu0
    %v1626 = vsel %vm259, %v1471, 0
    %1628 = vmatprep.subr.mxu0 0.0
    %1629 = vmatpush1.msra.mxu0 %v1550
    %1630 = vmatprep.subr.mxu0 0.0
    %1631 = vmatpush1.msra.mxu0 %v1551
    %1632 = vmatprep.subr.mxu0 0.0
    %1633 = vmatpush1.msra.mxu0 0.0
    %1634 = vmatprep.subr.mxu0 0.0
    %1635 = vmatpush1.msra.mxu0 0.0
    %1636 = vmatprep.subr.mxu0 0.0
    %1637 = vmatpush1.msra.mxu0 0.0
    %1638 = vmatprep.subr.mxu0 0.0
    %1639 = vmatpush1.msra.mxu0 0.0
    %1640 = vmatprep.subr.mxu0 0.0
    %1641 = vmatpush1.msra.mxu0 0.0
    %1642 = vmatprep.subr.mxu0 0.0
    %1643 = vmatpush1.msra.mxu0 0.0
    %1644 = vmatprep.subr.mxu0 0.0
    %1645 = vmatpush1.msra.mxu0 0.0
    %1646 = vmatprep.subr.mxu0 0.0
    %1647 = vmatpush1.msra.mxu0 0.0
    %1648 = vmatprep.subr.mxu0 0.0
    %1649 = vmatpush1.msra.mxu0 0.0
    %1650 = vmatprep.subr.mxu0 0.0
    %1651 = vmatpush1.msra.mxu0 0.0
    %1652 = vmatprep.subr.mxu0 0.0
    %1653 = vmatpush1.msra.mxu0 0.0
    %1654 = vmatprep.subr.mxu0 0.0
    %1655 = vmatpush1.msra.mxu0 0.0
    %1656 = vmatprep.subr.mxu0 0.0
    %1657 = vmatpush1.msra.mxu0 0.0
    %1658 = vmatprep.subr.mxu0 0.0
    %1659 = vmatpush1.msra.mxu0 0.0
    %1660 = vmatprep.subr.mxu0 0.0
    %1661 = vmatpush1.msra.mxu0 0.0
    %1662 = vmatprep.subr.mxu0 0.0
    %1663 = vmatpush1.msra.mxu0 0.0
    %1664 = vmatprep.subr.mxu0 0.0
    %1665 = vmatpush1.msra.mxu0 0.0
    %1666 = vmatprep.subr.mxu0 0.0
    %1667 = vmatpush1.msra.mxu0 0.0
    %1668 = vmatprep.subr.mxu0 0.0
    %1669 = vmatpush1.msra.mxu0 0.0
    %1670 = vmatprep.subr.mxu0 0.0
    %1671 = vmatpush1.msra.mxu0 0.0
    %1672 = vmatprep.subr.mxu0 0.0
    %1673 = vmatpush1.msra.mxu0 0.0
    %1674 = vmatprep.subr.mxu0 0.0
    %1675 = vmatpush1.msra.mxu0 0.0
    %1676 = vmatprep.subr.mxu0 0.0
    %1677 = vmatpush1.msra.mxu0 0.0
    %1678 = vmatprep.subr.mxu0 0.0
    %1679 = vmatpush1.msra.mxu0 0.0
    %1680 = vmatprep.subr.mxu0 0.0
    %1681 = vmatpush1.msra.mxu0 0.0
    %1682 = vmatprep.subr.mxu0 0.0
    %1683 = vmatpush1.msra.mxu0 0.0
    %1684 = vmatprep.subr.mxu0 0.0
    %1685 = vmatpush1.msra.mxu0 0.0
    %1686 = vmatprep.subr.mxu0 0.0
    %1687 = vmatpush1.msra.mxu0 0.0
    %1688 = vmatprep.subr.mxu0 0.0
    %1689 = vmatpush1.msra.mxu0 0.0
    %1690 = vmatprep.subr.mxu0 0.0
    %1691 = vmatpush1.msra.mxu0 0.0
    %1692 = vmatprep.mubr.f32.mxu0 0.0
    %1693 = vmatmul.mubr.f32.gmra.mrb[0].mxu0 %v1626
    %v1694 = vpop.f32.mrb[0].mxu0
    %v1695 = vadd.f32 0.0, %v1694
    %v1696 = vpop.f32.mrb[0].mxu0
    %1697 = vdwg.mxu0
    %v1698 = vmax.f32 %v1622, %v1695
    %1699 = vmatprep.subr.mxu0 0.0
    %1700 = vmatpush1.msra.mxu0 %v1489
    %1701 = vmatprep.subr.mxu0 0.0
    %1702 = vmatpush1.msra.mxu0 %v1490
    %1703 = vmatprep.subr.mxu0 0.0
    %1704 = vmatpush1.msra.mxu0 %v1491
    %1705 = vmatprep.subr.mxu0 0.0
    %1706 = vmatpush1.msra.mxu0 %v1492
    %1707 = vmatprep.subr.mxu0 0.0
    %1708 = vmatpush1.msra.mxu0 %v1493
    %1709 = vmatprep.subr.mxu0 0.0
    %1710 = vmatpush1.msra.mxu0 %v1494
    %1711 = vmatprep.subr.mxu0 0.0
    %1712 = vmatpush1.msra.mxu0 %v1495
    %1713 = vmatprep.subr.mxu0 0.0
    %1714 = vmatpush1.msra.mxu0 %v1496
    %1715 = vmatprep.subr.mxu0 0.0
    %1716 = vmatpush1.msra.mxu0 %v1497
    %1717 = vmatprep.subr.mxu0 0.0
    %1718 = vmatpush1.msra.mxu0 %v1498
    %1719 = vmatprep.subr.mxu0 0.0
    %1720 = vmatpush1.msra.mxu0 %v1499
    %1721 = vmatprep.subr.mxu0 0.0
    %1722 = vmatpush1.msra.mxu0 %v1500
    %1723 = vmatprep.subr.mxu0 0.0
    %1724 = vmatpush1.msra.mxu0 %v1501
    %1725 = vmatprep.subr.mxu0 0.0
    %1726 = vmatpush1.msra.mxu0 %v1502
    %1727 = vmatprep.subr.mxu0 0.0
    %1728 = vmatpush1.msra.mxu0 %v1503
    %1729 = vmatprep.subr.mxu0 0.0
    %1730 = vmatpush1.msra.mxu0 %v1504
    %1731 = vmatprep.subr.mxu0 0.0
    %1732 = vmatpush1.msra.mxu0 0.0
    %1733 = vmatprep.subr.mxu0 0.0
    %1734 = vmatpush1.msra.mxu0 0.0
    %1735 = vmatprep.subr.mxu0 0.0
    %1736 = vmatpush1.msra.mxu0 0.0
    %1737 = vmatprep.subr.mxu0 0.0
    %1738 = vmatpush1.msra.mxu0 0.0
    %1739 = vmatprep.subr.mxu0 0.0
    %1740 = vmatpush1.msra.mxu0 0.0
    %1741 = vmatprep.subr.mxu0 0.0
    %1742 = vmatpush1.msra.mxu0 0.0
    %1743 = vmatprep.subr.mxu0 0.0
    %1744 = vmatpush1.msra.mxu0 0.0
    %1745 = vmatprep.subr.mxu0 0.0
    %1746 = vmatpush1.msra.mxu0 0.0
    %1747 = vmatprep.subr.mxu0 0.0
    %1748 = vmatpush1.msra.mxu0 0.0
    %1749 = vmatprep.subr.mxu0 0.0
    %1750 = vmatpush1.msra.mxu0 0.0
    %1751 = vmatprep.subr.mxu0 0.0
    %1752 = vmatpush1.msra.mxu0 0.0
    %1753 = vmatprep.subr.mxu0 0.0
    %1754 = vmatpush1.msra.mxu0 0.0
    %1755 = vmatprep.subr.mxu0 0.0
    %1756 = vmatpush1.msra.mxu0 0.0
    %1757 = vmatprep.subr.mxu0 0.0
    %1758 = vmatpush1.msra.mxu0 0.0
    %1759 = vmatprep.subr.mxu0 0.0
    %1760 = vmatpush1.msra.mxu0 0.0
    %1761 = vmatprep.subr.mxu0 0.0
    %1762 = vmatpush1.msra.mxu0 0.0
    %1763 = vmatprep.mubr.f32.mxu0 0.0
    %1764 = vmatmul.mubr.f32.gmra.mrb[0].mxu0 %v1698
    %v1765 = vpop.f32.mrb[0].mxu0
    %v1766 = vadd.f32 0.0, %v1765
    %v1767 = vpop.f32.mrb[0].mxu0
    %1768 = vdwg.mxu0
    %1769 = vmatprep.subr.mxu0 0.0
    %1770 = vmatpush1.msra.mxu0 %v1522
    %1771 = vmatprep.subr.mxu0 0.0
    %1772 = vmatpush1.msra.mxu0 %v1523
    %1773 = vmatprep.subr.mxu0 0.0
    %1774 = vmatpush1.msra.mxu0 %v1524
    %1775 = vmatprep.subr.mxu0 0.0
    %1776 = vmatpush1.msra.mxu0 %v1525
    %1777 = vmatprep.subr.mxu0 0.0
    %1778 = vmatpush1.msra.mxu0 %v1526
    %1779 = vmatprep.subr.mxu0 0.0
    %1780 = vmatpush1.msra.mxu0 %v1527
    %1781 = vmatprep.subr.mxu0 0.0
    %1782 = vmatpush1.msra.mxu0 %v1528
    %1783 = vmatprep.subr.mxu0 0.0
    %1784 = vmatpush1.msra.mxu0 %v1529
    %1785 = vmatprep.subr.mxu0 0.0
    %1786 = vmatpush1.msra.mxu0 %v1530
    %1787 = vmatprep.subr.mxu0 0.0
    %1788 = vmatpush1.msra.mxu0 %v1531
    %1789 = vmatprep.subr.mxu0 0.0
    %1790 = vmatpush1.msra.mxu0 %v1532
    %1791 = vmatprep.subr.mxu0 0.0
    %1792 = vmatpush1.msra.mxu0 %v1533
    %1793 = vmatprep.subr.mxu0 0.0
    %1794 = vmatpush1.msra.mxu0 %v1534
    %1795 = vmatprep.subr.mxu0 0.0
    %1796 = vmatpush1.msra.mxu0 %v1535
    %1797 = vmatprep.subr.mxu0 0.0
    %1798 = vmatpush1.msra.mxu0 %v1536
    %1799 = vmatprep.subr.mxu0 0.0
    %1800 = vmatpush1.msra.mxu0 %v1537
    %1801 = vmatprep.subr.mxu0 0.0
    %1802 = vmatpush1.msra.mxu0 0.0
    %1803 = vmatprep.subr.mxu0 0.0
    %1804 = vmatpush1.msra.mxu0 0.0
    %1805 = vmatprep.subr.mxu0 0.0
    %1806 = vmatpush1.msra.mxu0 0.0
    %1807 = vmatprep.subr.mxu0 0.0
    %1808 = vmatpush1.msra.mxu0 0.0
    %1809 = vmatprep.subr.mxu0 0.0
    %1810 = vmatpush1.msra.mxu0 0.0
    %1811 = vmatprep.subr.mxu0 0.0
    %1812 = vmatpush1.msra.mxu0 0.0
    %1813 = vmatprep.subr.mxu0 0.0
    %1814 = vmatpush1.msra.mxu0 0.0
    %1815 = vmatprep.subr.mxu0 0.0
    %1816 = vmatpush1.msra.mxu0 0.0
    %1817 = vmatprep.subr.mxu0 0.0
    %1818 = vmatpush1.msra.mxu0 0.0
    %1819 = vmatprep.subr.mxu0 0.0
    %1820 = vmatpush1.msra.mxu0 0.0
    %1821 = vmatprep.subr.mxu0 0.0
    %1822 = vmatpush1.msra.mxu0 0.0
    %1823 = vmatprep.subr.mxu0 0.0
    %1824 = vmatpush1.msra.mxu0 0.0
    %1825 = vmatprep.subr.mxu0 0.0
    %1826 = vmatpush1.msra.mxu0 0.0
    %1827 = vmatprep.subr.mxu0 0.0
    %1828 = vmatpush1.msra.mxu0 0.0
    %1829 = vmatprep.subr.mxu0 0.0
    %1830 = vmatpush1.msra.mxu0 0.0
    %1831 = vmatprep.subr.mxu0 0.0
    %1832 = vmatpush1.msra.mxu0 0.0
    %1833 = vmatprep.mubr.f32.mxu0 0.0
    %1834 = vmatmul.mubr.f32.gmra.mrb[0].mxu0 %v1698
    %v1835 = vpop.f32.mrb[0].mxu0
    %v1836 = vadd.f32 0.0, %v1835
    %v1837 = vpop.f32.mrb[0].mxu0
    %1838 = vdwg.mxu0
    %v1839 = vmax.f32 %v1766, %v1836
    %v1840 = vmul.f32 %v1045, %v1541
    %v1841 = vmul.f32 %v1046, %v1541
    %v1842 = vadd.f32 %v1840, %v1547
    %v1843 = vadd.f32 %v1841, %v1547
    %v1844 = vmax.f32 %v1842, 0.0
    %v1845 = vmax.f32 %v1843, 0.0
    %1846 = vmatprep.subr.mxu0 0.0
    %1847 = vmatpush1.msra.mxu0 %v1844
    %1848 = vmatprep.subr.mxu0 0.0
    %1849 = vmatpush1.msra.mxu0 %v1845
    %1850 = vmatprep.subr.mxu0 0.0
    %1851 = vmatpush1.msra.mxu0 0.0
    %1852 = vmatprep.subr.mxu0 0.0
    %1853 = vmatpush1.msra.mxu0 0.0
    %1854 = vmatprep.subr.mxu0 0.0
    %1855 = vmatpush1.msra.mxu0 0.0
    %1856 = vmatprep.subr.mxu0 0.0
    %1857 = vmatpush1.msra.mxu0 0.0
    %1858 = vmatprep.subr.mxu0 0.0
    %1859 = vmatpush1.msra.mxu0 0.0
    %1860 = vmatprep.subr.mxu0 0.0
    %1861 = vmatpush1.msra.mxu0 0.0
    %1862 = vmatprep.subr.mxu0 0.0
    %1863 = vmatpush1.msra.mxu0 0.0
    %1864 = vmatprep.subr.mxu0 0.0
    %1865 = vmatpush1.msra.mxu0 0.0
    %1866 = vmatprep.subr.mxu0 0.0
    %1867 = vmatpush1.msra.mxu0 0.0
    %1868 = vmatprep.subr.mxu0 0.0
    %1869 = vmatpush1.msra.mxu0 0.0
    %1870 = vmatprep.subr.mxu0 0.0
    %1871 = vmatpush1.msra.mxu0 0.0
    %1872 = vmatprep.subr.mxu0 0.0
    %1873 = vmatpush1.msra.mxu0 0.0
    %1874 = vmatprep.subr.mxu0 0.0
    %1875 = vmatpush1.msra.mxu0 0.0
    %1876 = vmatprep.subr.mxu0 0.0
    %1877 = vmatpush1.msra.mxu0 0.0
    %1878 = vmatprep.subr.mxu0 0.0
    %1879 = vmatpush1.msra.mxu0 0.0
    %1880 = vmatprep.subr.mxu0 0.0
    %1881 = vmatpush1.msra.mxu0 0.0
    %1882 = vmatprep.subr.mxu0 0.0
    %1883 = vmatpush1.msra.mxu0 0.0
    %1884 = vmatprep.subr.mxu0 0.0
    %1885 = vmatpush1.msra.mxu0 0.0
    %1886 = vmatprep.subr.mxu0 0.0
    %1887 = vmatpush1.msra.mxu0 0.0
    %1888 = vmatprep.subr.mxu0 0.0
    %1889 = vmatpush1.msra.mxu0 0.0
    %1890 = vmatprep.subr.mxu0 0.0
    %1891 = vmatpush1.msra.mxu0 0.0
    %1892 = vmatprep.subr.mxu0 0.0
    %1893 = vmatpush1.msra.mxu0 0.0
    %1894 = vmatprep.subr.mxu0 0.0
    %1895 = vmatpush1.msra.mxu0 0.0
    %1896 = vmatprep.subr.mxu0 0.0
    %1897 = vmatpush1.msra.mxu0 0.0
    %1898 = vmatprep.subr.mxu0 0.0
    %1899 = vmatpush1.msra.mxu0 0.0
    %1900 = vmatprep.subr.mxu0 0.0
    %1901 = vmatpush1.msra.mxu0 0.0
    %1902 = vmatprep.subr.mxu0 0.0
    %1903 = vmatpush1.msra.mxu0 0.0
    %1904 = vmatprep.subr.mxu0 0.0
    %1905 = vmatpush1.msra.mxu0 0.0
    %1906 = vmatprep.subr.mxu0 0.0
    %1907 = vmatpush1.msra.mxu0 0.0
    %1908 = vmatprep.subr.mxu0 0.0
    %1909 = vmatpush1.msra.mxu0 0.0
    %1910 = vmatprep.mubr.f32.mxu0 0.0
    %1911 = vmatmul.mubr.f32.gmra.mrb[0].mxu0 %v1553
    %v1912 = vpop.f32.mrb[0].mxu0
    %v1913 = vadd.f32 0.0, %v1912
    %v1914 = vpop.f32.mrb[0].mxu0
    %1915 = vdwg.mxu0
    %1916 = vmatprep.subr.mxu0 0.0
    %1917 = vmatpush1.msra.mxu0 %v1844
    %1918 = vmatprep.subr.mxu0 0.0
    %1919 = vmatpush1.msra.mxu0 %v1845
    %1920 = vmatprep.subr.mxu0 0.0
    %1921 = vmatpush1.msra.mxu0 0.0
    %1922 = vmatprep.subr.mxu0 0.0
    %1923 = vmatpush1.msra.mxu0 0.0
    %1924 = vmatprep.subr.mxu0 0.0
    %1925 = vmatpush1.msra.mxu0 0.0
    %1926 = vmatprep.subr.mxu0 0.0
    %1927 = vmatpush1.msra.mxu0 0.0
    %1928 = vmatprep.subr.mxu0 0.0
    %1929 = vmatpush1.msra.mxu0 0.0
    %1930 = vmatprep.subr.mxu0 0.0
    %1931 = vmatpush1.msra.mxu0 0.0
    %1932 = vmatprep.subr.mxu0 0.0
    %1933 = vmatpush1.msra.mxu0 0.0
    %1934 = vmatprep.subr.mxu0 0.0
    %1935 = vmatpush1.msra.mxu0 0.0
    %1936 = vmatprep.subr.mxu0 0.0
    %1937 = vmatpush1.msra.mxu0 0.0
    %1938 = vmatprep.subr.mxu0 0.0
    %1939 = vmatpush1.msra.mxu0 0.0
    %1940 = vmatprep.subr.mxu0 0.0
    %1941 = vmatpush1.msra.mxu0 0.0
    %1942 = vmatprep.subr.mxu0 0.0
    %1943 = vmatpush1.msra.mxu0 0.0
    %1944 = vmatprep.subr.mxu0 0.0
    %1945 = vmatpush1.msra.mxu0 0.0
    %1946 = vmatprep.subr.mxu0 0.0
    %1947 = vmatpush1.msra.mxu0 0.0
    %1948 = vmatprep.subr.mxu0 0.0
    %1949 = vmatpush1.msra.mxu0 0.0
    %1950 = vmatprep.subr.mxu0 0.0
    %1951 = vmatpush1.msra.mxu0 0.0
    %1952 = vmatprep.subr.mxu0 0.0
    %1953 = vmatpush1.msra.mxu0 0.0
    %1954 = vmatprep.subr.mxu0 0.0
    %1955 = vmatpush1.msra.mxu0 0.0
    %1956 = vmatprep.subr.mxu0 0.0
    %1957 = vmatpush1.msra.mxu0 0.0
    %1958 = vmatprep.subr.mxu0 0.0
    %1959 = vmatpush1.msra.mxu0 0.0
    %1960 = vmatprep.subr.mxu0 0.0
    %1961 = vmatpush1.msra.mxu0 0.0
    %1962 = vmatprep.subr.mxu0 0.0
    %1963 = vmatpush1.msra.mxu0 0.0
    %1964 = vmatprep.subr.mxu0 0.0
    %1965 = vmatpush1.msra.mxu0 0.0
    %1966 = vmatprep.subr.mxu0 0.0
    %1967 = vmatpush1.msra.mxu0 0.0
    %1968 = vmatprep.subr.mxu0 0.0
    %1969 = vmatpush1.msra.mxu0 0.0
    %1970 = vmatprep.subr.mxu0 0.0
    %1971 = vmatpush1.msra.mxu0 0.0
    %1972 = vmatprep.subr.mxu0 0.0
    %1973 = vmatpush1.msra.mxu0 0.0
    %1974 = vmatprep.subr.mxu0 0.0
    %1975 = vmatpush1.msra.mxu0 0.0
    %1976 = vmatprep.subr.mxu0 0.0
    %1977 = vmatpush1.msra.mxu0 0.0
    %1978 = vmatprep.subr.mxu0 0.0
    %1979 = vmatpush1.msra.mxu0 0.0
    %1980 = vmatprep.mubr.f32.mxu0 0.0
    %1981 = vmatmul.mubr.f32.gmra.mrb[0].mxu0 %v1626
    %v1982 = vpop.f32.mrb[0].mxu0
    %v1983 = vadd.f32 0.0, %v1982
    %v1984 = vpop.f32.mrb[0].mxu0
    %1985 = vdwg.mxu0
    %v1986 = vmax.f32 %v1913, %v1983
    %1987 = vmatprep.subr.mxu0 0.0
    %1988 = vmatpush1.msra.mxu0 %v1489
    %1989 = vmatprep.subr.mxu0 0.0
    %1990 = vmatpush1.msra.mxu0 %v1490
    %1991 = vmatprep.subr.mxu0 0.0
    %1992 = vmatpush1.msra.mxu0 %v1491
    %1993 = vmatprep.subr.mxu0 0.0
    %1994 = vmatpush1.msra.mxu0 %v1492
    %1995 = vmatprep.subr.mxu0 0.0
    %1996 = vmatpush1.msra.mxu0 %v1493
    %1997 = vmatprep.subr.mxu0 0.0
    %1998 = vmatpush1.msra.mxu0 %v1494
    %1999 = vmatprep.subr.mxu0 0.0
    %2000 = vmatpush1.msra.mxu0 %v1495
    %2001 = vmatprep.subr.mxu0 0.0
    %2002 = vmatpush1.msra.mxu0 %v1496
    %2003 = vmatprep.subr.mxu0 0.0
    %2004 = vmatpush1.msra.mxu0 %v1497
    %2005 = vmatprep.subr.mxu0 0.0
    %2006 = vmatpush1.msra.mxu0 %v1498
    %2007 = vmatprep.subr.mxu0 0.0
    %2008 = vmatpush1.msra.mxu0 %v1499
    %2009 = vmatprep.subr.mxu0 0.0
    %2010 = vmatpush1.msra.mxu0 %v1500
    %2011 = vmatprep.subr.mxu0 0.0
    %2012 = vmatpush1.msra.mxu0 %v1501
    %2013 = vmatprep.subr.mxu0 0.0
    %2014 = vmatpush1.msra.mxu0 %v1502
    %2015 = vmatprep.subr.mxu0 0.0
    %2016 = vmatpush1.msra.mxu0 %v1503
    %2017 = vmatprep.subr.mxu0 0.0
    %2018 = vmatpush1.msra.mxu0 %v1504
    %2019 = vmatprep.subr.mxu0 0.0
    %2020 = vmatpush1.msra.mxu0 0.0
    %2021 = vmatprep.subr.mxu0 0.0
    %2022 = vmatpush1.msra.mxu0 0.0
    %2023 = vmatprep.subr.mxu0 0.0
    %2024 = vmatpush1.msra.mxu0 0.0
    %2025 = vmatprep.subr.mxu0 0.0
    %2026 = vmatpush1.msra.mxu0 0.0
    %2027 = vmatprep.subr.mxu0 0.0
    %2028 = vmatpush1.msra.mxu0 0.0
    %2029 = vmatprep.subr.mxu0 0.0
    %2030 = vmatpush1.msra.mxu0 0.0
    %2031 = vmatprep.subr.mxu0 0.0
    %2032 = vmatpush1.msra.mxu0 0.0
    %2033 = vmatprep.subr.mxu0 0.0
    %2034 = vmatpush1.msra.mxu0 0.0
    %2035 = vmatprep.subr.mxu0 0.0
    %2036 = vmatpush1.msra.mxu0 0.0
    %2037 = vmatprep.subr.mxu0 0.0
    %2038 = vmatpush1.msra.mxu0 0.0
    %2039 = vmatprep.subr.mxu0 0.0
    %2040 = vmatpush1.msra.mxu0 0.0
    %2041 = vmatprep.subr.mxu0 0.0
    %2042 = vmatpush1.msra.mxu0 0.0
    %2043 = vmatprep.subr.mxu0 0.0
    %2044 = vmatpush1.msra.mxu0 0.0
    %2045 = vmatprep.subr.mxu0 0.0
    %2046 = vmatpush1.msra.mxu0 0.0
    %2047 = vmatprep.subr.mxu0 0.0
    %2048 = vmatpush1.msra.mxu0 0.0
    %2049 = vmatprep.subr.mxu0 0.0
    %2050 = vmatpush1.msra.mxu0 0.0
    %2051 = vmatprep.mubr.f32.mxu0 0.0
    %2052 = vmatmul.mubr.f32.gmra.mrb[0].mxu0 %v1986
    %v2053 = vpop.f32.mrb[0].mxu0
    %v2054 = vadd.f32 0.0, %v2053
    %v2055 = vpop.f32.mrb[0].mxu0
    %2056 = vdwg.mxu0
    %2057 = vmatprep.subr.mxu0 0.0
    %2058 = vmatpush1.msra.mxu0 %v1522
    %2059 = vmatprep.subr.mxu0 0.0
    %2060 = vmatpush1.msra.mxu0 %v1523
    %2061 = vmatprep.subr.mxu0 0.0
    %2062 = vmatpush1.msra.mxu0 %v1524
    %2063 = vmatprep.subr.mxu0 0.0
    %2064 = vmatpush1.msra.mxu0 %v1525
    %2065 = vmatprep.subr.mxu0 0.0
    %2066 = vmatpush1.msra.mxu0 %v1526
    %2067 = vmatprep.subr.mxu0 0.0
    %2068 = vmatpush1.msra.mxu0 %v1527
    %2069 = vmatprep.subr.mxu0 0.0
    %2070 = vmatpush1.msra.mxu0 %v1528
    %2071 = vmatprep.subr.mxu0 0.0
    %2072 = vmatpush1.msra.mxu0 %v1529
    %2073 = vmatprep.subr.mxu0 0.0
    %2074 = vmatpush1.msra.mxu0 %v1530
    %2075 = vmatprep.subr.mxu0 0.0
    %2076 = vmatpush1.msra.mxu0 %v1531
    %2077 = vmatprep.subr.mxu0 0.0
    %2078 = vmatpush1.msra.mxu0 %v1532
    %2079 = vmatprep.subr.mxu0 0.0
    %2080 = vmatpush1.msra.mxu0 %v1533
    %2081 = vmatprep.subr.mxu0 0.0
    %2082 = vmatpush1.msra.mxu0 %v1534
    %2083 = vmatprep.subr.mxu0 0.0
    %2084 = vmatpush1.msra.mxu0 %v1535
    %2085 = vmatprep.subr.mxu0 0.0
    %2086 = vmatpush1.msra.mxu0 %v1536
    %2087 = vmatprep.subr.mxu0 0.0
    %2088 = vmatpush1.msra.mxu0 %v1537
    %2089 = vmatprep.subr.mxu0 0.0
    %2090 = vmatpush1.msra.mxu0 0.0
    %2091 = vmatprep.subr.mxu0 0.0
    %2092 = vmatpush1.msra.mxu0 0.0
    %2093 = vmatprep.subr.mxu0 0.0
    %2094 = vmatpush1.msra.mxu0 0.0
    %2095 = vmatprep.subr.mxu0 0.0
    %2096 = vmatpush1.msra.mxu0 0.0
    %2097 = vmatprep.subr.mxu0 0.0
    %2098 = vmatpush1.msra.mxu0 0.0
    %2099 = vmatprep.subr.mxu0 0.0
    %2100 = vmatpush1.msra.mxu0 0.0
    %2101 = vmatprep.subr.mxu0 0.0
    %2102 = vmatpush1.msra.mxu0 0.0
    %2103 = vmatprep.subr.mxu0 0.0
    %2104 = vmatpush1.msra.mxu0 0.0
    %2105 = vmatprep.subr.mxu0 0.0
    %2106 = vmatpush1.msra.mxu0 0.0
    %2107 = vmatprep.subr.mxu0 0.0
    %2108 = vmatpush1.msra.mxu0 0.0
    %2109 = vmatprep.subr.mxu0 0.0
    %2110 = vmatpush1.msra.mxu0 0.0
    %2111 = vmatprep.subr.mxu0 0.0
    %2112 = vmatpush1.msra.mxu0 0.0
    %2113 = vmatprep.subr.mxu0 0.0
    %2114 = vmatpush1.msra.mxu0 0.0
    %2115 = vmatprep.subr.mxu0 0.0
    %2116 = vmatpush1.msra.mxu0 0.0
    %2117 = vmatprep.subr.mxu0 0.0
    %2118 = vmatpush1.msra.mxu0 0.0
    %2119 = vmatprep.subr.mxu0 0.0
    %2120 = vmatpush1.msra.mxu0 0.0
    %2121 = vmatprep.mubr.f32.mxu0 0.0
    %2122 = vmatmul.mubr.f32.gmra.mrb[0].mxu0 %v1986
    %v2123 = vpop.f32.mrb[0].mxu0
    %v2124 = vadd.f32 0.0, %v2123
    %v2125 = vpop.f32.mrb[0].mxu0
    %2126 = vdwg.mxu0
    %v2127 = vmax.f32 %v2054, %v2124
    %v2128 = vld [vmem:[%s7] sm:$0x1]
    %v2129 = vld [vmem:[%s8] sm:$0x1]
    %v2130 = vld [vmem:[%s2] sm:$0xff]
    %v2131 = vld [vmem:[%s2 + $0x8] sm:$0xff]
    %v2132 = vld [vmem:[%s2 + $0x10] sm:$0xff]
    %v2133 = vld [vmem:[%s2 + $0x18] sm:$0xff]
    %v2134 = vld [vmem:[%s2 + $0x20] sm:$0xff]
    %v2135 = vld [vmem:[%s2 + $0x28] sm:$0xff]
    %v2136 = vld [vmem:[%s2 + $0x30] sm:$0xff]
    %v2137 = vld [vmem:[%s2 + $0x38] sm:$0xff]
    %v2139 = vsel %vm93, %v1839, 0
    %2141 = vmatprep.subr.mxu0 0.0
    %2142 = vmatpush1.msra.mxu0 %v2130
    %2143 = vmatprep.subr.mxu0 0.0
    %2144 = vmatpush1.msra.mxu0 %v2131
    %2145 = vmatprep.subr.mxu0 0.0
    %2146 = vmatpush1.msra.mxu0 %v2132
    %2147 = vmatprep.subr.mxu0 0.0
    %2148 = vmatpush1.msra.mxu0 %v2133
    %2149 = vmatprep.subr.mxu0 0.0
    %2150 = vmatpush1.msra.mxu0 %v2134
    %2151 = vmatprep.subr.mxu0 0.0
    %2152 = vmatpush1.msra.mxu0 %v2135
    %2153 = vmatprep.subr.mxu0 0.0
    %2154 = vmatpush1.msra.mxu0 %v2136
    %2155 = vmatprep.subr.mxu0 0.0
    %2156 = vmatpush1.msra.mxu0 %v2137
    %2157 = vmatprep.subr.mxu0 0.0
    %2158 = vmatpush1.msra.mxu0 0.0
    %2159 = vmatprep.subr.mxu0 0.0
    %2160 = vmatpush1.msra.mxu0 0.0
    %2161 = vmatprep.subr.mxu0 0.0
    %2162 = vmatpush1.msra.mxu0 0.0
    %2163 = vmatprep.subr.mxu0 0.0
    %2164 = vmatpush1.msra.mxu0 0.0
    %2165 = vmatprep.subr.mxu0 0.0
    %2166 = vmatpush1.msra.mxu0 0.0
    %2167 = vmatprep.subr.mxu0 0.0
    %2168 = vmatpush1.msra.mxu0 0.0
    %2169 = vmatprep.subr.mxu0 0.0
    %2170 = vmatpush1.msra.mxu0 0.0
    %2171 = vmatprep.subr.mxu0 0.0
    %2172 = vmatpush1.msra.mxu0 0.0
    %2173 = vmatprep.subr.mxu0 0.0
    %2174 = vmatpush1.msra.mxu0 0.0
    %2175 = vmatprep.subr.mxu0 0.0
    %2176 = vmatpush1.msra.mxu0 0.0
    %2177 = vmatprep.subr.mxu0 0.0
    %2178 = vmatpush1.msra.mxu0 0.0
    %2179 = vmatprep.subr.mxu0 0.0
    %2180 = vmatpush1.msra.mxu0 0.0
    %2181 = vmatprep.subr.mxu0 0.0
    %2182 = vmatpush1.msra.mxu0 0.0
    %2183 = vmatprep.subr.mxu0 0.0
    %2184 = vmatpush1.msra.mxu0 0.0
    %2185 = vmatprep.subr.mxu0 0.0
    %2186 = vmatpush1.msra.mxu0 0.0
    %2187 = vmatprep.subr.mxu0 0.0
    %2188 = vmatpush1.msra.mxu0 0.0
    %2189 = vmatprep.subr.mxu0 0.0
    %2190 = vmatpush1.msra.mxu0 0.0
    %2191 = vmatprep.subr.mxu0 0.0
    %2192 = vmatpush1.msra.mxu0 0.0
    %2193 = vmatprep.subr.mxu0 0.0
    %2194 = vmatpush1.msra.mxu0 0.0
    %2195 = vmatprep.subr.mxu0 0.0
    %2196 = vmatpush1.msra.mxu0 0.0
    %2197 = vmatprep.subr.mxu0 0.0
    %2198 = vmatpush1.msra.mxu0 0.0
    %2199 = vmatprep.subr.mxu0 0.0
    %2200 = vmatpush1.msra.mxu0 0.0
    %2201 = vmatprep.subr.mxu0 0.0
    %2202 = vmatpush1.msra.mxu0 0.0
    %2203 = vmatprep.subr.mxu0 0.0
    %2204 = vmatpush1.msra.mxu0 0.0
    %2205 = vmatprep.mubr.f32.mxu0 0.0
    %2206 = vmatmul.mubr.f32.gmra.mrb[0].mxu0 %v2139
    %v2207 = vpop.f32.mrb[0].mxu0
    %v2208 = vadd.f32 0.0, %v2207
    %v2209 = vpop.f32.mrb[0].mxu0
    %2210 = vdwg.mxu0
    %s2211 = scalar_lea.vmem %s2, 64
    %v2212 = vld [vmem:[%s2211] sm:$0xff]
    %v2213 = vld [vmem:[%s2211 + $0x8] sm:$0xff]
    %v2214 = vld [vmem:[%s2211 + $0x10] sm:$0xff]
    %v2215 = vld [vmem:[%s2211 + $0x18] sm:$0xff]
    %v2216 = vld [vmem:[%s2211 + $0x20] sm:$0xff]
    %v2217 = vld [vmem:[%s2211 + $0x28] sm:$0xff]
    %v2218 = vld [vmem:[%s2211 + $0x30] sm:$0xff]
    %v2219 = vld [vmem:[%s2211 + $0x38] sm:$0xff]
    %2220 = vmatprep.subr.mxu0 0.0
    %2221 = vmatpush1.msra.mxu0 %v2212
    %2222 = vmatprep.subr.mxu0 0.0
    %2223 = vmatpush1.msra.mxu0 %v2213
    %2224 = vmatprep.subr.mxu0 0.0
    %2225 = vmatpush1.msra.mxu0 %v2214
    %2226 = vmatprep.subr.mxu0 0.0
    %2227 = vmatpush1.msra.mxu0 %v2215
    %2228 = vmatprep.subr.mxu0 0.0
    %2229 = vmatpush1.msra.mxu0 %v2216
    %2230 = vmatprep.subr.mxu0 0.0
    %2231 = vmatpush1.msra.mxu0 %v2217
    %2232 = vmatprep.subr.mxu0 0.0
    %2233 = vmatpush1.msra.mxu0 %v2218
    %2234 = vmatprep.subr.mxu0 0.0
    %2235 = vmatpush1.msra.mxu0 %v2219
    %2236 = vmatprep.subr.mxu0 0.0
    %2237 = vmatpush1.msra.mxu0 0.0
    %2238 = vmatprep.subr.mxu0 0.0
    %2239 = vmatpush1.msra.mxu0 0.0
    %2240 = vmatprep.subr.mxu0 0.0
    %2241 = vmatpush1.msra.mxu0 0.0
    %2242 = vmatprep.subr.mxu0 0.0
    %2243 = vmatpush1.msra.mxu0 0.0
    %2244 = vmatprep.subr.mxu0 0.0
    %2245 = vmatpush1.msra.mxu0 0.0
    %2246 = vmatprep.subr.mxu0 0.0
    %2247 = vmatpush1.msra.mxu0 0.0
    %2248 = vmatprep.subr.mxu0 0.0
    %2249 = vmatpush1.msra.mxu0 0.0
    %2250 = vmatprep.subr.mxu0 0.0
    %2251 = vmatpush1.msra.mxu0 0.0
    %2252 = vmatprep.subr.mxu0 0.0
    %2253 = vmatpush1.msra.mxu0 0.0
    %2254 = vmatprep.subr.mxu0 0.0
    %2255 = vmatpush1.msra.mxu0 0.0
    %2256 = vmatprep.subr.mxu0 0.0
    %2257 = vmatpush1.msra.mxu0 0.0
    %2258 = vmatprep.subr.mxu0 0.0
    %2259 = vmatpush1.msra.mxu0 0.0
    %2260 = vmatprep.subr.mxu0 0.0
    %2261 = vmatpush1.msra.mxu0 0.0
    %2262 = vmatprep.subr.mxu0 0.0
    %2263 = vmatpush1.msra.mxu0 0.0
    %2264 = vmatprep.subr.mxu0 0.0
    %2265 = vmatpush1.msra.mxu0 0.0
    %2266 = vmatprep.subr.mxu0 0.0
    %2267 = vmatpush1.msra.mxu0 0.0
    %2268 = vmatprep.subr.mxu0 0.0
    %2269 = vmatpush1.msra.mxu0 0.0
    %2270 = vmatprep.subr.mxu0 0.0
    %2271 = vmatpush1.msra.mxu0 0.0
    %2272 = vmatprep.subr.mxu0 0.0
    %2273 = vmatpush1.msra.mxu0 0.0
    %2274 = vmatprep.subr.mxu0 0.0
    %2275 = vmatpush1.msra.mxu0 0.0
    %2276 = vmatprep.subr.mxu0 0.0
    %2277 = vmatpush1.msra.mxu0 0.0
    %2278 = vmatprep.subr.mxu0 0.0
    %2279 = vmatpush1.msra.mxu0 0.0
    %2280 = vmatprep.subr.mxu0 0.0
    %2281 = vmatpush1.msra.mxu0 0.0
    %2282 = vmatprep.subr.mxu0 0.0
    %2283 = vmatpush1.msra.mxu0 0.0
    %2284 = vmatprep.mubr.f32.mxu0 0.0
    %2285 = vmatmul.mubr.f32.gmra.mrb[0].mxu0 %v2139
    %v2286 = vpop.f32.mrb[0].mxu0
    %v2287 = vadd.f32 0.0, %v2286
    %v2288 = vpop.f32.mrb[0].mxu0
    %2289 = vdwg.mxu0
    %v2290 = vsel %vm1319, %v75, 0
    %2292 = vmatprep.subr.mxu0 0.0
    %2293 = vmatpush1.msra.mxu0 %v2287
    %2294 = vmatprep.subr.mxu0 0.0
    %2295 = vmatpush1.msra.mxu0 0.0
    %2296 = vmatprep.subr.mxu0 0.0
    %2297 = vmatpush1.msra.mxu0 0.0
    %2298 = vmatprep.subr.mxu0 0.0
    %2299 = vmatpush1.msra.mxu0 0.0
    %2300 = vmatprep.subr.mxu0 0.0
    %2301 = vmatpush1.msra.mxu0 0.0
    %2302 = vmatprep.subr.mxu0 0.0
    %2303 = vmatpush1.msra.mxu0 0.0
    %2304 = vmatprep.subr.mxu0 0.0
    %2305 = vmatpush1.msra.mxu0 0.0
    %2306 = vmatprep.subr.mxu0 0.0
    %2307 = vmatpush1.msra.mxu0 0.0
    %2308 = vmatprep.subr.mxu0 0.0
    %2309 = vmatpush1.msra.mxu0 0.0
    %2310 = vmatprep.subr.mxu0 0.0
    %2311 = vmatpush1.msra.mxu0 0.0
    %2312 = vmatprep.subr.mxu0 0.0
    %2313 = vmatpush1.msra.mxu0 0.0
    %2314 = vmatprep.subr.mxu0 0.0
    %2315 = vmatpush1.msra.mxu0 0.0
    %2316 = vmatprep.subr.mxu0 0.0
    %2317 = vmatpush1.msra.mxu0 0.0
    %2318 = vmatprep.subr.mxu0 0.0
    %2319 = vmatpush1.msra.mxu0 0.0
    %2320 = vmatprep.subr.mxu0 0.0
    %2321 = vmatpush1.msra.mxu0 0.0
    %2322 = vmatprep.subr.mxu0 0.0
    %2323 = vmatpush1.msra.mxu0 0.0
    %2324 = vmatprep.subr.mxu0 0.0
    %2325 = vmatpush1.msra.mxu0 0.0
    %2326 = vmatprep.subr.mxu0 0.0
    %2327 = vmatpush1.msra.mxu0 0.0
    %2328 = vmatprep.subr.mxu0 0.0
    %2329 = vmatpush1.msra.mxu0 0.0
    %2330 = vmatprep.subr.mxu0 0.0
    %2331 = vmatpush1.msra.mxu0 0.0
    %2332 = vmatprep.subr.mxu0 0.0
    %2333 = vmatpush1.msra.mxu0 0.0
    %2334 = vmatprep.subr.mxu0 0.0
    %2335 = vmatpush1.msra.mxu0 0.0
    %2336 = vmatprep.subr.mxu0 0.0
    %2337 = vmatpush1.msra.mxu0 0.0
    %2338 = vmatprep.subr.mxu0 0.0
    %2339 = vmatpush1.msra.mxu0 0.0
    %2340 = vmatprep.subr.mxu0 0.0
    %2341 = vmatpush1.msra.mxu0 0.0
    %2342 = vmatprep.subr.mxu0 0.0
    %2343 = vmatpush1.msra.mxu0 0.0
    %2344 = vmatprep.subr.mxu0 0.0
    %2345 = vmatpush1.msra.mxu0 0.0
    %2346 = vmatprep.subr.mxu0 0.0
    %2347 = vmatpush1.msra.mxu0 0.0
    %2348 = vmatprep.subr.mxu0 0.0
    %2349 = vmatpush1.msra.mxu0 0.0
    %2350 = vmatprep.subr.mxu0 0.0
    %2351 = vmatpush1.msra.mxu0 0.0
    %2352 = vmatprep.subr.mxu0 0.0
    %2353 = vmatpush1.msra.mxu0 0.0
    %2354 = vmatprep.subr.mxu0 0.0
    %2355 = vmatpush1.msra.mxu0 0.0
    %2356 = vmatprep.mubr.f32.mxu0 0.0
    %2357 = vmatmul.mubr.f32.gmra.mrb[0].mxu0 %v2290
    %v2358 = vpop.f32.mrb[0].mxu0
    %v2359 = vadd.f32 0.0, %v2358
    %v2360 = vpop.f32.mrb[0].mxu0
    %2361 = vdwg.mxu0
    %v2362 = vsel %vm1319, %v71, 0
    %2364 = vmatprep.subr.mxu0 0.0
    %2365 = vmatpush1.msra.mxu0 %v2208
    %2366 = vmatprep.subr.mxu0 0.0
    %2367 = vmatpush1.msra.mxu0 0.0
    %2368 = vmatprep.subr.mxu0 0.0
    %2369 = vmatpush1.msra.mxu0 0.0
    %2370 = vmatprep.subr.mxu0 0.0
    %2371 = vmatpush1.msra.mxu0 0.0
    %2372 = vmatprep.subr.mxu0 0.0
    %2373 = vmatpush1.msra.mxu0 0.0
    %2374 = vmatprep.subr.mxu0 0.0
    %2375 = vmatpush1.msra.mxu0 0.0
    %2376 = vmatprep.subr.mxu0 0.0
    %2377 = vmatpush1.msra.mxu0 0.0
    %2378 = vmatprep.subr.mxu0 0.0
    %2379 = vmatpush1.msra.mxu0 0.0
    %2380 = vmatprep.subr.mxu0 0.0
    %2381 = vmatpush1.msra.mxu0 0.0
    %2382 = vmatprep.subr.mxu0 0.0
    %2383 = vmatpush1.msra.mxu0 0.0
    %2384 = vmatprep.subr.mxu0 0.0
    %2385 = vmatpush1.msra.mxu0 0.0
    %2386 = vmatprep.subr.mxu0 0.0
    %2387 = vmatpush1.msra.mxu0 0.0
    %2388 = vmatprep.subr.mxu0 0.0
    %2389 = vmatpush1.msra.mxu0 0.0
    %2390 = vmatprep.subr.mxu0 0.0
    %2391 = vmatpush1.msra.mxu0 0.0
    %2392 = vmatprep.subr.mxu0 0.0
    %2393 = vmatpush1.msra.mxu0 0.0
    %2394 = vmatprep.subr.mxu0 0.0
    %2395 = vmatpush1.msra.mxu0 0.0
    %2396 = vmatprep.subr.mxu0 0.0
    %2397 = vmatpush1.msra.mxu0 0.0
    %2398 = vmatprep.subr.mxu0 0.0
    %2399 = vmatpush1.msra.mxu0 0.0
    %2400 = vmatprep.subr.mxu0 0.0
    %2401 = vmatpush1.msra.mxu0 0.0
    %2402 = vmatprep.subr.mxu0 0.0
    %2403 = vmatpush1.msra.mxu0 0.0
    %2404 = vmatprep.subr.mxu0 0.0
    %2405 = vmatpush1.msra.mxu0 0.0
    %2406 = vmatprep.subr.mxu0 0.0
    %2407 = vmatpush1.msra.mxu0 0.0
    %2408 = vmatprep.subr.mxu0 0.0
    %2409 = vmatpush1.msra.mxu0 0.0
    %2410 = vmatprep.subr.mxu0 0.0
    %2411 = vmatpush1.msra.mxu0 0.0
    %2412 = vmatprep.subr.mxu0 0.0
    %2413 = vmatpush1.msra.mxu0 0.0
    %2414 = vmatprep.subr.mxu0 0.0
    %2415 = vmatpush1.msra.mxu0 0.0
    %2416 = vmatprep.subr.mxu0 0.0
    %2417 = vmatpush1.msra.mxu0 0.0
    %2418 = vmatprep.subr.mxu0 0.0
    %2419 = vmatpush1.msra.mxu0 0.0
    %2420 = vmatprep.subr.mxu0 0.0
    %2421 = vmatpush1.msra.mxu0 0.0
    %2422 = vmatprep.subr.mxu0 0.0
    %2423 = vmatpush1.msra.mxu0 0.0
    %2424 = vmatprep.subr.mxu0 0.0
    %2425 = vmatpush1.msra.mxu0 0.0
    %2426 = vmatprep.subr.mxu0 0.0
    %2427 = vmatpush1.msra.mxu0 0.0
    %2428 = vmatprep.mubr.f32.mxu0 0.0
    %2429 = vmatmul.mubr.f32.gmra.mrb[0].mxu0 %v2362
    %v2430 = vpop.f32.mrb[0].mxu0
    %v2431 = vadd.f32 %v2359, %v2430
    %v2432 = vpop.f32.mrb[0].mxu0
    %2433 = vdwg.mxu0
    %s2434 = scalar_lea.vmem %s2, 128
    %v2435 = vld [vmem:[%s2434] sm:$0xff]
    %v2436 = vld [vmem:[%s2434 + $0x8] sm:$0xff]
    %v2437 = vld [vmem:[%s2434 + $0x10] sm:$0xff]
    %v2438 = vld [vmem:[%s2434 + $0x18] sm:$0xff]
    %v2439 = vld [vmem:[%s2434 + $0x20] sm:$0xff]
    %v2440 = vld [vmem:[%s2434 + $0x28] sm:$0xff]
    %v2441 = vld [vmem:[%s2434 + $0x30] sm:$0xff]
    %v2442 = vld [vmem:[%s2434 + $0x38] sm:$0xff]
    %2443 = vmatprep.subr.mxu0 0.0
    %2444 = vmatpush1.msra.mxu0 %v2435
    %2445 = vmatprep.subr.mxu0 0.0
    %2446 = vmatpush1.msra.mxu0 %v2436
    %2447 = vmatprep.subr.mxu0 0.0
    %2448 = vmatpush1.msra.mxu0 %v2437
    %2449 = vmatprep.subr.mxu0 0.0
    %2450 = vmatpush1.msra.mxu0 %v2438
    %2451 = vmatprep.subr.mxu0 0.0
    %2452 = vmatpush1.msra.mxu0 %v2439
    %2453 = vmatprep.subr.mxu0 0.0
    %2454 = vmatpush1.msra.mxu0 %v2440
    %2455 = vmatprep.subr.mxu0 0.0
    %2456 = vmatpush1.msra.mxu0 %v2441
    %2457 = vmatprep.subr.mxu0 0.0
    %2458 = vmatpush1.msra.mxu0 %v2442
    %2459 = vmatprep.subr.mxu0 0.0
    %2460 = vmatpush1.msra.mxu0 0.0
    %2461 = vmatprep.subr.mxu0 0.0
    %2462 = vmatpush1.msra.mxu0 0.0
    %2463 = vmatprep.subr.mxu0 0.0
    %2464 = vmatpush1.msra.mxu0 0.0
    %2465 = vmatprep.subr.mxu0 0.0
    %2466 = vmatpush1.msra.mxu0 0.0
    %2467 = vmatprep.subr.mxu0 0.0
    %2468 = vmatpush1.msra.mxu0 0.0
    %2469 = vmatprep.subr.mxu0 0.0
    %2470 = vmatpush1.msra.mxu0 0.0
    %2471 = vmatprep.subr.mxu0 0.0
    %2472 = vmatpush1.msra.mxu0 0.0
    %2473 = vmatprep.subr.mxu0 0.0
    %2474 = vmatpush1.msra.mxu0 0.0
    %2475 = vmatprep.subr.mxu0 0.0
    %2476 = vmatpush1.msra.mxu0 0.0
    %2477 = vmatprep.subr.mxu0 0.0
    %2478 = vmatpush1.msra.mxu0 0.0
    %2479 = vmatprep.subr.mxu0 0.0
    %2480 = vmatpush1.msra.mxu0 0.0
    %2481 = vmatprep.subr.mxu0 0.0
    %2482 = vmatpush1.msra.mxu0 0.0
    %2483 = vmatprep.subr.mxu0 0.0
    %2484 = vmatpush1.msra.mxu0 0.0
    %2485 = vmatprep.subr.mxu0 0.0
    %2486 = vmatpush1.msra.mxu0 0.0
    %2487 = vmatprep.subr.mxu0 0.0
    %2488 = vmatpush1.msra.mxu0 0.0
    %2489 = vmatprep.subr.mxu0 0.0
    %2490 = vmatpush1.msra.mxu0 0.0
    %2491 = vmatprep.subr.mxu0 0.0
    %2492 = vmatpush1.msra.mxu0 0.0
    %2493 = vmatprep.subr.mxu0 0.0
    %2494 = vmatpush1.msra.mxu0 0.0
    %2495 = vmatprep.subr.mxu0 0.0
    %2496 = vmatpush1.msra.mxu0 0.0
    %2497 = vmatprep.subr.mxu0 0.0
    %2498 = vmatpush1.msra.mxu0 0.0
    %2499 = vmatprep.subr.mxu0 0.0
    %2500 = vmatpush1.msra.mxu0 0.0
    %2501 = vmatprep.subr.mxu0 0.0
    %2502 = vmatpush1.msra.mxu0 0.0
    %2503 = vmatprep.subr.mxu0 0.0
    %2504 = vmatpush1.msra.mxu0 0.0
    %2505 = vmatprep.subr.mxu0 0.0
    %2506 = vmatpush1.msra.mxu0 0.0
    %2507 = vmatprep.mubr.f32.mxu0 0.0
    %2508 = vmatmul.mubr.f32.gmra.mrb[0].mxu0 %v2139
    %v2509 = vpop.f32.mrb[0].mxu0
    %v2510 = vadd.f32 0.0, %v2509
    %v2511 = vpop.f32.mrb[0].mxu0
    %2512 = vdwg.mxu0
    %v2513 = vsel %vm1319, %v83, 0
    %2515 = vmatprep.subr.mxu0 0.0
    %2516 = vmatpush1.msra.mxu0 %v2510
    %2517 = vmatprep.subr.mxu0 0.0
    %2518 = vmatpush1.msra.mxu0 0.0
    %2519 = vmatprep.subr.mxu0 0.0
    %2520 = vmatpush1.msra.mxu0 0.0
    %2521 = vmatprep.subr.mxu0 0.0
    %2522 = vmatpush1.msra.mxu0 0.0
    %2523 = vmatprep.subr.mxu0 0.0
    %2524 = vmatpush1.msra.mxu0 0.0
    %2525 = vmatprep.subr.mxu0 0.0
    %2526 = vmatpush1.msra.mxu0 0.0
    %2527 = vmatprep.subr.mxu0 0.0
    %2528 = vmatpush1.msra.mxu0 0.0
    %2529 = vmatprep.subr.mxu0 0.0
    %2530 = vmatpush1.msra.mxu0 0.0
    %2531 = vmatprep.subr.mxu0 0.0
    %2532 = vmatpush1.msra.mxu0 0.0
    %2533 = vmatprep.subr.mxu0 0.0
    %2534 = vmatpush1.msra.mxu0 0.0
    %2535 = vmatprep.subr.mxu0 0.0
    %2536 = vmatpush1.msra.mxu0 0.0
    %2537 = vmatprep.subr.mxu0 0.0
    %2538 = vmatpush1.msra.mxu0 0.0
    %2539 = vmatprep.subr.mxu0 0.0
    %2540 = vmatpush1.msra.mxu0 0.0
    %2541 = vmatprep.subr.mxu0 0.0
    %2542 = vmatpush1.msra.mxu0 0.0
    %2543 = vmatprep.subr.mxu0 0.0
    %2544 = vmatpush1.msra.mxu0 0.0
    %2545 = vmatprep.subr.mxu0 0.0
    %2546 = vmatpush1.msra.mxu0 0.0
    %2547 = vmatprep.subr.mxu0 0.0
    %2548 = vmatpush1.msra.mxu0 0.0
    %2549 = vmatprep.subr.mxu0 0.0
    %2550 = vmatpush1.msra.mxu0 0.0
    %2551 = vmatprep.subr.mxu0 0.0
    %2552 = vmatpush1.msra.mxu0 0.0
    %2553 = vmatprep.subr.mxu0 0.0
    %2554 = vmatpush1.msra.mxu0 0.0
    %2555 = vmatprep.subr.mxu0 0.0
    %2556 = vmatpush1.msra.mxu0 0.0
    %2557 = vmatprep.subr.mxu0 0.0
    %2558 = vmatpush1.msra.mxu0 0.0
    %2559 = vmatprep.subr.mxu0 0.0
    %2560 = vmatpush1.msra.mxu0 0.0
    %2561 = vmatprep.subr.mxu0 0.0
    %2562 = vmatpush1.msra.mxu0 0.0
    %2563 = vmatprep.subr.mxu0 0.0
    %2564 = vmatpush1.msra.mxu0 0.0
    %2565 = vmatprep.subr.mxu0 0.0
    %2566 = vmatpush1.msra.mxu0 0.0
    %2567 = vmatprep.subr.mxu0 0.0
    %2568 = vmatpush1.msra.mxu0 0.0
    %2569 = vmatprep.subr.mxu0 0.0
    %2570 = vmatpush1.msra.mxu0 0.0
    %2571 = vmatprep.subr.mxu0 0.0
    %2572 = vmatpush1.msra.mxu0 0.0
    %2573 = vmatprep.subr.mxu0 0.0
    %2574 = vmatpush1.msra.mxu0 0.0
    %2575 = vmatprep.subr.mxu0 0.0
    %2576 = vmatpush1.msra.mxu0 0.0
    %2577 = vmatprep.subr.mxu0 0.0
    %2578 = vmatpush1.msra.mxu0 0.0
    %2579 = vmatprep.mubr.f32.mxu0 0.0
    %2580 = vmatmul.mubr.f32.gmra.mrb[0].mxu0 %v2513
    %v2581 = vpop.f32.mrb[0].mxu0
    %v2582 = vadd.f32 0.0, %v2581
    %v2583 = vpop.f32.mrb[0].mxu0
    %2584 = vdwg.mxu0
    %v2585 = vadd.f32 %v2431, %v2582
    %v2587 = vsel %vm93, %v2127, 0
    %2589 = vmatprep.subr.mxu0 0.0
    %2590 = vmatpush1.msra.mxu0 %v2130
    %2591 = vmatprep.subr.mxu0 0.0
    %2592 = vmatpush1.msra.mxu0 %v2131
    %2593 = vmatprep.subr.mxu0 0.0
    %2594 = vmatpush1.msra.mxu0 %v2132
    %2595 = vmatprep.subr.mxu0 0.0
    %2596 = vmatpush1.msra.mxu0 %v2133
    %2597 = vmatprep.subr.mxu0 0.0
    %2598 = vmatpush1.msra.mxu0 %v2134
    %2599 = vmatprep.subr.mxu0 0.0
    %2600 = vmatpush1.msra.mxu0 %v2135
    %2601 = vmatprep.subr.mxu0 0.0
    %2602 = vmatpush1.msra.mxu0 %v2136
    %2603 = vmatprep.subr.mxu0 0.0
    %2604 = vmatpush1.msra.mxu0 %v2137
    %2605 = vmatprep.subr.mxu0 0.0
    %2606 = vmatpush1.msra.mxu0 0.0
    %2607 = vmatprep.subr.mxu0 0.0
    %2608 = vmatpush1.msra.mxu0 0.0
    %2609 = vmatprep.subr.mxu0 0.0
    %2610 = vmatpush1.msra.mxu0 0.0
    %2611 = vmatprep.subr.mxu0 0.0
    %2612 = vmatpush1.msra.mxu0 0.0
    %2613 = vmatprep.subr.mxu0 0.0
    %2614 = vmatpush1.msra.mxu0 0.0
    %2615 = vmatprep.subr.mxu0 0.0
    %2616 = vmatpush1.msra.mxu0 0.0
    %2617 = vmatprep.subr.mxu0 0.0
    %2618 = vmatpush1.msra.mxu0 0.0
    %2619 = vmatprep.subr.mxu0 0.0
    %2620 = vmatpush1.msra.mxu0 0.0
    %2621 = vmatprep.subr.mxu0 0.0
    %2622 = vmatpush1.msra.mxu0 0.0
    %2623 = vmatprep.subr.mxu0 0.0
    %2624 = vmatpush1.msra.mxu0 0.0
    %2625 = vmatprep.subr.mxu0 0.0
    %2626 = vmatpush1.msra.mxu0 0.0
    %2627 = vmatprep.subr.mxu0 0.0
    %2628 = vmatpush1.msra.mxu0 0.0
    %2629 = vmatprep.subr.mxu0 0.0
    %2630 = vmatpush1.msra.mxu0 0.0
    %2631 = vmatprep.subr.mxu0 0.0
    %2632 = vmatpush1.msra.mxu0 0.0
    %2633 = vmatprep.subr.mxu0 0.0
    %2634 = vmatpush1.msra.mxu0 0.0
    %2635 = vmatprep.subr.mxu0 0.0
    %2636 = vmatpush1.msra.mxu0 0.0
    %2637 = vmatprep.subr.mxu0 0.0
    %2638 = vmatpush1.msra.mxu0 0.0
    %2639 = vmatprep.subr.mxu0 0.0
    %2640 = vmatpush1.msra.mxu0 0.0
    %2641 = vmatprep.subr.mxu0 0.0
    %2642 = vmatpush1.msra.mxu0 0.0
    %2643 = vmatprep.subr.mxu0 0.0
    %2644 = vmatpush1.msra.mxu0 0.0
    %2645 = vmatprep.subr.mxu0 0.0
    %2646 = vmatpush1.msra.mxu0 0.0
    %2647 = vmatprep.subr.mxu0 0.0
    %2648 = vmatpush1.msra.mxu0 0.0
    %2649 = vmatprep.subr.mxu0 0.0
    %2650 = vmatpush1.msra.mxu0 0.0
    %2651 = vmatprep.subr.mxu0 0.0
    %2652 = vmatpush1.msra.mxu0 0.0
    %2653 = vmatprep.mubr.f32.mxu0 0.0
    %2654 = vmatmul.mubr.f32.gmra.mrb[0].mxu0 %v2587
    %v2655 = vpop.f32.mrb[0].mxu0
    %v2656 = vadd.f32 0.0, %v2655
    %v2657 = vpop.f32.mrb[0].mxu0
    %2658 = vdwg.mxu0
    %2659 = vmatprep.subr.mxu0 0.0
    %2660 = vmatpush1.msra.mxu0 %v2212
    %2661 = vmatprep.subr.mxu0 0.0
    %2662 = vmatpush1.msra.mxu0 %v2213
    %2663 = vmatprep.subr.mxu0 0.0
    %2664 = vmatpush1.msra.mxu0 %v2214
    %2665 = vmatprep.subr.mxu0 0.0
    %2666 = vmatpush1.msra.mxu0 %v2215
    %2667 = vmatprep.subr.mxu0 0.0
    %2668 = vmatpush1.msra.mxu0 %v2216
    %2669 = vmatprep.subr.mxu0 0.0
    %2670 = vmatpush1.msra.mxu0 %v2217
    %2671 = vmatprep.subr.mxu0 0.0
    %2672 = vmatpush1.msra.mxu0 %v2218
    %2673 = vmatprep.subr.mxu0 0.0
    %2674 = vmatpush1.msra.mxu0 %v2219
    %2675 = vmatprep.subr.mxu0 0.0
    %2676 = vmatpush1.msra.mxu0 0.0
    %2677 = vmatprep.subr.mxu0 0.0
    %2678 = vmatpush1.msra.mxu0 0.0
    %2679 = vmatprep.subr.mxu0 0.0
    %2680 = vmatpush1.msra.mxu0 0.0
    %2681 = vmatprep.subr.mxu0 0.0
    %2682 = vmatpush1.msra.mxu0 0.0
    %2683 = vmatprep.subr.mxu0 0.0
    %2684 = vmatpush1.msra.mxu0 0.0
    %2685 = vmatprep.subr.mxu0 0.0
    %2686 = vmatpush1.msra.mxu0 0.0
    %2687 = vmatprep.subr.mxu0 0.0
    %2688 = vmatpush1.msra.mxu0 0.0
    %2689 = vmatprep.subr.mxu0 0.0
    %2690 = vmatpush1.msra.mxu0 0.0
    %2691 = vmatprep.subr.mxu0 0.0
    %2692 = vmatpush1.msra.mxu0 0.0
    %2693 = vmatprep.subr.mxu0 0.0
    %2694 = vmatpush1.msra.mxu0 0.0
    %2695 = vmatprep.subr.mxu0 0.0
    %2696 = vmatpush1.msra.mxu0 0.0
    %2697 = vmatprep.subr.mxu0 0.0
    %2698 = vmatpush1.msra.mxu0 0.0
    %2699 = vmatprep.subr.mxu0 0.0
    %2700 = vmatpush1.msra.mxu0 0.0
    %2701 = vmatprep.subr.mxu0 0.0
    %2702 = vmatpush1.msra.mxu0 0.0
    %2703 = vmatprep.subr.mxu0 0.0
    %2704 = vmatpush1.msra.mxu0 0.0
    %2705 = vmatprep.subr.mxu0 0.0
    %2706 = vmatpush1.msra.mxu0 0.0
    %2707 = vmatprep.subr.mxu0 0.0
    %2708 = vmatpush1.msra.mxu0 0.0
    %2709 = vmatprep.subr.mxu0 0.0
    %2710 = vmatpush1.msra.mxu0 0.0
    %2711 = vmatprep.subr.mxu0 0.0
    %2712 = vmatpush1.msra.mxu0 0.0
    %2713 = vmatprep.subr.mxu0 0.0
    %2714 = vmatpush1.msra.mxu0 0.0
    %2715 = vmatprep.subr.mxu0 0.0
    %2716 = vmatpush1.msra.mxu0 0.0
    %2717 = vmatprep.subr.mxu0 0.0
    %2718 = vmatpush1.msra.mxu0 0.0
    %2719 = vmatprep.subr.mxu0 0.0
    %2720 = vmatpush1.msra.mxu0 0.0
    %2721 = vmatprep.subr.mxu0 0.0
    %2722 = vmatpush1.msra.mxu0 0.0
    %2723 = vmatprep.mubr.f32.mxu0 0.0
    %2724 = vmatmul.mubr.f32.gmra.mrb[0].mxu0 %v2587
    %v2725 = vpop.f32.mrb[0].mxu0
    %v2726 = vadd.f32 0.0, %v2725
    %v2727 = vpop.f32.mrb[0].mxu0
    %2728 = vdwg.mxu0
    %2729 = vmatprep.subr.mxu0 0.0
    %2730 = vmatpush1.msra.mxu0 %v2726
    %2731 = vmatprep.subr.mxu0 0.0
    %2732 = vmatpush1.msra.mxu0 0.0
    %2733 = vmatprep.subr.mxu0 0.0
    %2734 = vmatpush1.msra.mxu0 0.0
    %2735 = vmatprep.subr.mxu0 0.0
    %2736 = vmatpush1.msra.mxu0 0.0
    %2737 = vmatprep.subr.mxu0 0.0
    %2738 = vmatpush1.msra.mxu0 0.0
    %2739 = vmatprep.subr.mxu0 0.0
    %2740 = vmatpush1.msra.mxu0 0.0
    %2741 = vmatprep.subr.mxu0 0.0
    %2742 = vmatpush1.msra.mxu0 0.0
    %2743 = vmatprep.subr.mxu0 0.0
    %2744 = vmatpush1.msra.mxu0 0.0
    %2745 = vmatprep.subr.mxu0 0.0
    %2746 = vmatpush1.msra.mxu0 0.0
    %2747 = vmatprep.subr.mxu0 0.0
    %2748 = vmatpush1.msra.mxu0 0.0
    %2749 = vmatprep.subr.mxu0 0.0
    %2750 = vmatpush1.msra.mxu0 0.0
    %2751 = vmatprep.subr.mxu0 0.0
    %2752 = vmatpush1.msra.mxu0 0.0
    %2753 = vmatprep.subr.mxu0 0.0
    %2754 = vmatpush1.msra.mxu0 0.0
    %2755 = vmatprep.subr.mxu0 0.0
    %2756 = vmatpush1.msra.mxu0 0.0
    %2757 = vmatprep.subr.mxu0 0.0
    %2758 = vmatpush1.msra.mxu0 0.0
    %2759 = vmatprep.subr.mxu0 0.0
    %2760 = vmatpush1.msra.mxu0 0.0
    %2761 = vmatprep.subr.mxu0 0.0
    %2762 = vmatpush1.msra.mxu0 0.0
    %2763 = vmatprep.subr.mxu0 0.0
    %2764 = vmatpush1.msra.mxu0 0.0
    %2765 = vmatprep.subr.mxu0 0.0
    %2766 = vmatpush1.msra.mxu0 0.0
    %2767 = vmatprep.subr.mxu0 0.0
    %2768 = vmatpush1.msra.mxu0 0.0
    %2769 = vmatprep.subr.mxu0 0.0
    %2770 = vmatpush1.msra.mxu0 0.0
    %2771 = vmatprep.subr.mxu0 0.0
    %2772 = vmatpush1.msra.mxu0 0.0
    %2773 = vmatprep.subr.mxu0 0.0
    %2774 = vmatpush1.msra.mxu0 0.0
    %2775 = vmatprep.subr.mxu0 0.0
    %2776 = vmatpush1.msra.mxu0 0.0
    %2777 = vmatprep.subr.mxu0 0.0
    %2778 = vmatpush1.msra.mxu0 0.0
    %2779 = vmatprep.subr.mxu0 0.0
    %2780 = vmatpush1.msra.mxu0 0.0
    %2781 = vmatprep.subr.mxu0 0.0
    %2782 = vmatpush1.msra.mxu0 0.0
    %2783 = vmatprep.subr.mxu0 0.0
    %2784 = vmatpush1.msra.mxu0 0.0
    %2785 = vmatprep.subr.mxu0 0.0
    %2786 = vmatpush1.msra.mxu0 0.0
    %2787 = vmatprep.subr.mxu0 0.0
    %2788 = vmatpush1.msra.mxu0 0.0
    %2789 = vmatprep.subr.mxu0 0.0
    %2790 = vmatpush1.msra.mxu0 0.0
    %2791 = vmatprep.subr.mxu0 0.0
    %2792 = vmatpush1.msra.mxu0 0.0
    %2793 = vmatprep.mubr.f32.mxu0 0.0
    %2794 = vmatmul.mubr.f32.gmra.mrb[0].mxu0 %v2290
    %v2795 = vpop.f32.mrb[0].mxu0
    %v2796 = vadd.f32 0.0, %v2795
    %v2797 = vpop.f32.mrb[0].mxu0
    %2798 = vdwg.mxu0
    %2799 = vmatprep.subr.mxu0 0.0
    %2800 = vmatpush1.msra.mxu0 %v2656
    %2801 = vmatprep.subr.mxu0 0.0
    %2802 = vmatpush1.msra.mxu0 0.0
    %2803 = vmatprep.subr.mxu0 0.0
    %2804 = vmatpush1.msra.mxu0 0.0
    %2805 = vmatprep.subr.mxu0 0.0
    %2806 = vmatpush1.msra.mxu0 0.0
    %2807 = vmatprep.subr.mxu0 0.0
    %2808 = vmatpush1.msra.mxu0 0.0
    %2809 = vmatprep.subr.mxu0 0.0
    %2810 = vmatpush1.msra.mxu0 0.0
    %2811 = vmatprep.subr.mxu0 0.0
    %2812 = vmatpush1.msra.mxu0 0.0
    %2813 = vmatprep.subr.mxu0 0.0
    %2814 = vmatpush1.msra.mxu0 0.0
    %2815 = vmatprep.subr.mxu0 0.0
    %2816 = vmatpush1.msra.mxu0 0.0
    %2817 = vmatprep.subr.mxu0 0.0
    %2818 = vmatpush1.msra.mxu0 0.0
    %2819 = vmatprep.subr.mxu0 0.0
    %2820 = vmatpush1.msra.mxu0 0.0
    %2821 = vmatprep.subr.mxu0 0.0
    %2822 = vmatpush1.msra.mxu0 0.0
    %2823 = vmatprep.subr.mxu0 0.0
    %2824 = vmatpush1.msra.mxu0 0.0
    %2825 = vmatprep.subr.mxu0 0.0
    %2826 = vmatpush1.msra.mxu0 0.0
    %2827 = vmatprep.subr.mxu0 0.0
    %2828 = vmatpush1.msra.mxu0 0.0
    %2829 = vmatprep.subr.mxu0 0.0
    %2830 = vmatpush1.msra.mxu0 0.0
    %2831 = vmatprep.subr.mxu0 0.0
    %2832 = vmatpush1.msra.mxu0 0.0
    %2833 = vmatprep.subr.mxu0 0.0
    %2834 = vmatpush1.msra.mxu0 0.0
    %2835 = vmatprep.subr.mxu0 0.0
    %2836 = vmatpush1.msra.mxu0 0.0
    %2837 = vmatprep.subr.mxu0 0.0
    %2838 = vmatpush1.msra.mxu0 0.0
    %2839 = vmatprep.subr.mxu0 0.0
    %2840 = vmatpush1.msra.mxu0 0.0
    %2841 = vmatprep.subr.mxu0 0.0
    %2842 = vmatpush1.msra.mxu0 0.0
    %2843 = vmatprep.subr.mxu0 0.0
    %2844 = vmatpush1.msra.mxu0 0.0
    %2845 = vmatprep.subr.mxu0 0.0
    %2846 = vmatpush1.msra.mxu0 0.0
    %2847 = vmatprep.subr.mxu0 0.0
    %2848 = vmatpush1.msra.mxu0 0.0
    %2849 = vmatprep.subr.mxu0 0.0
    %2850 = vmatpush1.msra.mxu0 0.0
    %2851 = vmatprep.subr.mxu0 0.0
    %2852 = vmatpush1.msra.mxu0 0.0
    %2853 = vmatprep.subr.mxu0 0.0
    %2854 = vmatpush1.msra.mxu0 0.0
    %2855 = vmatprep.subr.mxu0 0.0
    %2856 = vmatpush1.msra.mxu0 0.0
    %2857 = vmatprep.subr.mxu0 0.0
    %2858 = vmatpush1.msra.mxu0 0.0
    %2859 = vmatprep.subr.mxu0 0.0
    %2860 = vmatpush1.msra.mxu0 0.0
    %2861 = vmatprep.subr.mxu0 0.0
    %2862 = vmatpush1.msra.mxu0 0.0
    %2863 = vmatprep.mubr.f32.mxu0 0.0
    %2864 = vmatmul.mubr.f32.gmra.mrb[0].mxu0 %v2362
    %v2865 = vpop.f32.mrb[0].mxu0
    %v2866 = vadd.f32 %v2796, %v2865
    %v2867 = vpop.f32.mrb[0].mxu0
    %2868 = vdwg.mxu0
    %2869 = vmatprep.subr.mxu0 0.0
    %2870 = vmatpush1.msra.mxu0 %v2435
    %2871 = vmatprep.subr.mxu0 0.0
    %2872 = vmatpush1.msra.mxu0 %v2436
    %2873 = vmatprep.subr.mxu0 0.0
    %2874 = vmatpush1.msra.mxu0 %v2437
    %2875 = vmatprep.subr.mxu0 0.0
    %2876 = vmatpush1.msra.mxu0 %v2438
    %2877 = vmatprep.subr.mxu0 0.0
    %2878 = vmatpush1.msra.mxu0 %v2439
    %2879 = vmatprep.subr.mxu0 0.0
    %2880 = vmatpush1.msra.mxu0 %v2440
    %2881 = vmatprep.subr.mxu0 0.0
    %2882 = vmatpush1.msra.mxu0 %v2441
    %2883 = vmatprep.subr.mxu0 0.0
    %2884 = vmatpush1.msra.mxu0 %v2442
    %2885 = vmatprep.subr.mxu0 0.0
    %2886 = vmatpush1.msra.mxu0 0.0
    %2887 = vmatprep.subr.mxu0 0.0
    %2888 = vmatpush1.msra.mxu0 0.0
    %2889 = vmatprep.subr.mxu0 0.0
    %2890 = vmatpush1.msra.mxu0 0.0
    %2891 = vmatprep.subr.mxu0 0.0
    %2892 = vmatpush1.msra.mxu0 0.0
    %2893 = vmatprep.subr.mxu0 0.0
    %2894 = vmatpush1.msra.mxu0 0.0
    %2895 = vmatprep.subr.mxu0 0.0
    %2896 = vmatpush1.msra.mxu0 0.0
    %2897 = vmatprep.subr.mxu0 0.0
    %2898 = vmatpush1.msra.mxu0 0.0
    %2899 = vmatprep.subr.mxu0 0.0
    %2900 = vmatpush1.msra.mxu0 0.0
    %2901 = vmatprep.subr.mxu0 0.0
    %2902 = vmatpush1.msra.mxu0 0.0
    %2903 = vmatprep.subr.mxu0 0.0
    %2904 = vmatpush1.msra.mxu0 0.0
    %2905 = vmatprep.subr.mxu0 0.0
    %2906 = vmatpush1.msra.mxu0 0.0
    %2907 = vmatprep.subr.mxu0 0.0
    %2908 = vmatpush1.msra.mxu0 0.0
    %2909 = vmatprep.subr.mxu0 0.0
    %2910 = vmatpush1.msra.mxu0 0.0
    %2911 = vmatprep.subr.mxu0 0.0
    %2912 = vmatpush1.msra.mxu0 0.0
    %2913 = vmatprep.subr.mxu0 0.0
    %2914 = vmatpush1.msra.mxu0 0.0
    %2915 = vmatprep.subr.mxu0 0.0
    %2916 = vmatpush1.msra.mxu0 0.0
    %2917 = vmatprep.subr.mxu0 0.0
    %2918 = vmatpush1.msra.mxu0 0.0
    %2919 = vmatprep.subr.mxu0 0.0
    %2920 = vmatpush1.msra.mxu0 0.0
    %2921 = vmatprep.subr.mxu0 0.0
    %2922 = vmatpush1.msra.mxu0 0.0
    %2923 = vmatprep.subr.mxu0 0.0
    %2924 = vmatpush1.msra.mxu0 0.0
    %2925 = vmatprep.subr.mxu0 0.0
    %2926 = vmatpush1.msra.mxu0 0.0
    %2927 = vmatprep.subr.mxu0 0.0
    %2928 = vmatpush1.msra.mxu0 0.0
    %2929 = vmatprep.subr.mxu0 0.0
    %2930 = vmatpush1.msra.mxu0 0.0
    %2931 = vmatprep.subr.mxu0 0.0
    %2932 = vmatpush1.msra.mxu0 0.0
    %2933 = vmatprep.mubr.f32.mxu0 0.0
    %2934 = vmatmul.mubr.f32.gmra.mrb[0].mxu0 %v2587
    %v2935 = vpop.f32.mrb[0].mxu0
    %v2936 = vadd.f32 0.0, %v2935
    %v2937 = vpop.f32.mrb[0].mxu0
    %2938 = vdwg.mxu0
    %2939 = vmatprep.subr.mxu0 0.0
    %2940 = vmatpush1.msra.mxu0 %v2936
    %2941 = vmatprep.subr.mxu0 0.0
    %2942 = vmatpush1.msra.mxu0 0.0
    %2943 = vmatprep.subr.mxu0 0.0
    %2944 = vmatpush1.msra.mxu0 0.0
    %2945 = vmatprep.subr.mxu0 0.0
    %2946 = vmatpush1.msra.mxu0 0.0
    %2947 = vmatprep.subr.mxu0 0.0
    %2948 = vmatpush1.msra.mxu0 0.0
    %2949 = vmatprep.subr.mxu0 0.0
    %2950 = vmatpush1.msra.mxu0 0.0
    %2951 = vmatprep.subr.mxu0 0.0
    %2952 = vmatpush1.msra.mxu0 0.0
    %2953 = vmatprep.subr.mxu0 0.0
    %2954 = vmatpush1.msra.mxu0 0.0
    %2955 = vmatprep.subr.mxu0 0.0
    %2956 = vmatpush1.msra.mxu0 0.0
    %2957 = vmatprep.subr.mxu0 0.0
    %2958 = vmatpush1.msra.mxu0 0.0
    %2959 = vmatprep.subr.mxu0 0.0
    %2960 = vmatpush1.msra.mxu0 0.0
    %2961 = vmatprep.subr.mxu0 0.0
    %2962 = vmatpush1.msra.mxu0 0.0
    %2963 = vmatprep.subr.mxu0 0.0
    %2964 = vmatpush1.msra.mxu0 0.0
    %2965 = vmatprep.subr.mxu0 0.0
    %2966 = vmatpush1.msra.mxu0 0.0
    %2967 = vmatprep.subr.mxu0 0.0
    %2968 = vmatpush1.msra.mxu0 0.0
    %2969 = vmatprep.subr.mxu0 0.0
    %2970 = vmatpush1.msra.mxu0 0.0
    %2971 = vmatprep.subr.mxu0 0.0
    %2972 = vmatpush1.msra.mxu0 0.0
    %2973 = vmatprep.subr.mxu0 0.0
    %2974 = vmatpush1.msra.mxu0 0.0
    %2975 = vmatprep.subr.mxu0 0.0
    %2976 = vmatpush1.msra.mxu0 0.0
    %2977 = vmatprep.subr.mxu0 0.0
    %2978 = vmatpush1.msra.mxu0 0.0
    %2979 = vmatprep.subr.mxu0 0.0
    %2980 = vmatpush1.msra.mxu0 0.0
    %2981 = vmatprep.subr.mxu0 0.0
    %2982 = vmatpush1.msra.mxu0 0.0
    %2983 = vmatprep.subr.mxu0 0.0
    %2984 = vmatpush1.msra.mxu0 0.0
    %2985 = vmatprep.subr.mxu0 0.0
    %2986 = vmatpush1.msra.mxu0 0.0
    %2987 = vmatprep.subr.mxu0 0.0
    %2988 = vmatpush1.msra.mxu0 0.0
    %2989 = vmatprep.subr.mxu0 0.0
    %2990 = vmatpush1.msra.mxu0 0.0
    %2991 = vmatprep.subr.mxu0 0.0
    %2992 = vmatpush1.msra.mxu0 0.0
    %2993 = vmatprep.subr.mxu0 0.0
    %2994 = vmatpush1.msra.mxu0 0.0
    %2995 = vmatprep.subr.mxu0 0.0
    %2996 = vmatpush1.msra.mxu0 0.0
    %2997 = vmatprep.subr.mxu0 0.0
    %2998 = vmatpush1.msra.mxu0 0.0
    %2999 = vmatprep.subr.mxu0 0.0
    %3000 = vmatpush1.msra.mxu0 0.0
    %3001 = vmatprep.subr.mxu0 0.0
    %3002 = vmatpush1.msra.mxu0 0.0
    %3003 = vmatprep.mubr.f32.mxu0 0.0
    %3004 = vmatmul.mubr.f32.gmra.mrb[0].mxu0 %v2513
    %v3005 = vpop.f32.mrb[0].mxu0
    %v3006 = vadd.f32 0.0, %v3005
    %v3007 = vpop.f32.mrb[0].mxu0
    %3008 = vdwg.mxu0
    %v3009 = vadd.f32 %v2866, %v3006
    %v3010 = vrot.slane %v2585, 4
    %v3011 = vadd.f32 %v2585, %v3010
    %v3012 = vrot.slane %v3011, 2
    %v3013 = vadd.f32 %v3011, %v3012
    %v3014 = vrot.slane %v3013, 1
    %v3015 = vadd.f32 %v3013, %v3014
    %v3016 = vadd.f32 %v3015, 0.0
    %v3017 = vmul.f32 %v2585, %v2585
    %v3018 = vrot.slane %v3017, 4
    %v3019 = vadd.f32 %v3017, %v3018
    %v3020 = vrot.slane %v3019, 2
    %v3021 = vadd.f32 %v3019, %v3020
    %v3022 = vrot.slane %v3021, 1
    %v3023 = vadd.f32 %v3021, %v3022
    %v3024 = vadd.f32 %v3023, 0.0
    %v3025 = vrot.slane %v3009, 4
    %v3026 = vadd.f32 %v3009, %v3025
    %v3027 = vrot.slane %v3026, 2
    %v3028 = vadd.f32 %v3026, %v3027
    %v3029 = vrot.slane %v3028, 1
    %v3030 = vadd.f32 %v3028, %v3029
    %v3031 = vadd.f32 %v3016, %v3030
    %v3032 = vmul.f32 %v3009, %v3009
    %v3033 = vrot.slane %v3032, 4
    %v3034 = vadd.f32 %v3032, %v3033
    %v3035 = vrot.slane %v3034, 2
    %v3036 = vadd.f32 %v3034, %v3035
    %v3037 = vrot.slane %v3036, 1
    %v3038 = vadd.f32 %v3036, %v3037
    %v3039 = vadd.f32 %v3024, %v3038
    %v3040 = vmul.u32 %v66, 8
    %vm3041 = vcmp.ge.s32.totalorder %v63, %v3040
    %vm3042 = vcmp.ge.s32.totalorder %v64, %v3040
    %vm3043 = vcmp.ge.s32.totalorder %v1083, %v3040
    %vm3044 = vcmp.ge.s32.totalorder %v1084, %v3040
    %vm3045 = vcmp.ge.s32.totalorder %v1085, %v3040
    %vm3046 = vcmp.ge.s32.totalorder %v1086, %v3040
    %vm3047 = vcmp.ge.s32.totalorder %v1087, %v3040
    %vm3048 = vcmp.ge.s32.totalorder %v1088, %v3040
    %vm3049 = vcmp.ge.s32.totalorder %v1089, %v3040
    %vm3050 = vcmp.ge.s32.totalorder %v1090, %v3040
    %vm3051 = vcmp.ge.s32.totalorder %v1091, %v3040
    %vm3052 = vcmp.ge.s32.totalorder %v1092, %v3040
    %vm3053 = vcmp.ge.s32.totalorder %v1093, %v3040
    %vm3054 = vcmp.ge.s32.totalorder %v1094, %v3040
    %vm3055 = vcmp.ge.s32.totalorder %v1095, %v3040
    %vm3056 = vcmp.ge.s32.totalorder %v1096, %v3040
    %v3057 = vadd.s32 %v3040, 8
    %vm3058 = vcmp.lt.s32.totalorder %v63, %v3057
    %vm3059 = vcmp.lt.s32.totalorder %v64, %v3057
    %vm3060 = vcmp.lt.s32.totalorder %v1083, %v3057
    %vm3061 = vcmp.lt.s32.totalorder %v1084, %v3057
    %vm3062 = vcmp.lt.s32.totalorder %v1085, %v3057
    %vm3063 = vcmp.lt.s32.totalorder %v1086, %v3057
    %vm3064 = vcmp.lt.s32.totalorder %v1087, %v3057
    %vm3065 = vcmp.lt.s32.totalorder %v1088, %v3057
    %vm3066 = vcmp.lt.s32.totalorder %v1089, %v3057
    %vm3067 = vcmp.lt.s32.totalorder %v1090, %v3057
    %vm3068 = vcmp.lt.s32.totalorder %v1091, %v3057
    %vm3069 = vcmp.lt.s32.totalorder %v1092, %v3057
    %vm3070 = vcmp.lt.s32.totalorder %v1093, %v3057
    %vm3071 = vcmp.lt.s32.totalorder %v1094, %v3057
    %vm3072 = vcmp.lt.s32.totalorder %v1095, %v3057
    %vm3073 = vcmp.lt.s32.totalorder %v1096, %v3057
    %vm3074 = vmand %vm3041, %vm3058
    %vm3075 = vmand %vm3042, %vm3059
    %vm3076 = vmand %vm3043, %vm3060
    %vm3077 = vmand %vm3044, %vm3061
    %vm3078 = vmand %vm3045, %vm3062
    %vm3079 = vmand %vm3046, %vm3063
    %vm3080 = vmand %vm3047, %vm3064
    %vm3081 = vmand %vm3048, %vm3065
    %vm3082 = vmand %vm3049, %vm3066
    %vm3083 = vmand %vm3050, %vm3067
    %vm3084 = vmand %vm3051, %vm3068
    %vm3085 = vmand %vm3052, %vm3069
    %vm3086 = vmand %vm3053, %vm3070
    %vm3087 = vmand %vm3054, %vm3071
    %vm3088 = vmand %vm3055, %vm3072
    %vm3089 = vmand %vm3056, %vm3073
    %v3090 = vsel %vm3074, 1.0, 0.0
    %v3091 = vsel %vm3075, 1.0, 0.0
    %v3092 = vsel %vm3076, 1.0, 0.0
    %v3093 = vsel %vm3077, 1.0, 0.0
    %v3094 = vsel %vm3078, 1.0, 0.0
    %v3095 = vsel %vm3079, 1.0, 0.0
    %v3096 = vsel %vm3080, 1.0, 0.0
    %v3097 = vsel %vm3081, 1.0, 0.0
    %v3098 = vsel %vm3082, 1.0, 0.0
    %v3099 = vsel %vm3083, 1.0, 0.0
    %v3100 = vsel %vm3084, 1.0, 0.0
    %v3101 = vsel %vm3085, 1.0, 0.0
    %v3102 = vsel %vm3086, 1.0, 0.0
    %v3103 = vsel %vm3087, 1.0, 0.0
    %v3104 = vsel %vm3088, 1.0, 0.0
    %v3105 = vsel %vm3089, 1.0, 0.0
    %3106 = vmatprep.subr.mxu0 0.0
    %3107 = vmatpush1.msra.mxu0 %v3090
    %3108 = vmatprep.subr.mxu0 0.0
    %3109 = vmatpush1.msra.mxu0 %v3091
    %3110 = vmatprep.subr.mxu0 0.0
    %3111 = vmatpush1.msra.mxu0 %v3092
    %3112 = vmatprep.subr.mxu0 0.0
    %3113 = vmatpush1.msra.mxu0 %v3093
    %3114 = vmatprep.subr.mxu0 0.0
    %3115 = vmatpush1.msra.mxu0 %v3094
    %3116 = vmatprep.subr.mxu0 0.0
    %3117 = vmatpush1.msra.mxu0 %v3095
    %3118 = vmatprep.subr.mxu0 0.0
    %3119 = vmatpush1.msra.mxu0 %v3096
    %3120 = vmatprep.subr.mxu0 0.0
    %3121 = vmatpush1.msra.mxu0 %v3097
    %3122 = vmatprep.subr.mxu0 0.0
    %3123 = vmatpush1.msra.mxu0 %v3098
    %3124 = vmatprep.subr.mxu0 0.0
    %3125 = vmatpush1.msra.mxu0 %v3099
    %3126 = vmatprep.subr.mxu0 0.0
    %3127 = vmatpush1.msra.mxu0 %v3100
    %3128 = vmatprep.subr.mxu0 0.0
    %3129 = vmatpush1.msra.mxu0 %v3101
    %3130 = vmatprep.subr.mxu0 0.0
    %3131 = vmatpush1.msra.mxu0 %v3102
    %3132 = vmatprep.subr.mxu0 0.0
    %3133 = vmatpush1.msra.mxu0 %v3103
    %3134 = vmatprep.subr.mxu0 0.0
    %3135 = vmatpush1.msra.mxu0 %v3104
    %3136 = vmatprep.subr.mxu0 0.0
    %3137 = vmatpush1.msra.mxu0 %v3105
    %3138 = vmatprep.subr.mxu0 0.0
    %3139 = vmatpush1.msra.mxu0 0.0
    %3140 = vmatprep.subr.mxu0 0.0
    %3141 = vmatpush1.msra.mxu0 0.0
    %3142 = vmatprep.subr.mxu0 0.0
    %3143 = vmatpush1.msra.mxu0 0.0
    %3144 = vmatprep.subr.mxu0 0.0
    %3145 = vmatpush1.msra.mxu0 0.0
    %3146 = vmatprep.subr.mxu0 0.0
    %3147 = vmatpush1.msra.mxu0 0.0
    %3148 = vmatprep.subr.mxu0 0.0
    %3149 = vmatpush1.msra.mxu0 0.0
    %3150 = vmatprep.subr.mxu0 0.0
    %3151 = vmatpush1.msra.mxu0 0.0
    %3152 = vmatprep.subr.mxu0 0.0
    %3153 = vmatpush1.msra.mxu0 0.0
    %3154 = vmatprep.subr.mxu0 0.0
    %3155 = vmatpush1.msra.mxu0 0.0
    %3156 = vmatprep.subr.mxu0 0.0
    %3157 = vmatpush1.msra.mxu0 0.0
    %3158 = vmatprep.subr.mxu0 0.0
    %3159 = vmatpush1.msra.mxu0 0.0
    %3160 = vmatprep.subr.mxu0 0.0
    %3161 = vmatpush1.msra.mxu0 0.0
    %3162 = vmatprep.subr.mxu0 0.0
    %3163 = vmatpush1.msra.mxu0 0.0
    %3164 = vmatprep.subr.mxu0 0.0
    %3165 = vmatpush1.msra.mxu0 0.0
    %3166 = vmatprep.subr.mxu0 0.0
    %3167 = vmatpush1.msra.mxu0 0.0
    %3168 = vmatprep.subr.mxu0 0.0
    %3169 = vmatpush1.msra.mxu0 0.0
    %3170 = vmatprep.mubr.f32.mxu0 0.0
    %3171 = vmatmul.mubr.f32.gmra.mrb[0].mxu0 %v3031
    %v3172 = vpop.f32.mrb[0].mxu0
    %v3173 = vadd.f32 0.0, %v3172
    %v3174 = vpop.f32.mrb[0].mxu0
    %3175 = vdwg.mxu0
    %3176 = vmatprep.subr.mxu0 0.0
    %3177 = vmatpush1.msra.mxu0 %v3090
    %3178 = vmatprep.subr.mxu0 0.0
    %3179 = vmatpush1.msra.mxu0 %v3091
    %3180 = vmatprep.subr.mxu0 0.0
    %3181 = vmatpush1.msra.mxu0 %v3092
    %3182 = vmatprep.subr.mxu0 0.0
    %3183 = vmatpush1.msra.mxu0 %v3093
    %3184 = vmatprep.subr.mxu0 0.0
    %3185 = vmatpush1.msra.mxu0 %v3094
    %3186 = vmatprep.subr.mxu0 0.0
    %3187 = vmatpush1.msra.mxu0 %v3095
    %3188 = vmatprep.subr.mxu0 0.0
    %3189 = vmatpush1.msra.mxu0 %v3096
    %3190 = vmatprep.subr.mxu0 0.0
    %3191 = vmatpush1.msra.mxu0 %v3097
    %3192 = vmatprep.subr.mxu0 0.0
    %3193 = vmatpush1.msra.mxu0 %v3098
    %3194 = vmatprep.subr.mxu0 0.0
    %3195 = vmatpush1.msra.mxu0 %v3099
    %3196 = vmatprep.subr.mxu0 0.0
    %3197 = vmatpush1.msra.mxu0 %v3100
    %3198 = vmatprep.subr.mxu0 0.0
    %3199 = vmatpush1.msra.mxu0 %v3101
    %3200 = vmatprep.subr.mxu0 0.0
    %3201 = vmatpush1.msra.mxu0 %v3102
    %3202 = vmatprep.subr.mxu0 0.0
    %3203 = vmatpush1.msra.mxu0 %v3103
    %3204 = vmatprep.subr.mxu0 0.0
    %3205 = vmatpush1.msra.mxu0 %v3104
    %3206 = vmatprep.subr.mxu0 0.0
    %3207 = vmatpush1.msra.mxu0 %v3105
    %3208 = vmatprep.subr.mxu0 0.0
    %3209 = vmatpush1.msra.mxu0 0.0
    %3210 = vmatprep.subr.mxu0 0.0
    %3211 = vmatpush1.msra.mxu0 0.0
    %3212 = vmatprep.subr.mxu0 0.0
    %3213 = vmatpush1.msra.mxu0 0.0
    %3214 = vmatprep.subr.mxu0 0.0
    %3215 = vmatpush1.msra.mxu0 0.0
    %3216 = vmatprep.subr.mxu0 0.0
    %3217 = vmatpush1.msra.mxu0 0.0
    %3218 = vmatprep.subr.mxu0 0.0
    %3219 = vmatpush1.msra.mxu0 0.0
    %3220 = vmatprep.subr.mxu0 0.0
    %3221 = vmatpush1.msra.mxu0 0.0
    %3222 = vmatprep.subr.mxu0 0.0
    %3223 = vmatpush1.msra.mxu0 0.0
    %3224 = vmatprep.subr.mxu0 0.0
    %3225 = vmatpush1.msra.mxu0 0.0
    %3226 = vmatprep.subr.mxu0 0.0
    %3227 = vmatpush1.msra.mxu0 0.0
    %3228 = vmatprep.subr.mxu0 0.0
    %3229 = vmatpush1.msra.mxu0 0.0
    %3230 = vmatprep.subr.mxu0 0.0
    %3231 = vmatpush1.msra.mxu0 0.0
    %3232 = vmatprep.subr.mxu0 0.0
    %3233 = vmatpush1.msra.mxu0 0.0
    %3234 = vmatprep.subr.mxu0 0.0
    %3235 = vmatpush1.msra.mxu0 0.0
    %3236 = vmatprep.subr.mxu0 0.0
    %3237 = vmatpush1.msra.mxu0 0.0
    %3238 = vmatprep.subr.mxu0 0.0
    %3239 = vmatpush1.msra.mxu0 0.0
    %3240 = vmatprep.mubr.f32.mxu0 0.0
    %3241 = vmatmul.mubr.f32.gmra.mrb[0].mxu0 %v3039
    %v3242 = vpop.f32.mrb[0].mxu0
    %v3243 = vadd.f32 0.0, %v3242
    %v3244 = vpop.f32.mrb[0].mxu0
    %3245 = vdwg.mxu0
    %v3246 = vrcp.pop 128.0
    %v3247 = vmul.f32 %v3173, %v3246
    %v3248 = vmul.f32 %v3243, %v3246
    %v3249 = vmul.f32 %v3247, %v3247
    %v3250 = vsub.f32 %v3248, %v3249
    %v3251 = vadd.f32 %v3250, 1e-05
    %v3252 = vrsqrt.pop %v3251
    %v3253 = vmul.f32 %v2128, %v3252
    %v3254 = vmul.f32 %v3247, %v3253
    %v3255 = vsub.f32 %v2129, %v3254
    %v3256 = vmul.u32 %v63, 8
    %v3257 = vmul.u32 %v64, 8
    %vm3258 = vcmp.ge.s32.totalorder %v66, %v3256
    %vm3259 = vcmp.ge.s32.totalorder %v66, %v3257
    %v3260 = vadd.s32 %v3256, 8
    %v3261 = vadd.s32 %v3257, 8
    %vm3262 = vcmp.lt.s32.totalorder %v66, %v3260
    %vm3263 = vcmp.lt.s32.totalorder %v66, %v3261
    %vm3264 = vmand %vm3258, %vm3262
    %vm3265 = vmand %vm3259, %vm3263
    %v3266 = vsel %vm3264, 1.0, 0.0
    %v3267 = vsel %vm3265, 1.0, 0.0
    %v3269 = vsel %vm259, %v3253, 0
    %3271 = vmatprep.subr.mxu0 0.0
    %3272 = vmatpush1.msra.mxu0 %v3266
    %3273 = vmatprep.subr.mxu0 0.0
    %3274 = vmatpush1.msra.mxu0 %v3267
    %3275 = vmatprep.subr.mxu0 0.0
    %3276 = vmatpush1.msra.mxu0 0.0
    %3277 = vmatprep.subr.mxu0 0.0
    %3278 = vmatpush1.msra.mxu0 0.0
    %3279 = vmatprep.subr.mxu0 0.0
    %3280 = vmatpush1.msra.mxu0 0.0
    %3281 = vmatprep.subr.mxu0 0.0
    %3282 = vmatpush1.msra.mxu0 0.0
    %3283 = vmatprep.subr.mxu0 0.0
    %3284 = vmatpush1.msra.mxu0 0.0
    %3285 = vmatprep.subr.mxu0 0.0
    %3286 = vmatpush1.msra.mxu0 0.0
    %3287 = vmatprep.subr.mxu0 0.0
    %3288 = vmatpush1.msra.mxu0 0.0
    %3289 = vmatprep.subr.mxu0 0.0
    %3290 = vmatpush1.msra.mxu0 0.0
    %3291 = vmatprep.subr.mxu0 0.0
    %3292 = vmatpush1.msra.mxu0 0.0
    %3293 = vmatprep.subr.mxu0 0.0
    %3294 = vmatpush1.msra.mxu0 0.0
    %3295 = vmatprep.subr.mxu0 0.0
    %3296 = vmatpush1.msra.mxu0 0.0
    %3297 = vmatprep.subr.mxu0 0.0
    %3298 = vmatpush1.msra.mxu0 0.0
    %3299 = vmatprep.subr.mxu0 0.0
    %3300 = vmatpush1.msra.mxu0 0.0
    %3301 = vmatprep.subr.mxu0 0.0
    %3302 = vmatpush1.msra.mxu0 0.0
    %3303 = vmatprep.subr.mxu0 0.0
    %3304 = vmatpush1.msra.mxu0 0.0
    %3305 = vmatprep.subr.mxu0 0.0
    %3306 = vmatpush1.msra.mxu0 0.0
    %3307 = vmatprep.subr.mxu0 0.0
    %3308 = vmatpush1.msra.mxu0 0.0
    %3309 = vmatprep.subr.mxu0 0.0
    %3310 = vmatpush1.msra.mxu0 0.0
    %3311 = vmatprep.subr.mxu0 0.0
    %3312 = vmatpush1.msra.mxu0 0.0
    %3313 = vmatprep.subr.mxu0 0.0
    %3314 = vmatpush1.msra.mxu0 0.0
    %3315 = vmatprep.subr.mxu0 0.0
    %3316 = vmatpush1.msra.mxu0 0.0
    %3317 = vmatprep.subr.mxu0 0.0
    %3318 = vmatpush1.msra.mxu0 0.0
    %3319 = vmatprep.subr.mxu0 0.0
    %3320 = vmatpush1.msra.mxu0 0.0
    %3321 = vmatprep.subr.mxu0 0.0
    %3322 = vmatpush1.msra.mxu0 0.0
    %3323 = vmatprep.subr.mxu0 0.0
    %3324 = vmatpush1.msra.mxu0 0.0
    %3325 = vmatprep.subr.mxu0 0.0
    %3326 = vmatpush1.msra.mxu0 0.0
    %3327 = vmatprep.subr.mxu0 0.0
    %3328 = vmatpush1.msra.mxu0 0.0
    %3329 = vmatprep.subr.mxu0 0.0
    %3330 = vmatpush1.msra.mxu0 0.0
    %3331 = vmatprep.subr.mxu0 0.0
    %3332 = vmatpush1.msra.mxu0 0.0
    %3333 = vmatprep.subr.mxu0 0.0
    %3334 = vmatpush1.msra.mxu0 0.0
    %3335 = vmatprep.mubr.f32.mxu0 0.0
    %3336 = vmatmul.mubr.f32.gmra.mrb[0].mxu0 %v3269
    %v3337 = vpop.f32.mrb[0].mxu0
    %v3338 = vadd.f32 0.0, %v3337
    %v3339 = vpop.f32.mrb[0].mxu0
    %3340 = vdwg.mxu0
    %v3342 = vsel %vm259, %v3255, 0
    %3344 = vmatprep.subr.mxu0 0.0
    %3345 = vmatpush1.msra.mxu0 %v3266
    %3346 = vmatprep.subr.mxu0 0.0
    %3347 = vmatpush1.msra.mxu0 %v3267
    %3348 = vmatprep.subr.mxu0 0.0
    %3349 = vmatpush1.msra.mxu0 0.0
    %3350 = vmatprep.subr.mxu0 0.0
    %3351 = vmatpush1.msra.mxu0 0.0
    %3352 = vmatprep.subr.mxu0 0.0
    %3353 = vmatpush1.msra.mxu0 0.0
    %3354 = vmatprep.subr.mxu0 0.0
    %3355 = vmatpush1.msra.mxu0 0.0
    %3356 = vmatprep.subr.mxu0 0.0
    %3357 = vmatpush1.msra.mxu0 0.0
    %3358 = vmatprep.subr.mxu0 0.0
    %3359 = vmatpush1.msra.mxu0 0.0
    %3360 = vmatprep.subr.mxu0 0.0
    %3361 = vmatpush1.msra.mxu0 0.0
    %3362 = vmatprep.subr.mxu0 0.0
    %3363 = vmatpush1.msra.mxu0 0.0
    %3364 = vmatprep.subr.mxu0 0.0
    %3365 = vmatpush1.msra.mxu0 0.0
    %3366 = vmatprep.subr.mxu0 0.0
    %3367 = vmatpush1.msra.mxu0 0.0
    %3368 = vmatprep.subr.mxu0 0.0
    %3369 = vmatpush1.msra.mxu0 0.0
    %3370 = vmatprep.subr.mxu0 0.0
    %3371 = vmatpush1.msra.mxu0 0.0
    %3372 = vmatprep.subr.mxu0 0.0
    %3373 = vmatpush1.msra.mxu0 0.0
    %3374 = vmatprep.subr.mxu0 0.0
    %3375 = vmatpush1.msra.mxu0 0.0
    %3376 = vmatprep.subr.mxu0 0.0
    %3377 = vmatpush1.msra.mxu0 0.0
    %3378 = vmatprep.subr.mxu0 0.0
    %3379 = vmatpush1.msra.mxu0 0.0
    %3380 = vmatprep.subr.mxu0 0.0
    %3381 = vmatpush1.msra.mxu0 0.0
    %3382 = vmatprep.subr.mxu0 0.0
    %3383 = vmatpush1.msra.mxu0 0.0
    %3384 = vmatprep.subr.mxu0 0.0
    %3385 = vmatpush1.msra.mxu0 0.0
    %3386 = vmatprep.subr.mxu0 0.0
    %3387 = vmatpush1.msra.mxu0 0.0
    %3388 = vmatprep.subr.mxu0 0.0
    %3389 = vmatpush1.msra.mxu0 0.0
    %3390 = vmatprep.subr.mxu0 0.0
    %3391 = vmatpush1.msra.mxu0 0.0
    %3392 = vmatprep.subr.mxu0 0.0
    %3393 = vmatpush1.msra.mxu0 0.0
    %3394 = vmatprep.subr.mxu0 0.0
    %3395 = vmatpush1.msra.mxu0 0.0
    %3396 = vmatprep.subr.mxu0 0.0
    %3397 = vmatpush1.msra.mxu0 0.0
    %3398 = vmatprep.subr.mxu0 0.0
    %3399 = vmatpush1.msra.mxu0 0.0
    %3400 = vmatprep.subr.mxu0 0.0
    %3401 = vmatpush1.msra.mxu0 0.0
    %3402 = vmatprep.subr.mxu0 0.0
    %3403 = vmatpush1.msra.mxu0 0.0
    %3404 = vmatprep.subr.mxu0 0.0
    %3405 = vmatpush1.msra.mxu0 0.0
    %3406 = vmatprep.subr.mxu0 0.0
    %3407 = vmatpush1.msra.mxu0 0.0
    %3408 = vmatprep.mubr.f32.mxu0 0.0
    %3409 = vmatmul.mubr.f32.gmra.mrb[0].mxu0 %v3342
    %v3410 = vpop.f32.mrb[0].mxu0
    %v3411 = vadd.f32 0.0, %v3410
    %v3412 = vpop.f32.mrb[0].mxu0
    %3413 = vdwg.mxu0
    %v3414 = vlaneseq
    %v3415 = vshrl.u32 %v3414, 7
    %v3416 = vsub.s32 0, %v3415
    %v3417 = vrot.slane %v3338, %v3416
    %v3418 = vmul.f32 %v2585, %v3417
    %v3419 = vlaneseq
    %v3420 = vshrl.u32 %v3419, 7
    %v3421 = vsub.s32 0, %v3420
    %v3422 = vrot.slane %v3411, %v3421
    %v3423 = vadd.f32 %v3418, %v3422
    %v3424 = vmax.f32 %v3423, 0.0
    %v3425 = vsel %vm1319, %v1468, 0
    %3427 = vmatprep.subr.mxu0 0.0
    %3428 = vmatpush1.msra.mxu0 %v3424
    %3429 = vmatprep.subr.mxu0 0.0
    %3430 = vmatpush1.msra.mxu0 0.0
    %3431 = vmatprep.subr.mxu0 0.0
    %3432 = vmatpush1.msra.mxu0 0.0
    %3433 = vmatprep.subr.mxu0 0.0
    %3434 = vmatpush1.msra.mxu0 0.0
    %3435 = vmatprep.subr.mxu0 0.0
    %3436 = vmatpush1.msra.mxu0 0.0
    %3437 = vmatprep.subr.mxu0 0.0
    %3438 = vmatpush1.msra.mxu0 0.0
    %3439 = vmatprep.subr.mxu0 0.0
    %3440 = vmatpush1.msra.mxu0 0.0
    %3441 = vmatprep.subr.mxu0 0.0
    %3442 = vmatpush1.msra.mxu0 0.0
    %3443 = vmatprep.subr.mxu0 0.0
    %3444 = vmatpush1.msra.mxu0 0.0
    %3445 = vmatprep.subr.mxu0 0.0
    %3446 = vmatpush1.msra.mxu0 0.0
    %3447 = vmatprep.subr.mxu0 0.0
    %3448 = vmatpush1.msra.mxu0 0.0
    %3449 = vmatprep.subr.mxu0 0.0
    %3450 = vmatpush1.msra.mxu0 0.0
    %3451 = vmatprep.subr.mxu0 0.0
    %3452 = vmatpush1.msra.mxu0 0.0
    %3453 = vmatprep.subr.mxu0 0.0
    %3454 = vmatpush1.msra.mxu0 0.0
    %3455 = vmatprep.subr.mxu0 0.0
    %3456 = vmatpush1.msra.mxu0 0.0
    %3457 = vmatprep.subr.mxu0 0.0
    %3458 = vmatpush1.msra.mxu0 0.0
    %3459 = vmatprep.subr.mxu0 0.0
    %3460 = vmatpush1.msra.mxu0 0.0
    %3461 = vmatprep.subr.mxu0 0.0
    %3462 = vmatpush1.msra.mxu0 0.0
    %3463 = vmatprep.subr.mxu0 0.0
    %3464 = vmatpush1.msra.mxu0 0.0
    %3465 = vmatprep.subr.mxu0 0.0
    %3466 = vmatpush1.msra.mxu0 0.0
    %3467 = vmatprep.subr.mxu0 0.0
    %3468 = vmatpush1.msra.mxu0 0.0
    %3469 = vmatprep.subr.mxu0 0.0
    %3470 = vmatpush1.msra.mxu0 0.0
    %3471 = vmatprep.subr.mxu0 0.0
    %3472 = vmatpush1.msra.mxu0 0.0
    %3473 = vmatprep.subr.mxu0 0.0
    %3474 = vmatpush1.msra.mxu0 0.0
    %3475 = vmatprep.subr.mxu0 0.0
    %3476 = vmatpush1.msra.mxu0 0.0
    %3477 = vmatprep.subr.mxu0 0.0
    %3478 = vmatpush1.msra.mxu0 0.0
    %3479 = vmatprep.subr.mxu0 0.0
    %3480 = vmatpush1.msra.mxu0 0.0
    %3481 = vmatprep.subr.mxu0 0.0
    %3482 = vmatpush1.msra.mxu0 0.0
    %3483 = vmatprep.subr.mxu0 0.0
    %3484 = vmatpush1.msra.mxu0 0.0
    %3485 = vmatprep.subr.mxu0 0.0
    %3486 = vmatpush1.msra.mxu0 0.0
    %3487 = vmatprep.subr.mxu0 0.0
    %3488 = vmatpush1.msra.mxu0 0.0
    %3489 = vmatprep.subr.mxu0 0.0
    %3490 = vmatpush1.msra.mxu0 0.0
    %3491 = vmatprep.mubr.f32.mxu0 0.0
    %3492 = vmatmul.mubr.f32.gmra.mrb[0].mxu0 %v3425
    %v3493 = vpop.f32.mrb[0].mxu0
    %v3494 = vadd.f32 0.0, %v3493
    %v3495 = vpop.f32.mrb[0].mxu0
    %3496 = vdwg.mxu0
    %v3497 = vsel %vm1319, %v1471, 0
    %3499 = vmatprep.subr.mxu0 0.0
    %3500 = vmatpush1.msra.mxu0 %v3424
    %3501 = vmatprep.subr.mxu0 0.0
    %3502 = vmatpush1.msra.mxu0 0.0
    %3503 = vmatprep.subr.mxu0 0.0
    %3504 = vmatpush1.msra.mxu0 0.0
    %3505 = vmatprep.subr.mxu0 0.0
    %3506 = vmatpush1.msra.mxu0 0.0
    %3507 = vmatprep.subr.mxu0 0.0
    %3508 = vmatpush1.msra.mxu0 0.0
    %3509 = vmatprep.subr.mxu0 0.0
    %3510 = vmatpush1.msra.mxu0 0.0
    %3511 = vmatprep.subr.mxu0 0.0
    %3512 = vmatpush1.msra.mxu0 0.0
    %3513 = vmatprep.subr.mxu0 0.0
    %3514 = vmatpush1.msra.mxu0 0.0
    %3515 = vmatprep.subr.mxu0 0.0
    %3516 = vmatpush1.msra.mxu0 0.0
    %3517 = vmatprep.subr.mxu0 0.0
    %3518 = vmatpush1.msra.mxu0 0.0
    %3519 = vmatprep.subr.mxu0 0.0
    %3520 = vmatpush1.msra.mxu0 0.0
    %3521 = vmatprep.subr.mxu0 0.0
    %3522 = vmatpush1.msra.mxu0 0.0
    %3523 = vmatprep.subr.mxu0 0.0
    %3524 = vmatpush1.msra.mxu0 0.0
    %3525 = vmatprep.subr.mxu0 0.0
    %3526 = vmatpush1.msra.mxu0 0.0
    %3527 = vmatprep.subr.mxu0 0.0
    %3528 = vmatpush1.msra.mxu0 0.0
    %3529 = vmatprep.subr.mxu0 0.0
    %3530 = vmatpush1.msra.mxu0 0.0
    %3531 = vmatprep.subr.mxu0 0.0
    %3532 = vmatpush1.msra.mxu0 0.0
    %3533 = vmatprep.subr.mxu0 0.0
    %3534 = vmatpush1.msra.mxu0 0.0
    %3535 = vmatprep.subr.mxu0 0.0
    %3536 = vmatpush1.msra.mxu0 0.0
    %3537 = vmatprep.subr.mxu0 0.0
    %3538 = vmatpush1.msra.mxu0 0.0
    %3539 = vmatprep.subr.mxu0 0.0
    %3540 = vmatpush1.msra.mxu0 0.0
    %3541 = vmatprep.subr.mxu0 0.0
    %3542 = vmatpush1.msra.mxu0 0.0
    %3543 = vmatprep.subr.mxu0 0.0
    %3544 = vmatpush1.msra.mxu0 0.0
    %3545 = vmatprep.subr.mxu0 0.0
    %3546 = vmatpush1.msra.mxu0 0.0
    %3547 = vmatprep.subr.mxu0 0.0
    %3548 = vmatpush1.msra.mxu0 0.0
    %3549 = vmatprep.subr.mxu0 0.0
    %3550 = vmatpush1.msra.mxu0 0.0
    %3551 = vmatprep.subr.mxu0 0.0
    %3552 = vmatpush1.msra.mxu0 0.0
    %3553 = vmatprep.subr.mxu0 0.0
    %3554 = vmatpush1.msra.mxu0 0.0
    %3555 = vmatprep.subr.mxu0 0.0
    %3556 = vmatpush1.msra.mxu0 0.0
    %3557 = vmatprep.subr.mxu0 0.0
    %3558 = vmatpush1.msra.mxu0 0.0
    %3559 = vmatprep.subr.mxu0 0.0
    %3560 = vmatpush1.msra.mxu0 0.0
    %3561 = vmatprep.subr.mxu0 0.0
    %3562 = vmatpush1.msra.mxu0 0.0
    %3563 = vmatprep.mubr.f32.mxu0 0.0
    %3564 = vmatmul.mubr.f32.gmra.mrb[0].mxu0 %v3497
    %v3565 = vpop.f32.mrb[0].mxu0
    %v3566 = vadd.f32 0.0, %v3565
    %v3567 = vpop.f32.mrb[0].mxu0
    %3568 = vdwg.mxu0
    %v3569 = vmax.f32 %v3494, %v3566
    %3570 = vmatprep.subr.mxu0 0.0
    %3571 = vmatpush1.msra.mxu0 %v1489
    %3572 = vmatprep.subr.mxu0 0.0
    %3573 = vmatpush1.msra.mxu0 %v1490
    %3574 = vmatprep.subr.mxu0 0.0
    %3575 = vmatpush1.msra.mxu0 %v1491
    %3576 = vmatprep.subr.mxu0 0.0
    %3577 = vmatpush1.msra.mxu0 %v1492
    %3578 = vmatprep.subr.mxu0 0.0
    %3579 = vmatpush1.msra.mxu0 %v1493
    %3580 = vmatprep.subr.mxu0 0.0
    %3581 = vmatpush1.msra.mxu0 %v1494
    %3582 = vmatprep.subr.mxu0 0.0
    %3583 = vmatpush1.msra.mxu0 %v1495
    %3584 = vmatprep.subr.mxu0 0.0
    %3585 = vmatpush1.msra.mxu0 %v1496
    %3586 = vmatprep.subr.mxu0 0.0
    %3587 = vmatpush1.msra.mxu0 %v1497
    %3588 = vmatprep.subr.mxu0 0.0
    %3589 = vmatpush1.msra.mxu0 %v1498
    %3590 = vmatprep.subr.mxu0 0.0
    %3591 = vmatpush1.msra.mxu0 %v1499
    %3592 = vmatprep.subr.mxu0 0.0
    %3593 = vmatpush1.msra.mxu0 %v1500
    %3594 = vmatprep.subr.mxu0 0.0
    %3595 = vmatpush1.msra.mxu0 %v1501
    %3596 = vmatprep.subr.mxu0 0.0
    %3597 = vmatpush1.msra.mxu0 %v1502
    %3598 = vmatprep.subr.mxu0 0.0
    %3599 = vmatpush1.msra.mxu0 %v1503
    %3600 = vmatprep.subr.mxu0 0.0
    %3601 = vmatpush1.msra.mxu0 %v1504
    %3602 = vmatprep.subr.mxu0 0.0
    %3603 = vmatpush1.msra.mxu0 0.0
    %3604 = vmatprep.subr.mxu0 0.0
    %3605 = vmatpush1.msra.mxu0 0.0
    %3606 = vmatprep.subr.mxu0 0.0
    %3607 = vmatpush1.msra.mxu0 0.0
    %3608 = vmatprep.subr.mxu0 0.0
    %3609 = vmatpush1.msra.mxu0 0.0
    %3610 = vmatprep.subr.mxu0 0.0
    %3611 = vmatpush1.msra.mxu0 0.0
    %3612 = vmatprep.subr.mxu0 0.0
    %3613 = vmatpush1.msra.mxu0 0.0
    %3614 = vmatprep.subr.mxu0 0.0
    %3615 = vmatpush1.msra.mxu0 0.0
    %3616 = vmatprep.subr.mxu0 0.0
    %3617 = vmatpush1.msra.mxu0 0.0
    %3618 = vmatprep.subr.mxu0 0.0
    %3619 = vmatpush1.msra.mxu0 0.0
    %3620 = vmatprep.subr.mxu0 0.0
    %3621 = vmatpush1.msra.mxu0 0.0
    %3622 = vmatprep.subr.mxu0 0.0
    %3623 = vmatpush1.msra.mxu0 0.0
    %3624 = vmatprep.subr.mxu0 0.0
    %3625 = vmatpush1.msra.mxu0 0.0
    %3626 = vmatprep.subr.mxu0 0.0
    %3627 = vmatpush1.msra.mxu0 0.0
    %3628 = vmatprep.subr.mxu0 0.0
    %3629 = vmatpush1.msra.mxu0 0.0
    %3630 = vmatprep.subr.mxu0 0.0
    %3631 = vmatpush1.msra.mxu0 0.0
    %3632 = vmatprep.subr.mxu0 0.0
    %3633 = vmatpush1.msra.mxu0 0.0
    %3634 = vmatprep.mubr.f32.mxu0 0.0
    %3635 = vmatmul.mubr.f32.gmra.mrb[0].mxu0 %v3569
    %v3636 = vpop.f32.mrb[0].mxu0
    %v3637 = vadd.f32 0.0, %v3636
    %v3638 = vpop.f32.mrb[0].mxu0
    %3639 = vdwg.mxu0
    %3640 = vmatprep.subr.mxu0 0.0
    %3641 = vmatpush1.msra.mxu0 %v1522
    %3642 = vmatprep.subr.mxu0 0.0
    %3643 = vmatpush1.msra.mxu0 %v1523
    %3644 = vmatprep.subr.mxu0 0.0
    %3645 = vmatpush1.msra.mxu0 %v1524
    %3646 = vmatprep.subr.mxu0 0.0
    %3647 = vmatpush1.msra.mxu0 %v1525
    %3648 = vmatprep.subr.mxu0 0.0
    %3649 = vmatpush1.msra.mxu0 %v1526
    %3650 = vmatprep.subr.mxu0 0.0
    %3651 = vmatpush1.msra.mxu0 %v1527
    %3652 = vmatprep.subr.mxu0 0.0
    %3653 = vmatpush1.msra.mxu0 %v1528
    %3654 = vmatprep.subr.mxu0 0.0
    %3655 = vmatpush1.msra.mxu0 %v1529
    %3656 = vmatprep.subr.mxu0 0.0
    %3657 = vmatpush1.msra.mxu0 %v1530
    %3658 = vmatprep.subr.mxu0 0.0
    %3659 = vmatpush1.msra.mxu0 %v1531
    %3660 = vmatprep.subr.mxu0 0.0
    %3661 = vmatpush1.msra.mxu0 %v1532
    %3662 = vmatprep.subr.mxu0 0.0
    %3663 = vmatpush1.msra.mxu0 %v1533
    %3664 = vmatprep.subr.mxu0 0.0
    %3665 = vmatpush1.msra.mxu0 %v1534
    %3666 = vmatprep.subr.mxu0 0.0
    %3667 = vmatpush1.msra.mxu0 %v1535
    %3668 = vmatprep.subr.mxu0 0.0
    %3669 = vmatpush1.msra.mxu0 %v1536
    %3670 = vmatprep.subr.mxu0 0.0
    %3671 = vmatpush1.msra.mxu0 %v1537
    %3672 = vmatprep.subr.mxu0 0.0
    %3673 = vmatpush1.msra.mxu0 0.0
    %3674 = vmatprep.subr.mxu0 0.0
    %3675 = vmatpush1.msra.mxu0 0.0
    %3676 = vmatprep.subr.mxu0 0.0
    %3677 = vmatpush1.msra.mxu0 0.0
    %3678 = vmatprep.subr.mxu0 0.0
    %3679 = vmatpush1.msra.mxu0 0.0
    %3680 = vmatprep.subr.mxu0 0.0
    %3681 = vmatpush1.msra.mxu0 0.0
    %3682 = vmatprep.subr.mxu0 0.0
    %3683 = vmatpush1.msra.mxu0 0.0
    %3684 = vmatprep.subr.mxu0 0.0
    %3685 = vmatpush1.msra.mxu0 0.0
    %3686 = vmatprep.subr.mxu0 0.0
    %3687 = vmatpush1.msra.mxu0 0.0
    %3688 = vmatprep.subr.mxu0 0.0
    %3689 = vmatpush1.msra.mxu0 0.0
    %3690 = vmatprep.subr.mxu0 0.0
    %3691 = vmatpush1.msra.mxu0 0.0
    %3692 = vmatprep.subr.mxu0 0.0
    %3693 = vmatpush1.msra.mxu0 0.0
    %3694 = vmatprep.subr.mxu0 0.0
    %3695 = vmatpush1.msra.mxu0 0.0
    %3696 = vmatprep.subr.mxu0 0.0
    %3697 = vmatpush1.msra.mxu0 0.0
    %3698 = vmatprep.subr.mxu0 0.0
    %3699 = vmatpush1.msra.mxu0 0.0
    %3700 = vmatprep.subr.mxu0 0.0
    %3701 = vmatpush1.msra.mxu0 0.0
    %3702 = vmatprep.subr.mxu0 0.0
    %3703 = vmatpush1.msra.mxu0 0.0
    %3704 = vmatprep.mubr.f32.mxu0 0.0
    %3705 = vmatmul.mubr.f32.gmra.mrb[0].mxu0 %v3569
    %v3706 = vpop.f32.mrb[0].mxu0
    %v3707 = vadd.f32 0.0, %v3706
    %v3708 = vpop.f32.mrb[0].mxu0
    %3709 = vdwg.mxu0
    %v3710 = vmax.f32 %v3637, %v3707
    %v3711 = vmul.f32 %v3009, %v3417
    %v3712 = vadd.f32 %v3711, %v3422
    %v3713 = vmax.f32 %v3712, 0.0
    %3714 = vmatprep.subr.mxu0 0.0
    %3715 = vmatpush1.msra.mxu0 %v3713
    %3716 = vmatprep.subr.mxu0 0.0
    %3717 = vmatpush1.msra.mxu0 0.0
    %3718 = vmatprep.subr.mxu0 0.0
    %3719 = vmatpush1.msra.mxu0 0.0
    %3720 = vmatprep.subr.mxu0 0.0
    %3721 = vmatpush1.msra.mxu0 0.0
    %3722 = vmatprep.subr.mxu0 0.0
    %3723 = vmatpush1.msra.mxu0 0.0
    %3724 = vmatprep.subr.mxu0 0.0
    %3725 = vmatpush1.msra.mxu0 0.0
    %3726 = vmatprep.subr.mxu0 0.0
    %3727 = vmatpush1.msra.mxu0 0.0
    %3728 = vmatprep.subr.mxu0 0.0
    %3729 = vmatpush1.msra.mxu0 0.0
    %3730 = vmatprep.subr.mxu0 0.0
    %3731 = vmatpush1.msra.mxu0 0.0
    %3732 = vmatprep.subr.mxu0 0.0
    %3733 = vmatpush1.msra.mxu0 0.0
    %3734 = vmatprep.subr.mxu0 0.0
    %3735 = vmatpush1.msra.mxu0 0.0
    %3736 = vmatprep.subr.mxu0 0.0
    %3737 = vmatpush1.msra.mxu0 0.0
    %3738 = vmatprep.subr.mxu0 0.0
    %3739 = vmatpush1.msra.mxu0 0.0
    %3740 = vmatprep.subr.mxu0 0.0
    %3741 = vmatpush1.msra.mxu0 0.0
    %3742 = vmatprep.subr.mxu0 0.0
    %3743 = vmatpush1.msra.mxu0 0.0
    %3744 = vmatprep.subr.mxu0 0.0
    %3745 = vmatpush1.msra.mxu0 0.0
    %3746 = vmatprep.subr.mxu0 0.0
    %3747 = vmatpush1.msra.mxu0 0.0
    %3748 = vmatprep.subr.mxu0 0.0
    %3749 = vmatpush1.msra.mxu0 0.0
    %3750 = vmatprep.subr.mxu0 0.0
    %3751 = vmatpush1.msra.mxu0 0.0
    %3752 = vmatprep.subr.mxu0 0.0
    %3753 = vmatpush1.msra.mxu0 0.0
    %3754 = vmatprep.subr.mxu0 0.0
    %3755 = vmatpush1.msra.mxu0 0.0
    %3756 = vmatprep.subr.mxu0 0.0
    %3757 = vmatpush1.msra.mxu0 0.0
    %3758 = vmatprep.subr.mxu0 0.0
    %3759 = vmatpush1.msra.mxu0 0.0
    %3760 = vmatprep.subr.mxu0 0.0
    %3761 = vmatpush1.msra.mxu0 0.0
    %3762 = vmatprep.subr.mxu0 0.0
    %3763 = vmatpush1.msra.mxu0 0.0
    %3764 = vmatprep.subr.mxu0 0.0
    %3765 = vmatpush1.msra.mxu0 0.0
    %3766 = vmatprep.subr.mxu0 0.0
    %3767 = vmatpush1.msra.mxu0 0.0
    %3768 = vmatprep.subr.mxu0 0.0
    %3769 = vmatpush1.msra.mxu0 0.0
    %3770 = vmatprep.subr.mxu0 0.0
    %3771 = vmatpush1.msra.mxu0 0.0
    %3772 = vmatprep.subr.mxu0 0.0
    %3773 = vmatpush1.msra.mxu0 0.0
    %3774 = vmatprep.subr.mxu0 0.0
    %3775 = vmatpush1.msra.mxu0 0.0
    %3776 = vmatprep.subr.mxu0 0.0
    %3777 = vmatpush1.msra.mxu0 0.0
    %3778 = vmatprep.mubr.f32.mxu0 0.0
    %3779 = vmatmul.mubr.f32.gmra.mrb[0].mxu0 %v3425
    %v3780 = vpop.f32.mrb[0].mxu0
    %v3781 = vadd.f32 0.0, %v3780
    %v3782 = vpop.f32.mrb[0].mxu0
    %3783 = vdwg.mxu0
    %3784 = vmatprep.subr.mxu0 0.0
    %3785 = vmatpush1.msra.mxu0 %v3713
    %3786 = vmatprep.subr.mxu0 0.0
    %3787 = vmatpush1.msra.mxu0 0.0
    %3788 = vmatprep.subr.mxu0 0.0
    %3789 = vmatpush1.msra.mxu0 0.0
    %3790 = vmatprep.subr.mxu0 0.0
    %3791 = vmatpush1.msra.mxu0 0.0
    %3792 = vmatprep.subr.mxu0 0.0
    %3793 = vmatpush1.msra.mxu0 0.0
    %3794 = vmatprep.subr.mxu0 0.0
    %3795 = vmatpush1.msra.mxu0 0.0
    %3796 = vmatprep.subr.mxu0 0.0
    %3797 = vmatpush1.msra.mxu0 0.0
    %3798 = vmatprep.subr.mxu0 0.0
    %3799 = vmatpush1.msra.mxu0 0.0
    %3800 = vmatprep.subr.mxu0 0.0
    %3801 = vmatpush1.msra.mxu0 0.0
    %3802 = vmatprep.subr.mxu0 0.0
    %3803 = vmatpush1.msra.mxu0 0.0
    %3804 = vmatprep.subr.mxu0 0.0
    %3805 = vmatpush1.msra.mxu0 0.0
    %3806 = vmatprep.subr.mxu0 0.0
    %3807 = vmatpush1.msra.mxu0 0.0
    %3808 = vmatprep.subr.mxu0 0.0
    %3809 = vmatpush1.msra.mxu0 0.0
    %3810 = vmatprep.subr.mxu0 0.0
    %3811 = vmatpush1.msra.mxu0 0.0
    %3812 = vmatprep.subr.mxu0 0.0
    %3813 = vmatpush1.msra.mxu0 0.0
    %3814 = vmatprep.subr.mxu0 0.0
    %3815 = vmatpush1.msra.mxu0 0.0
    %3816 = vmatprep.subr.mxu0 0.0
    %3817 = vmatpush1.msra.mxu0 0.0
    %3818 = vmatprep.subr.mxu0 0.0
    %3819 = vmatpush1.msra.mxu0 0.0
    %3820 = vmatprep.subr.mxu0 0.0
    %3821 = vmatpush1.msra.mxu0 0.0
    %3822 = vmatprep.subr.mxu0 0.0
    %3823 = vmatpush1.msra.mxu0 0.0
    %3824 = vmatprep.subr.mxu0 0.0
    %3825 = vmatpush1.msra.mxu0 0.0
    %3826 = vmatprep.subr.mxu0 0.0
    %3827 = vmatpush1.msra.mxu0 0.0
    %3828 = vmatprep.subr.mxu0 0.0
    %3829 = vmatpush1.msra.mxu0 0.0
    %3830 = vmatprep.subr.mxu0 0.0
    %3831 = vmatpush1.msra.mxu0 0.0
    %3832 = vmatprep.subr.mxu0 0.0
    %3833 = vmatpush1.msra.mxu0 0.0
    %3834 = vmatprep.subr.mxu0 0.0
    %3835 = vmatpush1.msra.mxu0 0.0
    %3836 = vmatprep.subr.mxu0 0.0
    %3837 = vmatpush1.msra.mxu0 0.0
    %3838 = vmatprep.subr.mxu0 0.0
    %3839 = vmatpush1.msra.mxu0 0.0
    %3840 = vmatprep.subr.mxu0 0.0
    %3841 = vmatpush1.msra.mxu0 0.0
    %3842 = vmatprep.subr.mxu0 0.0
    %3843 = vmatpush1.msra.mxu0 0.0
    %3844 = vmatprep.subr.mxu0 0.0
    %3845 = vmatpush1.msra.mxu0 0.0
    %3846 = vmatprep.subr.mxu0 0.0
    %3847 = vmatpush1.msra.mxu0 0.0
    %3848 = vmatprep.mubr.f32.mxu0 0.0
    %3849 = vmatmul.mubr.f32.gmra.mrb[0].mxu0 %v3497
    %v3850 = vpop.f32.mrb[0].mxu0
    %v3851 = vadd.f32 0.0, %v3850
    %v3852 = vpop.f32.mrb[0].mxu0
    %3853 = vdwg.mxu0
    %v3854 = vmax.f32 %v3781, %v3851
    %3855 = vmatprep.subr.mxu0 0.0
    %3856 = vmatpush1.msra.mxu0 %v1489
    %3857 = vmatprep.subr.mxu0 0.0
    %3858 = vmatpush1.msra.mxu0 %v1490
    %3859 = vmatprep.subr.mxu0 0.0
    %3860 = vmatpush1.msra.mxu0 %v1491
    %3861 = vmatprep.subr.mxu0 0.0
    %3862 = vmatpush1.msra.mxu0 %v1492
    %3863 = vmatprep.subr.mxu0 0.0
    %3864 = vmatpush1.msra.mxu0 %v1493
    %3865 = vmatprep.subr.mxu0 0.0
    %3866 = vmatpush1.msra.mxu0 %v1494
    %3867 = vmatprep.subr.mxu0 0.0
    %3868 = vmatpush1.msra.mxu0 %v1495
    %3869 = vmatprep.subr.mxu0 0.0
    %3870 = vmatpush1.msra.mxu0 %v1496
    %3871 = vmatprep.subr.mxu0 0.0
    %3872 = vmatpush1.msra.mxu0 %v1497
    %3873 = vmatprep.subr.mxu0 0.0
    %3874 = vmatpush1.msra.mxu0 %v1498
    %3875 = vmatprep.subr.mxu0 0.0
    %3876 = vmatpush1.msra.mxu0 %v1499
    %3877 = vmatprep.subr.mxu0 0.0
    %3878 = vmatpush1.msra.mxu0 %v1500
    %3879 = vmatprep.subr.mxu0 0.0
    %3880 = vmatpush1.msra.mxu0 %v1501
    %3881 = vmatprep.subr.mxu0 0.0
    %3882 = vmatpush1.msra.mxu0 %v1502
    %3883 = vmatprep.subr.mxu0 0.0
    %3884 = vmatpush1.msra.mxu0 %v1503
    %3885 = vmatprep.subr.mxu0 0.0
    %3886 = vmatpush1.msra.mxu0 %v1504
    %3887 = vmatprep.subr.mxu0 0.0
    %3888 = vmatpush1.msra.mxu0 0.0
    %3889 = vmatprep.subr.mxu0 0.0
    %3890 = vmatpush1.msra.mxu0 0.0
    %3891 = vmatprep.subr.mxu0 0.0
    %3892 = vmatpush1.msra.mxu0 0.0
    %3893 = vmatprep.subr.mxu0 0.0
    %3894 = vmatpush1.msra.mxu0 0.0
    %3895 = vmatprep.subr.mxu0 0.0
    %3896 = vmatpush1.msra.mxu0 0.0
    %3897 = vmatprep.subr.mxu0 0.0
    %3898 = vmatpush1.msra.mxu0 0.0
    %3899 = vmatprep.subr.mxu0 0.0
    %3900 = vmatpush1.msra.mxu0 0.0
    %3901 = vmatprep.subr.mxu0 0.0
    %3902 = vmatpush1.msra.mxu0 0.0
    %3903 = vmatprep.subr.mxu0 0.0
    %3904 = vmatpush1.msra.mxu0 0.0
    %3905 = vmatprep.subr.mxu0 0.0
    %3906 = vmatpush1.msra.mxu0 0.0
    %3907 = vmatprep.subr.mxu0 0.0
    %3908 = vmatpush1.msra.mxu0 0.0
    %3909 = vmatprep.subr.mxu0 0.0
    %3910 = vmatpush1.msra.mxu0 0.0
    %3911 = vmatprep.subr.mxu0 0.0
    %3912 = vmatpush1.msra.mxu0 0.0
    %3913 = vmatprep.subr.mxu0 0.0
    %3914 = vmatpush1.msra.mxu0 0.0
    %3915 = vmatprep.subr.mxu0 0.0
    %3916 = vmatpush1.msra.mxu0 0.0
    %3917 = vmatprep.subr.mxu0 0.0
    %3918 = vmatpush1.msra.mxu0 0.0
    %3919 = vmatprep.mubr.f32.mxu0 0.0
    %3920 = vmatmul.mubr.f32.gmra.mrb[0].mxu0 %v3854
    %v3921 = vpop.f32.mrb[0].mxu0
    %v3922 = vadd.f32 0.0, %v3921
    %v3923 = vpop.f32.mrb[0].mxu0
    %3924 = vdwg.mxu0
    %3925 = vmatprep.subr.mxu0 0.0
    %3926 = vmatpush1.msra.mxu0 %v1522
    %3927 = vmatprep.subr.mxu0 0.0
    %3928 = vmatpush1.msra.mxu0 %v1523
    %3929 = vmatprep.subr.mxu0 0.0
    %3930 = vmatpush1.msra.mxu0 %v1524
    %3931 = vmatprep.subr.mxu0 0.0
    %3932 = vmatpush1.msra.mxu0 %v1525
    %3933 = vmatprep.subr.mxu0 0.0
    %3934 = vmatpush1.msra.mxu0 %v1526
    %3935 = vmatprep.subr.mxu0 0.0
    %3936 = vmatpush1.msra.mxu0 %v1527
    %3937 = vmatprep.subr.mxu0 0.0
    %3938 = vmatpush1.msra.mxu0 %v1528
    %3939 = vmatprep.subr.mxu0 0.0
    %3940 = vmatpush1.msra.mxu0 %v1529
    %3941 = vmatprep.subr.mxu0 0.0
    %3942 = vmatpush1.msra.mxu0 %v1530
    %3943 = vmatprep.subr.mxu0 0.0
    %3944 = vmatpush1.msra.mxu0 %v1531
    %3945 = vmatprep.subr.mxu0 0.0
    %3946 = vmatpush1.msra.mxu0 %v1532
    %3947 = vmatprep.subr.mxu0 0.0
    %3948 = vmatpush1.msra.mxu0 %v1533
    %3949 = vmatprep.subr.mxu0 0.0
    %3950 = vmatpush1.msra.mxu0 %v1534
    %3951 = vmatprep.subr.mxu0 0.0
    %3952 = vmatpush1.msra.mxu0 %v1535
    %3953 = vmatprep.subr.mxu0 0.0
    %3954 = vmatpush1.msra.mxu0 %v1536
    %3955 = vmatprep.subr.mxu0 0.0
    %3956 = vmatpush1.msra.mxu0 %v1537
    %3957 = vmatprep.subr.mxu0 0.0
    %3958 = vmatpush1.msra.mxu0 0.0
    %3959 = vmatprep.subr.mxu0 0.0
    %3960 = vmatpush1.msra.mxu0 0.0
    %3961 = vmatprep.subr.mxu0 0.0
    %3962 = vmatpush1.msra.mxu0 0.0
    %3963 = vmatprep.subr.mxu0 0.0
    %3964 = vmatpush1.msra.mxu0 0.0
    %3965 = vmatprep.subr.mxu0 0.0
    %3966 = vmatpush1.msra.mxu0 0.0
    %3967 = vmatprep.subr.mxu0 0.0
    %3968 = vmatpush1.msra.mxu0 0.0
    %3969 = vmatprep.subr.mxu0 0.0
    %3970 = vmatpush1.msra.mxu0 0.0
    %3971 = vmatprep.subr.mxu0 0.0
    %3972 = vmatpush1.msra.mxu0 0.0
    %3973 = vmatprep.subr.mxu0 0.0
    %3974 = vmatpush1.msra.mxu0 0.0
    %3975 = vmatprep.subr.mxu0 0.0
    %3976 = vmatpush1.msra.mxu0 0.0
    %3977 = vmatprep.subr.mxu0 0.0
    %3978 = vmatpush1.msra.mxu0 0.0
    %3979 = vmatprep.subr.mxu0 0.0
    %3980 = vmatpush1.msra.mxu0 0.0
    %3981 = vmatprep.subr.mxu0 0.0
    %3982 = vmatpush1.msra.mxu0 0.0
    %3983 = vmatprep.subr.mxu0 0.0
    %3984 = vmatpush1.msra.mxu0 0.0
    %3985 = vmatprep.subr.mxu0 0.0
    %3986 = vmatpush1.msra.mxu0 0.0
    %3987 = vmatprep.subr.mxu0 0.0
    %3988 = vmatpush1.msra.mxu0 0.0
    %3989 = vmatprep.mubr.f32.mxu0 0.0
    %3990 = vmatmul.mubr.f32.gmra.mrb[0].mxu0 %v3854
    %v3991 = vpop.f32.mrb[0].mxu0
    %v3992 = vadd.f32 0.0, %v3991
    %v3993 = vpop.f32.mrb[0].mxu0
    %3994 = vdwg.mxu0
    %v3995 = vmax.f32 %v3922, %v3992
    %v3996 = vld [vmem:[%s9] sm:$0x1]
    %v3997 = vld [vmem:[%s10] sm:$0x1]
    %v3998 = vld [vmem:[#allocation2] sm:$0xff]
    %v3999 = vld [vmem:[#allocation2 + $0x8] sm:$0xff]
    %v4000 = vld [vmem:[#allocation2 + $0x10] sm:$0xff]
    %v4001 = vld [vmem:[#allocation2 + $0x18] sm:$0xff]
    %v4002 = vld [vmem:[#allocation2 + $0x20] sm:$0xff]
    %v4003 = vld [vmem:[#allocation2 + $0x28] sm:$0xff]
    %v4004 = vld [vmem:[#allocation2 + $0x30] sm:$0xff]
    %v4005 = vld [vmem:[#allocation2 + $0x38] sm:$0xff]
    %v4007 = vsel %vm93, %v3710, 0
    %4009 = vmatprep.subr.mxu0 0.0
    %4010 = vmatpush1.msra.mxu0 %v3998
    %4011 = vmatprep.subr.mxu0 0.0
    %4012 = vmatpush1.msra.mxu0 %v3999
    %4013 = vmatprep.subr.mxu0 0.0
    %4014 = vmatpush1.msra.mxu0 %v4000
    %4015 = vmatprep.subr.mxu0 0.0
    %4016 = vmatpush1.msra.mxu0 %v4001
    %4017 = vmatprep.subr.mxu0 0.0
    %4018 = vmatpush1.msra.mxu0 %v4002
    %4019 = vmatprep.subr.mxu0 0.0
    %4020 = vmatpush1.msra.mxu0 %v4003
    %4021 = vmatprep.subr.mxu0 0.0
    %4022 = vmatpush1.msra.mxu0 %v4004
    %4023 = vmatprep.subr.mxu0 0.0
    %4024 = vmatpush1.msra.mxu0 %v4005
    %4025 = vmatprep.subr.mxu0 0.0
    %4026 = vmatpush1.msra.mxu0 0.0
    %4027 = vmatprep.subr.mxu0 0.0
    %4028 = vmatpush1.msra.mxu0 0.0
    %4029 = vmatprep.subr.mxu0 0.0
    %4030 = vmatpush1.msra.mxu0 0.0
    %4031 = vmatprep.subr.mxu0 0.0
    %4032 = vmatpush1.msra.mxu0 0.0
    %4033 = vmatprep.subr.mxu0 0.0
    %4034 = vmatpush1.msra.mxu0 0.0
    %4035 = vmatprep.subr.mxu0 0.0
    %4036 = vmatpush1.msra.mxu0 0.0
    %4037 = vmatprep.subr.mxu0 0.0
    %4038 = vmatpush1.msra.mxu0 0.0
    %4039 = vmatprep.subr.mxu0 0.0
    %4040 = vmatpush1.msra.mxu0 0.0
    %4041 = vmatprep.subr.mxu0 0.0
    %4042 = vmatpush1.msra.mxu0 0.0
    %4043 = vmatprep.subr.mxu0 0.0
    %4044 = vmatpush1.msra.mxu0 0.0
    %4045 = vmatprep.subr.mxu0 0.0
    %4046 = vmatpush1.msra.mxu0 0.0
    %4047 = vmatprep.subr.mxu0 0.0
    %4048 = vmatpush1.msra.mxu0 0.0
    %4049 = vmatprep.subr.mxu0 0.0
    %4050 = vmatpush1.msra.mxu0 0.0
    %4051 = vmatprep.subr.mxu0 0.0
    %4052 = vmatpush1.msra.mxu0 0.0
    %4053 = vmatprep.subr.mxu0 0.0
    %4054 = vmatpush1.msra.mxu0 0.0
    %4055 = vmatprep.subr.mxu0 0.0
    %4056 = vmatpush1.msra.mxu0 0.0
    %4057 = vmatprep.subr.mxu0 0.0
    %4058 = vmatpush1.msra.mxu0 0.0
    %4059 = vmatprep.subr.mxu0 0.0
    %4060 = vmatpush1.msra.mxu0 0.0
    %4061 = vmatprep.subr.mxu0 0.0
    %4062 = vmatpush1.msra.mxu0 0.0
    %4063 = vmatprep.subr.mxu0 0.0
    %4064 = vmatpush1.msra.mxu0 0.0
    %4065 = vmatprep.subr.mxu0 0.0
    %4066 = vmatpush1.msra.mxu0 0.0
    %4067 = vmatprep.subr.mxu0 0.0
    %4068 = vmatpush1.msra.mxu0 0.0
    %4069 = vmatprep.subr.mxu0 0.0
    %4070 = vmatpush1.msra.mxu0 0.0
    %4071 = vmatprep.subr.mxu0 0.0
    %4072 = vmatpush1.msra.mxu0 0.0
    %4073 = vmatprep.mubr.f32.mxu0 0.0
    %4074 = vmatmul.mubr.f32.gmra.mrb[0].mxu0 %v4007
    %v4075 = vpop.f32.mrb[0].mxu0
    %v4076 = vadd.f32 0.0, %v4075
    %v4077 = vpop.f32.mrb[0].mxu0
    %4078 = vdwg.mxu0
    %s4079 = scalar_lea.vmem [#allocation2], 64
    %v4080 = vld [vmem:[%s4079] sm:$0xff]
    %v4081 = vld [vmem:[%s4079 + $0x8] sm:$0xff]
    %v4082 = vld [vmem:[%s4079 + $0x10] sm:$0xff]
    %v4083 = vld [vmem:[%s4079 + $0x18] sm:$0xff]
    %v4084 = vld [vmem:[%s4079 + $0x20] sm:$0xff]
    %v4085 = vld [vmem:[%s4079 + $0x28] sm:$0xff]
    %v4086 = vld [vmem:[%s4079 + $0x30] sm:$0xff]
    %v4087 = vld [vmem:[%s4079 + $0x38] sm:$0xff]
    %4088 = vmatprep.subr.mxu0 0.0
    %4089 = vmatpush1.msra.mxu0 %v4080
    %4090 = vmatprep.subr.mxu0 0.0
    %4091 = vmatpush1.msra.mxu0 %v4081
    %4092 = vmatprep.subr.mxu0 0.0
    %4093 = vmatpush1.msra.mxu0 %v4082
    %4094 = vmatprep.subr.mxu0 0.0
    %4095 = vmatpush1.msra.mxu0 %v4083
    %4096 = vmatprep.subr.mxu0 0.0
    %4097 = vmatpush1.msra.mxu0 %v4084
    %4098 = vmatprep.subr.mxu0 0.0
    %4099 = vmatpush1.msra.mxu0 %v4085
    %4100 = vmatprep.subr.mxu0 0.0
    %4101 = vmatpush1.msra.mxu0 %v4086
    %4102 = vmatprep.subr.mxu0 0.0
    %4103 = vmatpush1.msra.mxu0 %v4087
    %4104 = vmatprep.subr.mxu0 0.0
    %4105 = vmatpush1.msra.mxu0 0.0
    %4106 = vmatprep.subr.mxu0 0.0
    %4107 = vmatpush1.msra.mxu0 0.0
    %4108 = vmatprep.subr.mxu0 0.0
    %4109 = vmatpush1.msra.mxu0 0.0
    %4110 = vmatprep.subr.mxu0 0.0
    %4111 = vmatpush1.msra.mxu0 0.0
    %4112 = vmatprep.subr.mxu0 0.0
    %4113 = vmatpush1.msra.mxu0 0.0
    %4114 = vmatprep.subr.mxu0 0.0
    %4115 = vmatpush1.msra.mxu0 0.0
    %4116 = vmatprep.subr.mxu0 0.0
    %4117 = vmatpush1.msra.mxu0 0.0
    %4118 = vmatprep.subr.mxu0 0.0
    %4119 = vmatpush1.msra.mxu0 0.0
    %4120 = vmatprep.subr.mxu0 0.0
    %4121 = vmatpush1.msra.mxu0 0.0
    %4122 = vmatprep.subr.mxu0 0.0
    %4123 = vmatpush1.msra.mxu0 0.0
    %4124 = vmatprep.subr.mxu0 0.0
    %4125 = vmatpush1.msra.mxu0 0.0
    %4126 = vmatprep.subr.mxu0 0.0
    %4127 = vmatpush1.msra.mxu0 0.0
    %4128 = vmatprep.subr.mxu0 0.0
    %4129 = vmatpush1.msra.mxu0 0.0
    %4130 = vmatprep.subr.mxu0 0.0
    %4131 = vmatpush1.msra.mxu0 0.0
    %4132 = vmatprep.subr.mxu0 0.0
    %4133 = vmatpush1.msra.mxu0 0.0
    %4134 = vmatprep.subr.mxu0 0.0
    %4135 = vmatpush1.msra.mxu0 0.0
    %4136 = vmatprep.subr.mxu0 0.0
    %4137 = vmatpush1.msra.mxu0 0.0
    %4138 = vmatprep.subr.mxu0 0.0
    %4139 = vmatpush1.msra.mxu0 0.0
    %4140 = vmatprep.subr.mxu0 0.0
    %4141 = vmatpush1.msra.mxu0 0.0
    %4142 = vmatprep.subr.mxu0 0.0
    %4143 = vmatpush1.msra.mxu0 0.0
    %4144 = vmatprep.subr.mxu0 0.0
    %4145 = vmatpush1.msra.mxu0 0.0
    %4146 = vmatprep.subr.mxu0 0.0
    %4147 = vmatpush1.msra.mxu0 0.0
    %4148 = vmatprep.subr.mxu0 0.0
    %4149 = vmatpush1.msra.mxu0 0.0
    %4150 = vmatprep.subr.mxu0 0.0
    %4151 = vmatpush1.msra.mxu0 0.0
    %4152 = vmatprep.mubr.f32.mxu0 0.0
    %4153 = vmatmul.mubr.f32.gmra.mrb[0].mxu0 %v4007
    %v4154 = vpop.f32.mrb[0].mxu0
    %v4155 = vadd.f32 0.0, %v4154
    %v4156 = vpop.f32.mrb[0].mxu0
    %4157 = vdwg.mxu0
    %vm4158 = vcmask 31744
    %v4159 = vsel %vm4158, %v75, 0
    %vm4161 = vcmask 1043456
    %v4163 = vsel %vm4161, %v4155, 0
    %4165 = vmatprep.subr.mxu0 0.0
    %4166 = vmatpush1.msra.mxu0 %v4163
    %4167 = vmatprep.subr.mxu0 0.0
    %4168 = vmatpush1.msra.mxu0 0.0
    %4169 = vmatprep.subr.mxu0 0.0
    %4170 = vmatpush1.msra.mxu0 0.0
    %4171 = vmatprep.subr.mxu0 0.0
    %4172 = vmatpush1.msra.mxu0 0.0
    %4173 = vmatprep.subr.mxu0 0.0
    %4174 = vmatpush1.msra.mxu0 0.0
    %4175 = vmatprep.subr.mxu0 0.0
    %4176 = vmatpush1.msra.mxu0 0.0
    %4177 = vmatprep.subr.mxu0 0.0
    %4178 = vmatpush1.msra.mxu0 0.0
    %4179 = vmatprep.subr.mxu0 0.0
    %4180 = vmatpush1.msra.mxu0 0.0
    %4181 = vmatprep.subr.mxu0 0.0
    %4182 = vmatpush1.msra.mxu0 0.0
    %4183 = vmatprep.subr.mxu0 0.0
    %4184 = vmatpush1.msra.mxu0 0.0
    %4185 = vmatprep.subr.mxu0 0.0
    %4186 = vmatpush1.msra.mxu0 0.0
    %4187 = vmatprep.subr.mxu0 0.0
    %4188 = vmatpush1.msra.mxu0 0.0
    %4189 = vmatprep.subr.mxu0 0.0
    %4190 = vmatpush1.msra.mxu0 0.0
    %4191 = vmatprep.subr.mxu0 0.0
    %4192 = vmatpush1.msra.mxu0 0.0
    %4193 = vmatprep.subr.mxu0 0.0
    %4194 = vmatpush1.msra.mxu0 0.0
    %4195 = vmatprep.subr.mxu0 0.0
    %4196 = vmatpush1.msra.mxu0 0.0
    %4197 = vmatprep.subr.mxu0 0.0
    %4198 = vmatpush1.msra.mxu0 0.0
    %4199 = vmatprep.subr.mxu0 0.0
    %4200 = vmatpush1.msra.mxu0 0.0
    %4201 = vmatprep.subr.mxu0 0.0
    %4202 = vmatpush1.msra.mxu0 0.0
    %4203 = vmatprep.subr.mxu0 0.0
    %4204 = vmatpush1.msra.mxu0 0.0
    %4205 = vmatprep.subr.mxu0 0.0
    %4206 = vmatpush1.msra.mxu0 0.0
    %4207 = vmatprep.subr.mxu0 0.0
    %4208 = vmatpush1.msra.mxu0 0.0
    %4209 = vmatprep.subr.mxu0 0.0
    %4210 = vmatpush1.msra.mxu0 0.0
    %4211 = vmatprep.subr.mxu0 0.0
    %4212 = vmatpush1.msra.mxu0 0.0
    %4213 = vmatprep.subr.mxu0 0.0
    %4214 = vmatpush1.msra.mxu0 0.0
    %4215 = vmatprep.subr.mxu0 0.0
    %4216 = vmatpush1.msra.mxu0 0.0
    %4217 = vmatprep.subr.mxu0 0.0
    %4218 = vmatpush1.msra.mxu0 0.0
    %4219 = vmatprep.subr.mxu0 0.0
    %4220 = vmatpush1.msra.mxu0 0.0
    %4221 = vmatprep.subr.mxu0 0.0
    %4222 = vmatpush1.msra.mxu0 0.0
    %4223 = vmatprep.subr.mxu0 0.0
    %4224 = vmatpush1.msra.mxu0 0.0
    %4225 = vmatprep.subr.mxu0 0.0
    %4226 = vmatpush1.msra.mxu0 0.0
    %4227 = vmatprep.subr.mxu0 0.0
    %4228 = vmatpush1.msra.mxu0 0.0
    %4229 = vmatprep.mubr.f32.mxu0 0.0
    %4230 = vmatmul.mubr.f32.gmra.mrb[0].mxu0 %v4159
    %v4231 = vpop.f32.mrb[0].mxu0
    %v4232 = vadd.f32 0.0, %v4231
    %v4233 = vpop.f32.mrb[0].mxu0
    %4234 = vdwg.mxu0
    %v4235 = vsel %vm4158, %v71, 0
    %v4238 = vsel %vm4161, %v4076, 0
    %4240 = vmatprep.subr.mxu0 0.0
    %4241 = vmatpush1.msra.mxu0 %v4238
    %4242 = vmatprep.subr.mxu0 0.0
    %4243 = vmatpush1.msra.mxu0 0.0
    %4244 = vmatprep.subr.mxu0 0.0
    %4245 = vmatpush1.msra.mxu0 0.0
    %4246 = vmatprep.subr.mxu0 0.0
    %4247 = vmatpush1.msra.mxu0 0.0
    %4248 = vmatprep.subr.mxu0 0.0
    %4249 = vmatpush1.msra.mxu0 0.0
    %4250 = vmatprep.subr.mxu0 0.0
    %4251 = vmatpush1.msra.mxu0 0.0
    %4252 = vmatprep.subr.mxu0 0.0
    %4253 = vmatpush1.msra.mxu0 0.0
    %4254 = vmatprep.subr.mxu0 0.0
    %4255 = vmatpush1.msra.mxu0 0.0
    %4256 = vmatprep.subr.mxu0 0.0
    %4257 = vmatpush1.msra.mxu0 0.0
    %4258 = vmatprep.subr.mxu0 0.0
    %4259 = vmatpush1.msra.mxu0 0.0
    %4260 = vmatprep.subr.mxu0 0.0
    %4261 = vmatpush1.msra.mxu0 0.0
    %4262 = vmatprep.subr.mxu0 0.0
    %4263 = vmatpush1.msra.mxu0 0.0
    %4264 = vmatprep.subr.mxu0 0.0
    %4265 = vmatpush1.msra.mxu0 0.0
    %4266 = vmatprep.subr.mxu0 0.0
    %4267 = vmatpush1.msra.mxu0 0.0
    %4268 = vmatprep.subr.mxu0 0.0
    %4269 = vmatpush1.msra.mxu0 0.0
    %4270 = vmatprep.subr.mxu0 0.0
    %4271 = vmatpush1.msra.mxu0 0.0
    %4272 = vmatprep.subr.mxu0 0.0
    %4273 = vmatpush1.msra.mxu0 0.0
    %4274 = vmatprep.subr.mxu0 0.0
    %4275 = vmatpush1.msra.mxu0 0.0
    %4276 = vmatprep.subr.mxu0 0.0
    %4277 = vmatpush1.msra.mxu0 0.0
    %4278 = vmatprep.subr.mxu0 0.0
    %4279 = vmatpush1.msra.mxu0 0.0
    %4280 = vmatprep.subr.mxu0 0.0
    %4281 = vmatpush1.msra.mxu0 0.0
    %4282 = vmatprep.subr.mxu0 0.0
    %4283 = vmatpush1.msra.mxu0 0.0
    %4284 = vmatprep.subr.mxu0 0.0
    %4285 = vmatpush1.msra.mxu0 0.0
    %4286 = vmatprep.subr.mxu0 0.0
    %4287 = vmatpush1.msra.mxu0 0.0
    %4288 = vmatprep.subr.mxu0 0.0
    %4289 = vmatpush1.msra.mxu0 0.0
    %4290 = vmatprep.subr.mxu0 0.0
    %4291 = vmatpush1.msra.mxu0 0.0
    %4292 = vmatprep.subr.mxu0 0.0
    %4293 = vmatpush1.msra.mxu0 0.0
    %4294 = vmatprep.subr.mxu0 0.0
    %4295 = vmatpush1.msra.mxu0 0.0
    %4296 = vmatprep.subr.mxu0 0.0
    %4297 = vmatpush1.msra.mxu0 0.0
    %4298 = vmatprep.subr.mxu0 0.0
    %4299 = vmatpush1.msra.mxu0 0.0
    %4300 = vmatprep.subr.mxu0 0.0
    %4301 = vmatpush1.msra.mxu0 0.0
    %4302 = vmatprep.subr.mxu0 0.0
    %4303 = vmatpush1.msra.mxu0 0.0
    %4304 = vmatprep.mubr.f32.mxu0 0.0
    %4305 = vmatmul.mubr.f32.gmra.mrb[0].mxu0 %v4235
    %v4306 = vpop.f32.mrb[0].mxu0
    %v4307 = vadd.f32 %v4232, %v4306
    %v4308 = vpop.f32.mrb[0].mxu0
    %4309 = vdwg.mxu0
    %s4310 = scalar_lea.vmem [#allocation2], 128
    %v4311 = vld [vmem:[%s4310] sm:$0xff]
    %v4312 = vld [vmem:[%s4310 + $0x8] sm:$0xff]
    %v4313 = vld [vmem:[%s4310 + $0x10] sm:$0xff]
    %v4314 = vld [vmem:[%s4310 + $0x18] sm:$0xff]
    %v4315 = vld [vmem:[%s4310 + $0x20] sm:$0xff]
    %v4316 = vld [vmem:[%s4310 + $0x28] sm:$0xff]
    %v4317 = vld [vmem:[%s4310 + $0x30] sm:$0xff]
    %v4318 = vld [vmem:[%s4310 + $0x38] sm:$0xff]
    %4319 = vmatprep.subr.mxu0 0.0
    %4320 = vmatpush1.msra.mxu0 %v4311
    %4321 = vmatprep.subr.mxu0 0.0
    %4322 = vmatpush1.msra.mxu0 %v4312
    %4323 = vmatprep.subr.mxu0 0.0
    %4324 = vmatpush1.msra.mxu0 %v4313
    %4325 = vmatprep.subr.mxu0 0.0
    %4326 = vmatpush1.msra.mxu0 %v4314
    %4327 = vmatprep.subr.mxu0 0.0
    %4328 = vmatpush1.msra.mxu0 %v4315
    %4329 = vmatprep.subr.mxu0 0.0
    %4330 = vmatpush1.msra.mxu0 %v4316
    %4331 = vmatprep.subr.mxu0 0.0
    %4332 = vmatpush1.msra.mxu0 %v4317
    %4333 = vmatprep.subr.mxu0 0.0
    %4334 = vmatpush1.msra.mxu0 %v4318
    %4335 = vmatprep.subr.mxu0 0.0
    %4336 = vmatpush1.msra.mxu0 0.0
    %4337 = vmatprep.subr.mxu0 0.0
    %4338 = vmatpush1.msra.mxu0 0.0
    %4339 = vmatprep.subr.mxu0 0.0
    %4340 = vmatpush1.msra.mxu0 0.0
    %4341 = vmatprep.subr.mxu0 0.0
    %4342 = vmatpush1.msra.mxu0 0.0
    %4343 = vmatprep.subr.mxu0 0.0
    %4344 = vmatpush1.msra.mxu0 0.0
    %4345 = vmatprep.subr.mxu0 0.0
    %4346 = vmatpush1.msra.mxu0 0.0
    %4347 = vmatprep.subr.mxu0 0.0
    %4348 = vmatpush1.msra.mxu0 0.0
    %4349 = vmatprep.subr.mxu0 0.0
    %4350 = vmatpush1.msra.mxu0 0.0
    %4351 = vmatprep.subr.mxu0 0.0
    %4352 = vmatpush1.msra.mxu0 0.0
    %4353 = vmatprep.subr.mxu0 0.0
    %4354 = vmatpush1.msra.mxu0 0.0
    %4355 = vmatprep.subr.mxu0 0.0
    %4356 = vmatpush1.msra.mxu0 0.0
    %4357 = vmatprep.subr.mxu0 0.0
    %4358 = vmatpush1.msra.mxu0 0.0
    %4359 = vmatprep.subr.mxu0 0.0
    %4360 = vmatpush1.msra.mxu0 0.0
    %4361 = vmatprep.subr.mxu0 0.0
    %4362 = vmatpush1.msra.mxu0 0.0
    %4363 = vmatprep.subr.mxu0 0.0
    %4364 = vmatpush1.msra.mxu0 0.0
    %4365 = vmatprep.subr.mxu0 0.0
    %4366 = vmatpush1.msra.mxu0 0.0
    %4367 = vmatprep.subr.mxu0 0.0
    %4368 = vmatpush1.msra.mxu0 0.0
    %4369 = vmatprep.subr.mxu0 0.0
    %4370 = vmatpush1.msra.mxu0 0.0
    %4371 = vmatprep.subr.mxu0 0.0
    %4372 = vmatpush1.msra.mxu0 0.0
    %4373 = vmatprep.subr.mxu0 0.0
    %4374 = vmatpush1.msra.mxu0 0.0
    %4375 = vmatprep.subr.mxu0 0.0
    %4376 = vmatpush1.msra.mxu0 0.0
    %4377 = vmatprep.subr.mxu0 0.0
    %4378 = vmatpush1.msra.mxu0 0.0
    %4379 = vmatprep.subr.mxu0 0.0
    %4380 = vmatpush1.msra.mxu0 0.0
    %4381 = vmatprep.subr.mxu0 0.0
    %4382 = vmatpush1.msra.mxu0 0.0
    %4383 = vmatprep.mubr.f32.mxu0 0.0
    %4384 = vmatmul.mubr.f32.gmra.mrb[0].mxu0 %v4007
    %v4385 = vpop.f32.mrb[0].mxu0
    %v4386 = vadd.f32 0.0, %v4385
    %v4387 = vpop.f32.mrb[0].mxu0
    %4388 = vdwg.mxu0
    %v4389 = vsel %vm4158, %v83, 0
    %v4392 = vsel %vm4161, %v4386, 0
    %4394 = vmatprep.subr.mxu0 0.0
    %4395 = vmatpush1.msra.mxu0 %v4392
    %4396 = vmatprep.subr.mxu0 0.0
    %4397 = vmatpush1.msra.mxu0 0.0
    %4398 = vmatprep.subr.mxu0 0.0
    %4399 = vmatpush1.msra.mxu0 0.0
    %4400 = vmatprep.subr.mxu0 0.0
    %4401 = vmatpush1.msra.mxu0 0.0
    %4402 = vmatprep.subr.mxu0 0.0
    %4403 = vmatpush1.msra.mxu0 0.0
    %4404 = vmatprep.subr.mxu0 0.0
    %4405 = vmatpush1.msra.mxu0 0.0
    %4406 = vmatprep.subr.mxu0 0.0
    %4407 = vmatpush1.msra.mxu0 0.0
    %4408 = vmatprep.subr.mxu0 0.0
    %4409 = vmatpush1.msra.mxu0 0.0
    %4410 = vmatprep.subr.mxu0 0.0
    %4411 = vmatpush1.msra.mxu0 0.0
    %4412 = vmatprep.subr.mxu0 0.0
    %4413 = vmatpush1.msra.mxu0 0.0
    %4414 = vmatprep.subr.mxu0 0.0
    %4415 = vmatpush1.msra.mxu0 0.0
    %4416 = vmatprep.subr.mxu0 0.0
    %4417 = vmatpush1.msra.mxu0 0.0
    %4418 = vmatprep.subr.mxu0 0.0
    %4419 = vmatpush1.msra.mxu0 0.0
    %4420 = vmatprep.subr.mxu0 0.0
    %4421 = vmatpush1.msra.mxu0 0.0
    %4422 = vmatprep.subr.mxu0 0.0
    %4423 = vmatpush1.msra.mxu0 0.0
    %4424 = vmatprep.subr.mxu0 0.0
    %4425 = vmatpush1.msra.mxu0 0.0
    %4426 = vmatprep.subr.mxu0 0.0
    %4427 = vmatpush1.msra.mxu0 0.0
    %4428 = vmatprep.subr.mxu0 0.0
    %4429 = vmatpush1.msra.mxu0 0.0
    %4430 = vmatprep.subr.mxu0 0.0
    %4431 = vmatpush1.msra.mxu0 0.0
    %4432 = vmatprep.subr.mxu0 0.0
    %4433 = vmatpush1.msra.mxu0 0.0
    %4434 = vmatprep.subr.mxu0 0.0
    %4435 = vmatpush1.msra.mxu0 0.0
    %4436 = vmatprep.subr.mxu0 0.0
    %4437 = vmatpush1.msra.mxu0 0.0
    %4438 = vmatprep.subr.mxu0 0.0
    %4439 = vmatpush1.msra.mxu0 0.0
    %4440 = vmatprep.subr.mxu0 0.0
    %4441 = vmatpush1.msra.mxu0 0.0
    %4442 = vmatprep.subr.mxu0 0.0
    %4443 = vmatpush1.msra.mxu0 0.0
    %4444 = vmatprep.subr.mxu0 0.0
    %4445 = vmatpush1.msra.mxu0 0.0
    %4446 = vmatprep.subr.mxu0 0.0
    %4447 = vmatpush1.msra.mxu0 0.0
    %4448 = vmatprep.subr.mxu0 0.0
    %4449 = vmatpush1.msra.mxu0 0.0
    %4450 = vmatprep.subr.mxu0 0.0
    %4451 = vmatpush1.msra.mxu0 0.0
    %4452 = vmatprep.subr.mxu0 0.0
    %4453 = vmatpush1.msra.mxu0 0.0
    %4454 = vmatprep.subr.mxu0 0.0
    %4455 = vmatpush1.msra.mxu0 0.0
    %4456 = vmatprep.subr.mxu0 0.0
    %4457 = vmatpush1.msra.mxu0 0.0
    %4458 = vmatprep.mubr.f32.mxu0 0.0
    %4459 = vmatmul.mubr.f32.gmra.mrb[0].mxu0 %v4389
    %v4460 = vpop.f32.mrb[0].mxu0
    %v4461 = vadd.f32 0.0, %v4460
    %v4462 = vpop.f32.mrb[0].mxu0
    %4463 = vdwg.mxu0
    %v4464 = vadd.f32 %v4307, %v4461
    %v4466 = vsel %vm93, %v3995, 0
    %4468 = vmatprep.subr.mxu0 0.0
    %4469 = vmatpush1.msra.mxu0 %v3998
    %4470 = vmatprep.subr.mxu0 0.0
    %4471 = vmatpush1.msra.mxu0 %v3999
    %4472 = vmatprep.subr.mxu0 0.0
    %4473 = vmatpush1.msra.mxu0 %v4000
    %4474 = vmatprep.subr.mxu0 0.0
    %4475 = vmatpush1.msra.mxu0 %v4001
    %4476 = vmatprep.subr.mxu0 0.0
    %4477 = vmatpush1.msra.mxu0 %v4002
    %4478 = vmatprep.subr.mxu0 0.0
    %4479 = vmatpush1.msra.mxu0 %v4003
    %4480 = vmatprep.subr.mxu0 0.0
    %4481 = vmatpush1.msra.mxu0 %v4004
    %4482 = vmatprep.subr.mxu0 0.0
    %4483 = vmatpush1.msra.mxu0 %v4005
    %4484 = vmatprep.subr.mxu0 0.0
    %4485 = vmatpush1.msra.mxu0 0.0
    %4486 = vmatprep.subr.mxu0 0.0
    %4487 = vmatpush1.msra.mxu0 0.0
    %4488 = vmatprep.subr.mxu0 0.0
    %4489 = vmatpush1.msra.mxu0 0.0
    %4490 = vmatprep.subr.mxu0 0.0
    %4491 = vmatpush1.msra.mxu0 0.0
    %4492 = vmatprep.subr.mxu0 0.0
    %4493 = vmatpush1.msra.mxu0 0.0
    %4494 = vmatprep.subr.mxu0 0.0
    %4495 = vmatpush1.msra.mxu0 0.0
    %4496 = vmatprep.subr.mxu0 0.0
    %4497 = vmatpush1.msra.mxu0 0.0
    %4498 = vmatprep.subr.mxu0 0.0
    %4499 = vmatpush1.msra.mxu0 0.0
    %4500 = vmatprep.subr.mxu0 0.0
    %4501 = vmatpush1.msra.mxu0 0.0
    %4502 = vmatprep.subr.mxu0 0.0
    %4503 = vmatpush1.msra.mxu0 0.0
    %4504 = vmatprep.subr.mxu0 0.0
    %4505 = vmatpush1.msra.mxu0 0.0
    %4506 = vmatprep.subr.mxu0 0.0
    %4507 = vmatpush1.msra.mxu0 0.0
    %4508 = vmatprep.subr.mxu0 0.0
    %4509 = vmatpush1.msra.mxu0 0.0
    %4510 = vmatprep.subr.mxu0 0.0
    %4511 = vmatpush1.msra.mxu0 0.0
    %4512 = vmatprep.subr.mxu0 0.0
    %4513 = vmatpush1.msra.mxu0 0.0
    %4514 = vmatprep.subr.mxu0 0.0
    %4515 = vmatpush1.msra.mxu0 0.0
    %4516 = vmatprep.subr.mxu0 0.0
    %4517 = vmatpush1.msra.mxu0 0.0
    %4518 = vmatprep.subr.mxu0 0.0
    %4519 = vmatpush1.msra.mxu0 0.0
    %4520 = vmatprep.subr.mxu0 0.0
    %4521 = vmatpush1.msra.mxu0 0.0
    %4522 = vmatprep.subr.mxu0 0.0
    %4523 = vmatpush1.msra.mxu0 0.0
    %4524 = vmatprep.subr.mxu0 0.0
    %4525 = vmatpush1.msra.mxu0 0.0
    %4526 = vmatprep.subr.mxu0 0.0
    %4527 = vmatpush1.msra.mxu0 0.0
    %4528 = vmatprep.subr.mxu0 0.0
    %4529 = vmatpush1.msra.mxu0 0.0
    %4530 = vmatprep.subr.mxu0 0.0
    %4531 = vmatpush1.msra.mxu0 0.0
    %4532 = vmatprep.mubr.f32.mxu0 0.0
    %4533 = vmatmul.mubr.f32.gmra.mrb[0].mxu0 %v4466
    %v4534 = vpop.f32.mrb[0].mxu0
    %v4535 = vadd.f32 0.0, %v4534
    %v4536 = vpop.f32.mrb[0].mxu0
    %4537 = vdwg.mxu0
    %4538 = vmatprep.subr.mxu0 0.0
    %4539 = vmatpush1.msra.mxu0 %v4080
    %4540 = vmatprep.subr.mxu0 0.0
    %4541 = vmatpush1.msra.mxu0 %v4081
    %4542 = vmatprep.subr.mxu0 0.0
    %4543 = vmatpush1.msra.mxu0 %v4082
    %4544 = vmatprep.subr.mxu0 0.0
    %4545 = vmatpush1.msra.mxu0 %v4083
    %4546 = vmatprep.subr.mxu0 0.0
    %4547 = vmatpush1.msra.mxu0 %v4084
    %4548 = vmatprep.subr.mxu0 0.0
    %4549 = vmatpush1.msra.mxu0 %v4085
    %4550 = vmatprep.subr.mxu0 0.0
    %4551 = vmatpush1.msra.mxu0 %v4086
    %4552 = vmatprep.subr.mxu0 0.0
    %4553 = vmatpush1.msra.mxu0 %v4087
    %4554 = vmatprep.subr.mxu0 0.0
    %4555 = vmatpush1.msra.mxu0 0.0
    %4556 = vmatprep.subr.mxu0 0.0
    %4557 = vmatpush1.msra.mxu0 0.0
    %4558 = vmatprep.subr.mxu0 0.0
    %4559 = vmatpush1.msra.mxu0 0.0
    %4560 = vmatprep.subr.mxu0 0.0
    %4561 = vmatpush1.msra.mxu0 0.0
    %4562 = vmatprep.subr.mxu0 0.0
    %4563 = vmatpush1.msra.mxu0 0.0
    %4564 = vmatprep.subr.mxu0 0.0
    %4565 = vmatpush1.msra.mxu0 0.0
    %4566 = vmatprep.subr.mxu0 0.0
    %4567 = vmatpush1.msra.mxu0 0.0
    %4568 = vmatprep.subr.mxu0 0.0
    %4569 = vmatpush1.msra.mxu0 0.0
    %4570 = vmatprep.subr.mxu0 0.0
    %4571 = vmatpush1.msra.mxu0 0.0
    %4572 = vmatprep.subr.mxu0 0.0
    %4573 = vmatpush1.msra.mxu0 0.0
    %4574 = vmatprep.subr.mxu0 0.0
    %4575 = vmatpush1.msra.mxu0 0.0
    %4576 = vmatprep.subr.mxu0 0.0
    %4577 = vmatpush1.msra.mxu0 0.0
    %4578 = vmatprep.subr.mxu0 0.0
    %4579 = vmatpush1.msra.mxu0 0.0
    %4580 = vmatprep.subr.mxu0 0.0
    %4581 = vmatpush1.msra.mxu0 0.0
    %4582 = vmatprep.subr.mxu0 0.0
    %4583 = vmatpush1.msra.mxu0 0.0
    %4584 = vmatprep.subr.mxu0 0.0
    %4585 = vmatpush1.msra.mxu0 0.0
    %4586 = vmatprep.subr.mxu0 0.0
    %4587 = vmatpush1.msra.mxu0 0.0
    %4588 = vmatprep.subr.mxu0 0.0
    %4589 = vmatpush1.msra.mxu0 0.0
    %4590 = vmatprep.subr.mxu0 0.0
    %4591 = vmatpush1.msra.mxu0 0.0
    %4592 = vmatprep.subr.mxu0 0.0
    %4593 = vmatpush1.msra.mxu0 0.0
    %4594 = vmatprep.subr.mxu0 0.0
    %4595 = vmatpush1.msra.mxu0 0.0
    %4596 = vmatprep.subr.mxu0 0.0
    %4597 = vmatpush1.msra.mxu0 0.0
    %4598 = vmatprep.subr.mxu0 0.0
    %4599 = vmatpush1.msra.mxu0 0.0
    %4600 = vmatprep.subr.mxu0 0.0
    %4601 = vmatpush1.msra.mxu0 0.0
    %4602 = vmatprep.mubr.f32.mxu0 0.0
    %4603 = vmatmul.mubr.f32.gmra.mrb[0].mxu0 %v4466
    %v4604 = vpop.f32.mrb[0].mxu0
    %v4605 = vadd.f32 0.0, %v4604
    %v4606 = vpop.f32.mrb[0].mxu0
    %4607 = vdwg.mxu0
    %v4609 = vsel %vm4161, %v4605, 0
    %4611 = vmatprep.subr.mxu0 0.0
    %4612 = vmatpush1.msra.mxu0 %v4609
    %4613 = vmatprep.subr.mxu0 0.0
    %4614 = vmatpush1.msra.mxu0 0.0
    %4615 = vmatprep.subr.mxu0 0.0
    %4616 = vmatpush1.msra.mxu0 0.0
    %4617 = vmatprep.subr.mxu0 0.0
    %4618 = vmatpush1.msra.mxu0 0.0
    %4619 = vmatprep.subr.mxu0 0.0
    %4620 = vmatpush1.msra.mxu0 0.0
    %4621 = vmatprep.subr.mxu0 0.0
    %4622 = vmatpush1.msra.mxu0 0.0
    %4623 = vmatprep.subr.mxu0 0.0
    %4624 = vmatpush1.msra.mxu0 0.0
    %4625 = vmatprep.subr.mxu0 0.0
    %4626 = vmatpush1.msra.mxu0 0.0
    %4627 = vmatprep.subr.mxu0 0.0
    %4628 = vmatpush1.msra.mxu0 0.0
    %4629 = vmatprep.subr.mxu0 0.0
    %4630 = vmatpush1.msra.mxu0 0.0
    %4631 = vmatprep.subr.mxu0 0.0
    %4632 = vmatpush1.msra.mxu0 0.0
    %4633 = vmatprep.subr.mxu0 0.0
    %4634 = vmatpush1.msra.mxu0 0.0
    %4635 = vmatprep.subr.mxu0 0.0
    %4636 = vmatpush1.msra.mxu0 0.0
    %4637 = vmatprep.subr.mxu0 0.0
    %4638 = vmatpush1.msra.mxu0 0.0
    %4639 = vmatprep.subr.mxu0 0.0
    %4640 = vmatpush1.msra.mxu0 0.0
    %4641 = vmatprep.subr.mxu0 0.0
    %4642 = vmatpush1.msra.mxu0 0.0
    %4643 = vmatprep.subr.mxu0 0.0
    %4644 = vmatpush1.msra.mxu0 0.0
    %4645 = vmatprep.subr.mxu0 0.0
    %4646 = vmatpush1.msra.mxu0 0.0
    %4647 = vmatprep.subr.mxu0 0.0
    %4648 = vmatpush1.msra.mxu0 0.0
    %4649 = vmatprep.subr.mxu0 0.0
    %4650 = vmatpush1.msra.mxu0 0.0
    %4651 = vmatprep.subr.mxu0 0.0
    %4652 = vmatpush1.msra.mxu0 0.0
    %4653 = vmatprep.subr.mxu0 0.0
    %4654 = vmatpush1.msra.mxu0 0.0
    %4655 = vmatprep.subr.mxu0 0.0
    %4656 = vmatpush1.msra.mxu0 0.0
    %4657 = vmatprep.subr.mxu0 0.0
    %4658 = vmatpush1.msra.mxu0 0.0
    %4659 = vmatprep.subr.mxu0 0.0
    %4660 = vmatpush1.msra.mxu0 0.0
    %4661 = vmatprep.subr.mxu0 0.0
    %4662 = vmatpush1.msra.mxu0 0.0
    %4663 = vmatprep.subr.mxu0 0.0
    %4664 = vmatpush1.msra.mxu0 0.0
    %4665 = vmatprep.subr.mxu0 0.0
    %4666 = vmatpush1.msra.mxu0 0.0
    %4667 = vmatprep.subr.mxu0 0.0
    %4668 = vmatpush1.msra.mxu0 0.0
    %4669 = vmatprep.subr.mxu0 0.0
    %4670 = vmatpush1.msra.mxu0 0.0
    %4671 = vmatprep.subr.mxu0 0.0
    %4672 = vmatpush1.msra.mxu0 0.0
    %4673 = vmatprep.subr.mxu0 0.0
    %4674 = vmatpush1.msra.mxu0 0.0
    %4675 = vmatprep.mubr.f32.mxu0 0.0
    %4676 = vmatmul.mubr.f32.gmra.mrb[0].mxu0 %v4159
    %v4677 = vpop.f32.mrb[0].mxu0
    %v4678 = vadd.f32 0.0, %v4677
    %v4679 = vpop.f32.mrb[0].mxu0
    %4680 = vdwg.mxu0
    %v4682 = vsel %vm4161, %v4535, 0
    %4684 = vmatprep.subr.mxu0 0.0
    %4685 = vmatpush1.msra.mxu0 %v4682
    %4686 = vmatprep.subr.mxu0 0.0
    %4687 = vmatpush1.msra.mxu0 0.0
    %4688 = vmatprep.subr.mxu0 0.0
    %4689 = vmatpush1.msra.mxu0 0.0
    %4690 = vmatprep.subr.mxu0 0.0
    %4691 = vmatpush1.msra.mxu0 0.0
    %4692 = vmatprep.subr.mxu0 0.0
    %4693 = vmatpush1.msra.mxu0 0.0
    %4694 = vmatprep.subr.mxu0 0.0
    %4695 = vmatpush1.msra.mxu0 0.0
    %4696 = vmatprep.subr.mxu0 0.0
    %4697 = vmatpush1.msra.mxu0 0.0
    %4698 = vmatprep.subr.mxu0 0.0
    %4699 = vmatpush1.msra.mxu0 0.0
    %4700 = vmatprep.subr.mxu0 0.0
    %4701 = vmatpush1.msra.mxu0 0.0
    %4702 = vmatprep.subr.mxu0 0.0
    %4703 = vmatpush1.msra.mxu0 0.0
    %4704 = vmatprep.subr.mxu0 0.0
    %4705 = vmatpush1.msra.mxu0 0.0
    %4706 = vmatprep.subr.mxu0 0.0
    %4707 = vmatpush1.msra.mxu0 0.0
    %4708 = vmatprep.subr.mxu0 0.0
    %4709 = vmatpush1.msra.mxu0 0.0
    %4710 = vmatprep.subr.mxu0 0.0
    %4711 = vmatpush1.msra.mxu0 0.0
    %4712 = vmatprep.subr.mxu0 0.0
    %4713 = vmatpush1.msra.mxu0 0.0
    %4714 = vmatprep.subr.mxu0 0.0
    %4715 = vmatpush1.msra.mxu0 0.0
    %4716 = vmatprep.subr.mxu0 0.0
    %4717 = vmatpush1.msra.mxu0 0.0
    %4718 = vmatprep.subr.mxu0 0.0
    %4719 = vmatpush1.msra.mxu0 0.0
    %4720 = vmatprep.subr.mxu0 0.0
    %4721 = vmatpush1.msra.mxu0 0.0
    %4722 = vmatprep.subr.mxu0 0.0
    %4723 = vmatpush1.msra.mxu0 0.0
    %4724 = vmatprep.subr.mxu0 0.0
    %4725 = vmatpush1.msra.mxu0 0.0
    %4726 = vmatprep.subr.mxu0 0.0
    %4727 = vmatpush1.msra.mxu0 0.0
    %4728 = vmatprep.subr.mxu0 0.0
    %4729 = vmatpush1.msra.mxu0 0.0
    %4730 = vmatprep.subr.mxu0 0.0
    %4731 = vmatpush1.msra.mxu0 0.0
    %4732 = vmatprep.subr.mxu0 0.0
    %4733 = vmatpush1.msra.mxu0 0.0
    %4734 = vmatprep.subr.mxu0 0.0
    %4735 = vmatpush1.msra.mxu0 0.0
    %4736 = vmatprep.subr.mxu0 0.0
    %4737 = vmatpush1.msra.mxu0 0.0
    %4738 = vmatprep.subr.mxu0 0.0
    %4739 = vmatpush1.msra.mxu0 0.0
    %4740 = vmatprep.subr.mxu0 0.0
    %4741 = vmatpush1.msra.mxu0 0.0
    %4742 = vmatprep.subr.mxu0 0.0
    %4743 = vmatpush1.msra.mxu0 0.0
    %4744 = vmatprep.subr.mxu0 0.0
    %4745 = vmatpush1.msra.mxu0 0.0
    %4746 = vmatprep.subr.mxu0 0.0
    %4747 = vmatpush1.msra.mxu0 0.0
    %4748 = vmatprep.mubr.f32.mxu0 0.0
    %4749 = vmatmul.mubr.f32.gmra.mrb[0].mxu0 %v4235
    %v4750 = vpop.f32.mrb[0].mxu0
    %v4751 = vadd.f32 %v4678, %v4750
    %v4752 = vpop.f32.mrb[0].mxu0
    %4753 = vdwg.mxu0
    %4754 = vmatprep.subr.mxu0 0.0
    %4755 = vmatpush1.msra.mxu0 %v4311
    %4756 = vmatprep.subr.mxu0 0.0
    %4757 = vmatpush1.msra.mxu0 %v4312
    %4758 = vmatprep.subr.mxu0 0.0
    %4759 = vmatpush1.msra.mxu0 %v4313
    %4760 = vmatprep.subr.mxu0 0.0
    %4761 = vmatpush1.msra.mxu0 %v4314
    %4762 = vmatprep.subr.mxu0 0.0
    %4763 = vmatpush1.msra.mxu0 %v4315
    %4764 = vmatprep.subr.mxu0 0.0
    %4765 = vmatpush1.msra.mxu0 %v4316
    %4766 = vmatprep.subr.mxu0 0.0
    %4767 = vmatpush1.msra.mxu0 %v4317
    %4768 = vmatprep.subr.mxu0 0.0
    %4769 = vmatpush1.msra.mxu0 %v4318
    %4770 = vmatprep.subr.mxu0 0.0
    %4771 = vmatpush1.msra.mxu0 0.0
    %4772 = vmatprep.subr.mxu0 0.0
    %4773 = vmatpush1.msra.mxu0 0.0
    %4774 = vmatprep.subr.mxu0 0.0
    %4775 = vmatpush1.msra.mxu0 0.0
    %4776 = vmatprep.subr.mxu0 0.0
    %4777 = vmatpush1.msra.mxu0 0.0
    %4778 = vmatprep.subr.mxu0 0.0
    %4779 = vmatpush1.msra.mxu0 0.0
    %4780 = vmatprep.subr.mxu0 0.0
    %4781 = vmatpush1.msra.mxu0 0.0
    %4782 = vmatprep.subr.mxu0 0.0
    %4783 = vmatpush1.msra.mxu0 0.0
    %4784 = vmatprep.subr.mxu0 0.0
    %4785 = vmatpush1.msra.mxu0 0.0
    %4786 = vmatprep.subr.mxu0 0.0
    %4787 = vmatpush1.msra.mxu0 0.0
    %4788 = vmatprep.subr.mxu0 0.0
    %4789 = vmatpush1.msra.mxu0 0.0
    %4790 = vmatprep.subr.mxu0 0.0
    %4791 = vmatpush1.msra.mxu0 0.0
    %4792 = vmatprep.subr.mxu0 0.0
    %4793 = vmatpush1.msra.mxu0 0.0
    %4794 = vmatprep.subr.mxu0 0.0
    %4795 = vmatpush1.msra.mxu0 0.0
    %4796 = vmatprep.subr.mxu0 0.0
    %4797 = vmatpush1.msra.mxu0 0.0
    %4798 = vmatprep.subr.mxu0 0.0
    %4799 = vmatpush1.msra.mxu0 0.0
    %4800 = vmatprep.subr.mxu0 0.0
    %4801 = vmatpush1.msra.mxu0 0.0
    %4802 = vmatprep.subr.mxu0 0.0
    %4803 = vmatpush1.msra.mxu0 0.0
    %4804 = vmatprep.subr.mxu0 0.0
    %4805 = vmatpush1.msra.mxu0 0.0
    %4806 = vmatprep.subr.mxu0 0.0
    %4807 = vmatpush1.msra.mxu0 0.0
    %4808 = vmatprep.subr.mxu0 0.0
    %4809 = vmatpush1.msra.mxu0 0.0
    %4810 = vmatprep.subr.mxu0 0.0
    %4811 = vmatpush1.msra.mxu0 0.0
    %4812 = vmatprep.subr.mxu0 0.0
    %4813 = vmatpush1.msra.mxu0 0.0
    %4814 = vmatprep.subr.mxu0 0.0
    %4815 = vmatpush1.msra.mxu0 0.0
    %4816 = vmatprep.subr.mxu0 0.0
    %4817 = vmatpush1.msra.mxu0 0.0
    %4818 = vmatprep.mubr.f32.mxu0 0.0
    %4819 = vmatmul.mubr.f32.gmra.mrb[0].mxu0 %v4466
    %v4820 = vpop.f32.mrb[0].mxu0
    %v4821 = vadd.f32 0.0, %v4820
    %v4822 = vpop.f32.mrb[0].mxu0
    %4823 = vdwg.mxu0
    %v4825 = vsel %vm4161, %v4821, 0
    %4827 = vmatprep.subr.mxu0 0.0
    %4828 = vmatpush1.msra.mxu0 %v4825
    %4829 = vmatprep.subr.mxu0 0.0
    %4830 = vmatpush1.msra.mxu0 0.0
    %4831 = vmatprep.subr.mxu0 0.0
    %4832 = vmatpush1.msra.mxu0 0.0
    %4833 = vmatprep.subr.mxu0 0.0
    %4834 = vmatpush1.msra.mxu0 0.0
    %4835 = vmatprep.subr.mxu0 0.0
    %4836 = vmatpush1.msra.mxu0 0.0
    %4837 = vmatprep.subr.mxu0 0.0
    %4838 = vmatpush1.msra.mxu0 0.0
    %4839 = vmatprep.subr.mxu0 0.0
    %4840 = vmatpush1.msra.mxu0 0.0
    %4841 = vmatprep.subr.mxu0 0.0
    %4842 = vmatpush1.msra.mxu0 0.0
    %4843 = vmatprep.subr.mxu0 0.0
    %4844 = vmatpush1.msra.mxu0 0.0
    %4845 = vmatprep.subr.mxu0 0.0
    %4846 = vmatpush1.msra.mxu0 0.0
    %4847 = vmatprep.subr.mxu0 0.0
    %4848 = vmatpush1.msra.mxu0 0.0
    %4849 = vmatprep.subr.mxu0 0.0
    %4850 = vmatpush1.msra.mxu0 0.0
    %4851 = vmatprep.subr.mxu0 0.0
    %4852 = vmatpush1.msra.mxu0 0.0
    %4853 = vmatprep.subr.mxu0 0.0
    %4854 = vmatpush1.msra.mxu0 0.0
    %4855 = vmatprep.subr.mxu0 0.0
    %4856 = vmatpush1.msra.mxu0 0.0
    %4857 = vmatprep.subr.mxu0 0.0
    %4858 = vmatpush1.msra.mxu0 0.0
    %4859 = vmatprep.subr.mxu0 0.0
    %4860 = vmatpush1.msra.mxu0 0.0
    %4861 = vmatprep.subr.mxu0 0.0
    %4862 = vmatpush1.msra.mxu0 0.0
    %4863 = vmatprep.subr.mxu0 0.0
    %4864 = vmatpush1.msra.mxu0 0.0
    %4865 = vmatprep.subr.mxu0 0.0
    %4866 = vmatpush1.msra.mxu0 0.0
    %4867 = vmatprep.subr.mxu0 0.0
    %4868 = vmatpush1.msra.mxu0 0.0
    %4869 = vmatprep.subr.mxu0 0.0
    %4870 = vmatpush1.msra.mxu0 0.0
    %4871 = vmatprep.subr.mxu0 0.0
    %4872 = vmatpush1.msra.mxu0 0.0
    %4873 = vmatprep.subr.mxu0 0.0
    %4874 = vmatpush1.msra.mxu0 0.0
    %4875 = vmatprep.subr.mxu0 0.0
    %4876 = vmatpush1.msra.mxu0 0.0
    %4877 = vmatprep.subr.mxu0 0.0
    %4878 = vmatpush1.msra.mxu0 0.0
    %4879 = vmatprep.subr.mxu0 0.0
    %4880 = vmatpush1.msra.mxu0 0.0
    %4881 = vmatprep.subr.mxu0 0.0
    %4882 = vmatpush1.msra.mxu0 0.0
    %4883 = vmatprep.subr.mxu0 0.0
    %4884 = vmatpush1.msra.mxu0 0.0
    %4885 = vmatprep.subr.mxu0 0.0
    %4886 = vmatpush1.msra.mxu0 0.0
    %4887 = vmatprep.subr.mxu0 0.0
    %4888 = vmatpush1.msra.mxu0 0.0
    %4889 = vmatprep.subr.mxu0 0.0
    %4890 = vmatpush1.msra.mxu0 0.0
    %4891 = vmatprep.mubr.f32.mxu0 0.0
    %4892 = vmatmul.mubr.f32.gmra.mrb[0].mxu0 %v4389
    %v4893 = vpop.f32.mrb[0].mxu0
    %v4894 = vadd.f32 0.0, %v4893
    %v4895 = vpop.f32.mrb[0].mxu0
    %4896 = vdwg.mxu0
    %v4897 = vadd.f32 %v4751, %v4894
    %v4898 = vsel %vm4161, %v4464, 0.0
    %v4899 = vrot.slane %v4898, 4
    %v4900 = vadd.f32 %v4898, %v4899
    %v4901 = vrot.slane %v4900, 2
    %v4902 = vadd.f32 %v4900, %v4901
    %v4903 = vrot.slane %v4902, 1
    %v4904 = vadd.f32 %v4902, %v4903
    %v4905 = vadd.f32 %v4904, 0.0
    %v4906 = vmul.f32 %v4464, %v4464
    %v4907 = vsel %vm4161, %v4906, 0.0
    %v4908 = vrot.slane %v4907, 4
    %v4909 = vadd.f32 %v4907, %v4908
    %v4910 = vrot.slane %v4909, 2
    %v4911 = vadd.f32 %v4909, %v4910
    %v4912 = vrot.slane %v4911, 1
    %v4913 = vadd.f32 %v4911, %v4912
    %v4914 = vadd.f32 %v4913, 0.0
    %v4915 = vsel %vm4161, %v4897, 0.0
    %v4916 = vrot.slane %v4915, 4
    %v4917 = vadd.f32 %v4915, %v4916
    %v4918 = vrot.slane %v4917, 2
    %v4919 = vadd.f32 %v4917, %v4918
    %v4920 = vrot.slane %v4919, 1
    %v4921 = vadd.f32 %v4919, %v4920
    %v4922 = vadd.f32 %v4905, %v4921
    %v4923 = vmul.f32 %v4897, %v4897
    %v4924 = vsel %vm4161, %v4923, 0.0
    %v4925 = vrot.slane %v4924, 4
    %v4926 = vadd.f32 %v4924, %v4925
    %v4927 = vrot.slane %v4926, 2
    %v4928 = vadd.f32 %v4926, %v4927
    %v4929 = vrot.slane %v4928, 1
    %v4930 = vadd.f32 %v4928, %v4929
    %v4931 = vadd.f32 %v4914, %v4930
    %v4932 = vmul.u32 %v66, 4
    %vm4933 = vcmp.ge.s32.totalorder %v63, %v4932
    %vm4934 = vcmp.ge.s32.totalorder %v64, %v4932
    %vm4935 = vcmp.ge.s32.totalorder %v1083, %v4932
    %vm4936 = vcmp.ge.s32.totalorder %v1084, %v4932
    %vm4937 = vcmp.ge.s32.totalorder %v1085, %v4932
    %vm4938 = vcmp.ge.s32.totalorder %v1086, %v4932
    %vm4939 = vcmp.ge.s32.totalorder %v1087, %v4932
    %vm4940 = vcmp.ge.s32.totalorder %v1088, %v4932
    %vm4941 = vcmp.ge.s32.totalorder %v1089, %v4932
    %vm4942 = vcmp.ge.s32.totalorder %v1090, %v4932
    %vm4943 = vcmp.ge.s32.totalorder %v1091, %v4932
    %vm4944 = vcmp.ge.s32.totalorder %v1092, %v4932
    %vm4945 = vcmp.ge.s32.totalorder %v1093, %v4932
    %vm4946 = vcmp.ge.s32.totalorder %v1094, %v4932
    %vm4947 = vcmp.ge.s32.totalorder %v1095, %v4932
    %vm4948 = vcmp.ge.s32.totalorder %v1096, %v4932
    %v4949 = vadd.s32 %v4932, 4
    %vm4950 = vcmp.lt.s32.totalorder %v63, %v4949
    %vm4951 = vcmp.lt.s32.totalorder %v64, %v4949
    %vm4952 = vcmp.lt.s32.totalorder %v1083, %v4949
    %vm4953 = vcmp.lt.s32.totalorder %v1084, %v4949
    %vm4954 = vcmp.lt.s32.totalorder %v1085, %v4949
    %vm4955 = vcmp.lt.s32.totalorder %v1086, %v4949
    %vm4956 = vcmp.lt.s32.totalorder %v1087, %v4949
    %vm4957 = vcmp.lt.s32.totalorder %v1088, %v4949
    %vm4958 = vcmp.lt.s32.totalorder %v1089, %v4949
    %vm4959 = vcmp.lt.s32.totalorder %v1090, %v4949
    %vm4960 = vcmp.lt.s32.totalorder %v1091, %v4949
    %vm4961 = vcmp.lt.s32.totalorder %v1092, %v4949
    %vm4962 = vcmp.lt.s32.totalorder %v1093, %v4949
    %vm4963 = vcmp.lt.s32.totalorder %v1094, %v4949
    %vm4964 = vcmp.lt.s32.totalorder %v1095, %v4949
    %vm4965 = vcmp.lt.s32.totalorder %v1096, %v4949
    %vm4966 = vmand %vm4933, %vm4950
    %vm4967 = vmand %vm4934, %vm4951
    %vm4968 = vmand %vm4935, %vm4952
    %vm4969 = vmand %vm4936, %vm4953
    %vm4970 = vmand %vm4937, %vm4954
    %vm4971 = vmand %vm4938, %vm4955
    %vm4972 = vmand %vm4939, %vm4956
    %vm4973 = vmand %vm4940, %vm4957
    %vm4974 = vmand %vm4941, %vm4958
    %vm4975 = vmand %vm4942, %vm4959
    %vm4976 = vmand %vm4943, %vm4960
    %vm4977 = vmand %vm4944, %vm4961
    %vm4978 = vmand %vm4945, %vm4962
    %vm4979 = vmand %vm4946, %vm4963
    %vm4980 = vmand %vm4947, %vm4964
    %vm4981 = vmand %vm4948, %vm4965
    %v4982 = vsel %vm4966, 1.0, 0.0
    %v4983 = vsel %vm4967, 1.0, 0.0
    %v4984 = vsel %vm4968, 1.0, 0.0
    %v4985 = vsel %vm4969, 1.0, 0.0
    %v4986 = vsel %vm4970, 1.0, 0.0
    %v4987 = vsel %vm4971, 1.0, 0.0
    %v4988 = vsel %vm4972, 1.0, 0.0
    %v4989 = vsel %vm4973, 1.0, 0.0
    %v4990 = vsel %vm4974, 1.0, 0.0
    %v4991 = vsel %vm4975, 1.0, 0.0
    %v4992 = vsel %vm4976, 1.0, 0.0
    %v4993 = vsel %vm4977, 1.0, 0.0
    %v4994 = vsel %vm4978, 1.0, 0.0
    %v4995 = vsel %vm4979, 1.0, 0.0
    %v4996 = vsel %vm4980, 1.0, 0.0
    %v4997 = vsel %vm4981, 1.0, 0.0
    %4998 = vmatprep.subr.mxu0 0.0
    %4999 = vmatpush1.msra.mxu0 %v4982
    %5000 = vmatprep.subr.mxu0 0.0
    %5001 = vmatpush1.msra.mxu0 %v4983
    %5002 = vmatprep.subr.mxu0 0.0
    %5003 = vmatpush1.msra.mxu0 %v4984
    %5004 = vmatprep.subr.mxu0 0.0
    %5005 = vmatpush1.msra.mxu0 %v4985
    %5006 = vmatprep.subr.mxu0 0.0
    %5007 = vmatpush1.msra.mxu0 %v4986
    %5008 = vmatprep.subr.mxu0 0.0
    %5009 = vmatpush1.msra.mxu0 %v4987
    %5010 = vmatprep.subr.mxu0 0.0
    %5011 = vmatpush1.msra.mxu0 %v4988
    %5012 = vmatprep.subr.mxu0 0.0
    %5013 = vmatpush1.msra.mxu0 %v4989
    %5014 = vmatprep.subr.mxu0 0.0
    %5015 = vmatpush1.msra.mxu0 %v4990
    %5016 = vmatprep.subr.mxu0 0.0
    %5017 = vmatpush1.msra.mxu0 %v4991
    %5018 = vmatprep.subr.mxu0 0.0
    %5019 = vmatpush1.msra.mxu0 %v4992
    %5020 = vmatprep.subr.mxu0 0.0
    %5021 = vmatpush1.msra.mxu0 %v4993
    %5022 = vmatprep.subr.mxu0 0.0
    %5023 = vmatpush1.msra.mxu0 %v4994
    %5024 = vmatprep.subr.mxu0 0.0
    %5025 = vmatpush1.msra.mxu0 %v4995
    %5026 = vmatprep.subr.mxu0 0.0
    %5027 = vmatpush1.msra.mxu0 %v4996
    %5028 = vmatprep.subr.mxu0 0.0
    %5029 = vmatpush1.msra.mxu0 %v4997
    %5030 = vmatprep.subr.mxu0 0.0
    %5031 = vmatpush1.msra.mxu0 0.0
    %5032 = vmatprep.subr.mxu0 0.0
    %5033 = vmatpush1.msra.mxu0 0.0
    %5034 = vmatprep.subr.mxu0 0.0
    %5035 = vmatpush1.msra.mxu0 0.0
    %5036 = vmatprep.subr.mxu0 0.0
    %5037 = vmatpush1.msra.mxu0 0.0
    %5038 = vmatprep.subr.mxu0 0.0
    %5039 = vmatpush1.msra.mxu0 0.0
    %5040 = vmatprep.subr.mxu0 0.0
    %5041 = vmatpush1.msra.mxu0 0.0
    %5042 = vmatprep.subr.mxu0 0.0
    %5043 = vmatpush1.msra.mxu0 0.0
    %5044 = vmatprep.subr.mxu0 0.0
    %5045 = vmatpush1.msra.mxu0 0.0
    %5046 = vmatprep.subr.mxu0 0.0
    %5047 = vmatpush1.msra.mxu0 0.0
    %5048 = vmatprep.subr.mxu0 0.0
    %5049 = vmatpush1.msra.mxu0 0.0
    %5050 = vmatprep.subr.mxu0 0.0
    %5051 = vmatpush1.msra.mxu0 0.0
    %5052 = vmatprep.subr.mxu0 0.0
    %5053 = vmatpush1.msra.mxu0 0.0
    %5054 = vmatprep.subr.mxu0 0.0
    %5055 = vmatpush1.msra.mxu0 0.0
    %5056 = vmatprep.subr.mxu0 0.0
    %5057 = vmatpush1.msra.mxu0 0.0
    %5058 = vmatprep.subr.mxu0 0.0
    %5059 = vmatpush1.msra.mxu0 0.0
    %5060 = vmatprep.subr.mxu0 0.0
    %5061 = vmatpush1.msra.mxu0 0.0
    %5062 = vmatprep.mubr.f32.mxu0 0.0
    %5063 = vmatmul.mubr.f32.gmra.mrb[0].mxu0 %v4922
    %v5064 = vpop.f32.mrb[0].mxu0
    %v5065 = vadd.f32 0.0, %v5064
    %v5066 = vpop.f32.mrb[0].mxu0
    %5067 = vdwg.mxu0
    %5068 = vmatprep.subr.mxu0 0.0
    %5069 = vmatpush1.msra.mxu0 %v4982
    %5070 = vmatprep.subr.mxu0 0.0
    %5071 = vmatpush1.msra.mxu0 %v4983
    %5072 = vmatprep.subr.mxu0 0.0
    %5073 = vmatpush1.msra.mxu0 %v4984
    %5074 = vmatprep.subr.mxu0 0.0
    %5075 = vmatpush1.msra.mxu0 %v4985
    %5076 = vmatprep.subr.mxu0 0.0
    %5077 = vmatpush1.msra.mxu0 %v4986
    %5078 = vmatprep.subr.mxu0 0.0
    %5079 = vmatpush1.msra.mxu0 %v4987
    %5080 = vmatprep.subr.mxu0 0.0
    %5081 = vmatpush1.msra.mxu0 %v4988
    %5082 = vmatprep.subr.mxu0 0.0
    %5083 = vmatpush1.msra.mxu0 %v4989
    %5084 = vmatprep.subr.mxu0 0.0
    %5085 = vmatpush1.msra.mxu0 %v4990
    %5086 = vmatprep.subr.mxu0 0.0
    %5087 = vmatpush1.msra.mxu0 %v4991
    %5088 = vmatprep.subr.mxu0 0.0
    %5089 = vmatpush1.msra.mxu0 %v4992
    %5090 = vmatprep.subr.mxu0 0.0
    %5091 = vmatpush1.msra.mxu0 %v4993
    %5092 = vmatprep.subr.mxu0 0.0
    %5093 = vmatpush1.msra.mxu0 %v4994
    %5094 = vmatprep.subr.mxu0 0.0
    %5095 = vmatpush1.msra.mxu0 %v4995
    %5096 = vmatprep.subr.mxu0 0.0
    %5097 = vmatpush1.msra.mxu0 %v4996
    %5098 = vmatprep.subr.mxu0 0.0
    %5099 = vmatpush1.msra.mxu0 %v4997
    %5100 = vmatprep.subr.mxu0 0.0
    %5101 = vmatpush1.msra.mxu0 0.0
    %5102 = vmatprep.subr.mxu0 0.0
    %5103 = vmatpush1.msra.mxu0 0.0
    %5104 = vmatprep.subr.mxu0 0.0
    %5105 = vmatpush1.msra.mxu0 0.0
    %5106 = vmatprep.subr.mxu0 0.0
    %5107 = vmatpush1.msra.mxu0 0.0
    %5108 = vmatprep.subr.mxu0 0.0
    %5109 = vmatpush1.msra.mxu0 0.0
    %5110 = vmatprep.subr.mxu0 0.0
    %5111 = vmatpush1.msra.mxu0 0.0
    %5112 = vmatprep.subr.mxu0 0.0
    %5113 = vmatpush1.msra.mxu0 0.0
    %5114 = vmatprep.subr.mxu0 0.0
    %5115 = vmatpush1.msra.mxu0 0.0
    %5116 = vmatprep.subr.mxu0 0.0
    %5117 = vmatpush1.msra.mxu0 0.0
    %5118 = vmatprep.subr.mxu0 0.0
    %5119 = vmatpush1.msra.mxu0 0.0
    %5120 = vmatprep.subr.mxu0 0.0
    %5121 = vmatpush1.msra.mxu0 0.0
    %5122 = vmatprep.subr.mxu0 0.0
    %5123 = vmatpush1.msra.mxu0 0.0
    %5124 = vmatprep.subr.mxu0 0.0
    %5125 = vmatpush1.msra.mxu0 0.0
    %5126 = vmatprep.subr.mxu0 0.0
    %5127 = vmatpush1.msra.mxu0 0.0
    %5128 = vmatprep.subr.mxu0 0.0
    %5129 = vmatpush1.msra.mxu0 0.0
    %5130 = vmatprep.subr.mxu0 0.0
    %5131 = vmatpush1.msra.mxu0 0.0
    %5132 = vmatprep.mubr.f32.mxu0 0.0
    %5133 = vmatmul.mubr.f32.gmra.mrb[0].mxu0 %v4931
    %v5134 = vpop.f32.mrb[0].mxu0
    %v5135 = vadd.f32 0.0, %v5134
    %v5136 = vpop.f32.mrb[0].mxu0
    %5137 = vdwg.mxu0
    %v5138 = vrcp.pop 32.0
    %v5139 = vmul.f32 %v5065, %v5138
    %v5140 = vmul.f32 %v5135, %v5138
    %v5141 = vmul.f32 %v5139, %v5139
    %v5142 = vsub.f32 %v5140, %v5141
    %v5143 = vadd.f32 %v5142, 1e-05
    %v5144 = vrsqrt.pop %v5143
    %v5145 = vmul.f32 %v3996, %v5144
    %v5146 = vmul.f32 %v5139, %v5145
    %v5147 = vsub.f32 %v3997, %v5146
    %v5148 = vmul.u32 %v63, 4
    %v5149 = vmul.u32 %v64, 4
    %v5150 = vmul.u32 %v1083, 4
    %v5151 = vmul.u32 %v1084, 4
    %vm5152 = vcmp.ge.s32.totalorder %v66, %v5148
    %vm5153 = vcmp.ge.s32.totalorder %v66, %v5149
    %vm5154 = vcmp.ge.s32.totalorder %v66, %v5150
    %vm5155 = vcmp.ge.s32.totalorder %v66, %v5151
    %v5156 = vadd.s32 %v5148, 4
    %v5157 = vadd.s32 %v5149, 4
    %v5158 = vadd.s32 %v5150, 4
    %v5159 = vadd.s32 %v5151, 4
    %vm5160 = vcmp.lt.s32.totalorder %v66, %v5156
    %vm5161 = vcmp.lt.s32.totalorder %v66, %v5157
    %vm5162 = vcmp.lt.s32.totalorder %v66, %v5158
    %vm5163 = vcmp.lt.s32.totalorder %v66, %v5159
    %vm5164 = vmand %vm5152, %vm5160
    %vm5165 = vmand %vm5153, %vm5161
    %vm5166 = vmand %vm5154, %vm5162
    %vm5167 = vmand %vm5155, %vm5163
    %v5168 = vsel %vm5164, 1.0, 0.0
    %v5169 = vsel %vm5165, 1.0, 0.0
    %v5170 = vsel %vm5166, 1.0, 0.0
    %v5171 = vsel %vm5167, 1.0, 0.0
    %vm5172 = vcmask 261120
    %v5174 = vsel %vm5172, %v5145, 0
    %5176 = vmatprep.subr.mxu0 0.0
    %5177 = vmatpush1.msra.mxu0 %v5168
    %5178 = vmatprep.subr.mxu0 0.0
    %5179 = vmatpush1.msra.mxu0 %v5169
    %5180 = vmatprep.subr.mxu0 0.0
    %5181 = vmatpush1.msra.mxu0 %v5170
    %5182 = vmatprep.subr.mxu0 0.0
    %5183 = vmatpush1.msra.mxu0 %v5171
    %5184 = vmatprep.subr.mxu0 0.0
    %5185 = vmatpush1.msra.mxu0 0.0
    %5186 = vmatprep.subr.mxu0 0.0
    %5187 = vmatpush1.msra.mxu0 0.0
    %5188 = vmatprep.subr.mxu0 0.0
    %5189 = vmatpush1.msra.mxu0 0.0
    %5190 = vmatprep.subr.mxu0 0.0
    %5191 = vmatpush1.msra.mxu0 0.0
    %5192 = vmatprep.subr.mxu0 0.0
    %5193 = vmatpush1.msra.mxu0 0.0
    %5194 = vmatprep.subr.mxu0 0.0
    %5195 = vmatpush1.msra.mxu0 0.0
    %5196 = vmatprep.subr.mxu0 0.0
    %5197 = vmatpush1.msra.mxu0 0.0
    %5198 = vmatprep.subr.mxu0 0.0
    %5199 = vmatpush1.msra.mxu0 0.0
    %5200 = vmatprep.subr.mxu0 0.0
    %5201 = vmatpush1.msra.mxu0 0.0
    %5202 = vmatprep.subr.mxu0 0.0
    %5203 = vmatpush1.msra.mxu0 0.0
    %5204 = vmatprep.subr.mxu0 0.0
    %5205 = vmatpush1.msra.mxu0 0.0
    %5206 = vmatprep.subr.mxu0 0.0
    %5207 = vmatpush1.msra.mxu0 0.0
    %5208 = vmatprep.subr.mxu0 0.0
    %5209 = vmatpush1.msra.mxu0 0.0
    %5210 = vmatprep.subr.mxu0 0.0
    %5211 = vmatpush1.msra.mxu0 0.0
    %5212 = vmatprep.subr.mxu0 0.0
    %5213 = vmatpush1.msra.mxu0 0.0
    %5214 = vmatprep.subr.mxu0 0.0
    %5215 = vmatpush1.msra.mxu0 0.0
    %5216 = vmatprep.subr.mxu0 0.0
    %5217 = vmatpush1.msra.mxu0 0.0
    %5218 = vmatprep.subr.mxu0 0.0
    %5219 = vmatpush1.msra.mxu0 0.0
    %5220 = vmatprep.subr.mxu0 0.0
    %5221 = vmatpush1.msra.mxu0 0.0
    %5222 = vmatprep.subr.mxu0 0.0
    %5223 = vmatpush1.msra.mxu0 0.0
    %5224 = vmatprep.subr.mxu0 0.0
    %5225 = vmatpush1.msra.mxu0 0.0
    %5226 = vmatprep.subr.mxu0 0.0
    %5227 = vmatpush1.msra.mxu0 0.0
    %5228 = vmatprep.subr.mxu0 0.0
    %5229 = vmatpush1.msra.mxu0 0.0
    %5230 = vmatprep.subr.mxu0 0.0
    %5231 = vmatpush1.msra.mxu0 0.0
    %5232 = vmatprep.subr.mxu0 0.0
    %5233 = vmatpush1.msra.mxu0 0.0
    %5234 = vmatprep.subr.mxu0 0.0
    %5235 = vmatpush1.msra.mxu0 0.0
    %5236 = vmatprep.subr.mxu0 0.0
    %5237 = vmatpush1.msra.mxu0 0.0
    %5238 = vmatprep.subr.mxu0 0.0
    %5239 = vmatpush1.msra.mxu0 0.0
    %5240 = vmatprep.mubr.f32.mxu0 0.0
    %5241 = vmatmul.mubr.f32.gmra.mrb[0].mxu0 %v5174
    %v5242 = vpop.f32.mrb[0].mxu0
    %v5243 = vadd.f32 0.0, %v5242
    %v5244 = vpop.f32.mrb[0].mxu0
    %5245 = vdwg.mxu0
    %v5247 = vsel %vm5172, %v5147, 0
    %5249 = vmatprep.subr.mxu0 0.0
    %5250 = vmatpush1.msra.mxu0 %v5168
    %5251 = vmatprep.subr.mxu0 0.0
    %5252 = vmatpush1.msra.mxu0 %v5169
    %5253 = vmatprep.subr.mxu0 0.0
    %5254 = vmatpush1.msra.mxu0 %v5170
    %5255 = vmatprep.subr.mxu0 0.0
    %5256 = vmatpush1.msra.mxu0 %v5171
    %5257 = vmatprep.subr.mxu0 0.0
    %5258 = vmatpush1.msra.mxu0 0.0
    %5259 = vmatprep.subr.mxu0 0.0
    %5260 = vmatpush1.msra.mxu0 0.0
    %5261 = vmatprep.subr.mxu0 0.0
    %5262 = vmatpush1.msra.mxu0 0.0
    %5263 = vmatprep.subr.mxu0 0.0
    %5264 = vmatpush1.msra.mxu0 0.0
    %5265 = vmatprep.subr.mxu0 0.0
    %5266 = vmatpush1.msra.mxu0 0.0
    %5267 = vmatprep.subr.mxu0 0.0
    %5268 = vmatpush1.msra.mxu0 0.0
    %5269 = vmatprep.subr.mxu0 0.0
    %5270 = vmatpush1.msra.mxu0 0.0
    %5271 = vmatprep.subr.mxu0 0.0
    %5272 = vmatpush1.msra.mxu0 0.0
    %5273 = vmatprep.subr.mxu0 0.0
    %5274 = vmatpush1.msra.mxu0 0.0
    %5275 = vmatprep.subr.mxu0 0.0
    %5276 = vmatpush1.msra.mxu0 0.0
    %5277 = vmatprep.subr.mxu0 0.0
    %5278 = vmatpush1.msra.mxu0 0.0
    %5279 = vmatprep.subr.mxu0 0.0
    %5280 = vmatpush1.msra.mxu0 0.0
    %5281 = vmatprep.subr.mxu0 0.0
    %5282 = vmatpush1.msra.mxu0 0.0
    %5283 = vmatprep.subr.mxu0 0.0
    %5284 = vmatpush1.msra.mxu0 0.0
    %5285 = vmatprep.subr.mxu0 0.0
    %5286 = vmatpush1.msra.mxu0 0.0
    %5287 = vmatprep.subr.mxu0 0.0
    %5288 = vmatpush1.msra.mxu0 0.0
    %5289 = vmatprep.subr.mxu0 0.0
    %5290 = vmatpush1.msra.mxu0 0.0
    %5291 = vmatprep.subr.mxu0 0.0
    %5292 = vmatpush1.msra.mxu0 0.0
    %5293 = vmatprep.subr.mxu0 0.0
    %5294 = vmatpush1.msra.mxu0 0.0
    %5295 = vmatprep.subr.mxu0 0.0
    %5296 = vmatpush1.msra.mxu0 0.0
    %5297 = vmatprep.subr.mxu0 0.0
    %5298 = vmatpush1.msra.mxu0 0.0
    %5299 = vmatprep.subr.mxu0 0.0
    %5300 = vmatpush1.msra.mxu0 0.0
    %5301 = vmatprep.subr.mxu0 0.0
    %5302 = vmatpush1.msra.mxu0 0.0
    %5303 = vmatprep.subr.mxu0 0.0
    %5304 = vmatpush1.msra.mxu0 0.0
    %5305 = vmatprep.subr.mxu0 0.0
    %5306 = vmatpush1.msra.mxu0 0.0
    %5307 = vmatprep.subr.mxu0 0.0
    %5308 = vmatpush1.msra.mxu0 0.0
    %5309 = vmatprep.subr.mxu0 0.0
    %5310 = vmatpush1.msra.mxu0 0.0
    %5311 = vmatprep.subr.mxu0 0.0
    %5312 = vmatpush1.msra.mxu0 0.0
    %5313 = vmatprep.mubr.f32.mxu0 0.0
    %5314 = vmatmul.mubr.f32.gmra.mrb[0].mxu0 %v5247
    %v5315 = vpop.f32.mrb[0].mxu0
    %v5316 = vadd.f32 0.0, %v5315
    %v5317 = vpop.f32.mrb[0].mxu0
    %5318 = vdwg.mxu0
    %v5319 = vlaneseq
    %v5320 = vshrl.u32 %v5319, 7
    %v5321 = vsub.s32 0, %v5320
    %v5322 = vrot.slane %v5243, %v5321
    %v5323 = vmul.f32 %v4464, %v5322
    %v5324 = vlaneseq
    %v5325 = vshrl.u32 %v5324, 7
    %v5326 = vsub.s32 0, %v5325
    %v5327 = vrot.slane %v5316, %v5326
    %v5328 = vadd.f32 %v5323, %v5327
    %v5329 = vmax.f32 %v5328, 0.0
    %v5330 = vsel %vm4158, %v1468, 0
    %v5333 = vsel %vm4161, %v5329, 0
    %5335 = vmatprep.subr.mxu0 0.0
    %5336 = vmatpush1.msra.mxu0 %v5333
    %5337 = vmatprep.subr.mxu0 0.0
    %5338 = vmatpush1.msra.mxu0 0.0
    %5339 = vmatprep.subr.mxu0 0.0
    %5340 = vmatpush1.msra.mxu0 0.0
    %5341 = vmatprep.subr.mxu0 0.0
    %5342 = vmatpush1.msra.mxu0 0.0
    %5343 = vmatprep.subr.mxu0 0.0
    %5344 = vmatpush1.msra.mxu0 0.0
    %5345 = vmatprep.subr.mxu0 0.0
    %5346 = vmatpush1.msra.mxu0 0.0
    %5347 = vmatprep.subr.mxu0 0.0
    %5348 = vmatpush1.msra.mxu0 0.0
    %5349 = vmatprep.subr.mxu0 0.0
    %5350 = vmatpush1.msra.mxu0 0.0
    %5351 = vmatprep.subr.mxu0 0.0
    %5352 = vmatpush1.msra.mxu0 0.0
    %5353 = vmatprep.subr.mxu0 0.0
    %5354 = vmatpush1.msra.mxu0 0.0
    %5355 = vmatprep.subr.mxu0 0.0
    %5356 = vmatpush1.msra.mxu0 0.0
    %5357 = vmatprep.subr.mxu0 0.0
    %5358 = vmatpush1.msra.mxu0 0.0
    %5359 = vmatprep.subr.mxu0 0.0
    %5360 = vmatpush1.msra.mxu0 0.0
    %5361 = vmatprep.subr.mxu0 0.0
    %5362 = vmatpush1.msra.mxu0 0.0
    %5363 = vmatprep.subr.mxu0 0.0
    %5364 = vmatpush1.msra.mxu0 0.0
    %5365 = vmatprep.subr.mxu0 0.0
    %5366 = vmatpush1.msra.mxu0 0.0
    %5367 = vmatprep.subr.mxu0 0.0
    %5368 = vmatpush1.msra.mxu0 0.0
    %5369 = vmatprep.subr.mxu0 0.0
    %5370 = vmatpush1.msra.mxu0 0.0
    %5371 = vmatprep.subr.mxu0 0.0
    %5372 = vmatpush1.msra.mxu0 0.0
    %5373 = vmatprep.subr.mxu0 0.0
    %5374 = vmatpush1.msra.mxu0 0.0
    %5375 = vmatprep.subr.mxu0 0.0
    %5376 = vmatpush1.msra.mxu0 0.0
    %5377 = vmatprep.subr.mxu0 0.0
    %5378 = vmatpush1.msra.mxu0 0.0
    %5379 = vmatprep.subr.mxu0 0.0
    %5380 = vmatpush1.msra.mxu0 0.0
    %5381 = vmatprep.subr.mxu0 0.0
    %5382 = vmatpush1.msra.mxu0 0.0
    %5383 = vmatprep.subr.mxu0 0.0
    %5384 = vmatpush1.msra.mxu0 0.0
    %5385 = vmatprep.subr.mxu0 0.0
    %5386 = vmatpush1.msra.mxu0 0.0
    %5387 = vmatprep.subr.mxu0 0.0
    %5388 = vmatpush1.msra.mxu0 0.0
    %5389 = vmatprep.subr.mxu0 0.0
    %5390 = vmatpush1.msra.mxu0 0.0
    %5391 = vmatprep.subr.mxu0 0.0
    %5392 = vmatpush1.msra.mxu0 0.0
    %5393 = vmatprep.subr.mxu0 0.0
    %5394 = vmatpush1.msra.mxu0 0.0
    %5395 = vmatprep.subr.mxu0 0.0
    %5396 = vmatpush1.msra.mxu0 0.0
    %5397 = vmatprep.subr.mxu0 0.0
    %5398 = vmatpush1.msra.mxu0 0.0
    %5399 = vmatprep.mubr.f32.mxu0 0.0
    %5400 = vmatmul.mubr.f32.gmra.mrb[0].mxu0 %v5330
    %v5401 = vpop.f32.mrb[0].mxu0
    %v5402 = vadd.f32 0.0, %v5401
    %v5403 = vpop.f32.mrb[0].mxu0
    %5404 = vdwg.mxu0
    %v5405 = vsel %vm4158, %v1471, 0
    %5407 = vmatprep.subr.mxu0 0.0
    %5408 = vmatpush1.msra.mxu0 %v5333
    %5409 = vmatprep.subr.mxu0 0.0
    %5410 = vmatpush1.msra.mxu0 0.0
    %5411 = vmatprep.subr.mxu0 0.0
    %5412 = vmatpush1.msra.mxu0 0.0
    %5413 = vmatprep.subr.mxu0 0.0
    %5414 = vmatpush1.msra.mxu0 0.0
    %5415 = vmatprep.subr.mxu0 0.0
    %5416 = vmatpush1.msra.mxu0 0.0
    %5417 = vmatprep.subr.mxu0 0.0
    %5418 = vmatpush1.msra.mxu0 0.0
    %5419 = vmatprep.subr.mxu0 0.0
    %5420 = vmatpush1.msra.mxu0 0.0
    %5421 = vmatprep.subr.mxu0 0.0
    %5422 = vmatpush1.msra.mxu0 0.0
    %5423 = vmatprep.subr.mxu0 0.0
    %5424 = vmatpush1.msra.mxu0 0.0
    %5425 = vmatprep.subr.mxu0 0.0
    %5426 = vmatpush1.msra.mxu0 0.0
    %5427 = vmatprep.subr.mxu0 0.0
    %5428 = vmatpush1.msra.mxu0 0.0
    %5429 = vmatprep.subr.mxu0 0.0
    %5430 = vmatpush1.msra.mxu0 0.0
    %5431 = vmatprep.subr.mxu0 0.0
    %5432 = vmatpush1.msra.mxu0 0.0
    %5433 = vmatprep.subr.mxu0 0.0
    %5434 = vmatpush1.msra.mxu0 0.0
    %5435 = vmatprep.subr.mxu0 0.0
    %5436 = vmatpush1.msra.mxu0 0.0
    %5437 = vmatprep.subr.mxu0 0.0
    %5438 = vmatpush1.msra.mxu0 0.0
    %5439 = vmatprep.subr.mxu0 0.0
    %5440 = vmatpush1.msra.mxu0 0.0
    %5441 = vmatprep.subr.mxu0 0.0
    %5442 = vmatpush1.msra.mxu0 0.0
    %5443 = vmatprep.subr.mxu0 0.0
    %5444 = vmatpush1.msra.mxu0 0.0
    %5445 = vmatprep.subr.mxu0 0.0
    %5446 = vmatpush1.msra.mxu0 0.0
    %5447 = vmatprep.subr.mxu0 0.0
    %5448 = vmatpush1.msra.mxu0 0.0
    %5449 = vmatprep.subr.mxu0 0.0
    %5450 = vmatpush1.msra.mxu0 0.0
    %5451 = vmatprep.subr.mxu0 0.0
    %5452 = vmatpush1.msra.mxu0 0.0
    %5453 = vmatprep.subr.mxu0 0.0
    %5454 = vmatpush1.msra.mxu0 0.0
    %5455 = vmatprep.subr.mxu0 0.0
    %5456 = vmatpush1.msra.mxu0 0.0
    %5457 = vmatprep.subr.mxu0 0.0
    %5458 = vmatpush1.msra.mxu0 0.0
    %5459 = vmatprep.subr.mxu0 0.0
    %5460 = vmatpush1.msra.mxu0 0.0
    %5461 = vmatprep.subr.mxu0 0.0
    %5462 = vmatpush1.msra.mxu0 0.0
    %5463 = vmatprep.subr.mxu0 0.0
    %5464 = vmatpush1.msra.mxu0 0.0
    %5465 = vmatprep.subr.mxu0 0.0
    %5466 = vmatpush1.msra.mxu0 0.0
    %5467 = vmatprep.subr.mxu0 0.0
    %5468 = vmatpush1.msra.mxu0 0.0
    %5469 = vmatprep.subr.mxu0 0.0
    %5470 = vmatpush1.msra.mxu0 0.0
    %5471 = vmatprep.mubr.f32.mxu0 0.0
    %5472 = vmatmul.mubr.f32.gmra.mrb[0].mxu0 %v5405
    %v5473 = vpop.f32.mrb[0].mxu0
    %v5474 = vadd.f32 0.0, %v5473
    %v5475 = vpop.f32.mrb[0].mxu0
    %5476 = vdwg.mxu0
    %v5477 = vmax.f32 %v5402, %v5474
    %5478 = vmatprep.subr.mxu0 0.0
    %5479 = vmatpush1.msra.mxu0 %v1489
    %5480 = vmatprep.subr.mxu0 0.0
    %5481 = vmatpush1.msra.mxu0 %v1490
    %5482 = vmatprep.subr.mxu0 0.0
    %5483 = vmatpush1.msra.mxu0 %v1491
    %5484 = vmatprep.subr.mxu0 0.0
    %5485 = vmatpush1.msra.mxu0 %v1492
    %5486 = vmatprep.subr.mxu0 0.0
    %5487 = vmatpush1.msra.mxu0 %v1493
    %5488 = vmatprep.subr.mxu0 0.0
    %5489 = vmatpush1.msra.mxu0 %v1494
    %5490 = vmatprep.subr.mxu0 0.0
    %5491 = vmatpush1.msra.mxu0 %v1495
    %5492 = vmatprep.subr.mxu0 0.0
    %5493 = vmatpush1.msra.mxu0 %v1496
    %5494 = vmatprep.subr.mxu0 0.0
    %5495 = vmatpush1.msra.mxu0 %v1497
    %5496 = vmatprep.subr.mxu0 0.0
    %5497 = vmatpush1.msra.mxu0 %v1498
    %5498 = vmatprep.subr.mxu0 0.0
    %5499 = vmatpush1.msra.mxu0 %v1499
    %5500 = vmatprep.subr.mxu0 0.0
    %5501 = vmatpush1.msra.mxu0 %v1500
    %5502 = vmatprep.subr.mxu0 0.0
    %5503 = vmatpush1.msra.mxu0 %v1501
    %5504 = vmatprep.subr.mxu0 0.0
    %5505 = vmatpush1.msra.mxu0 %v1502
    %5506 = vmatprep.subr.mxu0 0.0
    %5507 = vmatpush1.msra.mxu0 %v1503
    %5508 = vmatprep.subr.mxu0 0.0
    %5509 = vmatpush1.msra.mxu0 %v1504
    %5510 = vmatprep.subr.mxu0 0.0
    %5511 = vmatpush1.msra.mxu0 0.0
    %5512 = vmatprep.subr.mxu0 0.0
    %5513 = vmatpush1.msra.mxu0 0.0
    %5514 = vmatprep.subr.mxu0 0.0
    %5515 = vmatpush1.msra.mxu0 0.0
    %5516 = vmatprep.subr.mxu0 0.0
    %5517 = vmatpush1.msra.mxu0 0.0
    %5518 = vmatprep.subr.mxu0 0.0
    %5519 = vmatpush1.msra.mxu0 0.0
    %5520 = vmatprep.subr.mxu0 0.0
    %5521 = vmatpush1.msra.mxu0 0.0
    %5522 = vmatprep.subr.mxu0 0.0
    %5523 = vmatpush1.msra.mxu0 0.0
    %5524 = vmatprep.subr.mxu0 0.0
    %5525 = vmatpush1.msra.mxu0 0.0
    %5526 = vmatprep.subr.mxu0 0.0
    %5527 = vmatpush1.msra.mxu0 0.0
    %5528 = vmatprep.subr.mxu0 0.0
    %5529 = vmatpush1.msra.mxu0 0.0
    %5530 = vmatprep.subr.mxu0 0.0
    %5531 = vmatpush1.msra.mxu0 0.0
    %5532 = vmatprep.subr.mxu0 0.0
    %5533 = vmatpush1.msra.mxu0 0.0
    %5534 = vmatprep.subr.mxu0 0.0
    %5535 = vmatpush1.msra.mxu0 0.0
    %5536 = vmatprep.subr.mxu0 0.0
    %5537 = vmatpush1.msra.mxu0 0.0
    %5538 = vmatprep.subr.mxu0 0.0
    %5539 = vmatpush1.msra.mxu0 0.0
    %5540 = vmatprep.subr.mxu0 0.0
    %5541 = vmatpush1.msra.mxu0 0.0
    %5542 = vmatprep.mubr.f32.mxu0 0.0
    %5543 = vmatmul.mubr.f32.gmra.mrb[0].mxu0 %v5477
    %v5544 = vpop.f32.mrb[0].mxu0
    %v5545 = vadd.f32 0.0, %v5544
    %v5546 = vpop.f32.mrb[0].mxu0
    %5547 = vdwg.mxu0
    %5548 = vmatprep.subr.mxu0 0.0
    %5549 = vmatpush1.msra.mxu0 %v1522
    %5550 = vmatprep.subr.mxu0 0.0
    %5551 = vmatpush1.msra.mxu0 %v1523
    %5552 = vmatprep.subr.mxu0 0.0
    %5553 = vmatpush1.msra.mxu0 %v1524
    %5554 = vmatprep.subr.mxu0 0.0
    %5555 = vmatpush1.msra.mxu0 %v1525
    %5556 = vmatprep.subr.mxu0 0.0
    %5557 = vmatpush1.msra.mxu0 %v1526
    %5558 = vmatprep.subr.mxu0 0.0
    %5559 = vmatpush1.msra.mxu0 %v1527
    %5560 = vmatprep.subr.mxu0 0.0
    %5561 = vmatpush1.msra.mxu0 %v1528
    %5562 = vmatprep.subr.mxu0 0.0
    %5563 = vmatpush1.msra.mxu0 %v1529
    %5564 = vmatprep.subr.mxu0 0.0
    %5565 = vmatpush1.msra.mxu0 %v1530
    %5566 = vmatprep.subr.mxu0 0.0
    %5567 = vmatpush1.msra.mxu0 %v1531
    %5568 = vmatprep.subr.mxu0 0.0
    %5569 = vmatpush1.msra.mxu0 %v1532
    %5570 = vmatprep.subr.mxu0 0.0
    %5571 = vmatpush1.msra.mxu0 %v1533
    %5572 = vmatprep.subr.mxu0 0.0
    %5573 = vmatpush1.msra.mxu0 %v1534
    %5574 = vmatprep.subr.mxu0 0.0
    %5575 = vmatpush1.msra.mxu0 %v1535
    %5576 = vmatprep.subr.mxu0 0.0
    %5577 = vmatpush1.msra.mxu0 %v1536
    %5578 = vmatprep.subr.mxu0 0.0
    %5579 = vmatpush1.msra.mxu0 %v1537
    %5580 = vmatprep.subr.mxu0 0.0
    %5581 = vmatpush1.msra.mxu0 0.0
    %5582 = vmatprep.subr.mxu0 0.0
    %5583 = vmatpush1.msra.mxu0 0.0
    %5584 = vmatprep.subr.mxu0 0.0
    %5585 = vmatpush1.msra.mxu0 0.0
    %5586 = vmatprep.subr.mxu0 0.0
    %5587 = vmatpush1.msra.mxu0 0.0
    %5588 = vmatprep.subr.mxu0 0.0
    %5589 = vmatpush1.msra.mxu0 0.0
    %5590 = vmatprep.subr.mxu0 0.0
    %5591 = vmatpush1.msra.mxu0 0.0
    %5592 = vmatprep.subr.mxu0 0.0
    %5593 = vmatpush1.msra.mxu0 0.0
    %5594 = vmatprep.subr.mxu0 0.0
    %5595 = vmatpush1.msra.mxu0 0.0
    %5596 = vmatprep.subr.mxu0 0.0
    %5597 = vmatpush1.msra.mxu0 0.0
    %5598 = vmatprep.subr.mxu0 0.0
    %5599 = vmatpush1.msra.mxu0 0.0
    %5600 = vmatprep.subr.mxu0 0.0
    %5601 = vmatpush1.msra.mxu0 0.0
    %5602 = vmatprep.subr.mxu0 0.0
    %5603 = vmatpush1.msra.mxu0 0.0
    %5604 = vmatprep.subr.mxu0 0.0
    %5605 = vmatpush1.msra.mxu0 0.0
    %5606 = vmatprep.subr.mxu0 0.0
    %5607 = vmatpush1.msra.mxu0 0.0
    %5608 = vmatprep.subr.mxu0 0.0
    %5609 = vmatpush1.msra.mxu0 0.0
    %5610 = vmatprep.subr.mxu0 0.0
    %5611 = vmatpush1.msra.mxu0 0.0
    %5612 = vmatprep.mubr.f32.mxu0 0.0
    %5613 = vmatmul.mubr.f32.gmra.mrb[0].mxu0 %v5477
    %v5614 = vpop.f32.mrb[0].mxu0
    %v5615 = vadd.f32 0.0, %v5614
    %v5616 = vpop.f32.mrb[0].mxu0
    %5617 = vdwg.mxu0
    %v5618 = vmax.f32 %v5545, %v5615
    %v5619 = vmul.f32 %v4897, %v5322
    %v5620 = vadd.f32 %v5619, %v5327
    %v5621 = vmax.f32 %v5620, 0.0
    %v5623 = vsel %vm4161, %v5621, 0
    %5625 = vmatprep.subr.mxu0 0.0
    %5626 = vmatpush1.msra.mxu0 %v5623
    %5627 = vmatprep.subr.mxu0 0.0
    %5628 = vmatpush1.msra.mxu0 0.0
    %5629 = vmatprep.subr.mxu0 0.0
    %5630 = vmatpush1.msra.mxu0 0.0
    %5631 = vmatprep.subr.mxu0 0.0
    %5632 = vmatpush1.msra.mxu0 0.0
    %5633 = vmatprep.subr.mxu0 0.0
    %5634 = vmatpush1.msra.mxu0 0.0
    %5635 = vmatprep.subr.mxu0 0.0
    %5636 = vmatpush1.msra.mxu0 0.0
    %5637 = vmatprep.subr.mxu0 0.0
    %5638 = vmatpush1.msra.mxu0 0.0
    %5639 = vmatprep.subr.mxu0 0.0
    %5640 = vmatpush1.msra.mxu0 0.0
    %5641 = vmatprep.subr.mxu0 0.0
    %5642 = vmatpush1.msra.mxu0 0.0
    %5643 = vmatprep.subr.mxu0 0.0
    %5644 = vmatpush1.msra.mxu0 0.0
    %5645 = vmatprep.subr.mxu0 0.0
    %5646 = vmatpush1.msra.mxu0 0.0
    %5647 = vmatprep.subr.mxu0 0.0
    %5648 = vmatpush1.msra.mxu0 0.0
    %5649 = vmatprep.subr.mxu0 0.0
    %5650 = vmatpush1.msra.mxu0 0.0
    %5651 = vmatprep.subr.mxu0 0.0
    %5652 = vmatpush1.msra.mxu0 0.0
    %5653 = vmatprep.subr.mxu0 0.0
    %5654 = vmatpush1.msra.mxu0 0.0
    %5655 = vmatprep.subr.mxu0 0.0
    %5656 = vmatpush1.msra.mxu0 0.0
    %5657 = vmatprep.subr.mxu0 0.0
    %5658 = vmatpush1.msra.mxu0 0.0
    %5659 = vmatprep.subr.mxu0 0.0
    %5660 = vmatpush1.msra.mxu0 0.0
    %5661 = vmatprep.subr.mxu0 0.0
    %5662 = vmatpush1.msra.mxu0 0.0
    %5663 = vmatprep.subr.mxu0 0.0
    %5664 = vmatpush1.msra.mxu0 0.0
    %5665 = vmatprep.subr.mxu0 0.0
    %5666 = vmatpush1.msra.mxu0 0.0
    %5667 = vmatprep.subr.mxu0 0.0
    %5668 = vmatpush1.msra.mxu0 0.0
    %5669 = vmatprep.subr.mxu0 0.0
    %5670 = vmatpush1.msra.mxu0 0.0
    %5671 = vmatprep.subr.mxu0 0.0
    %5672 = vmatpush1.msra.mxu0 0.0
    %5673 = vmatprep.subr.mxu0 0.0
    %5674 = vmatpush1.msra.mxu0 0.0
    %5675 = vmatprep.subr.mxu0 0.0
    %5676 = vmatpush1.msra.mxu0 0.0
    %5677 = vmatprep.subr.mxu0 0.0
    %5678 = vmatpush1.msra.mxu0 0.0
    %5679 = vmatprep.subr.mxu0 0.0
    %5680 = vmatpush1.msra.mxu0 0.0
    %5681 = vmatprep.subr.mxu0 0.0
    %5682 = vmatpush1.msra.mxu0 0.0
    %5683 = vmatprep.subr.mxu0 0.0
    %5684 = vmatpush1.msra.mxu0 0.0
    %5685 = vmatprep.subr.mxu0 0.0
    %5686 = vmatpush1.msra.mxu0 0.0
    %5687 = vmatprep.subr.mxu0 0.0
    %5688 = vmatpush1.msra.mxu0 0.0
    %5689 = vmatprep.mubr.f32.mxu0 0.0
    %5690 = vmatmul.mubr.f32.gmra.mrb[0].mxu0 %v5330
    %v5691 = vpop.f32.mrb[0].mxu0
    %v5692 = vadd.f32 0.0, %v5691
    %v5693 = vpop.f32.mrb[0].mxu0
    %5694 = vdwg.mxu0
    %5695 = vmatprep.subr.mxu0 0.0
    %5696 = vmatpush1.msra.mxu0 %v5623
    %5697 = vmatprep.subr.mxu0 0.0
    %5698 = vmatpush1.msra.mxu0 0.0
    %5699 = vmatprep.subr.mxu0 0.0
    %5700 = vmatpush1.msra.mxu0 0.0
    %5701 = vmatprep.subr.mxu0 0.0
    %5702 = vmatpush1.msra.mxu0 0.0
    %5703 = vmatprep.subr.mxu0 0.0
    %5704 = vmatpush1.msra.mxu0 0.0
    %5705 = vmatprep.subr.mxu0 0.0
    %5706 = vmatpush1.msra.mxu0 0.0
    %5707 = vmatprep.subr.mxu0 0.0
    %5708 = vmatpush1.msra.mxu0 0.0
    %5709 = vmatprep.subr.mxu0 0.0
    %5710 = vmatpush1.msra.mxu0 0.0
    %5711 = vmatprep.subr.mxu0 0.0
    %5712 = vmatpush1.msra.mxu0 0.0
    %5713 = vmatprep.subr.mxu0 0.0
    %5714 = vmatpush1.msra.mxu0 0.0
    %5715 = vmatprep.subr.mxu0 0.0
    %5716 = vmatpush1.msra.mxu0 0.0
    %5717 = vmatprep.subr.mxu0 0.0
    %5718 = vmatpush1.msra.mxu0 0.0
    %5719 = vmatprep.subr.mxu0 0.0
    %5720 = vmatpush1.msra.mxu0 0.0
    %5721 = vmatprep.subr.mxu0 0.0
    %5722 = vmatpush1.msra.mxu0 0.0
    %5723 = vmatprep.subr.mxu0 0.0
    %5724 = vmatpush1.msra.mxu0 0.0
    %5725 = vmatprep.subr.mxu0 0.0
    %5726 = vmatpush1.msra.mxu0 0.0
    %5727 = vmatprep.subr.mxu0 0.0
    %5728 = vmatpush1.msra.mxu0 0.0
    %5729 = vmatprep.subr.mxu0 0.0
    %5730 = vmatpush1.msra.mxu0 0.0
    %5731 = vmatprep.subr.mxu0 0.0
    %5732 = vmatpush1.msra.mxu0 0.0
    %5733 = vmatprep.subr.mxu0 0.0
    %5734 = vmatpush1.msra.mxu0 0.0
    %5735 = vmatprep.subr.mxu0 0.0
    %5736 = vmatpush1.msra.mxu0 0.0
    %5737 = vmatprep.subr.mxu0 0.0
    %5738 = vmatpush1.msra.mxu0 0.0
    %5739 = vmatprep.subr.mxu0 0.0
    %5740 = vmatpush1.msra.mxu0 0.0
    %5741 = vmatprep.subr.mxu0 0.0
    %5742 = vmatpush1.msra.mxu0 0.0
    %5743 = vmatprep.subr.mxu0 0.0
    %5744 = vmatpush1.msra.mxu0 0.0
    %5745 = vmatprep.subr.mxu0 0.0
    %5746 = vmatpush1.msra.mxu0 0.0
    %5747 = vmatprep.subr.mxu0 0.0
    %5748 = vmatpush1.msra.mxu0 0.0
    %5749 = vmatprep.subr.mxu0 0.0
    %5750 = vmatpush1.msra.mxu0 0.0
    %5751 = vmatprep.subr.mxu0 0.0
    %5752 = vmatpush1.msra.mxu0 0.0
    %5753 = vmatprep.subr.mxu0 0.0
    %5754 = vmatpush1.msra.mxu0 0.0
    %5755 = vmatprep.subr.mxu0 0.0
    %5756 = vmatpush1.msra.mxu0 0.0
    %5757 = vmatprep.subr.mxu0 0.0
    %5758 = vmatpush1.msra.mxu0 0.0
    %5759 = vmatprep.mubr.f32.mxu0 0.0
    %5760 = vmatmul.mubr.f32.gmra.mrb[0].mxu0 %v5405
    %v5761 = vpop.f32.mrb[0].mxu0
    %v5762 = vadd.f32 0.0, %v5761
    %v5763 = vpop.f32.mrb[0].mxu0
    %5764 = vdwg.mxu0
    %v5765 = vmax.f32 %v5692, %v5762
    %5766 = vmatprep.subr.mxu0 0.0
    %5767 = vmatpush1.msra.mxu0 %v1489
    %5768 = vmatprep.subr.mxu0 0.0
    %5769 = vmatpush1.msra.mxu0 %v1490
    %5770 = vmatprep.subr.mxu0 0.0
    %5771 = vmatpush1.msra.mxu0 %v1491
    %5772 = vmatprep.subr.mxu0 0.0
    %5773 = vmatpush1.msra.mxu0 %v1492
    %5774 = vmatprep.subr.mxu0 0.0
    %5775 = vmatpush1.msra.mxu0 %v1493
    %5776 = vmatprep.subr.mxu0 0.0
    %5777 = vmatpush1.msra.mxu0 %v1494
    %5778 = vmatprep.subr.mxu0 0.0
    %5779 = vmatpush1.msra.mxu0 %v1495
    %5780 = vmatprep.subr.mxu0 0.0
    %5781 = vmatpush1.msra.mxu0 %v1496
    %5782 = vmatprep.subr.mxu0 0.0
    %5783 = vmatpush1.msra.mxu0 %v1497
    %5784 = vmatprep.subr.mxu0 0.0
    %5785 = vmatpush1.msra.mxu0 %v1498
    %5786 = vmatprep.subr.mxu0 0.0
    %5787 = vmatpush1.msra.mxu0 %v1499
    %5788 = vmatprep.subr.mxu0 0.0
    %5789 = vmatpush1.msra.mxu0 %v1500
    %5790 = vmatprep.subr.mxu0 0.0
    %5791 = vmatpush1.msra.mxu0 %v1501
    %5792 = vmatprep.subr.mxu0 0.0
    %5793 = vmatpush1.msra.mxu0 %v1502
    %5794 = vmatprep.subr.mxu0 0.0
    %5795 = vmatpush1.msra.mxu0 %v1503
    %5796 = vmatprep.subr.mxu0 0.0
    %5797 = vmatpush1.msra.mxu0 %v1504
    %5798 = vmatprep.subr.mxu0 0.0
    %5799 = vmatpush1.msra.mxu0 0.0
    %5800 = vmatprep.subr.mxu0 0.0
    %5801 = vmatpush1.msra.mxu0 0.0
    %5802 = vmatprep.subr.mxu0 0.0
    %5803 = vmatpush1.msra.mxu0 0.0
    %5804 = vmatprep.subr.mxu0 0.0
    %5805 = vmatpush1.msra.mxu0 0.0
    %5806 = vmatprep.subr.mxu0 0.0
    %5807 = vmatpush1.msra.mxu0 0.0
    %5808 = vmatprep.subr.mxu0 0.0
    %5809 = vmatpush1.msra.mxu0 0.0
    %5810 = vmatprep.subr.mxu0 0.0
    %5811 = vmatpush1.msra.mxu0 0.0
    %5812 = vmatprep.subr.mxu0 0.0
    %5813 = vmatpush1.msra.mxu0 0.0
    %5814 = vmatprep.subr.mxu0 0.0
    %5815 = vmatpush1.msra.mxu0 0.0
    %5816 = vmatprep.subr.mxu0 0.0
    %5817 = vmatpush1.msra.mxu0 0.0
    %5818 = vmatprep.subr.mxu0 0.0
    %5819 = vmatpush1.msra.mxu0 0.0
    %5820 = vmatprep.subr.mxu0 0.0
    %5821 = vmatpush1.msra.mxu0 0.0
    %5822 = vmatprep.subr.mxu0 0.0
    %5823 = vmatpush1.msra.mxu0 0.0
    %5824 = vmatprep.subr.mxu0 0.0
    %5825 = vmatpush1.msra.mxu0 0.0
    %5826 = vmatprep.subr.mxu0 0.0
    %5827 = vmatpush1.msra.mxu0 0.0
    %5828 = vmatprep.subr.mxu0 0.0
    %5829 = vmatpush1.msra.mxu0 0.0
    %5830 = vmatprep.mubr.f32.mxu0 0.0
    %5831 = vmatmul.mubr.f32.gmra.mrb[0].mxu0 %v5765
    %v5832 = vpop.f32.mrb[0].mxu0
    %v5833 = vadd.f32 0.0, %v5832
    %v5834 = vpop.f32.mrb[0].mxu0
    %5835 = vdwg.mxu0
    %5836 = vmatprep.subr.mxu0 0.0
    %5837 = vmatpush1.msra.mxu0 %v1522
    %5838 = vmatprep.subr.mxu0 0.0
    %5839 = vmatpush1.msra.mxu0 %v1523
    %5840 = vmatprep.subr.mxu0 0.0
    %5841 = vmatpush1.msra.mxu0 %v1524
    %5842 = vmatprep.subr.mxu0 0.0
    %5843 = vmatpush1.msra.mxu0 %v1525
    %5844 = vmatprep.subr.mxu0 0.0
    %5845 = vmatpush1.msra.mxu0 %v1526
    %5846 = vmatprep.subr.mxu0 0.0
    %5847 = vmatpush1.msra.mxu0 %v1527
    %5848 = vmatprep.subr.mxu0 0.0
    %5849 = vmatpush1.msra.mxu0 %v1528
    %5850 = vmatprep.subr.mxu0 0.0
    %5851 = vmatpush1.msra.mxu0 %v1529
    %5852 = vmatprep.subr.mxu0 0.0
    %5853 = vmatpush1.msra.mxu0 %v1530
    %5854 = vmatprep.subr.mxu0 0.0
    %5855 = vmatpush1.msra.mxu0 %v1531
    %5856 = vmatprep.subr.mxu0 0.0
    %5857 = vmatpush1.msra.mxu0 %v1532
    %5858 = vmatprep.subr.mxu0 0.0
    %5859 = vmatpush1.msra.mxu0 %v1533
    %5860 = vmatprep.subr.mxu0 0.0
    %5861 = vmatpush1.msra.mxu0 %v1534
    %5862 = vmatprep.subr.mxu0 0.0
    %5863 = vmatpush1.msra.mxu0 %v1535
    %5864 = vmatprep.subr.mxu0 0.0
    %5865 = vmatpush1.msra.mxu0 %v1536
    %5866 = vmatprep.subr.mxu0 0.0
    %5867 = vmatpush1.msra.mxu0 %v1537
    %5868 = vmatprep.subr.mxu0 0.0
    %5869 = vmatpush1.msra.mxu0 0.0
    %5870 = vmatprep.subr.mxu0 0.0
    %5871 = vmatpush1.msra.mxu0 0.0
    %5872 = vmatprep.subr.mxu0 0.0
    %5873 = vmatpush1.msra.mxu0 0.0
    %5874 = vmatprep.subr.mxu0 0.0
    %5875 = vmatpush1.msra.mxu0 0.0
    %5876 = vmatprep.subr.mxu0 0.0
    %5877 = vmatpush1.msra.mxu0 0.0
    %5878 = vmatprep.subr.mxu0 0.0
    %5879 = vmatpush1.msra.mxu0 0.0
    %5880 = vmatprep.subr.mxu0 0.0
    %5881 = vmatpush1.msra.mxu0 0.0
    %5882 = vmatprep.subr.mxu0 0.0
    %5883 = vmatpush1.msra.mxu0 0.0
    %5884 = vmatprep.subr.mxu0 0.0
    %5885 = vmatpush1.msra.mxu0 0.0
    %5886 = vmatprep.subr.mxu0 0.0
    %5887 = vmatpush1.msra.mxu0 0.0
    %5888 = vmatprep.subr.mxu0 0.0
    %5889 = vmatpush1.msra.mxu0 0.0
    %5890 = vmatprep.subr.mxu0 0.0
    %5891 = vmatpush1.msra.mxu0 0.0
    %5892 = vmatprep.subr.mxu0 0.0
    %5893 = vmatpush1.msra.mxu0 0.0
    %5894 = vmatprep.subr.mxu0 0.0
    %5895 = vmatpush1.msra.mxu0 0.0
    %5896 = vmatprep.subr.mxu0 0.0
    %5897 = vmatpush1.msra.mxu0 0.0
    %5898 = vmatprep.subr.mxu0 0.0
    %5899 = vmatpush1.msra.mxu0 0.0
    %5900 = vmatprep.mubr.f32.mxu0 0.0
    %5901 = vmatmul.mubr.f32.gmra.mrb[0].mxu0 %v5765
    %v5902 = vpop.f32.mrb[0].mxu0
    %v5903 = vadd.f32 0.0, %v5902
    %v5904 = vpop.f32.mrb[0].mxu0
    %5905 = vdwg.mxu0
    %v5906 = vmax.f32 %v5833, %v5903
    %v5907 = vld [vmem:[%s4] sm:$0xff]
    %v5908 = vld [vmem:[%s4 + $0x8] sm:$0xff]
    %v5909 = vld [vmem:[%s4 + $0x10] sm:$0xff]
    %v5910 = vld [vmem:[%s4 + $0x18] sm:$0xff]
    %v5911 = vld [vmem:[%s4 + $0x20] sm:$0xff]
    %v5912 = vld [vmem:[%s4 + $0x28] sm:$0xff]
    %v5913 = vld [vmem:[%s4 + $0x30] sm:$0xff]
    %v5914 = vld [vmem:[%s4 + $0x38] sm:$0xff]
    %v5915 = vld [vmem:[%s11] sm:$0x1]
    %v5917 = vlaneseq
    %v5918 = vshrl.u32 %v5917, 7
    %v5919 = vsub.s32 0, %v5918
    %v5920 = vrot.slane %v5915, %v5919
    %v5923 = vsel %vm93, %v5618, 0
    %5925 = vmatprep.subr.mxu0 0.0
    %5926 = vmatpush1.msra.mxu0 %v5907
    %5927 = vmatprep.subr.mxu0 0.0
    %5928 = vmatpush1.msra.mxu0 %v5908
    %5929 = vmatprep.subr.mxu0 0.0
    %5930 = vmatpush1.msra.mxu0 %v5909
    %5931 = vmatprep.subr.mxu0 0.0
    %5932 = vmatpush1.msra.mxu0 %v5910
    %5933 = vmatprep.subr.mxu0 0.0
    %5934 = vmatpush1.msra.mxu0 %v5911
    %5935 = vmatprep.subr.mxu0 0.0
    %5936 = vmatpush1.msra.mxu0 %v5912
    %5937 = vmatprep.subr.mxu0 0.0
    %5938 = vmatpush1.msra.mxu0 %v5913
    %5939 = vmatprep.subr.mxu0 0.0
    %5940 = vmatpush1.msra.mxu0 %v5914
    %5941 = vmatprep.subr.mxu0 0.0
    %5942 = vmatpush1.msra.mxu0 0.0
    %5943 = vmatprep.subr.mxu0 0.0
    %5944 = vmatpush1.msra.mxu0 0.0
    %5945 = vmatprep.subr.mxu0 0.0
    %5946 = vmatpush1.msra.mxu0 0.0
    %5947 = vmatprep.subr.mxu0 0.0
    %5948 = vmatpush1.msra.mxu0 0.0
    %5949 = vmatprep.subr.mxu0 0.0
    %5950 = vmatpush1.msra.mxu0 0.0
    %5951 = vmatprep.subr.mxu0 0.0
    %5952 = vmatpush1.msra.mxu0 0.0
    %5953 = vmatprep.subr.mxu0 0.0
    %5954 = vmatpush1.msra.mxu0 0.0
    %5955 = vmatprep.subr.mxu0 0.0
    %5956 = vmatpush1.msra.mxu0 0.0
    %5957 = vmatprep.subr.mxu0 0.0
    %5958 = vmatpush1.msra.mxu0 0.0
    %5959 = vmatprep.subr.mxu0 0.0
    %5960 = vmatpush1.msra.mxu0 0.0
    %5961 = vmatprep.subr.mxu0 0.0
    %5962 = vmatpush1.msra.mxu0 0.0
    %5963 = vmatprep.subr.mxu0 0.0
    %5964 = vmatpush1.msra.mxu0 0.0
    %5965 = vmatprep.subr.mxu0 0.0
    %5966 = vmatpush1.msra.mxu0 0.0
    %5967 = vmatprep.subr.mxu0 0.0
    %5968 = vmatpush1.msra.mxu0 0.0
    %5969 = vmatprep.subr.mxu0 0.0
    %5970 = vmatpush1.msra.mxu0 0.0
    %5971 = vmatprep.subr.mxu0 0.0
    %5972 = vmatpush1.msra.mxu0 0.0
    %5973 = vmatprep.subr.mxu0 0.0
    %5974 = vmatpush1.msra.mxu0 0.0
    %5975 = vmatprep.subr.mxu0 0.0
    %5976 = vmatpush1.msra.mxu0 0.0
    %5977 = vmatprep.subr.mxu0 0.0
    %5978 = vmatpush1.msra.mxu0 0.0
    %5979 = vmatprep.subr.mxu0 0.0
    %5980 = vmatpush1.msra.mxu0 0.0
    %5981 = vmatprep.subr.mxu0 0.0
    %5982 = vmatpush1.msra.mxu0 0.0
    %5983 = vmatprep.subr.mxu0 0.0
    %5984 = vmatpush1.msra.mxu0 0.0
    %5985 = vmatprep.subr.mxu0 0.0
    %5986 = vmatpush1.msra.mxu0 0.0
    %5987 = vmatprep.subr.mxu0 0.0
    %5988 = vmatpush1.msra.mxu0 0.0
    %5989 = vmatprep.mubr.f32.mxu0 0.0
    %5990 = vmatmul.mubr.f32.gmra.mrb[0].mxu0 %v5923
    %v5991 = vpop.f32.mrb[0].mxu0
    %v5992 = vadd.f32 %v5920, %v5991
    %v5993 = vpop.f32.mrb[0].mxu0
    %5994 = vdwg.mxu0
    %vm5995 = vcmask 123904
    %5996 = vst.msk [vmem:[%s12] sm:$0x3] %vm5995, %v5992
    %v5997 = vld [vmem:[%s4] sm:$0xff]
    %v5998 = vld [vmem:[%s4 + $0x8] sm:$0xff]
    %v5999 = vld [vmem:[%s4 + $0x10] sm:$0xff]
    %v6000 = vld [vmem:[%s4 + $0x18] sm:$0xff]
    %v6001 = vld [vmem:[%s4 + $0x20] sm:$0xff]
    %v6002 = vld [vmem:[%s4 + $0x28] sm:$0xff]
    %v6003 = vld [vmem:[%s4 + $0x30] sm:$0xff]
    %v6004 = vld [vmem:[%s4 + $0x38] sm:$0xff]
    %v6005 = vld [vmem:[%s11] sm:$0x1]
    %v6007 = vlaneseq
    %v6008 = vshrl.u32 %v6007, 7
    %v6009 = vsub.s32 0, %v6008
    %v6010 = vrot.slane %v6005, %v6009
    %v6013 = vsel %vm93, %v5906, 0
    %6015 = vmatprep.subr.mxu0 0.0
    %6016 = vmatpush1.msra.mxu0 %v5997
    %6017 = vmatprep.subr.mxu0 0.0
    %6018 = vmatpush1.msra.mxu0 %v5998
    %6019 = vmatprep.subr.mxu0 0.0
    %6020 = vmatpush1.msra.mxu0 %v5999
    %6021 = vmatprep.subr.mxu0 0.0
    %6022 = vmatpush1.msra.mxu0 %v6000
    %6023 = vmatprep.subr.mxu0 0.0
    %6024 = vmatpush1.msra.mxu0 %v6001
    %6025 = vmatprep.subr.mxu0 0.0
    %6026 = vmatpush1.msra.mxu0 %v6002
    %6027 = vmatprep.subr.mxu0 0.0
    %6028 = vmatpush1.msra.mxu0 %v6003
    %6029 = vmatprep.subr.mxu0 0.0
    %6030 = vmatpush1.msra.mxu0 %v6004
    %6031 = vmatprep.subr.mxu0 0.0
    %6032 = vmatpush1.msra.mxu0 0.0
    %6033 = vmatprep.subr.mxu0 0.0
    %6034 = vmatpush1.msra.mxu0 0.0
    %6035 = vmatprep.subr.mxu0 0.0
    %6036 = vmatpush1.msra.mxu0 0.0
    %6037 = vmatprep.subr.mxu0 0.0
    %6038 = vmatpush1.msra.mxu0 0.0
    %6039 = vmatprep.subr.mxu0 0.0
    %6040 = vmatpush1.msra.mxu0 0.0
    %6041 = vmatprep.subr.mxu0 0.0
    %6042 = vmatpush1.msra.mxu0 0.0
    %6043 = vmatprep.subr.mxu0 0.0
    %6044 = vmatpush1.msra.mxu0 0.0
    %6045 = vmatprep.subr.mxu0 0.0
    %6046 = vmatpush1.msra.mxu0 0.0
    %6047 = vmatprep.subr.mxu0 0.0
    %6048 = vmatpush1.msra.mxu0 0.0
    %6049 = vmatprep.subr.mxu0 0.0
    %6050 = vmatpush1.msra.mxu0 0.0
    %6051 = vmatprep.subr.mxu0 0.0
    %6052 = vmatpush1.msra.mxu0 0.0
    %6053 = vmatprep.subr.mxu0 0.0
    %6054 = vmatpush1.msra.mxu0 0.0
    %6055 = vmatprep.subr.mxu0 0.0
    %6056 = vmatpush1.msra.mxu0 0.0
    %6057 = vmatprep.subr.mxu0 0.0
    %6058 = vmatpush1.msra.mxu0 0.0
    %6059 = vmatprep.subr.mxu0 0.0
    %6060 = vmatpush1.msra.mxu0 0.0
    %6061 = vmatprep.subr.mxu0 0.0
    %6062 = vmatpush1.msra.mxu0 0.0
    %6063 = vmatprep.subr.mxu0 0.0
    %6064 = vmatpush1.msra.mxu0 0.0
    %6065 = vmatprep.subr.mxu0 0.0
    %6066 = vmatpush1.msra.mxu0 0.0
    %6067 = vmatprep.subr.mxu0 0.0
    %6068 = vmatpush1.msra.mxu0 0.0
    %6069 = vmatprep.subr.mxu0 0.0
    %6070 = vmatpush1.msra.mxu0 0.0
    %6071 = vmatprep.subr.mxu0 0.0
    %6072 = vmatpush1.msra.mxu0 0.0
    %6073 = vmatprep.subr.mxu0 0.0
    %6074 = vmatpush1.msra.mxu0 0.0
    %6075 = vmatprep.subr.mxu0 0.0
    %6076 = vmatpush1.msra.mxu0 0.0
    %6077 = vmatprep.subr.mxu0 0.0
    %6078 = vmatpush1.msra.mxu0 0.0
    %6079 = vmatprep.mubr.f32.mxu0 0.0
    %6080 = vmatmul.mubr.f32.gmra.mrb[0].mxu0 %v6013
    %v6081 = vpop.f32.mrb[0].mxu0
    %v6082 = vadd.f32 %v6010, %v6081
    %v6083 = vpop.f32.mrb[0].mxu0
    %6084 = vdwg.mxu0
    %s6085 = scalar_lea.vmem %s12, 2
    %6086 = vst.msk [vmem:[%s6085] sm:$0x3] %vm5995, %v6082
    // Predicated region
    $region54: #{cnn_forward.1} parent=1 // pred_check
      _
    $region55: #{cnn_forward.1} parent=1 // pred_check_branch
      %6088 = sbr.rel (0) target = $region57
    $region56: #{cnn_forward.1} parent=1 // pred_region
      _
    $region57: #{cnn_forward.1} parent=1 // pred_fallthru
      _
    // Predicated region
    $region58: #{cnn_forward.1} parent=1 // pred_check
      _
    $region59: #{cnn_forward.1} parent=1 // pred_check_branch
      %6090 = sbr.rel (0) target = $region61
    $region60: #{cnn_forward.1} parent=1 // pred_region
      _
    $region61: #{cnn_forward.1} parent=1 // pred_fallthru
      _
    %6091 = vsyncpa [#allocation3], 1

</llo_original>
